<compile_context>
chip_gen: v7x
topology: tpu7x:2x2x1
jax: 0.10.0
libtpu: 0.0.40
codegen_flags: <defaults>
</compile_context>

<pallas_src>
import math
import functools

import jax
import jax.numpy as jnp
from jax import lax
from jax.experimental import pallas as pl
from jax.experimental.pallas import tpu as pltpu


_N_ENC_W = 12   # per-encoder-layer weight arrays (stacked over layers)
_N_DEC_W = 20   # per-decoder-layer weight arrays (stacked over layers)


# ----------------------------- in-kernel building blocks -----------------------------

def _dot_bf16(x, w_bf16):
    """MXU matmul: activation cast to bf16, weight already bf16, f32 accumulation."""
    return jnp.dot(x.astype(jnp.bfloat16), w_bf16, preferred_element_type=jnp.float32)


def _layernorm(x, g, b):
    """LayerNorm over the last dim (f32 math, eps = nn.LayerNorm default)."""
    mu = jnp.mean(x, axis=-1, keepdims=True)
    var = jnp.mean((x - mu) ** 2, axis=-1, keepdims=True)
    return (x - mu) * lax.rsqrt(var + 1e-5) * g + b


def _ffn(x, w1, b1, w2, b2):
    """Linear -> ReLU -> (Dropout = id) -> Linear, fully fused."""
    h = jnp.maximum(_dot_bf16(x, w1) + b1, 0.0)
    return _dot_bf16(h, w2) + b2


def _mha_core(q, k, v, wo, bo, num_heads, bblk, sq, skv):
    """Scaled-dot-product attention over a flattened (bblk*sq, D) Q slab.

    q: (bblk*sq, D) f32, k/v: (bblk*skv, D) f32.  Attention is computed per
    batch element / per head (bf16 MXU, f32 accumulation), heads are
    concatenated back to (sq, D) and a single K=D matmul applies Wo.
    """
    D = q.shape[-1]
    dk = D // num_heads
    inv_scale = 1.0 / math.sqrt(dk)

    rows = []
    for bi in range(bblk):                         # static batch loop
        qb = q[bi * sq:(bi + 1) * sq]
        kb = k[bi * skv:(bi + 1) * skv]
        vb = v[bi * skv:(bi + 1) * skv]
        heads = []
        for h in range(num_heads):                 # static head loop (2-D ops only)
            sl = slice(h * dk, (h + 1) * dk)
            # scores = qh @ kh^T / scale (bf16 operands, f32 accumulation)
            s = lax.dot_general(qb[:, sl].astype(jnp.bfloat16),
                                kb[:, sl].astype(jnp.bfloat16),
                                (((1,), (1,)), ((), ())),
                                preferred_element_type=jnp.float32) * inv_scale
            m = jnp.max(s, axis=-1, keepdims=True)                  # max-subtraction
            e = jnp.exp(s - m)
            p = e / (jnp.sum(e, axis=-1, keepdims=True) + 1e-9)     # +1e-9 denom (reference exact)
            heads.append(jnp.dot(p.astype(jnp.bfloat16),
                                 vb[:, sl].astype(jnp.bfloat16),
                                 preferred_element_type=jnp.float32))
        rows.append(jnp.concatenate(heads, axis=-1))                # (sq, D) head-merge
    o = rows[0] if bblk == 1 else jnp.concatenate(rows, axis=0)     # (bblk*sq, D)
    return _dot_bf16(o, wo) + bo


def _self_attention(x, wqkv, bqkv, wo, bo, num_heads, bblk, s):
    """Self-attention with a single fused (D, 3D) QKV matmul."""
    D = x.shape[-1]
    qkv = _dot_bf16(x, wqkv) + bqkv                                  # (bblk*s, 3D)
    return _mha_core(qkv[:, :D], qkv[:, D:2 * D], qkv[:, 2 * D:],
                     wo, bo, num_heads, bblk, s, s)


def _cross_attention(xq, xkv, wq, bq, wkv, bkv, wo, bo, num_heads, bblk, sq, skv):
    """Cross-attention: Q from the decoder stream, fused KV from the encoder output."""
    D = xq.shape[-1]
    q = _dot_bf16(xq, wq) + bq                                       # (bblk*sq, D)
    kv = _dot_bf16(xkv, wkv) + bkv                                   # (bblk*skv, 2D)
    return _mha_core(q, kv[:, :D], kv[:, D:], wo, bo, num_heads, bblk, sq, skv)


# ----------------------------- fused full-model kernel -----------------------------

def _transformer_kernel(*refs, num_heads):
    src_emb_ref, tgt_emb_ref, pe_ref = refs[:3]
    enc_w = refs[3:3 + _N_ENC_W]
    dec_w = refs[3 + _N_ENC_W:3 + _N_ENC_W + _N_DEC_W]
    fcw_ref, fcb_ref, out_ref = refs[-3:]

    bblk, s_src, D = src_emb_ref.shape
    s_tgt = tgt_emb_ref.shape[1]
    emb_scale = math.sqrt(D)

    (e_wqkv, e_bqkv, e_wo, e_bo, e_w1, e_b1, e_w2, e_b2,
     e_ln1g, e_ln1b, e_ln2g, e_ln2b) = enc_w
    (sa_wqkv, sa_bqkv, sa_wo, sa_bo,
     ca_wq, ca_bq, ca_wkv, ca_bkv, ca_wo, ca_bo,
     d_w1, d_b1, d_w2, d_b2,
     d_ln1g, d_ln1b, d_ln2g, d_ln2b, d_ln3g, d_ln3b) = dec_w

    pe = pe_ref[...]                                          # (bblk, 1, D), batch-indexed quirk

    # ---------------- encoder stack ----------------
    x = (src_emb_ref[...] * emb_scale + pe).reshape(bblk * s_src, D)
    n_enc = e_wqkv.shape[0]
    for l in range(n_enc):
        attn = _self_attention(x, e_wqkv[l], e_bqkv[l], e_wo[l], e_bo[l],
                               num_heads, bblk, s_src)
        x = _layernorm(x + attn, e_ln1g[l], e_ln1b[l])        # residual + LN fused
        ff = _ffn(x, e_w1[l], e_b1[l], e_w2[l], e_b2[l])
        x = _layernorm(x + ff, e_ln2g[l], e_ln2b[l])
    enc = x                                                   # stays in VMEM, no HBM round-trip

    # ---------------- decoder stack ----------------
    y = (tgt_emb_ref[...] * emb_scale + pe).reshape(bblk * s_tgt, D)
    n_dec = sa_wqkv.shape[0]
    for l in range(n_dec):
        sa = _self_attention(y, sa_wqkv[l], sa_bqkv[l], sa_wo[l], sa_bo[l],
                             num_heads, bblk, s_tgt)
        y = _layernorm(y + sa, d_ln1g[l], d_ln1b[l])
        ca = _cross_attention(y, enc, ca_wq[l], ca_bq[l], ca_wkv[l], ca_bkv[l],
                              ca_wo[l], ca_bo[l], num_heads, bblk, s_tgt, s_src)
        y = _layernorm(y + ca, d_ln2g[l], d_ln2b[l])
        ff = _ffn(y, d_w1[l], d_b1[l], d_w2[l], d_b2[l])
        y = _layernorm(y + ff, d_ln3g[l], d_ln3b[l])

    # final vocab projection (lane-padded output -> full, unmasked stores)
    logits = _dot_bf16(y, fcw_ref[...]) + fcb_ref[...]        # (bblk*s_tgt, Vpad)
    out_ref[...] = logits.reshape(out_ref.shape)


# ----------------------------- pallas_call wrapper -----------------------------

def _replicated_spec(shape):
    """Full-array block, same for every grid step (weights stay VMEM-resident)."""
    n = len(shape)
    return pl.BlockSpec(shape, lambda b, _n=n: (0,) * _n)


def transformer_forward(prep, src, tgt, num_heads, tgt_vocab):
    """prep: output of prepare_weights().  Returns logits (B, S_tgt, tgt_vocab)."""
    B, s_src = src.shape
    s_tgt = tgt.shape[1]
    D = prep["enc_emb"].shape[1]

    src_emb = prep["enc_emb"][src]              # (B, Ss, D)  XLA gather (outside Pallas)
    tgt_emb = prep["dec_emb"][tgt]              # (B, St, D)
    pe_b = prep["pe"][:B]                       # (B, 1, D) -- reproduces pe[:x.size(0)] quirk

    weights = prep["stack"]
    v_pad = weights[-1].shape[-1]               # lane-padded vocab width

    nb = 2 if (B % 2 == 0 and B >= 2) else 1    # keep both v7x TensorCores busy
    bblk = B // nb

    out_pad = pl.pallas_call(
        functools.partial(_transformer_kernel, num_heads=num_heads),
        out_shape=jax.ShapeDtypeStruct((B, s_tgt, v_pad), jnp.float32),
        grid=(nb,),
        in_specs=([pl.BlockSpec((bblk, s_src, D), lambda b: (b, 0, 0)),
                   pl.BlockSpec((bblk, s_tgt, D), lambda b: (b, 0, 0)),
                   pl.BlockSpec((bblk, 1, D), lambda b: (b, 0, 0))]
                  + [_replicated_spec(w.shape) for w in weights]),
        out_specs=pl.BlockSpec((bblk, s_tgt, v_pad), lambda b: (b, 0, 0)),
        compiler_params=pltpu.CompilerParams(
            dimension_semantics=("parallel",),
            vmem_limit_bytes=48 * 1024 * 1024),
    )(src_emb, tgt_emb, pe_b, *weights)

    return out_pad[..., :tgt_vocab]             # strip lane padding outside the kernel


# ----------------------------- host-side weight preparation -----------------------------

def prepare_weights(params, lane=128):
    """One-time host-side prep: bf16-cast matmul weights, split cross-attn Q/KV,
    lane-pad the vocab projection.  Biases / LayerNorm params stay f32."""
    bf = lambda a: a.astype(jnp.bfloat16)
    e, d = params["enc"], params["dec"]
    D = params["fc_w"].shape[0]

    enc_w = (bf(e["wqkv"]), e["bqkv"], bf(e["wo"]), e["bo"],
             bf(e["w1"]), e["b1"], bf(e["w2"]), e["b2"],
             e["ln1_g"], e["ln1_b"], e["ln2_g"], e["ln2_b"])

    ca_wq, ca_wkv = d["ca_wqkv"][:, :, :D], d["ca_wqkv"][:, :, D:]
    ca_bq, ca_bkv = d["ca_bqkv"][:, :, :D], d["ca_bqkv"][:, :, D:]
    dec_w = (bf(d["sa_wqkv"]), d["sa_bqkv"], bf(d["sa_wo"]), d["sa_bo"],
             bf(ca_wq), ca_bq, bf(ca_wkv), ca_bkv, bf(d["ca_wo"]), d["ca_bo"],
             bf(d["w1"]), d["b1"], bf(d["w2"]), d["b2"],
             d["ln1_g"], d["ln1_b"], d["ln2_g"], d["ln2_b"], d["ln3_g"], d["ln3_b"])

    V = params["fc_w"].shape[1]
    v_pad = ((V + lane - 1) // lane) * lane
    fc_w_pad = bf(jnp.zeros((D, v_pad), jnp.float32).at[:, :V].set(params["fc_w"]))
    fc_b_pad = jnp.zeros((1, v_pad), jnp.float32).at[:, :V].set(params["fc_b"])

    assert len(enc_w) == _N_ENC_W and len(dec_w) == _N_DEC_W
    return {
        "enc_emb": params["enc_emb"],
        "dec_emb": params["dec_emb"],
        "pe": params["pe"],
        "stack": enc_w + dec_w + (fc_w_pad, fc_b_pad),
    }


# ----------------------------- deterministic parameter init -----------------------------

def make_positional_encoding(d_model, max_len):
    position = jnp.arange(max_len, dtype=jnp.float32)[:, None]
    div_term = jnp.exp(jnp.arange(0, d_model, 2, dtype=jnp.float32)
                       * (-math.log(10000.0) / d_model))
    pe = jnp.zeros((max_len, d_model), dtype=jnp.float32)
    pe = pe.at[:, 0::2].set(jnp.sin(position * div_term))
    pe = pe.at[:, 1::2].set(jnp.cos(position * div_term))
    return pe[:, None, :]          # (max_len, 1, d_model), matches the torch buffer shape


def _nrm(key, shape, scale=0.05):
    return scale * jax.random.normal(key, shape, dtype=jnp.float32)


def make_params(key, src_vocab, tgt_vocab, d_model, d_ff, n_enc, n_dec, max_len):
    ks = iter(jax.random.split(key, 24))
    D, F = d_model, d_ff
    ones = lambda s: jnp.ones(s, jnp.float32)
    zeros = lambda s: jnp.zeros(s, jnp.float32)

    enc = {
        "wqkv": _nrm(next(ks), (n_enc, D, 3 * D)),   # fused [Wq|Wk|Wv], (in,out) layout
        "bqkv": zeros((n_enc, 1, 3 * D)),
        "wo": _nrm(next(ks), (n_enc, D, D)),
        "bo": zeros((n_enc, 1, D)),
        "w1": _nrm(next(ks), (n_enc, D, F)),
        "b1": _nrm(next(ks), (n_enc, 1, F)),
        "w2": _nrm(next(ks), (n_enc, F, D)),
        "b2": _nrm(next(ks), (n_enc, 1, D)),
        "ln1_g": ones((n_enc, 1, D)), "ln1_b": zeros((n_enc, 1, D)),
        "ln2_g": ones((n_enc, 1, D)), "ln2_b": zeros((n_enc, 1, D)),
    }
    dec = {
        "sa_wqkv": _nrm(next(ks), (n_dec, D, 3 * D)),
        "sa_bqkv": zeros((n_dec, 1, 3 * D)),
        "sa_wo": _nrm(next(ks), (n_dec, D, D)),
        "sa_bo": zeros((n_dec, 1, D)),
        "ca_wqkv": _nrm(next(ks), (n_dec, D, 3 * D)),
        "ca_bqkv": zeros((n_dec, 1, 3 * D)),
        "ca_wo": _nrm(next(ks), (n_dec, D, D)),
        "ca_bo": zeros((n_dec, 1, D)),
        "w1": _nrm(next(ks), (n_dec, D, F)),
        "b1": _nrm(next(ks), (n_dec, 1, F)),
        "w2": _nrm(next(ks), (n_dec, F, D)),
        "b2": _nrm(next(ks), (n_dec, 1, D)),
        "ln1_g": ones((n_dec, 1, D)), "ln1_b": zeros((n_dec, 1, D)),
        "ln2_g": ones((n_dec, 1, D)), "ln2_b": zeros((n_dec, 1, D)),
        "ln3_g": ones((n_dec, 1, D)), "ln3_b": zeros((n_dec, 1, D)),
    }
    return {
        "enc_emb": _nrm(next(ks), (src_vocab, D), scale=0.1),
        "dec_emb": _nrm(next(ks), (tgt_vocab, D), scale=0.1),
        "fc_w": _nrm(next(ks), (D, tgt_vocab)),
        "fc_b": _nrm(next(ks), (1, tgt_vocab)),
        "pe": make_positional_encoding(D, max_len),
        "enc": enc,
        "dec": dec,
    }


# ----------------------------- main -----------------------------

if __name__ == "__main__":
    SRC_VOCAB = 50
    TGT_VOCAB = 50
    D_MODEL = 32
    NUM_HEADS = 4
    N_ENC = 2
    N_DEC = 2
    D_FF = 64
    MAX_LEN = 128
    B, S = 2, 8

    root = jax.random.PRNGKey(0)
    kp, ks, kt = jax.random.split(root, 3)

    params = make_params(kp, SRC_VOCAB, TGT_VOCAB, D_MODEL, D_FF, N_ENC, N_DEC, MAX_LEN)
    prep = prepare_weights(params)     # one-time host-side bf16 cast + vocab lane-padding
    src = jax.random.randint(ks, (B, S), 0, SRC_VOCAB, dtype=jnp.int32)
    tgt = jax.random.randint(kt, (B, S), 0, TGT_VOCAB, dtype=jnp.int32)

    fwd = jax.jit(transformer_forward, static_argnums=(3, 4))
    out = jax.block_until_ready(fwd(prep, src, tgt, NUM_HEADS, TGT_VOCAB))

    assert out.shape == (B, S, TGT_VOCAB), out.shape
    assert bool(jnp.all(jnp.isfinite(out)))
    print("KERNEL_OK")
</pallas_src>

<mosaic_0001>
module attributes {stable_mosaic.version = 11 : i64} {
  func.func @_transformer_kernel(%arg0: i32, %arg1: memref<1x8x32xf32, #tpu.memory_space<vmem>>, %arg2: memref<1x8x32xf32, #tpu.memory_space<vmem>>, %arg3: memref<1x1x32xf32, #tpu.memory_space<vmem>>, %arg4: memref<2x32x96xbf16, #tpu.memory_space<vmem>>, %arg5: memref<2x1x96xf32, #tpu.memory_space<vmem>>, %arg6: memref<2x32x32xbf16, #tpu.memory_space<vmem>>, %arg7: memref<2x1x32xf32, #tpu.memory_space<vmem>>, %arg8: memref<2x32x64xbf16, #tpu.memory_space<vmem>>, %arg9: memref<2x1x64xf32, #tpu.memory_space<vmem>>, %arg10: memref<2x64x32xbf16, #tpu.memory_space<vmem>>, %arg11: memref<2x1x32xf32, #tpu.memory_space<vmem>>, %arg12: memref<2x1x32xf32, #tpu.memory_space<vmem>>, %arg13: memref<2x1x32xf32, #tpu.memory_space<vmem>>, %arg14: memref<2x1x32xf32, #tpu.memory_space<vmem>>, %arg15: memref<2x1x32xf32, #tpu.memory_space<vmem>>, %arg16: memref<2x32x96xbf16, #tpu.memory_space<vmem>>, %arg17: memref<2x1x96xf32, #tpu.memory_space<vmem>>, %arg18: memref<2x32x32xbf16, #tpu.memory_space<vmem>>, %arg19: memref<2x1x32xf32, #tpu.memory_space<vmem>>, %arg20: memref<2x32x32xbf16, #tpu.memory_space<vmem>>, %arg21: memref<2x1x32xf32, #tpu.memory_space<vmem>>, %arg22: memref<2x32x64xbf16, #tpu.memory_space<vmem>>, %arg23: memref<2x1x64xf32, #tpu.memory_space<vmem>>, %arg24: memref<2x32x32xbf16, #tpu.memory_space<vmem>>, %arg25: memref<2x1x32xf32, #tpu.memory_space<vmem>>, %arg26: memref<2x32x64xbf16, #tpu.memory_space<vmem>>, %arg27: memref<2x1x64xf32, #tpu.memory_space<vmem>>, %arg28: memref<2x64x32xbf16, #tpu.memory_space<vmem>>, %arg29: memref<2x1x32xf32, #tpu.memory_space<vmem>>, %arg30: memref<2x1x32xf32, #tpu.memory_space<vmem>>, %arg31: memref<2x1x32xf32, #tpu.memory_space<vmem>>, %arg32: memref<2x1x32xf32, #tpu.memory_space<vmem>>, %arg33: memref<2x1x32xf32, #tpu.memory_space<vmem>>, %arg34: memref<2x1x32xf32, #tpu.memory_space<vmem>>, %arg35: memref<2x1x32xf32, #tpu.memory_space<vmem>>, %arg36: memref<32x128xbf16, #tpu.memory_space<vmem>>, %arg37: memref<1x128xf32, #tpu.memory_space<vmem>>, %arg38: memref<1x8x128xf32, #tpu.memory_space<vmem>>) attributes {dimension_semantics = [#tpu.dimension_semantics<parallel>], iteration_bounds = array<i64: 2>, scalar_prefetch = 0 : i64, scratch_operands = 0 : i64, tpu.core_type = #tpu.core_type<tc>, window_params = [{transform_indices = @transform_0, window_bounds = array<i64: 1, 8, 32>}, {transform_indices = @transform_1, window_bounds = array<i64: 1, 8, 32>}, {transform_indices = @transform_2, window_bounds = array<i64: 1, 1, 32>}, {pipeline_mode = #tpu.pipeline_mode<synchronous>, transform_indices = @transform_3, window_bounds = array<i64: 2, 32, 96>}, {pipeline_mode = #tpu.pipeline_mode<synchronous>, transform_indices = @transform_4, window_bounds = array<i64: 2, 1, 96>}, {pipeline_mode = #tpu.pipeline_mode<synchronous>, transform_indices = @transform_5, window_bounds = array<i64: 2, 32, 32>}, {pipeline_mode = #tpu.pipeline_mode<synchronous>, transform_indices = @transform_6, window_bounds = array<i64: 2, 1, 32>}, {pipeline_mode = #tpu.pipeline_mode<synchronous>, transform_indices = @transform_7, window_bounds = array<i64: 2, 32, 64>}, {pipeline_mode = #tpu.pipeline_mode<synchronous>, transform_indices = @transform_8, window_bounds = array<i64: 2, 1, 64>}, {pipeline_mode = #tpu.pipeline_mode<synchronous>, transform_indices = @transform_9, window_bounds = array<i64: 2, 64, 32>}, {pipeline_mode = #tpu.pipeline_mode<synchronous>, transform_indices = @transform_10, window_bounds = array<i64: 2, 1, 32>}, {pipeline_mode = #tpu.pipeline_mode<synchronous>, transform_indices = @transform_11, window_bounds = array<i64: 2, 1, 32>}, {pipeline_mode = #tpu.pipeline_mode<synchronous>, transform_indices = @transform_12, window_bounds = array<i64: 2, 1, 32>}, {pipeline_mode = #tpu.pipeline_mode<synchronous>, transform_indices = @transform_13, window_bounds = array<i64: 2, 1, 32>}, {pipeline_mode = #tpu.pipeline_mode<synchronous>, transform_indices = @transform_14, window_bounds = array<i64: 2, 1, 32>}, {pipeline_mode = #tpu.pipeline_mode<synchronous>, transform_indices = @transform_15, window_bounds = array<i64: 2, 32, 96>}, {pipeline_mode = #tpu.pipeline_mode<synchronous>, transform_indices = @transform_16, window_bounds = array<i64: 2, 1, 96>}, {pipeline_mode = #tpu.pipeline_mode<synchronous>, transform_indices = @transform_17, window_bounds = array<i64: 2, 32, 32>}, {pipeline_mode = #tpu.pipeline_mode<synchronous>, transform_indices = @transform_18, window_bounds = array<i64: 2, 1, 32>}, {pipeline_mode = #tpu.pipeline_mode<synchronous>, transform_indices = @transform_19, window_bounds = array<i64: 2, 32, 32>}, {pipeline_mode = #tpu.pipeline_mode<synchronous>, transform_indices = @transform_20, window_bounds = array<i64: 2, 1, 32>}, {pipeline_mode = #tpu.pipeline_mode<synchronous>, transform_indices = @transform_21, window_bounds = array<i64: 2, 32, 64>}, {pipeline_mode = #tpu.pipeline_mode<synchronous>, transform_indices = @transform_22, window_bounds = array<i64: 2, 1, 64>}, {pipeline_mode = #tpu.pipeline_mode<synchronous>, transform_indices = @transform_23, window_bounds = array<i64: 2, 32, 32>}, {pipeline_mode = #tpu.pipeline_mode<synchronous>, transform_indices = @transform_24, window_bounds = array<i64: 2, 1, 32>}, {pipeline_mode = #tpu.pipeline_mode<synchronous>, transform_indices = @transform_25, window_bounds = array<i64: 2, 32, 64>}, {pipeline_mode = #tpu.pipeline_mode<synchronous>, transform_indices = @transform_26, window_bounds = array<i64: 2, 1, 64>}, {pipeline_mode = #tpu.pipeline_mode<synchronous>, transform_indices = @transform_27, window_bounds = array<i64: 2, 64, 32>}, {pipeline_mode = #tpu.pipeline_mode<synchronous>, transform_indices = @transform_28, window_bounds = array<i64: 2, 1, 32>}, {pipeline_mode = #tpu.pipeline_mode<synchronous>, transform_indices = @transform_29, window_bounds = array<i64: 2, 1, 32>}, {pipeline_mode = #tpu.pipeline_mode<synchronous>, transform_indices = @transform_30, window_bounds = array<i64: 2, 1, 32>}, {pipeline_mode = #tpu.pipeline_mode<synchronous>, transform_indices = @transform_31, window_bounds = array<i64: 2, 1, 32>}, {pipeline_mode = #tpu.pipeline_mode<synchronous>, transform_indices = @transform_32, window_bounds = array<i64: 2, 1, 32>}, {pipeline_mode = #tpu.pipeline_mode<synchronous>, transform_indices = @transform_33, window_bounds = array<i64: 2, 1, 32>}, {pipeline_mode = #tpu.pipeline_mode<synchronous>, transform_indices = @transform_34, window_bounds = array<i64: 2, 1, 32>}, {pipeline_mode = #tpu.pipeline_mode<synchronous>, transform_indices = @transform_35, window_bounds = array<i64: 32, 128>}, {pipeline_mode = #tpu.pipeline_mode<synchronous>, transform_indices = @transform_36, window_bounds = array<i64: 1, 128>}, {transform_indices = @transform_37, window_bounds = array<i64: 1, 8, 128>}]} {
    %c0 = arith.constant 0 : index
    %c0_0 = arith.constant 0 : index
    %c0_1 = arith.constant 0 : index
    %0 = vector.load %arg3[%c0, %c0_0, %c0_1] : memref<1x1x32xf32, #tpu.memory_space<vmem>>, vector<1x1x32xf32>
    %c0_2 = arith.constant 0 : index
    %c0_3 = arith.constant 0 : index
    %c0_4 = arith.constant 0 : index
    %1 = vector.load %arg1[%c0_2, %c0_3, %c0_4] : memref<1x8x32xf32, #tpu.memory_space<vmem>>, vector<1x8x32xf32>
    %cst = arith.constant 5.65685415 : f32
    %2 = vector.broadcast %cst : f32 to vector<1x8x32xf32>
    %3 = arith.mulf %1, %2 : vector<1x8x32xf32>
    %4 = vector.broadcast %0 : vector<1x1x32xf32> to vector<1x8x32xf32>
    %5 = arith.addf %3, %4 : vector<1x8x32xf32>
    %6 = vector.shape_cast %5 : vector<1x8x32xf32> to vector<8x32xf32>
    %c0_5 = arith.constant 0 : index
    %c0_6 = arith.constant 0 : index
    %c0_7 = arith.constant 0 : index
    %7 = vector.load %arg4[%c0_5, %c0_6, %c0_7] : memref<2x32x96xbf16, #tpu.memory_space<vmem>>, vector<1x32x96xbf16>
    %8 = vector.shape_cast %7 : vector<1x32x96xbf16> to vector<32x96xbf16>
    %c0_8 = arith.constant 0 : index
    %c0_9 = arith.constant 0 : index
    %c0_10 = arith.constant 0 : index
    %9 = vector.load %arg5[%c0_8, %c0_9, %c0_10] : memref<2x1x96xf32, #tpu.memory_space<vmem>>, vector<1x1x96xf32>
    %10 = vector.shape_cast %9 : vector<1x1x96xf32> to vector<1x96xf32>
    %c0_11 = arith.constant 0 : index
    %c0_12 = arith.constant 0 : index
    %c0_13 = arith.constant 0 : index
    %11 = vector.load %arg6[%c0_11, %c0_12, %c0_13] : memref<2x32x32xbf16, #tpu.memory_space<vmem>>, vector<1x32x32xbf16>
    %12 = vector.shape_cast %11 : vector<1x32x32xbf16> to vector<32x32xbf16>
    %c0_14 = arith.constant 0 : index
    %c0_15 = arith.constant 0 : index
    %c0_16 = arith.constant 0 : index
    %13 = vector.load %arg7[%c0_14, %c0_15, %c0_16] : memref<2x1x32xf32, #tpu.memory_space<vmem>>, vector<1x1x32xf32>
    %14 = vector.shape_cast %13 : vector<1x1x32xf32> to vector<1x32xf32>
    %15 = arith.truncf %6 : vector<8x32xf32> to vector<8x32xbf16>
    %cst_17 = arith.constant dense<0.000000e+00> : vector<8x96xf32>
    %16 = tpu.matmul %15, %8, %cst_17 {dimension_numbers = #tpu.dot_dimension_numbers<[1], [0], [0], [1], [0, 0, 1, 1], [], []>} : vector<8x32xbf16>, vector<32x96xbf16>, vector<8x96xf32> -> vector<8x96xf32>
    %17 = vector.broadcast %10 : vector<1x96xf32> to vector<8x96xf32>
    %18 = arith.addf %16, %17 : vector<8x96xf32>
    %19 = vector.extract_strided_slice %18 {offsets = [0, 0], sizes = [8, 32], strides = [1, 1]} : vector<8x96xf32> to vector<8x32xf32>
    %20 = vector.extract_strided_slice %18 {offsets = [0, 32], sizes = [8, 32], strides = [1, 1]} : vector<8x96xf32> to vector<8x32xf32>
    %21 = vector.extract_strided_slice %18 {offsets = [0, 64], sizes = [8, 32], strides = [1, 1]} : vector<8x96xf32> to vector<8x32xf32>
    %22 = vector.extract_strided_slice %19 {offsets = [0, 0], sizes = [8, 8], strides = [1, 1]} : vector<8x32xf32> to vector<8x8xf32>
    %23 = arith.truncf %22 : vector<8x8xf32> to vector<8x8xbf16>
    %24 = vector.extract_strided_slice %20 {offsets = [0, 0], sizes = [8, 8], strides = [1, 1]} : vector<8x32xf32> to vector<8x8xf32>
    %25 = arith.truncf %24 : vector<8x8xf32> to vector<8x8xbf16>
    %cst_18 = arith.constant dense<0.000000e+00> : vector<8x8xf32>
    %26 = tpu.matmul %23, %25, %cst_18 {dimension_numbers = #tpu.dot_dimension_numbers<[1], [1], [0], [0], [0, 0, 1, 0], [], []>} : vector<8x8xbf16>, vector<8x8xbf16>, vector<8x8xf32> -> vector<8x8xf32>
    %cst_19 = arith.constant 0.353553385 : f32
    %27 = vector.broadcast %cst_19 : f32 to vector<8x8xf32>
    %28 = arith.mulf %26, %27 : vector<8x8xf32>
    %cst_20 = arith.constant dense<0xFF800000> : vector<8xf32>
    %29 = vector.multi_reduction <maximumf>, %28, %cst_20 [1] : vector<8x8xf32> to vector<8xf32>
    %30 = vector.shape_cast %29 : vector<8xf32> to vector<8x1xf32>
    %31 = vector.broadcast %30 : vector<8x1xf32> to vector<8x8xf32>
    %32 = arith.subf %28, %31 : vector<8x8xf32>
    %33 = math.exp %32 : vector<8x8xf32>
    %cst_21 = arith.constant dense<0.000000e+00> : vector<8xf32>
    %34 = vector.multi_reduction <add>, %33, %cst_21 [1] : vector<8x8xf32> to vector<8xf32>
    %35 = vector.shape_cast %34 : vector<8xf32> to vector<8x1xf32>
    %cst_22 = arith.constant 9.99999971E-10 : f32
    %36 = vector.broadcast %cst_22 : f32 to vector<8x1xf32>
    %37 = arith.addf %35, %36 : vector<8x1xf32>
    %38 = vector.broadcast %37 : vector<8x1xf32> to vector<8x8xf32>
    %39 = arith.divf %33, %38 : vector<8x8xf32>
    %40 = arith.truncf %39 : vector<8x8xf32> to vector<8x8xbf16>
    %41 = vector.extract_strided_slice %21 {offsets = [0, 0], sizes = [8, 8], strides = [1, 1]} : vector<8x32xf32> to vector<8x8xf32>
    %42 = arith.truncf %41 : vector<8x8xf32> to vector<8x8xbf16>
    %cst_23 = arith.constant dense<0.000000e+00> : vector<8x8xf32>
    %43 = tpu.matmul %40, %42, %cst_23 {dimension_numbers = #tpu.dot_dimension_numbers<[1], [0], [0], [1], [0, 0, 1, 1], [], []>} : vector<8x8xbf16>, vector<8x8xbf16>, vector<8x8xf32> -> vector<8x8xf32>
    %44 = vector.extract_strided_slice %19 {offsets = [0, 8], sizes = [8, 8], strides = [1, 1]} : vector<8x32xf32> to vector<8x8xf32>
    %45 = arith.truncf %44 : vector<8x8xf32> to vector<8x8xbf16>
    %46 = vector.extract_strided_slice %20 {offsets = [0, 8], sizes = [8, 8], strides = [1, 1]} : vector<8x32xf32> to vector<8x8xf32>
    %47 = arith.truncf %46 : vector<8x8xf32> to vector<8x8xbf16>
    %cst_24 = arith.constant dense<0.000000e+00> : vector<8x8xf32>
    %48 = tpu.matmul %45, %47, %cst_24 {dimension_numbers = #tpu.dot_dimension_numbers<[1], [1], [0], [0], [0, 0, 1, 0], [], []>} : vector<8x8xbf16>, vector<8x8xbf16>, vector<8x8xf32> -> vector<8x8xf32>
    %cst_25 = arith.constant 0.353553385 : f32
    %49 = vector.broadcast %cst_25 : f32 to vector<8x8xf32>
    %50 = arith.mulf %48, %49 : vector<8x8xf32>
    %cst_26 = arith.constant dense<0xFF800000> : vector<8xf32>
    %51 = vector.multi_reduction <maximumf>, %50, %cst_26 [1] : vector<8x8xf32> to vector<8xf32>
    %52 = vector.shape_cast %51 : vector<8xf32> to vector<8x1xf32>
    %53 = vector.broadcast %52 : vector<8x1xf32> to vector<8x8xf32>
    %54 = arith.subf %50, %53 : vector<8x8xf32>
    %55 = math.exp %54 : vector<8x8xf32>
    %cst_27 = arith.constant dense<0.000000e+00> : vector<8xf32>
    %56 = vector.multi_reduction <add>, %55, %cst_27 [1] : vector<8x8xf32> to vector<8xf32>
    %57 = vector.shape_cast %56 : vector<8xf32> to vector<8x1xf32>
    %cst_28 = arith.constant 9.99999971E-10 : f32
    %58 = vector.broadcast %cst_28 : f32 to vector<8x1xf32>
    %59 = arith.addf %57, %58 : vector<8x1xf32>
    %60 = vector.broadcast %59 : vector<8x1xf32> to vector<8x8xf32>
    %61 = arith.divf %55, %60 : vector<8x8xf32>
    %62 = arith.truncf %61 : vector<8x8xf32> to vector<8x8xbf16>
    %63 = vector.extract_strided_slice %21 {offsets = [0, 8], sizes = [8, 8], strides = [1, 1]} : vector<8x32xf32> to vector<8x8xf32>
    %64 = arith.truncf %63 : vector<8x8xf32> to vector<8x8xbf16>
    %cst_29 = arith.constant dense<0.000000e+00> : vector<8x8xf32>
    %65 = tpu.matmul %62, %64, %cst_29 {dimension_numbers = #tpu.dot_dimension_numbers<[1], [0], [0], [1], [0, 0, 1, 1], [], []>} : vector<8x8xbf16>, vector<8x8xbf16>, vector<8x8xf32> -> vector<8x8xf32>
    %66 = vector.extract_strided_slice %19 {offsets = [0, 16], sizes = [8, 8], strides = [1, 1]} : vector<8x32xf32> to vector<8x8xf32>
    %67 = arith.truncf %66 : vector<8x8xf32> to vector<8x8xbf16>
    %68 = vector.extract_strided_slice %20 {offsets = [0, 16], sizes = [8, 8], strides = [1, 1]} : vector<8x32xf32> to vector<8x8xf32>
    %69 = arith.truncf %68 : vector<8x8xf32> to vector<8x8xbf16>
    %cst_30 = arith.constant dense<0.000000e+00> : vector<8x8xf32>
    %70 = tpu.matmul %67, %69, %cst_30 {dimension_numbers = #tpu.dot_dimension_numbers<[1], [1], [0], [0], [0, 0, 1, 0], [], []>} : vector<8x8xbf16>, vector<8x8xbf16>, vector<8x8xf32> -> vector<8x8xf32>
    %cst_31 = arith.constant 0.353553385 : f32
    %71 = vector.broadcast %cst_31 : f32 to vector<8x8xf32>
    %72 = arith.mulf %70, %71 : vector<8x8xf32>
    %cst_32 = arith.constant dense<0xFF800000> : vector<8xf32>
    %73 = vector.multi_reduction <maximumf>, %72, %cst_32 [1] : vector<8x8xf32> to vector<8xf32>
    %74 = vector.shape_cast %73 : vector<8xf32> to vector<8x1xf32>
    %75 = vector.broadcast %74 : vector<8x1xf32> to vector<8x8xf32>
    %76 = arith.subf %72, %75 : vector<8x8xf32>
    %77 = math.exp %76 : vector<8x8xf32>
    %cst_33 = arith.constant dense<0.000000e+00> : vector<8xf32>
    %78 = vector.multi_reduction <add>, %77, %cst_33 [1] : vector<8x8xf32> to vector<8xf32>
    %79 = vector.shape_cast %78 : vector<8xf32> to vector<8x1xf32>
    %cst_34 = arith.constant 9.99999971E-10 : f32
    %80 = vector.broadcast %cst_34 : f32 to vector<8x1xf32>
    %81 = arith.addf %79, %80 : vector<8x1xf32>
    %82 = vector.broadcast %81 : vector<8x1xf32> to vector<8x8xf32>
    %83 = arith.divf %77, %82 : vector<8x8xf32>
    %84 = arith.truncf %83 : vector<8x8xf32> to vector<8x8xbf16>
    %85 = vector.extract_strided_slice %21 {offsets = [0, 16], sizes = [8, 8], strides = [1, 1]} : vector<8x32xf32> to vector<8x8xf32>
    %86 = arith.truncf %85 : vector<8x8xf32> to vector<8x8xbf16>
    %cst_35 = arith.constant dense<0.000000e+00> : vector<8x8xf32>
    %87 = tpu.matmul %84, %86, %cst_35 {dimension_numbers = #tpu.dot_dimension_numbers<[1], [0], [0], [1], [0, 0, 1, 1], [], []>} : vector<8x8xbf16>, vector<8x8xbf16>, vector<8x8xf32> -> vector<8x8xf32>
    %88 = vector.extract_strided_slice %19 {offsets = [0, 24], sizes = [8, 8], strides = [1, 1]} : vector<8x32xf32> to vector<8x8xf32>
    %89 = arith.truncf %88 : vector<8x8xf32> to vector<8x8xbf16>
    %90 = vector.extract_strided_slice %20 {offsets = [0, 24], sizes = [8, 8], strides = [1, 1]} : vector<8x32xf32> to vector<8x8xf32>
    %91 = arith.truncf %90 : vector<8x8xf32> to vector<8x8xbf16>
    %cst_36 = arith.constant dense<0.000000e+00> : vector<8x8xf32>
    %92 = tpu.matmul %89, %91, %cst_36 {dimension_numbers = #tpu.dot_dimension_numbers<[1], [1], [0], [0], [0, 0, 1, 0], [], []>} : vector<8x8xbf16>, vector<8x8xbf16>, vector<8x8xf32> -> vector<8x8xf32>
    %cst_37 = arith.constant 0.353553385 : f32
    %93 = vector.broadcast %cst_37 : f32 to vector<8x8xf32>
    %94 = arith.mulf %92, %93 : vector<8x8xf32>
    %cst_38 = arith.constant dense<0xFF800000> : vector<8xf32>
    %95 = vector.multi_reduction <maximumf>, %94, %cst_38 [1] : vector<8x8xf32> to vector<8xf32>
    %96 = vector.shape_cast %95 : vector<8xf32> to vector<8x1xf32>
    %97 = vector.broadcast %96 : vector<8x1xf32> to vector<8x8xf32>
    %98 = arith.subf %94, %97 : vector<8x8xf32>
    %99 = math.exp %98 : vector<8x8xf32>
    %cst_39 = arith.constant dense<0.000000e+00> : vector<8xf32>
    %100 = vector.multi_reduction <add>, %99, %cst_39 [1] : vector<8x8xf32> to vector<8xf32>
    %101 = vector.shape_cast %100 : vector<8xf32> to vector<8x1xf32>
    %cst_40 = arith.constant 9.99999971E-10 : f32
    %102 = vector.broadcast %cst_40 : f32 to vector<8x1xf32>
    %103 = arith.addf %101, %102 : vector<8x1xf32>
    %104 = vector.broadcast %103 : vector<8x1xf32> to vector<8x8xf32>
    %105 = arith.divf %99, %104 : vector<8x8xf32>
    %106 = arith.truncf %105 : vector<8x8xf32> to vector<8x8xbf16>
    %107 = vector.extract_strided_slice %21 {offsets = [0, 24], sizes = [8, 8], strides = [1, 1]} : vector<8x32xf32> to vector<8x8xf32>
    %108 = arith.truncf %107 : vector<8x8xf32> to vector<8x8xbf16>
    %cst_41 = arith.constant dense<0.000000e+00> : vector<8x8xf32>
    %109 = tpu.matmul %106, %108, %cst_41 {dimension_numbers = #tpu.dot_dimension_numbers<[1], [0], [0], [1], [0, 0, 1, 1], [], []>} : vector<8x8xbf16>, vector<8x8xbf16>, vector<8x8xf32> -> vector<8x8xf32>
    %110 = tpu.concatenate %43, %65, %87, %109 in 1 : vector<8x8xf32>, vector<8x8xf32>, vector<8x8xf32>, vector<8x8xf32> -> vector<8x32xf32>
    %111 = arith.truncf %110 : vector<8x32xf32> to vector<8x32xbf16>
    %cst_42 = arith.constant dense<0.000000e+00> : vector<8x32xf32>
    %112 = tpu.matmul %111, %12, %cst_42 {dimension_numbers = #tpu.dot_dimension_numbers<[1], [0], [0], [1], [0, 0, 1, 1], [], []>} : vector<8x32xbf16>, vector<32x32xbf16>, vector<8x32xf32> -> vector<8x32xf32>
    %113 = vector.broadcast %14 : vector<1x32xf32> to vector<8x32xf32>
    %114 = arith.addf %112, %113 : vector<8x32xf32>
    %115 = arith.addf %6, %114 : vector<8x32xf32>
    %c0_43 = arith.constant 0 : index
    %c0_44 = arith.constant 0 : index
    %c0_45 = arith.constant 0 : index
    %116 = vector.load %arg12[%c0_43, %c0_44, %c0_45] : memref<2x1x32xf32, #tpu.memory_space<vmem>>, vector<1x1x32xf32>
    %117 = vector.shape_cast %116 : vector<1x1x32xf32> to vector<1x32xf32>
    %c0_46 = arith.constant 0 : index
    %c0_47 = arith.constant 0 : index
    %c0_48 = arith.constant 0 : index
    %118 = vector.load %arg13[%c0_46, %c0_47, %c0_48] : memref<2x1x32xf32, #tpu.memory_space<vmem>>, vector<1x1x32xf32>
    %119 = vector.shape_cast %118 : vector<1x1x32xf32> to vector<1x32xf32>
    %cst_49 = arith.constant dense<0.000000e+00> : vector<8xf32>
    %120 = vector.multi_reduction <add>, %115, %cst_49 [1] : vector<8x32xf32> to vector<8xf32>
    %121 = vector.shape_cast %120 : vector<8xf32> to vector<8x1xf32>
    %cst_50 = arith.constant 3.200000e+01 : f32
    %122 = vector.broadcast %cst_50 : f32 to vector<8x1xf32>
    %123 = arith.divf %121, %122 : vector<8x1xf32>
    %124 = vector.broadcast %123 : vector<8x1xf32> to vector<8x32xf32>
    %125 = arith.subf %115, %124 : vector<8x32xf32>
    %126 = arith.mulf %125, %125 : vector<8x32xf32>
    %cst_51 = arith.constant dense<0.000000e+00> : vector<8xf32>
    %127 = vector.multi_reduction <add>, %126, %cst_51 [1] : vector<8x32xf32> to vector<8xf32>
    %128 = vector.shape_cast %127 : vector<8xf32> to vector<8x1xf32>
    %cst_52 = arith.constant 3.200000e+01 : f32
    %129 = vector.broadcast %cst_52 : f32 to vector<8x1xf32>
    %130 = arith.divf %128, %129 : vector<8x1xf32>
    %131 = vector.broadcast %123 : vector<8x1xf32> to vector<8x32xf32>
    %132 = arith.subf %115, %131 : vector<8x32xf32>
    %cst_53 = arith.constant 9.99999974E-6 : f32
    %133 = vector.broadcast %cst_53 : f32 to vector<8x1xf32>
    %134 = arith.addf %130, %133 : vector<8x1xf32>
    %135 = math.rsqrt %134 : vector<8x1xf32>
    %136 = vector.broadcast %135 : vector<8x1xf32> to vector<8x32xf32>
    %137 = arith.mulf %132, %136 : vector<8x32xf32>
    %138 = vector.broadcast %117 : vector<1x32xf32> to vector<8x32xf32>
    %139 = arith.mulf %137, %138 : vector<8x32xf32>
    %140 = vector.broadcast %119 : vector<1x32xf32> to vector<8x32xf32>
    %141 = arith.addf %139, %140 : vector<8x32xf32>
    %c0_54 = arith.constant 0 : index
    %c0_55 = arith.constant 0 : index
    %c0_56 = arith.constant 0 : index
    %142 = vector.load %arg8[%c0_54, %c0_55, %c0_56] : memref<2x32x64xbf16, #tpu.memory_space<vmem>>, vector<1x32x64xbf16>
    %143 = vector.shape_cast %142 : vector<1x32x64xbf16> to vector<32x64xbf16>
    %c0_57 = arith.constant 0 : index
    %c0_58 = arith.constant 0 : index
    %c0_59 = arith.constant 0 : index
    %144 = vector.load %arg9[%c0_57, %c0_58, %c0_59] : memref<2x1x64xf32, #tpu.memory_space<vmem>>, vector<1x1x64xf32>
    %145 = vector.shape_cast %144 : vector<1x1x64xf32> to vector<1x64xf32>
    %c0_60 = arith.constant 0 : index
    %c0_61 = arith.constant 0 : index
    %c0_62 = arith.constant 0 : index
    %146 = vector.load %arg10[%c0_60, %c0_61, %c0_62] : memref<2x64x32xbf16, #tpu.memory_space<vmem>>, vector<1x64x32xbf16>
    %147 = vector.shape_cast %146 : vector<1x64x32xbf16> to vector<64x32xbf16>
    %c0_63 = arith.constant 0 : index
    %c0_64 = arith.constant 0 : index
    %c0_65 = arith.constant 0 : index
    %148 = vector.load %arg11[%c0_63, %c0_64, %c0_65] : memref<2x1x32xf32, #tpu.memory_space<vmem>>, vector<1x1x32xf32>
    %149 = vector.shape_cast %148 : vector<1x1x32xf32> to vector<1x32xf32>
    %150 = arith.truncf %141 : vector<8x32xf32> to vector<8x32xbf16>
    %cst_66 = arith.constant dense<0.000000e+00> : vector<8x64xf32>
    %151 = tpu.matmul %150, %143, %cst_66 {dimension_numbers = #tpu.dot_dimension_numbers<[1], [0], [0], [1], [0, 0, 1, 1], [], []>} : vector<8x32xbf16>, vector<32x64xbf16>, vector<8x64xf32> -> vector<8x64xf32>
    %152 = vector.broadcast %145 : vector<1x64xf32> to vector<8x64xf32>
    %153 = arith.addf %151, %152 : vector<8x64xf32>
    %cst_67 = arith.constant 0.000000e+00 : f32
    %154 = vector.broadcast %cst_67 : f32 to vector<8x64xf32>
    %155 = arith.maximumf %153, %154 : vector<8x64xf32>
    %156 = arith.truncf %155 : vector<8x64xf32> to vector<8x64xbf16>
    %cst_68 = arith.constant dense<0.000000e+00> : vector<8x32xf32>
    %157 = tpu.matmul %156, %147, %cst_68 {dimension_numbers = #tpu.dot_dimension_numbers<[1], [0], [0], [1], [0, 0, 1, 1], [], []>} : vector<8x64xbf16>, vector<64x32xbf16>, vector<8x32xf32> -> vector<8x32xf32>
    %158 = vector.broadcast %149 : vector<1x32xf32> to vector<8x32xf32>
    %159 = arith.addf %157, %158 : vector<8x32xf32>
    %160 = arith.addf %141, %159 : vector<8x32xf32>
    %c0_69 = arith.constant 0 : index
    %c0_70 = arith.constant 0 : index
    %c0_71 = arith.constant 0 : index
    %161 = vector.load %arg14[%c0_69, %c0_70, %c0_71] : memref<2x1x32xf32, #tpu.memory_space<vmem>>, vector<1x1x32xf32>
    %162 = vector.shape_cast %161 : vector<1x1x32xf32> to vector<1x32xf32>
    %c0_72 = arith.constant 0 : index
    %c0_73 = arith.constant 0 : index
    %c0_74 = arith.constant 0 : index
    %163 = vector.load %arg15[%c0_72, %c0_73, %c0_74] : memref<2x1x32xf32, #tpu.memory_space<vmem>>, vector<1x1x32xf32>
    %164 = vector.shape_cast %163 : vector<1x1x32xf32> to vector<1x32xf32>
    %cst_75 = arith.constant dense<0.000000e+00> : vector<8xf32>
    %165 = vector.multi_reduction <add>, %160, %cst_75 [1] : vector<8x32xf32> to vector<8xf32>
    %166 = vector.shape_cast %165 : vector<8xf32> to vector<8x1xf32>
    %cst_76 = arith.constant 3.200000e+01 : f32
    %167 = vector.broadcast %cst_76 : f32 to vector<8x1xf32>
    %168 = arith.divf %166, %167 : vector<8x1xf32>
    %169 = vector.broadcast %168 : vector<8x1xf32> to vector<8x32xf32>
    %170 = arith.subf %160, %169 : vector<8x32xf32>
    %171 = arith.mulf %170, %170 : vector<8x32xf32>
    %cst_77 = arith.constant dense<0.000000e+00> : vector<8xf32>
    %172 = vector.multi_reduction <add>, %171, %cst_77 [1] : vector<8x32xf32> to vector<8xf32>
    %173 = vector.shape_cast %172 : vector<8xf32> to vector<8x1xf32>
    %cst_78 = arith.constant 3.200000e+01 : f32
    %174 = vector.broadcast %cst_78 : f32 to vector<8x1xf32>
    %175 = arith.divf %173, %174 : vector<8x1xf32>
    %176 = vector.broadcast %168 : vector<8x1xf32> to vector<8x32xf32>
    %177 = arith.subf %160, %176 : vector<8x32xf32>
    %cst_79 = arith.constant 9.99999974E-6 : f32
    %178 = vector.broadcast %cst_79 : f32 to vector<8x1xf32>
    %179 = arith.addf %175, %178 : vector<8x1xf32>
    %180 = math.rsqrt %179 : vector<8x1xf32>
    %181 = vector.broadcast %180 : vector<8x1xf32> to vector<8x32xf32>
    %182 = arith.mulf %177, %181 : vector<8x32xf32>
    %183 = vector.broadcast %162 : vector<1x32xf32> to vector<8x32xf32>
    %184 = arith.mulf %182, %183 : vector<8x32xf32>
    %185 = vector.broadcast %164 : vector<1x32xf32> to vector<8x32xf32>
    %186 = arith.addf %184, %185 : vector<8x32xf32>
    %c1 = arith.constant 1 : index
    %c0_80 = arith.constant 0 : index
    %c0_81 = arith.constant 0 : index
    %187 = vector.load %arg4[%c1, %c0_80, %c0_81] : memref<2x32x96xbf16, #tpu.memory_space<vmem>>, vector<1x32x96xbf16>
    %188 = vector.shape_cast %187 : vector<1x32x96xbf16> to vector<32x96xbf16>
    %c1_82 = arith.constant 1 : index
    %c0_83 = arith.constant 0 : index
    %c0_84 = arith.constant 0 : index
    %189 = vector.load %arg5[%c1_82, %c0_83, %c0_84] : memref<2x1x96xf32, #tpu.memory_space<vmem>>, vector<1x1x96xf32>
    %190 = vector.shape_cast %189 : vector<1x1x96xf32> to vector<1x96xf32>
    %c1_85 = arith.constant 1 : index
    %c0_86 = arith.constant 0 : index
    %c0_87 = arith.constant 0 : index
    %191 = vector.load %arg6[%c1_85, %c0_86, %c0_87] : memref<2x32x32xbf16, #tpu.memory_space<vmem>>, vector<1x32x32xbf16>
    %192 = vector.shape_cast %191 : vector<1x32x32xbf16> to vector<32x32xbf16>
    %c1_88 = arith.constant 1 : index
    %c0_89 = arith.constant 0 : index
    %c0_90 = arith.constant 0 : index
    %193 = vector.load %arg7[%c1_88, %c0_89, %c0_90] : memref<2x1x32xf32, #tpu.memory_space<vmem>>, vector<1x1x32xf32>
    %194 = vector.shape_cast %193 : vector<1x1x32xf32> to vector<1x32xf32>
    %195 = arith.truncf %186 : vector<8x32xf32> to vector<8x32xbf16>
    %cst_91 = arith.constant dense<0.000000e+00> : vector<8x96xf32>
    %196 = tpu.matmul %195, %188, %cst_91 {dimension_numbers = #tpu.dot_dimension_numbers<[1], [0], [0], [1], [0, 0, 1, 1], [], []>} : vector<8x32xbf16>, vector<32x96xbf16>, vector<8x96xf32> -> vector<8x96xf32>
    %197 = vector.broadcast %190 : vector<1x96xf32> to vector<8x96xf32>
    %198 = arith.addf %196, %197 : vector<8x96xf32>
    %199 = vector.extract_strided_slice %198 {offsets = [0, 0], sizes = [8, 32], strides = [1, 1]} : vector<8x96xf32> to vector<8x32xf32>
    %200 = vector.extract_strided_slice %198 {offsets = [0, 32], sizes = [8, 32], strides = [1, 1]} : vector<8x96xf32> to vector<8x32xf32>
    %201 = vector.extract_strided_slice %198 {offsets = [0, 64], sizes = [8, 32], strides = [1, 1]} : vector<8x96xf32> to vector<8x32xf32>
    %202 = vector.extract_strided_slice %199 {offsets = [0, 0], sizes = [8, 8], strides = [1, 1]} : vector<8x32xf32> to vector<8x8xf32>
    %203 = arith.truncf %202 : vector<8x8xf32> to vector<8x8xbf16>
    %204 = vector.extract_strided_slice %200 {offsets = [0, 0], sizes = [8, 8], strides = [1, 1]} : vector<8x32xf32> to vector<8x8xf32>
    %205 = arith.truncf %204 : vector<8x8xf32> to vector<8x8xbf16>
    %cst_92 = arith.constant dense<0.000000e+00> : vector<8x8xf32>
    %206 = tpu.matmul %203, %205, %cst_92 {dimension_numbers = #tpu.dot_dimension_numbers<[1], [1], [0], [0], [0, 0, 1, 0], [], []>} : vector<8x8xbf16>, vector<8x8xbf16>, vector<8x8xf32> -> vector<8x8xf32>
    %cst_93 = arith.constant 0.353553385 : f32
    %207 = vector.broadcast %cst_93 : f32 to vector<8x8xf32>
    %208 = arith.mulf %206, %207 : vector<8x8xf32>
    %cst_94 = arith.constant dense<0xFF800000> : vector<8xf32>
    %209 = vector.multi_reduction <maximumf>, %208, %cst_94 [1] : vector<8x8xf32> to vector<8xf32>
    %210 = vector.shape_cast %209 : vector<8xf32> to vector<8x1xf32>
    %211 = vector.broadcast %210 : vector<8x1xf32> to vector<8x8xf32>
    %212 = arith.subf %208, %211 : vector<8x8xf32>
    %213 = math.exp %212 : vector<8x8xf32>
    %cst_95 = arith.constant dense<0.000000e+00> : vector<8xf32>
    %214 = vector.multi_reduction <add>, %213, %cst_95 [1] : vector<8x8xf32> to vector<8xf32>
    %215 = vector.shape_cast %214 : vector<8xf32> to vector<8x1xf32>
    %cst_96 = arith.constant 9.99999971E-10 : f32
    %216 = vector.broadcast %cst_96 : f32 to vector<8x1xf32>
    %217 = arith.addf %215, %216 : vector<8x1xf32>
    %218 = vector.broadcast %217 : vector<8x1xf32> to vector<8x8xf32>
    %219 = arith.divf %213, %218 : vector<8x8xf32>
    %220 = arith.truncf %219 : vector<8x8xf32> to vector<8x8xbf16>
    %221 = vector.extract_strided_slice %201 {offsets = [0, 0], sizes = [8, 8], strides = [1, 1]} : vector<8x32xf32> to vector<8x8xf32>
    %222 = arith.truncf %221 : vector<8x8xf32> to vector<8x8xbf16>
    %cst_97 = arith.constant dense<0.000000e+00> : vector<8x8xf32>
    %223 = tpu.matmul %220, %222, %cst_97 {dimension_numbers = #tpu.dot_dimension_numbers<[1], [0], [0], [1], [0, 0, 1, 1], [], []>} : vector<8x8xbf16>, vector<8x8xbf16>, vector<8x8xf32> -> vector<8x8xf32>
    %224 = vector.extract_strided_slice %199 {offsets = [0, 8], sizes = [8, 8], strides = [1, 1]} : vector<8x32xf32> to vector<8x8xf32>
    %225 = arith.truncf %224 : vector<8x8xf32> to vector<8x8xbf16>
    %226 = vector.extract_strided_slice %200 {offsets = [0, 8], sizes = [8, 8], strides = [1, 1]} : vector<8x32xf32> to vector<8x8xf32>
    %227 = arith.truncf %226 : vector<8x8xf32> to vector<8x8xbf16>
    %cst_98 = arith.constant dense<0.000000e+00> : vector<8x8xf32>
    %228 = tpu.matmul %225, %227, %cst_98 {dimension_numbers = #tpu.dot_dimension_numbers<[1], [1], [0], [0], [0, 0, 1, 0], [], []>} : vector<8x8xbf16>, vector<8x8xbf16>, vector<8x8xf32> -> vector<8x8xf32>
    %cst_99 = arith.constant 0.353553385 : f32
    %229 = vector.broadcast %cst_99 : f32 to vector<8x8xf32>
    %230 = arith.mulf %228, %229 : vector<8x8xf32>
    %cst_100 = arith.constant dense<0xFF800000> : vector<8xf32>
    %231 = vector.multi_reduction <maximumf>, %230, %cst_100 [1] : vector<8x8xf32> to vector<8xf32>
    %232 = vector.shape_cast %231 : vector<8xf32> to vector<8x1xf32>
    %233 = vector.broadcast %232 : vector<8x1xf32> to vector<8x8xf32>
    %234 = arith.subf %230, %233 : vector<8x8xf32>
    %235 = math.exp %234 : vector<8x8xf32>
    %cst_101 = arith.constant dense<0.000000e+00> : vector<8xf32>
    %236 = vector.multi_reduction <add>, %235, %cst_101 [1] : vector<8x8xf32> to vector<8xf32>
    %237 = vector.shape_cast %236 : vector<8xf32> to vector<8x1xf32>
    %cst_102 = arith.constant 9.99999971E-10 : f32
    %238 = vector.broadcast %cst_102 : f32 to vector<8x1xf32>
    %239 = arith.addf %237, %238 : vector<8x1xf32>
    %240 = vector.broadcast %239 : vector<8x1xf32> to vector<8x8xf32>
    %241 = arith.divf %235, %240 : vector<8x8xf32>
    %242 = arith.truncf %241 : vector<8x8xf32> to vector<8x8xbf16>
    %243 = vector.extract_strided_slice %201 {offsets = [0, 8], sizes = [8, 8], strides = [1, 1]} : vector<8x32xf32> to vector<8x8xf32>
    %244 = arith.truncf %243 : vector<8x8xf32> to vector<8x8xbf16>
    %cst_103 = arith.constant dense<0.000000e+00> : vector<8x8xf32>
    %245 = tpu.matmul %242, %244, %cst_103 {dimension_numbers = #tpu.dot_dimension_numbers<[1], [0], [0], [1], [0, 0, 1, 1], [], []>} : vector<8x8xbf16>, vector<8x8xbf16>, vector<8x8xf32> -> vector<8x8xf32>
    %246 = vector.extract_strided_slice %199 {offsets = [0, 16], sizes = [8, 8], strides = [1, 1]} : vector<8x32xf32> to vector<8x8xf32>
    %247 = arith.truncf %246 : vector<8x8xf32> to vector<8x8xbf16>
    %248 = vector.extract_strided_slice %200 {offsets = [0, 16], sizes = [8, 8], strides = [1, 1]} : vector<8x32xf32> to vector<8x8xf32>
    %249 = arith.truncf %248 : vector<8x8xf32> to vector<8x8xbf16>
    %cst_104 = arith.constant dense<0.000000e+00> : vector<8x8xf32>
    %250 = tpu.matmul %247, %249, %cst_104 {dimension_numbers = #tpu.dot_dimension_numbers<[1], [1], [0], [0], [0, 0, 1, 0], [], []>} : vector<8x8xbf16>, vector<8x8xbf16>, vector<8x8xf32> -> vector<8x8xf32>
    %cst_105 = arith.constant 0.353553385 : f32
    %251 = vector.broadcast %cst_105 : f32 to vector<8x8xf32>
    %252 = arith.mulf %250, %251 : vector<8x8xf32>
    %cst_106 = arith.constant dense<0xFF800000> : vector<8xf32>
    %253 = vector.multi_reduction <maximumf>, %252, %cst_106 [1] : vector<8x8xf32> to vector<8xf32>
    %254 = vector.shape_cast %253 : vector<8xf32> to vector<8x1xf32>
    %255 = vector.broadcast %254 : vector<8x1xf32> to vector<8x8xf32>
    %256 = arith.subf %252, %255 : vector<8x8xf32>
    %257 = math.exp %256 : vector<8x8xf32>
    %cst_107 = arith.constant dense<0.000000e+00> : vector<8xf32>
    %258 = vector.multi_reduction <add>, %257, %cst_107 [1] : vector<8x8xf32> to vector<8xf32>
    %259 = vector.shape_cast %258 : vector<8xf32> to vector<8x1xf32>
    %cst_108 = arith.constant 9.99999971E-10 : f32
    %260 = vector.broadcast %cst_108 : f32 to vector<8x1xf32>
    %261 = arith.addf %259, %260 : vector<8x1xf32>
    %262 = vector.broadcast %261 : vector<8x1xf32> to vector<8x8xf32>
    %263 = arith.divf %257, %262 : vector<8x8xf32>
    %264 = arith.truncf %263 : vector<8x8xf32> to vector<8x8xbf16>
    %265 = vector.extract_strided_slice %201 {offsets = [0, 16], sizes = [8, 8], strides = [1, 1]} : vector<8x32xf32> to vector<8x8xf32>
    %266 = arith.truncf %265 : vector<8x8xf32> to vector<8x8xbf16>
    %cst_109 = arith.constant dense<0.000000e+00> : vector<8x8xf32>
    %267 = tpu.matmul %264, %266, %cst_109 {dimension_numbers = #tpu.dot_dimension_numbers<[1], [0], [0], [1], [0, 0, 1, 1], [], []>} : vector<8x8xbf16>, vector<8x8xbf16>, vector<8x8xf32> -> vector<8x8xf32>
    %268 = vector.extract_strided_slice %199 {offsets = [0, 24], sizes = [8, 8], strides = [1, 1]} : vector<8x32xf32> to vector<8x8xf32>
    %269 = arith.truncf %268 : vector<8x8xf32> to vector<8x8xbf16>
    %270 = vector.extract_strided_slice %200 {offsets = [0, 24], sizes = [8, 8], strides = [1, 1]} : vector<8x32xf32> to vector<8x8xf32>
    %271 = arith.truncf %270 : vector<8x8xf32> to vector<8x8xbf16>
    %cst_110 = arith.constant dense<0.000000e+00> : vector<8x8xf32>
    %272 = tpu.matmul %269, %271, %cst_110 {dimension_numbers = #tpu.dot_dimension_numbers<[1], [1], [0], [0], [0, 0, 1, 0], [], []>} : vector<8x8xbf16>, vector<8x8xbf16>, vector<8x8xf32> -> vector<8x8xf32>
    %cst_111 = arith.constant 0.353553385 : f32
    %273 = vector.broadcast %cst_111 : f32 to vector<8x8xf32>
    %274 = arith.mulf %272, %273 : vector<8x8xf32>
    %cst_112 = arith.constant dense<0xFF800000> : vector<8xf32>
    %275 = vector.multi_reduction <maximumf>, %274, %cst_112 [1] : vector<8x8xf32> to vector<8xf32>
    %276 = vector.shape_cast %275 : vector<8xf32> to vector<8x1xf32>
    %277 = vector.broadcast %276 : vector<8x1xf32> to vector<8x8xf32>
    %278 = arith.subf %274, %277 : vector<8x8xf32>
    %279 = math.exp %278 : vector<8x8xf32>
    %cst_113 = arith.constant dense<0.000000e+00> : vector<8xf32>
    %280 = vector.multi_reduction <add>, %279, %cst_113 [1] : vector<8x8xf32> to vector<8xf32>
    %281 = vector.shape_cast %280 : vector<8xf32> to vector<8x1xf32>
    %cst_114 = arith.constant 9.99999971E-10 : f32
    %282 = vector.broadcast %cst_114 : f32 to vector<8x1xf32>
    %283 = arith.addf %281, %282 : vector<8x1xf32>
    %284 = vector.broadcast %283 : vector<8x1xf32> to vector<8x8xf32>
    %285 = arith.divf %279, %284 : vector<8x8xf32>
    %286 = arith.truncf %285 : vector<8x8xf32> to vector<8x8xbf16>
    %287 = vector.extract_strided_slice %201 {offsets = [0, 24], sizes = [8, 8], strides = [1, 1]} : vector<8x32xf32> to vector<8x8xf32>
    %288 = arith.truncf %287 : vector<8x8xf32> to vector<8x8xbf16>
    %cst_115 = arith.constant dense<0.000000e+00> : vector<8x8xf32>
    %289 = tpu.matmul %286, %288, %cst_115 {dimension_numbers = #tpu.dot_dimension_numbers<[1], [0], [0], [1], [0, 0, 1, 1], [], []>} : vector<8x8xbf16>, vector<8x8xbf16>, vector<8x8xf32> -> vector<8x8xf32>
    %290 = tpu.concatenate %223, %245, %267, %289 in 1 : vector<8x8xf32>, vector<8x8xf32>, vector<8x8xf32>, vector<8x8xf32> -> vector<8x32xf32>
    %291 = arith.truncf %290 : vector<8x32xf32> to vector<8x32xbf16>
    %cst_116 = arith.constant dense<0.000000e+00> : vector<8x32xf32>
    %292 = tpu.matmul %291, %192, %cst_116 {dimension_numbers = #tpu.dot_dimension_numbers<[1], [0], [0], [1], [0, 0, 1, 1], [], []>} : vector<8x32xbf16>, vector<32x32xbf16>, vector<8x32xf32> -> vector<8x32xf32>
    %293 = vector.broadcast %194 : vector<1x32xf32> to vector<8x32xf32>
    %294 = arith.addf %292, %293 : vector<8x32xf32>
    %295 = arith.addf %186, %294 : vector<8x32xf32>
    %c1_117 = arith.constant 1 : index
    %c0_118 = arith.constant 0 : index
    %c0_119 = arith.constant 0 : index
    %296 = vector.load %arg12[%c1_117, %c0_118, %c0_119] : memref<2x1x32xf32, #tpu.memory_space<vmem>>, vector<1x1x32xf32>
    %297 = vector.shape_cast %296 : vector<1x1x32xf32> to vector<1x32xf32>
    %c1_120 = arith.constant 1 : index
    %c0_121 = arith.constant 0 : index
    %c0_122 = arith.constant 0 : index
    %298 = vector.load %arg13[%c1_120, %c0_121, %c0_122] : memref<2x1x32xf32, #tpu.memory_space<vmem>>, vector<1x1x32xf32>
    %299 = vector.shape_cast %298 : vector<1x1x32xf32> to vector<1x32xf32>
    %cst_123 = arith.constant dense<0.000000e+00> : vector<8xf32>
    %300 = vector.multi_reduction <add>, %295, %cst_123 [1] : vector<8x32xf32> to vector<8xf32>
    %301 = vector.shape_cast %300 : vector<8xf32> to vector<8x1xf32>
    %cst_124 = arith.constant 3.200000e+01 : f32
    %302 = vector.broadcast %cst_124 : f32 to vector<8x1xf32>
    %303 = arith.divf %301, %302 : vector<8x1xf32>
    %304 = vector.broadcast %303 : vector<8x1xf32> to vector<8x32xf32>
    %305 = arith.subf %295, %304 : vector<8x32xf32>
    %306 = arith.mulf %305, %305 : vector<8x32xf32>
    %cst_125 = arith.constant dense<0.000000e+00> : vector<8xf32>
    %307 = vector.multi_reduction <add>, %306, %cst_125 [1] : vector<8x32xf32> to vector<8xf32>
    %308 = vector.shape_cast %307 : vector<8xf32> to vector<8x1xf32>
    %cst_126 = arith.constant 3.200000e+01 : f32
    %309 = vector.broadcast %cst_126 : f32 to vector<8x1xf32>
    %310 = arith.divf %308, %309 : vector<8x1xf32>
    %311 = vector.broadcast %303 : vector<8x1xf32> to vector<8x32xf32>
    %312 = arith.subf %295, %311 : vector<8x32xf32>
    %cst_127 = arith.constant 9.99999974E-6 : f32
    %313 = vector.broadcast %cst_127 : f32 to vector<8x1xf32>
    %314 = arith.addf %310, %313 : vector<8x1xf32>
    %315 = math.rsqrt %314 : vector<8x1xf32>
    %316 = vector.broadcast %315 : vector<8x1xf32> to vector<8x32xf32>
    %317 = arith.mulf %312, %316 : vector<8x32xf32>
    %318 = vector.broadcast %297 : vector<1x32xf32> to vector<8x32xf32>
    %319 = arith.mulf %317, %318 : vector<8x32xf32>
    %320 = vector.broadcast %299 : vector<1x32xf32> to vector<8x32xf32>
    %321 = arith.addf %319, %320 : vector<8x32xf32>
    %c1_128 = arith.constant 1 : index
    %c0_129 = arith.constant 0 : index
    %c0_130 = arith.constant 0 : index
    %322 = vector.load %arg8[%c1_128, %c0_129, %c0_130] : memref<2x32x64xbf16, #tpu.memory_space<vmem>>, vector<1x32x64xbf16>
    %323 = vector.shape_cast %322 : vector<1x32x64xbf16> to vector<32x64xbf16>
    %c1_131 = arith.constant 1 : index
    %c0_132 = arith.constant 0 : index
    %c0_133 = arith.constant 0 : index
    %324 = vector.load %arg9[%c1_131, %c0_132, %c0_133] : memref<2x1x64xf32, #tpu.memory_space<vmem>>, vector<1x1x64xf32>
    %325 = vector.shape_cast %324 : vector<1x1x64xf32> to vector<1x64xf32>
    %c1_134 = arith.constant 1 : index
    %c0_135 = arith.constant 0 : index
    %c0_136 = arith.constant 0 : index
    %326 = vector.load %arg10[%c1_134, %c0_135, %c0_136] : memref<2x64x32xbf16, #tpu.memory_space<vmem>>, vector<1x64x32xbf16>
    %327 = vector.shape_cast %326 : vector<1x64x32xbf16> to vector<64x32xbf16>
    %c1_137 = arith.constant 1 : index
    %c0_138 = arith.constant 0 : index
    %c0_139 = arith.constant 0 : index
    %328 = vector.load %arg11[%c1_137, %c0_138, %c0_139] : memref<2x1x32xf32, #tpu.memory_space<vmem>>, vector<1x1x32xf32>
    %329 = vector.shape_cast %328 : vector<1x1x32xf32> to vector<1x32xf32>
    %330 = arith.truncf %321 : vector<8x32xf32> to vector<8x32xbf16>
    %cst_140 = arith.constant dense<0.000000e+00> : vector<8x64xf32>
    %331 = tpu.matmul %330, %323, %cst_140 {dimension_numbers = #tpu.dot_dimension_numbers<[1], [0], [0], [1], [0, 0, 1, 1], [], []>} : vector<8x32xbf16>, vector<32x64xbf16>, vector<8x64xf32> -> vector<8x64xf32>
    %332 = vector.broadcast %325 : vector<1x64xf32> to vector<8x64xf32>
    %333 = arith.addf %331, %332 : vector<8x64xf32>
    %cst_141 = arith.constant 0.000000e+00 : f32
    %334 = vector.broadcast %cst_141 : f32 to vector<8x64xf32>
    %335 = arith.maximumf %333, %334 : vector<8x64xf32>
    %336 = arith.truncf %335 : vector<8x64xf32> to vector<8x64xbf16>
    %cst_142 = arith.constant dense<0.000000e+00> : vector<8x32xf32>
    %337 = tpu.matmul %336, %327, %cst_142 {dimension_numbers = #tpu.dot_dimension_numbers<[1], [0], [0], [1], [0, 0, 1, 1], [], []>} : vector<8x64xbf16>, vector<64x32xbf16>, vector<8x32xf32> -> vector<8x32xf32>
    %338 = vector.broadcast %329 : vector<1x32xf32> to vector<8x32xf32>
    %339 = arith.addf %337, %338 : vector<8x32xf32>
    %340 = arith.addf %321, %339 : vector<8x32xf32>
    %c1_143 = arith.constant 1 : index
    %c0_144 = arith.constant 0 : index
    %c0_145 = arith.constant 0 : index
    %341 = vector.load %arg14[%c1_143, %c0_144, %c0_145] : memref<2x1x32xf32, #tpu.memory_space<vmem>>, vector<1x1x32xf32>
    %342 = vector.shape_cast %341 : vector<1x1x32xf32> to vector<1x32xf32>
    %c1_146 = arith.constant 1 : index
    %c0_147 = arith.constant 0 : index
    %c0_148 = arith.constant 0 : index
    %343 = vector.load %arg15[%c1_146, %c0_147, %c0_148] : memref<2x1x32xf32, #tpu.memory_space<vmem>>, vector<1x1x32xf32>
    %344 = vector.shape_cast %343 : vector<1x1x32xf32> to vector<1x32xf32>
    %cst_149 = arith.constant dense<0.000000e+00> : vector<8xf32>
    %345 = vector.multi_reduction <add>, %340, %cst_149 [1] : vector<8x32xf32> to vector<8xf32>
    %346 = vector.shape_cast %345 : vector<8xf32> to vector<8x1xf32>
    %cst_150 = arith.constant 3.200000e+01 : f32
    %347 = vector.broadcast %cst_150 : f32 to vector<8x1xf32>
    %348 = arith.divf %346, %347 : vector<8x1xf32>
    %349 = vector.broadcast %348 : vector<8x1xf32> to vector<8x32xf32>
    %350 = arith.subf %340, %349 : vector<8x32xf32>
    %351 = arith.mulf %350, %350 : vector<8x32xf32>
    %cst_151 = arith.constant dense<0.000000e+00> : vector<8xf32>
    %352 = vector.multi_reduction <add>, %351, %cst_151 [1] : vector<8x32xf32> to vector<8xf32>
    %353 = vector.shape_cast %352 : vector<8xf32> to vector<8x1xf32>
    %cst_152 = arith.constant 3.200000e+01 : f32
    %354 = vector.broadcast %cst_152 : f32 to vector<8x1xf32>
    %355 = arith.divf %353, %354 : vector<8x1xf32>
    %356 = vector.broadcast %348 : vector<8x1xf32> to vector<8x32xf32>
    %357 = arith.subf %340, %356 : vector<8x32xf32>
    %cst_153 = arith.constant 9.99999974E-6 : f32
    %358 = vector.broadcast %cst_153 : f32 to vector<8x1xf32>
    %359 = arith.addf %355, %358 : vector<8x1xf32>
    %360 = math.rsqrt %359 : vector<8x1xf32>
    %361 = vector.broadcast %360 : vector<8x1xf32> to vector<8x32xf32>
    %362 = arith.mulf %357, %361 : vector<8x32xf32>
    %363 = vector.broadcast %342 : vector<1x32xf32> to vector<8x32xf32>
    %364 = arith.mulf %362, %363 : vector<8x32xf32>
    %365 = vector.broadcast %344 : vector<1x32xf32> to vector<8x32xf32>
    %366 = arith.addf %364, %365 : vector<8x32xf32>
    %c0_154 = arith.constant 0 : index
    %c0_155 = arith.constant 0 : index
    %c0_156 = arith.constant 0 : index
    %367 = vector.load %arg2[%c0_154, %c0_155, %c0_156] : memref<1x8x32xf32, #tpu.memory_space<vmem>>, vector<1x8x32xf32>
    %cst_157 = arith.constant 5.65685415 : f32
    %368 = vector.broadcast %cst_157 : f32 to vector<1x8x32xf32>
    %369 = arith.mulf %367, %368 : vector<1x8x32xf32>
    %370 = vector.broadcast %0 : vector<1x1x32xf32> to vector<1x8x32xf32>
    %371 = arith.addf %369, %370 : vector<1x8x32xf32>
    %372 = vector.shape_cast %371 : vector<1x8x32xf32> to vector<8x32xf32>
    %c0_158 = arith.constant 0 : index
    %c0_159 = arith.constant 0 : index
    %c0_160 = arith.constant 0 : index
    %373 = vector.load %arg16[%c0_158, %c0_159, %c0_160] : memref<2x32x96xbf16, #tpu.memory_space<vmem>>, vector<1x32x96xbf16>
    %374 = vector.shape_cast %373 : vector<1x32x96xbf16> to vector<32x96xbf16>
    %c0_161 = arith.constant 0 : index
    %c0_162 = arith.constant 0 : index
    %c0_163 = arith.constant 0 : index
    %375 = vector.load %arg17[%c0_161, %c0_162, %c0_163] : memref<2x1x96xf32, #tpu.memory_space<vmem>>, vector<1x1x96xf32>
    %376 = vector.shape_cast %375 : vector<1x1x96xf32> to vector<1x96xf32>
    %c0_164 = arith.constant 0 : index
    %c0_165 = arith.constant 0 : index
    %c0_166 = arith.constant 0 : index
    %377 = vector.load %arg18[%c0_164, %c0_165, %c0_166] : memref<2x32x32xbf16, #tpu.memory_space<vmem>>, vector<1x32x32xbf16>
    %378 = vector.shape_cast %377 : vector<1x32x32xbf16> to vector<32x32xbf16>
    %c0_167 = arith.constant 0 : index
    %c0_168 = arith.constant 0 : index
    %c0_169 = arith.constant 0 : index
    %379 = vector.load %arg19[%c0_167, %c0_168, %c0_169] : memref<2x1x32xf32, #tpu.memory_space<vmem>>, vector<1x1x32xf32>
    %380 = vector.shape_cast %379 : vector<1x1x32xf32> to vector<1x32xf32>
    %381 = arith.truncf %372 : vector<8x32xf32> to vector<8x32xbf16>
    %cst_170 = arith.constant dense<0.000000e+00> : vector<8x96xf32>
    %382 = tpu.matmul %381, %374, %cst_170 {dimension_numbers = #tpu.dot_dimension_numbers<[1], [0], [0], [1], [0, 0, 1, 1], [], []>} : vector<8x32xbf16>, vector<32x96xbf16>, vector<8x96xf32> -> vector<8x96xf32>
    %383 = vector.broadcast %376 : vector<1x96xf32> to vector<8x96xf32>
    %384 = arith.addf %382, %383 : vector<8x96xf32>
    %385 = vector.extract_strided_slice %384 {offsets = [0, 0], sizes = [8, 32], strides = [1, 1]} : vector<8x96xf32> to vector<8x32xf32>
    %386 = vector.extract_strided_slice %384 {offsets = [0, 32], sizes = [8, 32], strides = [1, 1]} : vector<8x96xf32> to vector<8x32xf32>
    %387 = vector.extract_strided_slice %384 {offsets = [0, 64], sizes = [8, 32], strides = [1, 1]} : vector<8x96xf32> to vector<8x32xf32>
    %388 = vector.extract_strided_slice %385 {offsets = [0, 0], sizes = [8, 8], strides = [1, 1]} : vector<8x32xf32> to vector<8x8xf32>
    %389 = arith.truncf %388 : vector<8x8xf32> to vector<8x8xbf16>
    %390 = vector.extract_strided_slice %386 {offsets = [0, 0], sizes = [8, 8], strides = [1, 1]} : vector<8x32xf32> to vector<8x8xf32>
    %391 = arith.truncf %390 : vector<8x8xf32> to vector<8x8xbf16>
    %cst_171 = arith.constant dense<0.000000e+00> : vector<8x8xf32>
    %392 = tpu.matmul %389, %391, %cst_171 {dimension_numbers = #tpu.dot_dimension_numbers<[1], [1], [0], [0], [0, 0, 1, 0], [], []>} : vector<8x8xbf16>, vector<8x8xbf16>, vector<8x8xf32> -> vector<8x8xf32>
    %cst_172 = arith.constant 0.353553385 : f32
    %393 = vector.broadcast %cst_172 : f32 to vector<8x8xf32>
    %394 = arith.mulf %392, %393 : vector<8x8xf32>
    %cst_173 = arith.constant dense<0xFF800000> : vector<8xf32>
    %395 = vector.multi_reduction <maximumf>, %394, %cst_173 [1] : vector<8x8xf32> to vector<8xf32>
    %396 = vector.shape_cast %395 : vector<8xf32> to vector<8x1xf32>
    %397 = vector.broadcast %396 : vector<8x1xf32> to vector<8x8xf32>
    %398 = arith.subf %394, %397 : vector<8x8xf32>
    %399 = math.exp %398 : vector<8x8xf32>
    %cst_174 = arith.constant dense<0.000000e+00> : vector<8xf32>
    %400 = vector.multi_reduction <add>, %399, %cst_174 [1] : vector<8x8xf32> to vector<8xf32>
    %401 = vector.shape_cast %400 : vector<8xf32> to vector<8x1xf32>
    %cst_175 = arith.constant 9.99999971E-10 : f32
    %402 = vector.broadcast %cst_175 : f32 to vector<8x1xf32>
    %403 = arith.addf %401, %402 : vector<8x1xf32>
    %404 = vector.broadcast %403 : vector<8x1xf32> to vector<8x8xf32>
    %405 = arith.divf %399, %404 : vector<8x8xf32>
    %406 = arith.truncf %405 : vector<8x8xf32> to vector<8x8xbf16>
    %407 = vector.extract_strided_slice %387 {offsets = [0, 0], sizes = [8, 8], strides = [1, 1]} : vector<8x32xf32> to vector<8x8xf32>
    %408 = arith.truncf %407 : vector<8x8xf32> to vector<8x8xbf16>
    %cst_176 = arith.constant dense<0.000000e+00> : vector<8x8xf32>
    %409 = tpu.matmul %406, %408, %cst_176 {dimension_numbers = #tpu.dot_dimension_numbers<[1], [0], [0], [1], [0, 0, 1, 1], [], []>} : vector<8x8xbf16>, vector<8x8xbf16>, vector<8x8xf32> -> vector<8x8xf32>
    %410 = vector.extract_strided_slice %385 {offsets = [0, 8], sizes = [8, 8], strides = [1, 1]} : vector<8x32xf32> to vector<8x8xf32>
    %411 = arith.truncf %410 : vector<8x8xf32> to vector<8x8xbf16>
    %412 = vector.extract_strided_slice %386 {offsets = [0, 8], sizes = [8, 8], strides = [1, 1]} : vector<8x32xf32> to vector<8x8xf32>
    %413 = arith.truncf %412 : vector<8x8xf32> to vector<8x8xbf16>
    %cst_177 = arith.constant dense<0.000000e+00> : vector<8x8xf32>
    %414 = tpu.matmul %411, %413, %cst_177 {dimension_numbers = #tpu.dot_dimension_numbers<[1], [1], [0], [0], [0, 0, 1, 0], [], []>} : vector<8x8xbf16>, vector<8x8xbf16>, vector<8x8xf32> -> vector<8x8xf32>
    %cst_178 = arith.constant 0.353553385 : f32
    %415 = vector.broadcast %cst_178 : f32 to vector<8x8xf32>
    %416 = arith.mulf %414, %415 : vector<8x8xf32>
    %cst_179 = arith.constant dense<0xFF800000> : vector<8xf32>
    %417 = vector.multi_reduction <maximumf>, %416, %cst_179 [1] : vector<8x8xf32> to vector<8xf32>
    %418 = vector.shape_cast %417 : vector<8xf32> to vector<8x1xf32>
    %419 = vector.broadcast %418 : vector<8x1xf32> to vector<8x8xf32>
    %420 = arith.subf %416, %419 : vector<8x8xf32>
    %421 = math.exp %420 : vector<8x8xf32>
    %cst_180 = arith.constant dense<0.000000e+00> : vector<8xf32>
    %422 = vector.multi_reduction <add>, %421, %cst_180 [1] : vector<8x8xf32> to vector<8xf32>
    %423 = vector.shape_cast %422 : vector<8xf32> to vector<8x1xf32>
    %cst_181 = arith.constant 9.99999971E-10 : f32
    %424 = vector.broadcast %cst_181 : f32 to vector<8x1xf32>
    %425 = arith.addf %423, %424 : vector<8x1xf32>
    %426 = vector.broadcast %425 : vector<8x1xf32> to vector<8x8xf32>
    %427 = arith.divf %421, %426 : vector<8x8xf32>
    %428 = arith.truncf %427 : vector<8x8xf32> to vector<8x8xbf16>
    %429 = vector.extract_strided_slice %387 {offsets = [0, 8], sizes = [8, 8], strides = [1, 1]} : vector<8x32xf32> to vector<8x8xf32>
    %430 = arith.truncf %429 : vector<8x8xf32> to vector<8x8xbf16>
    %cst_182 = arith.constant dense<0.000000e+00> : vector<8x8xf32>
    %431 = tpu.matmul %428, %430, %cst_182 {dimension_numbers = #tpu.dot_dimension_numbers<[1], [0], [0], [1], [0, 0, 1, 1], [], []>} : vector<8x8xbf16>, vector<8x8xbf16>, vector<8x8xf32> -> vector<8x8xf32>
    %432 = vector.extract_strided_slice %385 {offsets = [0, 16], sizes = [8, 8], strides = [1, 1]} : vector<8x32xf32> to vector<8x8xf32>
    %433 = arith.truncf %432 : vector<8x8xf32> to vector<8x8xbf16>
    %434 = vector.extract_strided_slice %386 {offsets = [0, 16], sizes = [8, 8], strides = [1, 1]} : vector<8x32xf32> to vector<8x8xf32>
    %435 = arith.truncf %434 : vector<8x8xf32> to vector<8x8xbf16>
    %cst_183 = arith.constant dense<0.000000e+00> : vector<8x8xf32>
    %436 = tpu.matmul %433, %435, %cst_183 {dimension_numbers = #tpu.dot_dimension_numbers<[1], [1], [0], [0], [0, 0, 1, 0], [], []>} : vector<8x8xbf16>, vector<8x8xbf16>, vector<8x8xf32> -> vector<8x8xf32>
    %cst_184 = arith.constant 0.353553385 : f32
    %437 = vector.broadcast %cst_184 : f32 to vector<8x8xf32>
    %438 = arith.mulf %436, %437 : vector<8x8xf32>
    %cst_185 = arith.constant dense<0xFF800000> : vector<8xf32>
    %439 = vector.multi_reduction <maximumf>, %438, %cst_185 [1] : vector<8x8xf32> to vector<8xf32>
    %440 = vector.shape_cast %439 : vector<8xf32> to vector<8x1xf32>
    %441 = vector.broadcast %440 : vector<8x1xf32> to vector<8x8xf32>
    %442 = arith.subf %438, %441 : vector<8x8xf32>
    %443 = math.exp %442 : vector<8x8xf32>
    %cst_186 = arith.constant dense<0.000000e+00> : vector<8xf32>
    %444 = vector.multi_reduction <add>, %443, %cst_186 [1] : vector<8x8xf32> to vector<8xf32>
    %445 = vector.shape_cast %444 : vector<8xf32> to vector<8x1xf32>
    %cst_187 = arith.constant 9.99999971E-10 : f32
    %446 = vector.broadcast %cst_187 : f32 to vector<8x1xf32>
    %447 = arith.addf %445, %446 : vector<8x1xf32>
    %448 = vector.broadcast %447 : vector<8x1xf32> to vector<8x8xf32>
    %449 = arith.divf %443, %448 : vector<8x8xf32>
    %450 = arith.truncf %449 : vector<8x8xf32> to vector<8x8xbf16>
    %451 = vector.extract_strided_slice %387 {offsets = [0, 16], sizes = [8, 8], strides = [1, 1]} : vector<8x32xf32> to vector<8x8xf32>
    %452 = arith.truncf %451 : vector<8x8xf32> to vector<8x8xbf16>
    %cst_188 = arith.constant dense<0.000000e+00> : vector<8x8xf32>
    %453 = tpu.matmul %450, %452, %cst_188 {dimension_numbers = #tpu.dot_dimension_numbers<[1], [0], [0], [1], [0, 0, 1, 1], [], []>} : vector<8x8xbf16>, vector<8x8xbf16>, vector<8x8xf32> -> vector<8x8xf32>
    %454 = vector.extract_strided_slice %385 {offsets = [0, 24], sizes = [8, 8], strides = [1, 1]} : vector<8x32xf32> to vector<8x8xf32>
    %455 = arith.truncf %454 : vector<8x8xf32> to vector<8x8xbf16>
    %456 = vector.extract_strided_slice %386 {offsets = [0, 24], sizes = [8, 8], strides = [1, 1]} : vector<8x32xf32> to vector<8x8xf32>
    %457 = arith.truncf %456 : vector<8x8xf32> to vector<8x8xbf16>
    %cst_189 = arith.constant dense<0.000000e+00> : vector<8x8xf32>
    %458 = tpu.matmul %455, %457, %cst_189 {dimension_numbers = #tpu.dot_dimension_numbers<[1], [1], [0], [0], [0, 0, 1, 0], [], []>} : vector<8x8xbf16>, vector<8x8xbf16>, vector<8x8xf32> -> vector<8x8xf32>
    %cst_190 = arith.constant 0.353553385 : f32
    %459 = vector.broadcast %cst_190 : f32 to vector<8x8xf32>
    %460 = arith.mulf %458, %459 : vector<8x8xf32>
    %cst_191 = arith.constant dense<0xFF800000> : vector<8xf32>
    %461 = vector.multi_reduction <maximumf>, %460, %cst_191 [1] : vector<8x8xf32> to vector<8xf32>
    %462 = vector.shape_cast %461 : vector<8xf32> to vector<8x1xf32>
    %463 = vector.broadcast %462 : vector<8x1xf32> to vector<8x8xf32>
    %464 = arith.subf %460, %463 : vector<8x8xf32>
    %465 = math.exp %464 : vector<8x8xf32>
    %cst_192 = arith.constant dense<0.000000e+00> : vector<8xf32>
    %466 = vector.multi_reduction <add>, %465, %cst_192 [1] : vector<8x8xf32> to vector<8xf32>
    %467 = vector.shape_cast %466 : vector<8xf32> to vector<8x1xf32>
    %cst_193 = arith.constant 9.99999971E-10 : f32
    %468 = vector.broadcast %cst_193 : f32 to vector<8x1xf32>
    %469 = arith.addf %467, %468 : vector<8x1xf32>
    %470 = vector.broadcast %469 : vector<8x1xf32> to vector<8x8xf32>
    %471 = arith.divf %465, %470 : vector<8x8xf32>
    %472 = arith.truncf %471 : vector<8x8xf32> to vector<8x8xbf16>
    %473 = vector.extract_strided_slice %387 {offsets = [0, 24], sizes = [8, 8], strides = [1, 1]} : vector<8x32xf32> to vector<8x8xf32>
    %474 = arith.truncf %473 : vector<8x8xf32> to vector<8x8xbf16>
    %cst_194 = arith.constant dense<0.000000e+00> : vector<8x8xf32>
    %475 = tpu.matmul %472, %474, %cst_194 {dimension_numbers = #tpu.dot_dimension_numbers<[1], [0], [0], [1], [0, 0, 1, 1], [], []>} : vector<8x8xbf16>, vector<8x8xbf16>, vector<8x8xf32> -> vector<8x8xf32>
    %476 = tpu.concatenate %409, %431, %453, %475 in 1 : vector<8x8xf32>, vector<8x8xf32>, vector<8x8xf32>, vector<8x8xf32> -> vector<8x32xf32>
    %477 = arith.truncf %476 : vector<8x32xf32> to vector<8x32xbf16>
    %cst_195 = arith.constant dense<0.000000e+00> : vector<8x32xf32>
    %478 = tpu.matmul %477, %378, %cst_195 {dimension_numbers = #tpu.dot_dimension_numbers<[1], [0], [0], [1], [0, 0, 1, 1], [], []>} : vector<8x32xbf16>, vector<32x32xbf16>, vector<8x32xf32> -> vector<8x32xf32>
    %479 = vector.broadcast %380 : vector<1x32xf32> to vector<8x32xf32>
    %480 = arith.addf %478, %479 : vector<8x32xf32>
    %481 = arith.addf %372, %480 : vector<8x32xf32>
    %c0_196 = arith.constant 0 : index
    %c0_197 = arith.constant 0 : index
    %c0_198 = arith.constant 0 : index
    %482 = vector.load %arg30[%c0_196, %c0_197, %c0_198] : memref<2x1x32xf32, #tpu.memory_space<vmem>>, vector<1x1x32xf32>
    %483 = vector.shape_cast %482 : vector<1x1x32xf32> to vector<1x32xf32>
    %c0_199 = arith.constant 0 : index
    %c0_200 = arith.constant 0 : index
    %c0_201 = arith.constant 0 : index
    %484 = vector.load %arg31[%c0_199, %c0_200, %c0_201] : memref<2x1x32xf32, #tpu.memory_space<vmem>>, vector<1x1x32xf32>
    %485 = vector.shape_cast %484 : vector<1x1x32xf32> to vector<1x32xf32>
    %cst_202 = arith.constant dense<0.000000e+00> : vector<8xf32>
    %486 = vector.multi_reduction <add>, %481, %cst_202 [1] : vector<8x32xf32> to vector<8xf32>
    %487 = vector.shape_cast %486 : vector<8xf32> to vector<8x1xf32>
    %cst_203 = arith.constant 3.200000e+01 : f32
    %488 = vector.broadcast %cst_203 : f32 to vector<8x1xf32>
    %489 = arith.divf %487, %488 : vector<8x1xf32>
    %490 = vector.broadcast %489 : vector<8x1xf32> to vector<8x32xf32>
    %491 = arith.subf %481, %490 : vector<8x32xf32>
    %492 = arith.mulf %491, %491 : vector<8x32xf32>
    %cst_204 = arith.constant dense<0.000000e+00> : vector<8xf32>
    %493 = vector.multi_reduction <add>, %492, %cst_204 [1] : vector<8x32xf32> to vector<8xf32>
    %494 = vector.shape_cast %493 : vector<8xf32> to vector<8x1xf32>
    %cst_205 = arith.constant 3.200000e+01 : f32
    %495 = vector.broadcast %cst_205 : f32 to vector<8x1xf32>
    %496 = arith.divf %494, %495 : vector<8x1xf32>
    %497 = vector.broadcast %489 : vector<8x1xf32> to vector<8x32xf32>
    %498 = arith.subf %481, %497 : vector<8x32xf32>
    %cst_206 = arith.constant 9.99999974E-6 : f32
    %499 = vector.broadcast %cst_206 : f32 to vector<8x1xf32>
    %500 = arith.addf %496, %499 : vector<8x1xf32>
    %501 = math.rsqrt %500 : vector<8x1xf32>
    %502 = vector.broadcast %501 : vector<8x1xf32> to vector<8x32xf32>
    %503 = arith.mulf %498, %502 : vector<8x32xf32>
    %504 = vector.broadcast %483 : vector<1x32xf32> to vector<8x32xf32>
    %505 = arith.mulf %503, %504 : vector<8x32xf32>
    %506 = vector.broadcast %485 : vector<1x32xf32> to vector<8x32xf32>
    %507 = arith.addf %505, %506 : vector<8x32xf32>
    %c0_207 = arith.constant 0 : index
    %c0_208 = arith.constant 0 : index
    %c0_209 = arith.constant 0 : index
    %508 = vector.load %arg20[%c0_207, %c0_208, %c0_209] : memref<2x32x32xbf16, #tpu.memory_space<vmem>>, vector<1x32x32xbf16>
    %509 = vector.shape_cast %508 : vector<1x32x32xbf16> to vector<32x32xbf16>
    %c0_210 = arith.constant 0 : index
    %c0_211 = arith.constant 0 : index
    %c0_212 = arith.constant 0 : index
    %510 = vector.load %arg21[%c0_210, %c0_211, %c0_212] : memref<2x1x32xf32, #tpu.memory_space<vmem>>, vector<1x1x32xf32>
    %511 = vector.shape_cast %510 : vector<1x1x32xf32> to vector<1x32xf32>
    %c0_213 = arith.constant 0 : index
    %c0_214 = arith.constant 0 : index
    %c0_215 = arith.constant 0 : index
    %512 = vector.load %arg22[%c0_213, %c0_214, %c0_215] : memref<2x32x64xbf16, #tpu.memory_space<vmem>>, vector<1x32x64xbf16>
    %513 = vector.shape_cast %512 : vector<1x32x64xbf16> to vector<32x64xbf16>
    %c0_216 = arith.constant 0 : index
    %c0_217 = arith.constant 0 : index
    %c0_218 = arith.constant 0 : index
    %514 = vector.load %arg23[%c0_216, %c0_217, %c0_218] : memref<2x1x64xf32, #tpu.memory_space<vmem>>, vector<1x1x64xf32>
    %515 = vector.shape_cast %514 : vector<1x1x64xf32> to vector<1x64xf32>
    %c0_219 = arith.constant 0 : index
    %c0_220 = arith.constant 0 : index
    %c0_221 = arith.constant 0 : index
    %516 = vector.load %arg24[%c0_219, %c0_220, %c0_221] : memref<2x32x32xbf16, #tpu.memory_space<vmem>>, vector<1x32x32xbf16>
    %517 = vector.shape_cast %516 : vector<1x32x32xbf16> to vector<32x32xbf16>
    %c0_222 = arith.constant 0 : index
    %c0_223 = arith.constant 0 : index
    %c0_224 = arith.constant 0 : index
    %518 = vector.load %arg25[%c0_222, %c0_223, %c0_224] : memref<2x1x32xf32, #tpu.memory_space<vmem>>, vector<1x1x32xf32>
    %519 = vector.shape_cast %518 : vector<1x1x32xf32> to vector<1x32xf32>
    %520 = arith.truncf %507 : vector<8x32xf32> to vector<8x32xbf16>
    %cst_225 = arith.constant dense<0.000000e+00> : vector<8x32xf32>
    %521 = tpu.matmul %520, %509, %cst_225 {dimension_numbers = #tpu.dot_dimension_numbers<[1], [0], [0], [1], [0, 0, 1, 1], [], []>} : vector<8x32xbf16>, vector<32x32xbf16>, vector<8x32xf32> -> vector<8x32xf32>
    %522 = vector.broadcast %511 : vector<1x32xf32> to vector<8x32xf32>
    %523 = arith.addf %521, %522 : vector<8x32xf32>
    %524 = arith.truncf %366 : vector<8x32xf32> to vector<8x32xbf16>
    %cst_226 = arith.constant dense<0.000000e+00> : vector<8x64xf32>
    %525 = tpu.matmul %524, %513, %cst_226 {dimension_numbers = #tpu.dot_dimension_numbers<[1], [0], [0], [1], [0, 0, 1, 1], [], []>} : vector<8x32xbf16>, vector<32x64xbf16>, vector<8x64xf32> -> vector<8x64xf32>
    %526 = vector.broadcast %515 : vector<1x64xf32> to vector<8x64xf32>
    %527 = arith.addf %525, %526 : vector<8x64xf32>
    %528 = vector.extract_strided_slice %527 {offsets = [0, 0], sizes = [8, 32], strides = [1, 1]} : vector<8x64xf32> to vector<8x32xf32>
    %529 = vector.extract_strided_slice %527 {offsets = [0, 32], sizes = [8, 32], strides = [1, 1]} : vector<8x64xf32> to vector<8x32xf32>
    %530 = vector.extract_strided_slice %523 {offsets = [0, 0], sizes = [8, 8], strides = [1, 1]} : vector<8x32xf32> to vector<8x8xf32>
    %531 = arith.truncf %530 : vector<8x8xf32> to vector<8x8xbf16>
    %532 = vector.extract_strided_slice %528 {offsets = [0, 0], sizes = [8, 8], strides = [1, 1]} : vector<8x32xf32> to vector<8x8xf32>
    %533 = arith.truncf %532 : vector<8x8xf32> to vector<8x8xbf16>
    %cst_227 = arith.constant dense<0.000000e+00> : vector<8x8xf32>
    %534 = tpu.matmul %531, %533, %cst_227 {dimension_numbers = #tpu.dot_dimension_numbers<[1], [1], [0], [0], [0, 0, 1, 0], [], []>} : vector<8x8xbf16>, vector<8x8xbf16>, vector<8x8xf32> -> vector<8x8xf32>
    %cst_228 = arith.constant 0.353553385 : f32
    %535 = vector.broadcast %cst_228 : f32 to vector<8x8xf32>
    %536 = arith.mulf %534, %535 : vector<8x8xf32>
    %cst_229 = arith.constant dense<0xFF800000> : vector<8xf32>
    %537 = vector.multi_reduction <maximumf>, %536, %cst_229 [1] : vector<8x8xf32> to vector<8xf32>
    %538 = vector.shape_cast %537 : vector<8xf32> to vector<8x1xf32>
    %539 = vector.broadcast %538 : vector<8x1xf32> to vector<8x8xf32>
    %540 = arith.subf %536, %539 : vector<8x8xf32>
    %541 = math.exp %540 : vector<8x8xf32>
    %cst_230 = arith.constant dense<0.000000e+00> : vector<8xf32>
    %542 = vector.multi_reduction <add>, %541, %cst_230 [1] : vector<8x8xf32> to vector<8xf32>
    %543 = vector.shape_cast %542 : vector<8xf32> to vector<8x1xf32>
    %cst_231 = arith.constant 9.99999971E-10 : f32
    %544 = vector.broadcast %cst_231 : f32 to vector<8x1xf32>
    %545 = arith.addf %543, %544 : vector<8x1xf32>
    %546 = vector.broadcast %545 : vector<8x1xf32> to vector<8x8xf32>
    %547 = arith.divf %541, %546 : vector<8x8xf32>
    %548 = arith.truncf %547 : vector<8x8xf32> to vector<8x8xbf16>
    %549 = vector.extract_strided_slice %529 {offsets = [0, 0], sizes = [8, 8], strides = [1, 1]} : vector<8x32xf32> to vector<8x8xf32>
    %550 = arith.truncf %549 : vector<8x8xf32> to vector<8x8xbf16>
    %cst_232 = arith.constant dense<0.000000e+00> : vector<8x8xf32>
    %551 = tpu.matmul %548, %550, %cst_232 {dimension_numbers = #tpu.dot_dimension_numbers<[1], [0], [0], [1], [0, 0, 1, 1], [], []>} : vector<8x8xbf16>, vector<8x8xbf16>, vector<8x8xf32> -> vector<8x8xf32>
    %552 = vector.extract_strided_slice %523 {offsets = [0, 8], sizes = [8, 8], strides = [1, 1]} : vector<8x32xf32> to vector<8x8xf32>
    %553 = arith.truncf %552 : vector<8x8xf32> to vector<8x8xbf16>
    %554 = vector.extract_strided_slice %528 {offsets = [0, 8], sizes = [8, 8], strides = [1, 1]} : vector<8x32xf32> to vector<8x8xf32>
    %555 = arith.truncf %554 : vector<8x8xf32> to vector<8x8xbf16>
    %cst_233 = arith.constant dense<0.000000e+00> : vector<8x8xf32>
    %556 = tpu.matmul %553, %555, %cst_233 {dimension_numbers = #tpu.dot_dimension_numbers<[1], [1], [0], [0], [0, 0, 1, 0], [], []>} : vector<8x8xbf16>, vector<8x8xbf16>, vector<8x8xf32> -> vector<8x8xf32>
    %cst_234 = arith.constant 0.353553385 : f32
    %557 = vector.broadcast %cst_234 : f32 to vector<8x8xf32>
    %558 = arith.mulf %556, %557 : vector<8x8xf32>
    %cst_235 = arith.constant dense<0xFF800000> : vector<8xf32>
    %559 = vector.multi_reduction <maximumf>, %558, %cst_235 [1] : vector<8x8xf32> to vector<8xf32>
    %560 = vector.shape_cast %559 : vector<8xf32> to vector<8x1xf32>
    %561 = vector.broadcast %560 : vector<8x1xf32> to vector<8x8xf32>
    %562 = arith.subf %558, %561 : vector<8x8xf32>
    %563 = math.exp %562 : vector<8x8xf32>
    %cst_236 = arith.constant dense<0.000000e+00> : vector<8xf32>
    %564 = vector.multi_reduction <add>, %563, %cst_236 [1] : vector<8x8xf32> to vector<8xf32>
    %565 = vector.shape_cast %564 : vector<8xf32> to vector<8x1xf32>
    %cst_237 = arith.constant 9.99999971E-10 : f32
    %566 = vector.broadcast %cst_237 : f32 to vector<8x1xf32>
    %567 = arith.addf %565, %566 : vector<8x1xf32>
    %568 = vector.broadcast %567 : vector<8x1xf32> to vector<8x8xf32>
    %569 = arith.divf %563, %568 : vector<8x8xf32>
    %570 = arith.truncf %569 : vector<8x8xf32> to vector<8x8xbf16>
    %571 = vector.extract_strided_slice %529 {offsets = [0, 8], sizes = [8, 8], strides = [1, 1]} : vector<8x32xf32> to vector<8x8xf32>
    %572 = arith.truncf %571 : vector<8x8xf32> to vector<8x8xbf16>
    %cst_238 = arith.constant dense<0.000000e+00> : vector<8x8xf32>
    %573 = tpu.matmul %570, %572, %cst_238 {dimension_numbers = #tpu.dot_dimension_numbers<[1], [0], [0], [1], [0, 0, 1, 1], [], []>} : vector<8x8xbf16>, vector<8x8xbf16>, vector<8x8xf32> -> vector<8x8xf32>
    %574 = vector.extract_strided_slice %523 {offsets = [0, 16], sizes = [8, 8], strides = [1, 1]} : vector<8x32xf32> to vector<8x8xf32>
    %575 = arith.truncf %574 : vector<8x8xf32> to vector<8x8xbf16>
    %576 = vector.extract_strided_slice %528 {offsets = [0, 16], sizes = [8, 8], strides = [1, 1]} : vector<8x32xf32> to vector<8x8xf32>
    %577 = arith.truncf %576 : vector<8x8xf32> to vector<8x8xbf16>
    %cst_239 = arith.constant dense<0.000000e+00> : vector<8x8xf32>
    %578 = tpu.matmul %575, %577, %cst_239 {dimension_numbers = #tpu.dot_dimension_numbers<[1], [1], [0], [0], [0, 0, 1, 0], [], []>} : vector<8x8xbf16>, vector<8x8xbf16>, vector<8x8xf32> -> vector<8x8xf32>
    %cst_240 = arith.constant 0.353553385 : f32
    %579 = vector.broadcast %cst_240 : f32 to vector<8x8xf32>
    %580 = arith.mulf %578, %579 : vector<8x8xf32>
    %cst_241 = arith.constant dense<0xFF800000> : vector<8xf32>
    %581 = vector.multi_reduction <maximumf>, %580, %cst_241 [1] : vector<8x8xf32> to vector<8xf32>
    %582 = vector.shape_cast %581 : vector<8xf32> to vector<8x1xf32>
    %583 = vector.broadcast %582 : vector<8x1xf32> to vector<8x8xf32>
    %584 = arith.subf %580, %583 : vector<8x8xf32>
    %585 = math.exp %584 : vector<8x8xf32>
    %cst_242 = arith.constant dense<0.000000e+00> : vector<8xf32>
    %586 = vector.multi_reduction <add>, %585, %cst_242 [1] : vector<8x8xf32> to vector<8xf32>
    %587 = vector.shape_cast %586 : vector<8xf32> to vector<8x1xf32>
    %cst_243 = arith.constant 9.99999971E-10 : f32
    %588 = vector.broadcast %cst_243 : f32 to vector<8x1xf32>
    %589 = arith.addf %587, %588 : vector<8x1xf32>
    %590 = vector.broadcast %589 : vector<8x1xf32> to vector<8x8xf32>
    %591 = arith.divf %585, %590 : vector<8x8xf32>
    %592 = arith.truncf %591 : vector<8x8xf32> to vector<8x8xbf16>
    %593 = vector.extract_strided_slice %529 {offsets = [0, 16], sizes = [8, 8], strides = [1, 1]} : vector<8x32xf32> to vector<8x8xf32>
    %594 = arith.truncf %593 : vector<8x8xf32> to vector<8x8xbf16>
    %cst_244 = arith.constant dense<0.000000e+00> : vector<8x8xf32>
    %595 = tpu.matmul %592, %594, %cst_244 {dimension_numbers = #tpu.dot_dimension_numbers<[1], [0], [0], [1], [0, 0, 1, 1], [], []>} : vector<8x8xbf16>, vector<8x8xbf16>, vector<8x8xf32> -> vector<8x8xf32>
    %596 = vector.extract_strided_slice %523 {offsets = [0, 24], sizes = [8, 8], strides = [1, 1]} : vector<8x32xf32> to vector<8x8xf32>
    %597 = arith.truncf %596 : vector<8x8xf32> to vector<8x8xbf16>
    %598 = vector.extract_strided_slice %528 {offsets = [0, 24], sizes = [8, 8], strides = [1, 1]} : vector<8x32xf32> to vector<8x8xf32>
    %599 = arith.truncf %598 : vector<8x8xf32> to vector<8x8xbf16>
    %cst_245 = arith.constant dense<0.000000e+00> : vector<8x8xf32>
    %600 = tpu.matmul %597, %599, %cst_245 {dimension_numbers = #tpu.dot_dimension_numbers<[1], [1], [0], [0], [0, 0, 1, 0], [], []>} : vector<8x8xbf16>, vector<8x8xbf16>, vector<8x8xf32> -> vector<8x8xf32>
    %cst_246 = arith.constant 0.353553385 : f32
    %601 = vector.broadcast %cst_246 : f32 to vector<8x8xf32>
    %602 = arith.mulf %600, %601 : vector<8x8xf32>
    %cst_247 = arith.constant dense<0xFF800000> : vector<8xf32>
    %603 = vector.multi_reduction <maximumf>, %602, %cst_247 [1] : vector<8x8xf32> to vector<8xf32>
    %604 = vector.shape_cast %603 : vector<8xf32> to vector<8x1xf32>
    %605 = vector.broadcast %604 : vector<8x1xf32> to vector<8x8xf32>
    %606 = arith.subf %602, %605 : vector<8x8xf32>
    %607 = math.exp %606 : vector<8x8xf32>
    %cst_248 = arith.constant dense<0.000000e+00> : vector<8xf32>
    %608 = vector.multi_reduction <add>, %607, %cst_248 [1] : vector<8x8xf32> to vector<8xf32>
    %609 = vector.shape_cast %608 : vector<8xf32> to vector<8x1xf32>
    %cst_249 = arith.constant 9.99999971E-10 : f32
    %610 = vector.broadcast %cst_249 : f32 to vector<8x1xf32>
    %611 = arith.addf %609, %610 : vector<8x1xf32>
    %612 = vector.broadcast %611 : vector<8x1xf32> to vector<8x8xf32>
    %613 = arith.divf %607, %612 : vector<8x8xf32>
    %614 = arith.truncf %613 : vector<8x8xf32> to vector<8x8xbf16>
    %615 = vector.extract_strided_slice %529 {offsets = [0, 24], sizes = [8, 8], strides = [1, 1]} : vector<8x32xf32> to vector<8x8xf32>
    %616 = arith.truncf %615 : vector<8x8xf32> to vector<8x8xbf16>
    %cst_250 = arith.constant dense<0.000000e+00> : vector<8x8xf32>
    %617 = tpu.matmul %614, %616, %cst_250 {dimension_numbers = #tpu.dot_dimension_numbers<[1], [0], [0], [1], [0, 0, 1, 1], [], []>} : vector<8x8xbf16>, vector<8x8xbf16>, vector<8x8xf32> -> vector<8x8xf32>
    %618 = tpu.concatenate %551, %573, %595, %617 in 1 : vector<8x8xf32>, vector<8x8xf32>, vector<8x8xf32>, vector<8x8xf32> -> vector<8x32xf32>
    %619 = arith.truncf %618 : vector<8x32xf32> to vector<8x32xbf16>
    %cst_251 = arith.constant dense<0.000000e+00> : vector<8x32xf32>
    %620 = tpu.matmul %619, %517, %cst_251 {dimension_numbers = #tpu.dot_dimension_numbers<[1], [0], [0], [1], [0, 0, 1, 1], [], []>} : vector<8x32xbf16>, vector<32x32xbf16>, vector<8x32xf32> -> vector<8x32xf32>
    %621 = vector.broadcast %519 : vector<1x32xf32> to vector<8x32xf32>
    %622 = arith.addf %620, %621 : vector<8x32xf32>
    %623 = arith.addf %507, %622 : vector<8x32xf32>
    %c0_252 = arith.constant 0 : index
    %c0_253 = arith.constant 0 : index
    %c0_254 = arith.constant 0 : index
    %624 = vector.load %arg32[%c0_252, %c0_253, %c0_254] : memref<2x1x32xf32, #tpu.memory_space<vmem>>, vector<1x1x32xf32>
    %625 = vector.shape_cast %624 : vector<1x1x32xf32> to vector<1x32xf32>
    %c0_255 = arith.constant 0 : index
    %c0_256 = arith.constant 0 : index
    %c0_257 = arith.constant 0 : index
    %626 = vector.load %arg33[%c0_255, %c0_256, %c0_257] : memref<2x1x32xf32, #tpu.memory_space<vmem>>, vector<1x1x32xf32>
    %627 = vector.shape_cast %626 : vector<1x1x32xf32> to vector<1x32xf32>
    %cst_258 = arith.constant dense<0.000000e+00> : vector<8xf32>
    %628 = vector.multi_reduction <add>, %623, %cst_258 [1] : vector<8x32xf32> to vector<8xf32>
    %629 = vector.shape_cast %628 : vector<8xf32> to vector<8x1xf32>
    %cst_259 = arith.constant 3.200000e+01 : f32
    %630 = vector.broadcast %cst_259 : f32 to vector<8x1xf32>
    %631 = arith.divf %629, %630 : vector<8x1xf32>
    %632 = vector.broadcast %631 : vector<8x1xf32> to vector<8x32xf32>
    %633 = arith.subf %623, %632 : vector<8x32xf32>
    %634 = arith.mulf %633, %633 : vector<8x32xf32>
    %cst_260 = arith.constant dense<0.000000e+00> : vector<8xf32>
    %635 = vector.multi_reduction <add>, %634, %cst_260 [1] : vector<8x32xf32> to vector<8xf32>
    %636 = vector.shape_cast %635 : vector<8xf32> to vector<8x1xf32>
    %cst_261 = arith.constant 3.200000e+01 : f32
    %637 = vector.broadcast %cst_261 : f32 to vector<8x1xf32>
    %638 = arith.divf %636, %637 : vector<8x1xf32>
    %639 = vector.broadcast %631 : vector<8x1xf32> to vector<8x32xf32>
    %640 = arith.subf %623, %639 : vector<8x32xf32>
    %cst_262 = arith.constant 9.99999974E-6 : f32
    %641 = vector.broadcast %cst_262 : f32 to vector<8x1xf32>
    %642 = arith.addf %638, %641 : vector<8x1xf32>
    %643 = math.rsqrt %642 : vector<8x1xf32>
    %644 = vector.broadcast %643 : vector<8x1xf32> to vector<8x32xf32>
    %645 = arith.mulf %640, %644 : vector<8x32xf32>
    %646 = vector.broadcast %625 : vector<1x32xf32> to vector<8x32xf32>
    %647 = arith.mulf %645, %646 : vector<8x32xf32>
    %648 = vector.broadcast %627 : vector<1x32xf32> to vector<8x32xf32>
    %649 = arith.addf %647, %648 : vector<8x32xf32>
    %c0_263 = arith.constant 0 : index
    %c0_264 = arith.constant 0 : index
    %c0_265 = arith.constant 0 : index
    %650 = vector.load %arg26[%c0_263, %c0_264, %c0_265] : memref<2x32x64xbf16, #tpu.memory_space<vmem>>, vector<1x32x64xbf16>
    %651 = vector.shape_cast %650 : vector<1x32x64xbf16> to vector<32x64xbf16>
    %c0_266 = arith.constant 0 : index
    %c0_267 = arith.constant 0 : index
    %c0_268 = arith.constant 0 : index
    %652 = vector.load %arg27[%c0_266, %c0_267, %c0_268] : memref<2x1x64xf32, #tpu.memory_space<vmem>>, vector<1x1x64xf32>
    %653 = vector.shape_cast %652 : vector<1x1x64xf32> to vector<1x64xf32>
    %c0_269 = arith.constant 0 : index
    %c0_270 = arith.constant 0 : index
    %c0_271 = arith.constant 0 : index
    %654 = vector.load %arg28[%c0_269, %c0_270, %c0_271] : memref<2x64x32xbf16, #tpu.memory_space<vmem>>, vector<1x64x32xbf16>
    %655 = vector.shape_cast %654 : vector<1x64x32xbf16> to vector<64x32xbf16>
    %c0_272 = arith.constant 0 : index
    %c0_273 = arith.constant 0 : index
    %c0_274 = arith.constant 0 : index
    %656 = vector.load %arg29[%c0_272, %c0_273, %c0_274] : memref<2x1x32xf32, #tpu.memory_space<vmem>>, vector<1x1x32xf32>
    %657 = vector.shape_cast %656 : vector<1x1x32xf32> to vector<1x32xf32>
    %658 = arith.truncf %649 : vector<8x32xf32> to vector<8x32xbf16>
    %cst_275 = arith.constant dense<0.000000e+00> : vector<8x64xf32>
    %659 = tpu.matmul %658, %651, %cst_275 {dimension_numbers = #tpu.dot_dimension_numbers<[1], [0], [0], [1], [0, 0, 1, 1], [], []>} : vector<8x32xbf16>, vector<32x64xbf16>, vector<8x64xf32> -> vector<8x64xf32>
    %660 = vector.broadcast %653 : vector<1x64xf32> to vector<8x64xf32>
    %661 = arith.addf %659, %660 : vector<8x64xf32>
    %cst_276 = arith.constant 0.000000e+00 : f32
    %662 = vector.broadcast %cst_276 : f32 to vector<8x64xf32>
    %663 = arith.maximumf %661, %662 : vector<8x64xf32>
    %664 = arith.truncf %663 : vector<8x64xf32> to vector<8x64xbf16>
    %cst_277 = arith.constant dense<0.000000e+00> : vector<8x32xf32>
    %665 = tpu.matmul %664, %655, %cst_277 {dimension_numbers = #tpu.dot_dimension_numbers<[1], [0], [0], [1], [0, 0, 1, 1], [], []>} : vector<8x64xbf16>, vector<64x32xbf16>, vector<8x32xf32> -> vector<8x32xf32>
    %666 = vector.broadcast %657 : vector<1x32xf32> to vector<8x32xf32>
    %667 = arith.addf %665, %666 : vector<8x32xf32>
    %668 = arith.addf %649, %667 : vector<8x32xf32>
    %c0_278 = arith.constant 0 : index
    %c0_279 = arith.constant 0 : index
    %c0_280 = arith.constant 0 : index
    %669 = vector.load %arg34[%c0_278, %c0_279, %c0_280] : memref<2x1x32xf32, #tpu.memory_space<vmem>>, vector<1x1x32xf32>
    %670 = vector.shape_cast %669 : vector<1x1x32xf32> to vector<1x32xf32>
    %c0_281 = arith.constant 0 : index
    %c0_282 = arith.constant 0 : index
    %c0_283 = arith.constant 0 : index
    %671 = vector.load %arg35[%c0_281, %c0_282, %c0_283] : memref<2x1x32xf32, #tpu.memory_space<vmem>>, vector<1x1x32xf32>
    %672 = vector.shape_cast %671 : vector<1x1x32xf32> to vector<1x32xf32>
    %cst_284 = arith.constant dense<0.000000e+00> : vector<8xf32>
    %673 = vector.multi_reduction <add>, %668, %cst_284 [1] : vector<8x32xf32> to vector<8xf32>
    %674 = vector.shape_cast %673 : vector<8xf32> to vector<8x1xf32>
    %cst_285 = arith.constant 3.200000e+01 : f32
    %675 = vector.broadcast %cst_285 : f32 to vector<8x1xf32>
    %676 = arith.divf %674, %675 : vector<8x1xf32>
    %677 = vector.broadcast %676 : vector<8x1xf32> to vector<8x32xf32>
    %678 = arith.subf %668, %677 : vector<8x32xf32>
    %679 = arith.mulf %678, %678 : vector<8x32xf32>
    %cst_286 = arith.constant dense<0.000000e+00> : vector<8xf32>
    %680 = vector.multi_reduction <add>, %679, %cst_286 [1] : vector<8x32xf32> to vector<8xf32>
    %681 = vector.shape_cast %680 : vector<8xf32> to vector<8x1xf32>
    %cst_287 = arith.constant 3.200000e+01 : f32
    %682 = vector.broadcast %cst_287 : f32 to vector<8x1xf32>
    %683 = arith.divf %681, %682 : vector<8x1xf32>
    %684 = vector.broadcast %676 : vector<8x1xf32> to vector<8x32xf32>
    %685 = arith.subf %668, %684 : vector<8x32xf32>
    %cst_288 = arith.constant 9.99999974E-6 : f32
    %686 = vector.broadcast %cst_288 : f32 to vector<8x1xf32>
    %687 = arith.addf %683, %686 : vector<8x1xf32>
    %688 = math.rsqrt %687 : vector<8x1xf32>
    %689 = vector.broadcast %688 : vector<8x1xf32> to vector<8x32xf32>
    %690 = arith.mulf %685, %689 : vector<8x32xf32>
    %691 = vector.broadcast %670 : vector<1x32xf32> to vector<8x32xf32>
    %692 = arith.mulf %690, %691 : vector<8x32xf32>
    %693 = vector.broadcast %672 : vector<1x32xf32> to vector<8x32xf32>
    %694 = arith.addf %692, %693 : vector<8x32xf32>
    %c1_289 = arith.constant 1 : index
    %c0_290 = arith.constant 0 : index
    %c0_291 = arith.constant 0 : index
    %695 = vector.load %arg16[%c1_289, %c0_290, %c0_291] : memref<2x32x96xbf16, #tpu.memory_space<vmem>>, vector<1x32x96xbf16>
    %696 = vector.shape_cast %695 : vector<1x32x96xbf16> to vector<32x96xbf16>
    %c1_292 = arith.constant 1 : index
    %c0_293 = arith.constant 0 : index
    %c0_294 = arith.constant 0 : index
    %697 = vector.load %arg17[%c1_292, %c0_293, %c0_294] : memref<2x1x96xf32, #tpu.memory_space<vmem>>, vector<1x1x96xf32>
    %698 = vector.shape_cast %697 : vector<1x1x96xf32> to vector<1x96xf32>
    %c1_295 = arith.constant 1 : index
    %c0_296 = arith.constant 0 : index
    %c0_297 = arith.constant 0 : index
    %699 = vector.load %arg18[%c1_295, %c0_296, %c0_297] : memref<2x32x32xbf16, #tpu.memory_space<vmem>>, vector<1x32x32xbf16>
    %700 = vector.shape_cast %699 : vector<1x32x32xbf16> to vector<32x32xbf16>
    %c1_298 = arith.constant 1 : index
    %c0_299 = arith.constant 0 : index
    %c0_300 = arith.constant 0 : index
    %701 = vector.load %arg19[%c1_298, %c0_299, %c0_300] : memref<2x1x32xf32, #tpu.memory_space<vmem>>, vector<1x1x32xf32>
    %702 = vector.shape_cast %701 : vector<1x1x32xf32> to vector<1x32xf32>
    %703 = arith.truncf %694 : vector<8x32xf32> to vector<8x32xbf16>
    %cst_301 = arith.constant dense<0.000000e+00> : vector<8x96xf32>
    %704 = tpu.matmul %703, %696, %cst_301 {dimension_numbers = #tpu.dot_dimension_numbers<[1], [0], [0], [1], [0, 0, 1, 1], [], []>} : vector<8x32xbf16>, vector<32x96xbf16>, vector<8x96xf32> -> vector<8x96xf32>
    %705 = vector.broadcast %698 : vector<1x96xf32> to vector<8x96xf32>
    %706 = arith.addf %704, %705 : vector<8x96xf32>
    %707 = vector.extract_strided_slice %706 {offsets = [0, 0], sizes = [8, 32], strides = [1, 1]} : vector<8x96xf32> to vector<8x32xf32>
    %708 = vector.extract_strided_slice %706 {offsets = [0, 32], sizes = [8, 32], strides = [1, 1]} : vector<8x96xf32> to vector<8x32xf32>
    %709 = vector.extract_strided_slice %706 {offsets = [0, 64], sizes = [8, 32], strides = [1, 1]} : vector<8x96xf32> to vector<8x32xf32>
    %710 = vector.extract_strided_slice %707 {offsets = [0, 0], sizes = [8, 8], strides = [1, 1]} : vector<8x32xf32> to vector<8x8xf32>
    %711 = arith.truncf %710 : vector<8x8xf32> to vector<8x8xbf16>
    %712 = vector.extract_strided_slice %708 {offsets = [0, 0], sizes = [8, 8], strides = [1, 1]} : vector<8x32xf32> to vector<8x8xf32>
    %713 = arith.truncf %712 : vector<8x8xf32> to vector<8x8xbf16>
    %cst_302 = arith.constant dense<0.000000e+00> : vector<8x8xf32>
    %714 = tpu.matmul %711, %713, %cst_302 {dimension_numbers = #tpu.dot_dimension_numbers<[1], [1], [0], [0], [0, 0, 1, 0], [], []>} : vector<8x8xbf16>, vector<8x8xbf16>, vector<8x8xf32> -> vector<8x8xf32>
    %cst_303 = arith.constant 0.353553385 : f32
    %715 = vector.broadcast %cst_303 : f32 to vector<8x8xf32>
    %716 = arith.mulf %714, %715 : vector<8x8xf32>
    %cst_304 = arith.constant dense<0xFF800000> : vector<8xf32>
    %717 = vector.multi_reduction <maximumf>, %716, %cst_304 [1] : vector<8x8xf32> to vector<8xf32>
    %718 = vector.shape_cast %717 : vector<8xf32> to vector<8x1xf32>
    %719 = vector.broadcast %718 : vector<8x1xf32> to vector<8x8xf32>
    %720 = arith.subf %716, %719 : vector<8x8xf32>
    %721 = math.exp %720 : vector<8x8xf32>
    %cst_305 = arith.constant dense<0.000000e+00> : vector<8xf32>
    %722 = vector.multi_reduction <add>, %721, %cst_305 [1] : vector<8x8xf32> to vector<8xf32>
    %723 = vector.shape_cast %722 : vector<8xf32> to vector<8x1xf32>
    %cst_306 = arith.constant 9.99999971E-10 : f32
    %724 = vector.broadcast %cst_306 : f32 to vector<8x1xf32>
    %725 = arith.addf %723, %724 : vector<8x1xf32>
    %726 = vector.broadcast %725 : vector<8x1xf32> to vector<8x8xf32>
    %727 = arith.divf %721, %726 : vector<8x8xf32>
    %728 = arith.truncf %727 : vector<8x8xf32> to vector<8x8xbf16>
    %729 = vector.extract_strided_slice %709 {offsets = [0, 0], sizes = [8, 8], strides = [1, 1]} : vector<8x32xf32> to vector<8x8xf32>
    %730 = arith.truncf %729 : vector<8x8xf32> to vector<8x8xbf16>
    %cst_307 = arith.constant dense<0.000000e+00> : vector<8x8xf32>
    %731 = tpu.matmul %728, %730, %cst_307 {dimension_numbers = #tpu.dot_dimension_numbers<[1], [0], [0], [1], [0, 0, 1, 1], [], []>} : vector<8x8xbf16>, vector<8x8xbf16>, vector<8x8xf32> -> vector<8x8xf32>
    %732 = vector.extract_strided_slice %707 {offsets = [0, 8], sizes = [8, 8], strides = [1, 1]} : vector<8x32xf32> to vector<8x8xf32>
    %733 = arith.truncf %732 : vector<8x8xf32> to vector<8x8xbf16>
    %734 = vector.extract_strided_slice %708 {offsets = [0, 8], sizes = [8, 8], strides = [1, 1]} : vector<8x32xf32> to vector<8x8xf32>
    %735 = arith.truncf %734 : vector<8x8xf32> to vector<8x8xbf16>
    %cst_308 = arith.constant dense<0.000000e+00> : vector<8x8xf32>
    %736 = tpu.matmul %733, %735, %cst_308 {dimension_numbers = #tpu.dot_dimension_numbers<[1], [1], [0], [0], [0, 0, 1, 0], [], []>} : vector<8x8xbf16>, vector<8x8xbf16>, vector<8x8xf32> -> vector<8x8xf32>
    %cst_309 = arith.constant 0.353553385 : f32
    %737 = vector.broadcast %cst_309 : f32 to vector<8x8xf32>
    %738 = arith.mulf %736, %737 : vector<8x8xf32>
    %cst_310 = arith.constant dense<0xFF800000> : vector<8xf32>
    %739 = vector.multi_reduction <maximumf>, %738, %cst_310 [1] : vector<8x8xf32> to vector<8xf32>
    %740 = vector.shape_cast %739 : vector<8xf32> to vector<8x1xf32>
    %741 = vector.broadcast %740 : vector<8x1xf32> to vector<8x8xf32>
    %742 = arith.subf %738, %741 : vector<8x8xf32>
    %743 = math.exp %742 : vector<8x8xf32>
    %cst_311 = arith.constant dense<0.000000e+00> : vector<8xf32>
    %744 = vector.multi_reduction <add>, %743, %cst_311 [1] : vector<8x8xf32> to vector<8xf32>
    %745 = vector.shape_cast %744 : vector<8xf32> to vector<8x1xf32>
    %cst_312 = arith.constant 9.99999971E-10 : f32
    %746 = vector.broadcast %cst_312 : f32 to vector<8x1xf32>
    %747 = arith.addf %745, %746 : vector<8x1xf32>
    %748 = vector.broadcast %747 : vector<8x1xf32> to vector<8x8xf32>
    %749 = arith.divf %743, %748 : vector<8x8xf32>
    %750 = arith.truncf %749 : vector<8x8xf32> to vector<8x8xbf16>
    %751 = vector.extract_strided_slice %709 {offsets = [0, 8], sizes = [8, 8], strides = [1, 1]} : vector<8x32xf32> to vector<8x8xf32>
    %752 = arith.truncf %751 : vector<8x8xf32> to vector<8x8xbf16>
    %cst_313 = arith.constant dense<0.000000e+00> : vector<8x8xf32>
    %753 = tpu.matmul %750, %752, %cst_313 {dimension_numbers = #tpu.dot_dimension_numbers<[1], [0], [0], [1], [0, 0, 1, 1], [], []>} : vector<8x8xbf16>, vector<8x8xbf16>, vector<8x8xf32> -> vector<8x8xf32>
    %754 = vector.extract_strided_slice %707 {offsets = [0, 16], sizes = [8, 8], strides = [1, 1]} : vector<8x32xf32> to vector<8x8xf32>
    %755 = arith.truncf %754 : vector<8x8xf32> to vector<8x8xbf16>
    %756 = vector.extract_strided_slice %708 {offsets = [0, 16], sizes = [8, 8], strides = [1, 1]} : vector<8x32xf32> to vector<8x8xf32>
    %757 = arith.truncf %756 : vector<8x8xf32> to vector<8x8xbf16>
    %cst_314 = arith.constant dense<0.000000e+00> : vector<8x8xf32>
    %758 = tpu.matmul %755, %757, %cst_314 {dimension_numbers = #tpu.dot_dimension_numbers<[1], [1], [0], [0], [0, 0, 1, 0], [], []>} : vector<8x8xbf16>, vector<8x8xbf16>, vector<8x8xf32> -> vector<8x8xf32>
    %cst_315 = arith.constant 0.353553385 : f32
    %759 = vector.broadcast %cst_315 : f32 to vector<8x8xf32>
    %760 = arith.mulf %758, %759 : vector<8x8xf32>
    %cst_316 = arith.constant dense<0xFF800000> : vector<8xf32>
    %761 = vector.multi_reduction <maximumf>, %760, %cst_316 [1] : vector<8x8xf32> to vector<8xf32>
    %762 = vector.shape_cast %761 : vector<8xf32> to vector<8x1xf32>
    %763 = vector.broadcast %762 : vector<8x1xf32> to vector<8x8xf32>
    %764 = arith.subf %760, %763 : vector<8x8xf32>
    %765 = math.exp %764 : vector<8x8xf32>
    %cst_317 = arith.constant dense<0.000000e+00> : vector<8xf32>
    %766 = vector.multi_reduction <add>, %765, %cst_317 [1] : vector<8x8xf32> to vector<8xf32>
    %767 = vector.shape_cast %766 : vector<8xf32> to vector<8x1xf32>
    %cst_318 = arith.constant 9.99999971E-10 : f32
    %768 = vector.broadcast %cst_318 : f32 to vector<8x1xf32>
    %769 = arith.addf %767, %768 : vector<8x1xf32>
    %770 = vector.broadcast %769 : vector<8x1xf32> to vector<8x8xf32>
    %771 = arith.divf %765, %770 : vector<8x8xf32>
    %772 = arith.truncf %771 : vector<8x8xf32> to vector<8x8xbf16>
    %773 = vector.extract_strided_slice %709 {offsets = [0, 16], sizes = [8, 8], strides = [1, 1]} : vector<8x32xf32> to vector<8x8xf32>
    %774 = arith.truncf %773 : vector<8x8xf32> to vector<8x8xbf16>
    %cst_319 = arith.constant dense<0.000000e+00> : vector<8x8xf32>
    %775 = tpu.matmul %772, %774, %cst_319 {dimension_numbers = #tpu.dot_dimension_numbers<[1], [0], [0], [1], [0, 0, 1, 1], [], []>} : vector<8x8xbf16>, vector<8x8xbf16>, vector<8x8xf32> -> vector<8x8xf32>
    %776 = vector.extract_strided_slice %707 {offsets = [0, 24], sizes = [8, 8], strides = [1, 1]} : vector<8x32xf32> to vector<8x8xf32>
    %777 = arith.truncf %776 : vector<8x8xf32> to vector<8x8xbf16>
    %778 = vector.extract_strided_slice %708 {offsets = [0, 24], sizes = [8, 8], strides = [1, 1]} : vector<8x32xf32> to vector<8x8xf32>
    %779 = arith.truncf %778 : vector<8x8xf32> to vector<8x8xbf16>
    %cst_320 = arith.constant dense<0.000000e+00> : vector<8x8xf32>
    %780 = tpu.matmul %777, %779, %cst_320 {dimension_numbers = #tpu.dot_dimension_numbers<[1], [1], [0], [0], [0, 0, 1, 0], [], []>} : vector<8x8xbf16>, vector<8x8xbf16>, vector<8x8xf32> -> vector<8x8xf32>
    %cst_321 = arith.constant 0.353553385 : f32
    %781 = vector.broadcast %cst_321 : f32 to vector<8x8xf32>
    %782 = arith.mulf %780, %781 : vector<8x8xf32>
    %cst_322 = arith.constant dense<0xFF800000> : vector<8xf32>
    %783 = vector.multi_reduction <maximumf>, %782, %cst_322 [1] : vector<8x8xf32> to vector<8xf32>
    %784 = vector.shape_cast %783 : vector<8xf32> to vector<8x1xf32>
    %785 = vector.broadcast %784 : vector<8x1xf32> to vector<8x8xf32>
    %786 = arith.subf %782, %785 : vector<8x8xf32>
    %787 = math.exp %786 : vector<8x8xf32>
    %cst_323 = arith.constant dense<0.000000e+00> : vector<8xf32>
    %788 = vector.multi_reduction <add>, %787, %cst_323 [1] : vector<8x8xf32> to vector<8xf32>
    %789 = vector.shape_cast %788 : vector<8xf32> to vector<8x1xf32>
    %cst_324 = arith.constant 9.99999971E-10 : f32
    %790 = vector.broadcast %cst_324 : f32 to vector<8x1xf32>
    %791 = arith.addf %789, %790 : vector<8x1xf32>
    %792 = vector.broadcast %791 : vector<8x1xf32> to vector<8x8xf32>
    %793 = arith.divf %787, %792 : vector<8x8xf32>
    %794 = arith.truncf %793 : vector<8x8xf32> to vector<8x8xbf16>
    %795 = vector.extract_strided_slice %709 {offsets = [0, 24], sizes = [8, 8], strides = [1, 1]} : vector<8x32xf32> to vector<8x8xf32>
    %796 = arith.truncf %795 : vector<8x8xf32> to vector<8x8xbf16>
    %cst_325 = arith.constant dense<0.000000e+00> : vector<8x8xf32>
    %797 = tpu.matmul %794, %796, %cst_325 {dimension_numbers = #tpu.dot_dimension_numbers<[1], [0], [0], [1], [0, 0, 1, 1], [], []>} : vector<8x8xbf16>, vector<8x8xbf16>, vector<8x8xf32> -> vector<8x8xf32>
    %798 = tpu.concatenate %731, %753, %775, %797 in 1 : vector<8x8xf32>, vector<8x8xf32>, vector<8x8xf32>, vector<8x8xf32> -> vector<8x32xf32>
    %799 = arith.truncf %798 : vector<8x32xf32> to vector<8x32xbf16>
    %cst_326 = arith.constant dense<0.000000e+00> : vector<8x32xf32>
    %800 = tpu.matmul %799, %700, %cst_326 {dimension_numbers = #tpu.dot_dimension_numbers<[1], [0], [0], [1], [0, 0, 1, 1], [], []>} : vector<8x32xbf16>, vector<32x32xbf16>, vector<8x32xf32> -> vector<8x32xf32>
    %801 = vector.broadcast %702 : vector<1x32xf32> to vector<8x32xf32>
    %802 = arith.addf %800, %801 : vector<8x32xf32>
    %803 = arith.addf %694, %802 : vector<8x32xf32>
    %c1_327 = arith.constant 1 : index
    %c0_328 = arith.constant 0 : index
    %c0_329 = arith.constant 0 : index
    %804 = vector.load %arg30[%c1_327, %c0_328, %c0_329] : memref<2x1x32xf32, #tpu.memory_space<vmem>>, vector<1x1x32xf32>
    %805 = vector.shape_cast %804 : vector<1x1x32xf32> to vector<1x32xf32>
    %c1_330 = arith.constant 1 : index
    %c0_331 = arith.constant 0 : index
    %c0_332 = arith.constant 0 : index
    %806 = vector.load %arg31[%c1_330, %c0_331, %c0_332] : memref<2x1x32xf32, #tpu.memory_space<vmem>>, vector<1x1x32xf32>
    %807 = vector.shape_cast %806 : vector<1x1x32xf32> to vector<1x32xf32>
    %cst_333 = arith.constant dense<0.000000e+00> : vector<8xf32>
    %808 = vector.multi_reduction <add>, %803, %cst_333 [1] : vector<8x32xf32> to vector<8xf32>
    %809 = vector.shape_cast %808 : vector<8xf32> to vector<8x1xf32>
    %cst_334 = arith.constant 3.200000e+01 : f32
    %810 = vector.broadcast %cst_334 : f32 to vector<8x1xf32>
    %811 = arith.divf %809, %810 : vector<8x1xf32>
    %812 = vector.broadcast %811 : vector<8x1xf32> to vector<8x32xf32>
    %813 = arith.subf %803, %812 : vector<8x32xf32>
    %814 = arith.mulf %813, %813 : vector<8x32xf32>
    %cst_335 = arith.constant dense<0.000000e+00> : vector<8xf32>
    %815 = vector.multi_reduction <add>, %814, %cst_335 [1] : vector<8x32xf32> to vector<8xf32>
    %816 = vector.shape_cast %815 : vector<8xf32> to vector<8x1xf32>
    %cst_336 = arith.constant 3.200000e+01 : f32
    %817 = vector.broadcast %cst_336 : f32 to vector<8x1xf32>
    %818 = arith.divf %816, %817 : vector<8x1xf32>
    %819 = vector.broadcast %811 : vector<8x1xf32> to vector<8x32xf32>
    %820 = arith.subf %803, %819 : vector<8x32xf32>
    %cst_337 = arith.constant 9.99999974E-6 : f32
    %821 = vector.broadcast %cst_337 : f32 to vector<8x1xf32>
    %822 = arith.addf %818, %821 : vector<8x1xf32>
    %823 = math.rsqrt %822 : vector<8x1xf32>
    %824 = vector.broadcast %823 : vector<8x1xf32> to vector<8x32xf32>
    %825 = arith.mulf %820, %824 : vector<8x32xf32>
    %826 = vector.broadcast %805 : vector<1x32xf32> to vector<8x32xf32>
    %827 = arith.mulf %825, %826 : vector<8x32xf32>
    %828 = vector.broadcast %807 : vector<1x32xf32> to vector<8x32xf32>
    %829 = arith.addf %827, %828 : vector<8x32xf32>
    %c1_338 = arith.constant 1 : index
    %c0_339 = arith.constant 0 : index
    %c0_340 = arith.constant 0 : index
    %830 = vector.load %arg20[%c1_338, %c0_339, %c0_340] : memref<2x32x32xbf16, #tpu.memory_space<vmem>>, vector<1x32x32xbf16>
    %831 = vector.shape_cast %830 : vector<1x32x32xbf16> to vector<32x32xbf16>
    %c1_341 = arith.constant 1 : index
    %c0_342 = arith.constant 0 : index
    %c0_343 = arith.constant 0 : index
    %832 = vector.load %arg21[%c1_341, %c0_342, %c0_343] : memref<2x1x32xf32, #tpu.memory_space<vmem>>, vector<1x1x32xf32>
    %833 = vector.shape_cast %832 : vector<1x1x32xf32> to vector<1x32xf32>
    %c1_344 = arith.constant 1 : index
    %c0_345 = arith.constant 0 : index
    %c0_346 = arith.constant 0 : index
    %834 = vector.load %arg22[%c1_344, %c0_345, %c0_346] : memref<2x32x64xbf16, #tpu.memory_space<vmem>>, vector<1x32x64xbf16>
    %835 = vector.shape_cast %834 : vector<1x32x64xbf16> to vector<32x64xbf16>
    %c1_347 = arith.constant 1 : index
    %c0_348 = arith.constant 0 : index
    %c0_349 = arith.constant 0 : index
    %836 = vector.load %arg23[%c1_347, %c0_348, %c0_349] : memref<2x1x64xf32, #tpu.memory_space<vmem>>, vector<1x1x64xf32>
    %837 = vector.shape_cast %836 : vector<1x1x64xf32> to vector<1x64xf32>
    %c1_350 = arith.constant 1 : index
    %c0_351 = arith.constant 0 : index
    %c0_352 = arith.constant 0 : index
    %838 = vector.load %arg24[%c1_350, %c0_351, %c0_352] : memref<2x32x32xbf16, #tpu.memory_space<vmem>>, vector<1x32x32xbf16>
    %839 = vector.shape_cast %838 : vector<1x32x32xbf16> to vector<32x32xbf16>
    %c1_353 = arith.constant 1 : index
    %c0_354 = arith.constant 0 : index
    %c0_355 = arith.constant 0 : index
    %840 = vector.load %arg25[%c1_353, %c0_354, %c0_355] : memref<2x1x32xf32, #tpu.memory_space<vmem>>, vector<1x1x32xf32>
    %841 = vector.shape_cast %840 : vector<1x1x32xf32> to vector<1x32xf32>
    %842 = arith.truncf %829 : vector<8x32xf32> to vector<8x32xbf16>
    %cst_356 = arith.constant dense<0.000000e+00> : vector<8x32xf32>
    %843 = tpu.matmul %842, %831, %cst_356 {dimension_numbers = #tpu.dot_dimension_numbers<[1], [0], [0], [1], [0, 0, 1, 1], [], []>} : vector<8x32xbf16>, vector<32x32xbf16>, vector<8x32xf32> -> vector<8x32xf32>
    %844 = vector.broadcast %833 : vector<1x32xf32> to vector<8x32xf32>
    %845 = arith.addf %843, %844 : vector<8x32xf32>
    %846 = arith.truncf %366 : vector<8x32xf32> to vector<8x32xbf16>
    %cst_357 = arith.constant dense<0.000000e+00> : vector<8x64xf32>
    %847 = tpu.matmul %846, %835, %cst_357 {dimension_numbers = #tpu.dot_dimension_numbers<[1], [0], [0], [1], [0, 0, 1, 1], [], []>} : vector<8x32xbf16>, vector<32x64xbf16>, vector<8x64xf32> -> vector<8x64xf32>
    %848 = vector.broadcast %837 : vector<1x64xf32> to vector<8x64xf32>
    %849 = arith.addf %847, %848 : vector<8x64xf32>
    %850 = vector.extract_strided_slice %849 {offsets = [0, 0], sizes = [8, 32], strides = [1, 1]} : vector<8x64xf32> to vector<8x32xf32>
    %851 = vector.extract_strided_slice %849 {offsets = [0, 32], sizes = [8, 32], strides = [1, 1]} : vector<8x64xf32> to vector<8x32xf32>
    %852 = vector.extract_strided_slice %845 {offsets = [0, 0], sizes = [8, 8], strides = [1, 1]} : vector<8x32xf32> to vector<8x8xf32>
    %853 = arith.truncf %852 : vector<8x8xf32> to vector<8x8xbf16>
    %854 = vector.extract_strided_slice %850 {offsets = [0, 0], sizes = [8, 8], strides = [1, 1]} : vector<8x32xf32> to vector<8x8xf32>
    %855 = arith.truncf %854 : vector<8x8xf32> to vector<8x8xbf16>
    %cst_358 = arith.constant dense<0.000000e+00> : vector<8x8xf32>
    %856 = tpu.matmul %853, %855, %cst_358 {dimension_numbers = #tpu.dot_dimension_numbers<[1], [1], [0], [0], [0, 0, 1, 0], [], []>} : vector<8x8xbf16>, vector<8x8xbf16>, vector<8x8xf32> -> vector<8x8xf32>
    %cst_359 = arith.constant 0.353553385 : f32
    %857 = vector.broadcast %cst_359 : f32 to vector<8x8xf32>
    %858 = arith.mulf %856, %857 : vector<8x8xf32>
    %cst_360 = arith.constant dense<0xFF800000> : vector<8xf32>
    %859 = vector.multi_reduction <maximumf>, %858, %cst_360 [1] : vector<8x8xf32> to vector<8xf32>
    %860 = vector.shape_cast %859 : vector<8xf32> to vector<8x1xf32>
    %861 = vector.broadcast %860 : vector<8x1xf32> to vector<8x8xf32>
    %862 = arith.subf %858, %861 : vector<8x8xf32>
    %863 = math.exp %862 : vector<8x8xf32>
    %cst_361 = arith.constant dense<0.000000e+00> : vector<8xf32>
    %864 = vector.multi_reduction <add>, %863, %cst_361 [1] : vector<8x8xf32> to vector<8xf32>
    %865 = vector.shape_cast %864 : vector<8xf32> to vector<8x1xf32>
    %cst_362 = arith.constant 9.99999971E-10 : f32
    %866 = vector.broadcast %cst_362 : f32 to vector<8x1xf32>
    %867 = arith.addf %865, %866 : vector<8x1xf32>
    %868 = vector.broadcast %867 : vector<8x1xf32> to vector<8x8xf32>
    %869 = arith.divf %863, %868 : vector<8x8xf32>
    %870 = arith.truncf %869 : vector<8x8xf32> to vector<8x8xbf16>
    %871 = vector.extract_strided_slice %851 {offsets = [0, 0], sizes = [8, 8], strides = [1, 1]} : vector<8x32xf32> to vector<8x8xf32>
    %872 = arith.truncf %871 : vector<8x8xf32> to vector<8x8xbf16>
    %cst_363 = arith.constant dense<0.000000e+00> : vector<8x8xf32>
    %873 = tpu.matmul %870, %872, %cst_363 {dimension_numbers = #tpu.dot_dimension_numbers<[1], [0], [0], [1], [0, 0, 1, 1], [], []>} : vector<8x8xbf16>, vector<8x8xbf16>, vector<8x8xf32> -> vector<8x8xf32>
    %874 = vector.extract_strided_slice %845 {offsets = [0, 8], sizes = [8, 8], strides = [1, 1]} : vector<8x32xf32> to vector<8x8xf32>
    %875 = arith.truncf %874 : vector<8x8xf32> to vector<8x8xbf16>
    %876 = vector.extract_strided_slice %850 {offsets = [0, 8], sizes = [8, 8], strides = [1, 1]} : vector<8x32xf32> to vector<8x8xf32>
    %877 = arith.truncf %876 : vector<8x8xf32> to vector<8x8xbf16>
    %cst_364 = arith.constant dense<0.000000e+00> : vector<8x8xf32>
    %878 = tpu.matmul %875, %877, %cst_364 {dimension_numbers = #tpu.dot_dimension_numbers<[1], [1], [0], [0], [0, 0, 1, 0], [], []>} : vector<8x8xbf16>, vector<8x8xbf16>, vector<8x8xf32> -> vector<8x8xf32>
    %cst_365 = arith.constant 0.353553385 : f32
    %879 = vector.broadcast %cst_365 : f32 to vector<8x8xf32>
    %880 = arith.mulf %878, %879 : vector<8x8xf32>
    %cst_366 = arith.constant dense<0xFF800000> : vector<8xf32>
    %881 = vector.multi_reduction <maximumf>, %880, %cst_366 [1] : vector<8x8xf32> to vector<8xf32>
    %882 = vector.shape_cast %881 : vector<8xf32> to vector<8x1xf32>
    %883 = vector.broadcast %882 : vector<8x1xf32> to vector<8x8xf32>
    %884 = arith.subf %880, %883 : vector<8x8xf32>
    %885 = math.exp %884 : vector<8x8xf32>
    %cst_367 = arith.constant dense<0.000000e+00> : vector<8xf32>
    %886 = vector.multi_reduction <add>, %885, %cst_367 [1] : vector<8x8xf32> to vector<8xf32>
    %887 = vector.shape_cast %886 : vector<8xf32> to vector<8x1xf32>
    %cst_368 = arith.constant 9.99999971E-10 : f32
    %888 = vector.broadcast %cst_368 : f32 to vector<8x1xf32>
    %889 = arith.addf %887, %888 : vector<8x1xf32>
    %890 = vector.broadcast %889 : vector<8x1xf32> to vector<8x8xf32>
    %891 = arith.divf %885, %890 : vector<8x8xf32>
    %892 = arith.truncf %891 : vector<8x8xf32> to vector<8x8xbf16>
    %893 = vector.extract_strided_slice %851 {offsets = [0, 8], sizes = [8, 8], strides = [1, 1]} : vector<8x32xf32> to vector<8x8xf32>
    %894 = arith.truncf %893 : vector<8x8xf32> to vector<8x8xbf16>
    %cst_369 = arith.constant dense<0.000000e+00> : vector<8x8xf32>
    %895 = tpu.matmul %892, %894, %cst_369 {dimension_numbers = #tpu.dot_dimension_numbers<[1], [0], [0], [1], [0, 0, 1, 1], [], []>} : vector<8x8xbf16>, vector<8x8xbf16>, vector<8x8xf32> -> vector<8x8xf32>
    %896 = vector.extract_strided_slice %845 {offsets = [0, 16], sizes = [8, 8], strides = [1, 1]} : vector<8x32xf32> to vector<8x8xf32>
    %897 = arith.truncf %896 : vector<8x8xf32> to vector<8x8xbf16>
    %898 = vector.extract_strided_slice %850 {offsets = [0, 16], sizes = [8, 8], strides = [1, 1]} : vector<8x32xf32> to vector<8x8xf32>
    %899 = arith.truncf %898 : vector<8x8xf32> to vector<8x8xbf16>
    %cst_370 = arith.constant dense<0.000000e+00> : vector<8x8xf32>
    %900 = tpu.matmul %897, %899, %cst_370 {dimension_numbers = #tpu.dot_dimension_numbers<[1], [1], [0], [0], [0, 0, 1, 0], [], []>} : vector<8x8xbf16>, vector<8x8xbf16>, vector<8x8xf32> -> vector<8x8xf32>
    %cst_371 = arith.constant 0.353553385 : f32
    %901 = vector.broadcast %cst_371 : f32 to vector<8x8xf32>
    %902 = arith.mulf %900, %901 : vector<8x8xf32>
    %cst_372 = arith.constant dense<0xFF800000> : vector<8xf32>
    %903 = vector.multi_reduction <maximumf>, %902, %cst_372 [1] : vector<8x8xf32> to vector<8xf32>
    %904 = vector.shape_cast %903 : vector<8xf32> to vector<8x1xf32>
    %905 = vector.broadcast %904 : vector<8x1xf32> to vector<8x8xf32>
    %906 = arith.subf %902, %905 : vector<8x8xf32>
    %907 = math.exp %906 : vector<8x8xf32>
    %cst_373 = arith.constant dense<0.000000e+00> : vector<8xf32>
    %908 = vector.multi_reduction <add>, %907, %cst_373 [1] : vector<8x8xf32> to vector<8xf32>
    %909 = vector.shape_cast %908 : vector<8xf32> to vector<8x1xf32>
    %cst_374 = arith.constant 9.99999971E-10 : f32
    %910 = vector.broadcast %cst_374 : f32 to vector<8x1xf32>
    %911 = arith.addf %909, %910 : vector<8x1xf32>
    %912 = vector.broadcast %911 : vector<8x1xf32> to vector<8x8xf32>
    %913 = arith.divf %907, %912 : vector<8x8xf32>
    %914 = arith.truncf %913 : vector<8x8xf32> to vector<8x8xbf16>
    %915 = vector.extract_strided_slice %851 {offsets = [0, 16], sizes = [8, 8], strides = [1, 1]} : vector<8x32xf32> to vector<8x8xf32>
    %916 = arith.truncf %915 : vector<8x8xf32> to vector<8x8xbf16>
    %cst_375 = arith.constant dense<0.000000e+00> : vector<8x8xf32>
    %917 = tpu.matmul %914, %916, %cst_375 {dimension_numbers = #tpu.dot_dimension_numbers<[1], [0], [0], [1], [0, 0, 1, 1], [], []>} : vector<8x8xbf16>, vector<8x8xbf16>, vector<8x8xf32> -> vector<8x8xf32>
    %918 = vector.extract_strided_slice %845 {offsets = [0, 24], sizes = [8, 8], strides = [1, 1]} : vector<8x32xf32> to vector<8x8xf32>
    %919 = arith.truncf %918 : vector<8x8xf32> to vector<8x8xbf16>
    %920 = vector.extract_strided_slice %850 {offsets = [0, 24], sizes = [8, 8], strides = [1, 1]} : vector<8x32xf32> to vector<8x8xf32>
    %921 = arith.truncf %920 : vector<8x8xf32> to vector<8x8xbf16>
    %cst_376 = arith.constant dense<0.000000e+00> : vector<8x8xf32>
    %922 = tpu.matmul %919, %921, %cst_376 {dimension_numbers = #tpu.dot_dimension_numbers<[1], [1], [0], [0], [0, 0, 1, 0], [], []>} : vector<8x8xbf16>, vector<8x8xbf16>, vector<8x8xf32> -> vector<8x8xf32>
    %cst_377 = arith.constant 0.353553385 : f32
    %923 = vector.broadcast %cst_377 : f32 to vector<8x8xf32>
    %924 = arith.mulf %922, %923 : vector<8x8xf32>
    %cst_378 = arith.constant dense<0xFF800000> : vector<8xf32>
    %925 = vector.multi_reduction <maximumf>, %924, %cst_378 [1] : vector<8x8xf32> to vector<8xf32>
    %926 = vector.shape_cast %925 : vector<8xf32> to vector<8x1xf32>
    %927 = vector.broadcast %926 : vector<8x1xf32> to vector<8x8xf32>
    %928 = arith.subf %924, %927 : vector<8x8xf32>
    %929 = math.exp %928 : vector<8x8xf32>
    %cst_379 = arith.constant dense<0.000000e+00> : vector<8xf32>
    %930 = vector.multi_reduction <add>, %929, %cst_379 [1] : vector<8x8xf32> to vector<8xf32>
    %931 = vector.shape_cast %930 : vector<8xf32> to vector<8x1xf32>
    %cst_380 = arith.constant 9.99999971E-10 : f32
    %932 = vector.broadcast %cst_380 : f32 to vector<8x1xf32>
    %933 = arith.addf %931, %932 : vector<8x1xf32>
    %934 = vector.broadcast %933 : vector<8x1xf32> to vector<8x8xf32>
    %935 = arith.divf %929, %934 : vector<8x8xf32>
    %936 = arith.truncf %935 : vector<8x8xf32> to vector<8x8xbf16>
    %937 = vector.extract_strided_slice %851 {offsets = [0, 24], sizes = [8, 8], strides = [1, 1]} : vector<8x32xf32> to vector<8x8xf32>
    %938 = arith.truncf %937 : vector<8x8xf32> to vector<8x8xbf16>
    %cst_381 = arith.constant dense<0.000000e+00> : vector<8x8xf32>
    %939 = tpu.matmul %936, %938, %cst_381 {dimension_numbers = #tpu.dot_dimension_numbers<[1], [0], [0], [1], [0, 0, 1, 1], [], []>} : vector<8x8xbf16>, vector<8x8xbf16>, vector<8x8xf32> -> vector<8x8xf32>
    %940 = tpu.concatenate %873, %895, %917, %939 in 1 : vector<8x8xf32>, vector<8x8xf32>, vector<8x8xf32>, vector<8x8xf32> -> vector<8x32xf32>
    %941 = arith.truncf %940 : vector<8x32xf32> to vector<8x32xbf16>
    %cst_382 = arith.constant dense<0.000000e+00> : vector<8x32xf32>
    %942 = tpu.matmul %941, %839, %cst_382 {dimension_numbers = #tpu.dot_dimension_numbers<[1], [0], [0], [1], [0, 0, 1, 1], [], []>} : vector<8x32xbf16>, vector<32x32xbf16>, vector<8x32xf32> -> vector<8x32xf32>
    %943 = vector.broadcast %841 : vector<1x32xf32> to vector<8x32xf32>
    %944 = arith.addf %942, %943 : vector<8x32xf32>
    %945 = arith.addf %829, %944 : vector<8x32xf32>
    %c1_383 = arith.constant 1 : index
    %c0_384 = arith.constant 0 : index
    %c0_385 = arith.constant 0 : index
    %946 = vector.load %arg32[%c1_383, %c0_384, %c0_385] : memref<2x1x32xf32, #tpu.memory_space<vmem>>, vector<1x1x32xf32>
    %947 = vector.shape_cast %946 : vector<1x1x32xf32> to vector<1x32xf32>
    %c1_386 = arith.constant 1 : index
    %c0_387 = arith.constant 0 : index
    %c0_388 = arith.constant 0 : index
    %948 = vector.load %arg33[%c1_386, %c0_387, %c0_388] : memref<2x1x32xf32, #tpu.memory_space<vmem>>, vector<1x1x32xf32>
    %949 = vector.shape_cast %948 : vector<1x1x32xf32> to vector<1x32xf32>
    %cst_389 = arith.constant dense<0.000000e+00> : vector<8xf32>
    %950 = vector.multi_reduction <add>, %945, %cst_389 [1] : vector<8x32xf32> to vector<8xf32>
    %951 = vector.shape_cast %950 : vector<8xf32> to vector<8x1xf32>
    %cst_390 = arith.constant 3.200000e+01 : f32
    %952 = vector.broadcast %cst_390 : f32 to vector<8x1xf32>
    %953 = arith.divf %951, %952 : vector<8x1xf32>
    %954 = vector.broadcast %953 : vector<8x1xf32> to vector<8x32xf32>
    %955 = arith.subf %945, %954 : vector<8x32xf32>
    %956 = arith.mulf %955, %955 : vector<8x32xf32>
    %cst_391 = arith.constant dense<0.000000e+00> : vector<8xf32>
    %957 = vector.multi_reduction <add>, %956, %cst_391 [1] : vector<8x32xf32> to vector<8xf32>
    %958 = vector.shape_cast %957 : vector<8xf32> to vector<8x1xf32>
    %cst_392 = arith.constant 3.200000e+01 : f32
    %959 = vector.broadcast %cst_392 : f32 to vector<8x1xf32>
    %960 = arith.divf %958, %959 : vector<8x1xf32>
    %961 = vector.broadcast %953 : vector<8x1xf32> to vector<8x32xf32>
    %962 = arith.subf %945, %961 : vector<8x32xf32>
    %cst_393 = arith.constant 9.99999974E-6 : f32
    %963 = vector.broadcast %cst_393 : f32 to vector<8x1xf32>
    %964 = arith.addf %960, %963 : vector<8x1xf32>
    %965 = math.rsqrt %964 : vector<8x1xf32>
    %966 = vector.broadcast %965 : vector<8x1xf32> to vector<8x32xf32>
    %967 = arith.mulf %962, %966 : vector<8x32xf32>
    %968 = vector.broadcast %947 : vector<1x32xf32> to vector<8x32xf32>
    %969 = arith.mulf %967, %968 : vector<8x32xf32>
    %970 = vector.broadcast %949 : vector<1x32xf32> to vector<8x32xf32>
    %971 = arith.addf %969, %970 : vector<8x32xf32>
    %c1_394 = arith.constant 1 : index
    %c0_395 = arith.constant 0 : index
    %c0_396 = arith.constant 0 : index
    %972 = vector.load %arg26[%c1_394, %c0_395, %c0_396] : memref<2x32x64xbf16, #tpu.memory_space<vmem>>, vector<1x32x64xbf16>
    %973 = vector.shape_cast %972 : vector<1x32x64xbf16> to vector<32x64xbf16>
    %c1_397 = arith.constant 1 : index
    %c0_398 = arith.constant 0 : index
    %c0_399 = arith.constant 0 : index
    %974 = vector.load %arg27[%c1_397, %c0_398, %c0_399] : memref<2x1x64xf32, #tpu.memory_space<vmem>>, vector<1x1x64xf32>
    %975 = vector.shape_cast %974 : vector<1x1x64xf32> to vector<1x64xf32>
    %c1_400 = arith.constant 1 : index
    %c0_401 = arith.constant 0 : index
    %c0_402 = arith.constant 0 : index
    %976 = vector.load %arg28[%c1_400, %c0_401, %c0_402] : memref<2x64x32xbf16, #tpu.memory_space<vmem>>, vector<1x64x32xbf16>
    %977 = vector.shape_cast %976 : vector<1x64x32xbf16> to vector<64x32xbf16>
    %c1_403 = arith.constant 1 : index
    %c0_404 = arith.constant 0 : index
    %c0_405 = arith.constant 0 : index
    %978 = vector.load %arg29[%c1_403, %c0_404, %c0_405] : memref<2x1x32xf32, #tpu.memory_space<vmem>>, vector<1x1x32xf32>
    %979 = vector.shape_cast %978 : vector<1x1x32xf32> to vector<1x32xf32>
    %980 = arith.truncf %971 : vector<8x32xf32> to vector<8x32xbf16>
    %cst_406 = arith.constant dense<0.000000e+00> : vector<8x64xf32>
    %981 = tpu.matmul %980, %973, %cst_406 {dimension_numbers = #tpu.dot_dimension_numbers<[1], [0], [0], [1], [0, 0, 1, 1], [], []>} : vector<8x32xbf16>, vector<32x64xbf16>, vector<8x64xf32> -> vector<8x64xf32>
    %982 = vector.broadcast %975 : vector<1x64xf32> to vector<8x64xf32>
    %983 = arith.addf %981, %982 : vector<8x64xf32>
    %cst_407 = arith.constant 0.000000e+00 : f32
    %984 = vector.broadcast %cst_407 : f32 to vector<8x64xf32>
    %985 = arith.maximumf %983, %984 : vector<8x64xf32>
    %986 = arith.truncf %985 : vector<8x64xf32> to vector<8x64xbf16>
    %cst_408 = arith.constant dense<0.000000e+00> : vector<8x32xf32>
    %987 = tpu.matmul %986, %977, %cst_408 {dimension_numbers = #tpu.dot_dimension_numbers<[1], [0], [0], [1], [0, 0, 1, 1], [], []>} : vector<8x64xbf16>, vector<64x32xbf16>, vector<8x32xf32> -> vector<8x32xf32>
    %988 = vector.broadcast %979 : vector<1x32xf32> to vector<8x32xf32>
    %989 = arith.addf %987, %988 : vector<8x32xf32>
    %990 = arith.addf %971, %989 : vector<8x32xf32>
    %c1_409 = arith.constant 1 : index
    %c0_410 = arith.constant 0 : index
    %c0_411 = arith.constant 0 : index
    %991 = vector.load %arg34[%c1_409, %c0_410, %c0_411] : memref<2x1x32xf32, #tpu.memory_space<vmem>>, vector<1x1x32xf32>
    %992 = vector.shape_cast %991 : vector<1x1x32xf32> to vector<1x32xf32>
    %c1_412 = arith.constant 1 : index
    %c0_413 = arith.constant 0 : index
    %c0_414 = arith.constant 0 : index
    %993 = vector.load %arg35[%c1_412, %c0_413, %c0_414] : memref<2x1x32xf32, #tpu.memory_space<vmem>>, vector<1x1x32xf32>
    %994 = vector.shape_cast %993 : vector<1x1x32xf32> to vector<1x32xf32>
    %cst_415 = arith.constant dense<0.000000e+00> : vector<8xf32>
    %995 = vector.multi_reduction <add>, %990, %cst_415 [1] : vector<8x32xf32> to vector<8xf32>
    %996 = vector.shape_cast %995 : vector<8xf32> to vector<8x1xf32>
    %cst_416 = arith.constant 3.200000e+01 : f32
    %997 = vector.broadcast %cst_416 : f32 to vector<8x1xf32>
    %998 = arith.divf %996, %997 : vector<8x1xf32>
    %999 = vector.broadcast %998 : vector<8x1xf32> to vector<8x32xf32>
    %1000 = arith.subf %990, %999 : vector<8x32xf32>
    %1001 = arith.mulf %1000, %1000 : vector<8x32xf32>
    %cst_417 = arith.constant dense<0.000000e+00> : vector<8xf32>
    %1002 = vector.multi_reduction <add>, %1001, %cst_417 [1] : vector<8x32xf32> to vector<8xf32>
    %1003 = vector.shape_cast %1002 : vector<8xf32> to vector<8x1xf32>
    %cst_418 = arith.constant 3.200000e+01 : f32
    %1004 = vector.broadcast %cst_418 : f32 to vector<8x1xf32>
    %1005 = arith.divf %1003, %1004 : vector<8x1xf32>
    %1006 = vector.broadcast %998 : vector<8x1xf32> to vector<8x32xf32>
    %1007 = arith.subf %990, %1006 : vector<8x32xf32>
    %cst_419 = arith.constant 9.99999974E-6 : f32
    %1008 = vector.broadcast %cst_419 : f32 to vector<8x1xf32>
    %1009 = arith.addf %1005, %1008 : vector<8x1xf32>
    %1010 = math.rsqrt %1009 : vector<8x1xf32>
    %1011 = vector.broadcast %1010 : vector<8x1xf32> to vector<8x32xf32>
    %1012 = arith.mulf %1007, %1011 : vector<8x32xf32>
    %1013 = vector.broadcast %992 : vector<1x32xf32> to vector<8x32xf32>
    %1014 = arith.mulf %1012, %1013 : vector<8x32xf32>
    %1015 = vector.broadcast %994 : vector<1x32xf32> to vector<8x32xf32>
    %1016 = arith.addf %1014, %1015 : vector<8x32xf32>
    %c0_420 = arith.constant 0 : index
    %c0_421 = arith.constant 0 : index
    %1017 = vector.load %arg36[%c0_420, %c0_421] : memref<32x128xbf16, #tpu.memory_space<vmem>>, vector<32x128xbf16>
    %1018 = arith.truncf %1016 : vector<8x32xf32> to vector<8x32xbf16>
    %cst_422 = arith.constant dense<0.000000e+00> : vector<8x128xf32>
    %1019 = tpu.matmul %1018, %1017, %cst_422 {dimension_numbers = #tpu.dot_dimension_numbers<[1], [0], [0], [1], [0, 0, 1, 1], [], []>} : vector<8x32xbf16>, vector<32x128xbf16>, vector<8x128xf32> -> vector<8x128xf32>
    %c0_423 = arith.constant 0 : index
    %c0_424 = arith.constant 0 : index
    %1020 = vector.load %arg37[%c0_423, %c0_424] : memref<1x128xf32, #tpu.memory_space<vmem>>, vector<1x128xf32>
    %1021 = vector.broadcast %1020 : vector<1x128xf32> to vector<8x128xf32>
    %1022 = arith.addf %1019, %1021 : vector<8x128xf32>
    %1023 = vector.shape_cast %1022 : vector<8x128xf32> to vector<1x8x128xf32>
    %c0_425 = arith.constant 0 : index
    %c0_426 = arith.constant 0 : index
    %c0_427 = arith.constant 0 : index
    %1024 = vector.load %arg38[%c0_425, %c0_426, %c0_427] : memref<1x8x128xf32, #tpu.memory_space<vmem>>, vector<1x8x128xf32>
    tpu.vector_store %arg38[%c0_425, %c0_426, %c0_427], %1023 {strides = array<i32>} : memref<1x8x128xf32, #tpu.memory_space<vmem>>, vector<1x8x128xf32>,
    return
  }
  func.func @transform_0(%arg0: i32) -> (i32, i32, i32) {
    %c0_i32 = arith.constant 0 : i32
    %c0_i32_0 = arith.constant 0 : i32
    %c0_i32_1 = arith.constant 0 : i32
    return %arg0, %c0_i32, %c0_i32_0 : i32, i32, i32
  }
  func.func @transform_1(%arg0: i32) -> (i32, i32, i32) {
    %c0_i32 = arith.constant 0 : i32
    %c0_i32_0 = arith.constant 0 : i32
    %c0_i32_1 = arith.constant 0 : i32
    return %arg0, %c0_i32, %c0_i32_0 : i32, i32, i32
  }
  func.func @transform_2(%arg0: i32) -> (i32, i32, i32) {
    %c0_i32 = arith.constant 0 : i32
    %c0_i32_0 = arith.constant 0 : i32
    %c0_i32_1 = arith.constant 0 : i32
    return %arg0, %c0_i32, %c0_i32_0 : i32, i32, i32
  }
  func.func @transform_3(%arg0: i32) -> (i32, i32, i32) {
    %c0_i32 = arith.constant 0 : i32
    %c0_i32_0 = arith.constant 0 : i32
    %c0_i32_1 = arith.constant 0 : i32
    %c0_i32_2 = arith.constant 0 : i32
    return %c0_i32, %c0_i32_0, %c0_i32_1 : i32, i32, i32
  }
  func.func @transform_4(%arg0: i32) -> (i32, i32, i32) {
    %c0_i32 = arith.constant 0 : i32
    %c0_i32_0 = arith.constant 0 : i32
    %c0_i32_1 = arith.constant 0 : i32
    %c0_i32_2 = arith.constant 0 : i32
    return %c0_i32, %c0_i32_0, %c0_i32_1 : i32, i32, i32
  }
  func.func @transform_5(%arg0: i32) -> (i32, i32, i32) {
    %c0_i32 = arith.constant 0 : i32
    %c0_i32_0 = arith.constant 0 : i32
    %c0_i32_1 = arith.constant 0 : i32
    %c0_i32_2 = arith.constant 0 : i32
    return %c0_i32, %c0_i32_0, %c0_i32_1 : i32, i32, i32
  }
  func.func @transform_6(%arg0: i32) -> (i32, i32, i32) {
    %c0_i32 = arith.constant 0 : i32
    %c0_i32_0 = arith.constant 0 : i32
    %c0_i32_1 = arith.constant 0 : i32
    %c0_i32_2 = arith.constant 0 : i32
    return %c0_i32, %c0_i32_0, %c0_i32_1 : i32, i32, i32
  }
  func.func @transform_7(%arg0: i32) -> (i32, i32, i32) {
    %c0_i32 = arith.constant 0 : i32
    %c0_i32_0 = arith.constant 0 : i32
    %c0_i32_1 = arith.constant 0 : i32
    %c0_i32_2 = arith.constant 0 : i32
    return %c0_i32, %c0_i32_0, %c0_i32_1 : i32, i32, i32
  }
  func.func @transform_8(%arg0: i32) -> (i32, i32, i32) {
    %c0_i32 = arith.constant 0 : i32
    %c0_i32_0 = arith.constant 0 : i32
    %c0_i32_1 = arith.constant 0 : i32
    %c0_i32_2 = arith.constant 0 : i32
    return %c0_i32, %c0_i32_0, %c0_i32_1 : i32, i32, i32
  }
  func.func @transform_9(%arg0: i32) -> (i32, i32, i32) {
    %c0_i32 = arith.constant 0 : i32
    %c0_i32_0 = arith.constant 0 : i32
    %c0_i32_1 = arith.constant 0 : i32
    %c0_i32_2 = arith.constant 0 : i32
    return %c0_i32, %c0_i32_0, %c0_i32_1 : i32, i32, i32
  }
  func.func @transform_10(%arg0: i32) -> (i32, i32, i32) {
    %c0_i32 = arith.constant 0 : i32
    %c0_i32_0 = arith.constant 0 : i32
    %c0_i32_1 = arith.constant 0 : i32
    %c0_i32_2 = arith.constant 0 : i32
    return %c0_i32, %c0_i32_0, %c0_i32_1 : i32, i32, i32
  }
  func.func @transform_11(%arg0: i32) -> (i32, i32, i32) {
    %c0_i32 = arith.constant 0 : i32
    %c0_i32_0 = arith.constant 0 : i32
    %c0_i32_1 = arith.constant 0 : i32
    %c0_i32_2 = arith.constant 0 : i32
    return %c0_i32, %c0_i32_0, %c0_i32_1 : i32, i32, i32
  }
  func.func @transform_12(%arg0: i32) -> (i32, i32, i32) {
    %c0_i32 = arith.constant 0 : i32
    %c0_i32_0 = arith.constant 0 : i32
    %c0_i32_1 = arith.constant 0 : i32
    %c0_i32_2 = arith.constant 0 : i32
    return %c0_i32, %c0_i32_0, %c0_i32_1 : i32, i32, i32
  }
  func.func @transform_13(%arg0: i32) -> (i32, i32, i32) {
    %c0_i32 = arith.constant 0 : i32
    %c0_i32_0 = arith.constant 0 : i32
    %c0_i32_1 = arith.constant 0 : i32
    %c0_i32_2 = arith.constant 0 : i32
    return %c0_i32, %c0_i32_0, %c0_i32_1 : i32, i32, i32
  }
  func.func @transform_14(%arg0: i32) -> (i32, i32, i32) {
    %c0_i32 = arith.constant 0 : i32
    %c0_i32_0 = arith.constant 0 : i32
    %c0_i32_1 = arith.constant 0 : i32
    %c0_i32_2 = arith.constant 0 : i32
    return %c0_i32, %c0_i32_0, %c0_i32_1 : i32, i32, i32
  }
  func.func @transform_15(%arg0: i32) -> (i32, i32, i32) {
    %c0_i32 = arith.constant 0 : i32
    %c0_i32_0 = arith.constant 0 : i32
    %c0_i32_1 = arith.constant 0 : i32
    %c0_i32_2 = arith.constant 0 : i32
    return %c0_i32, %c0_i32_0, %c0_i32_1 : i32, i32, i32
  }
  func.func @transform_16(%arg0: i32) -> (i32, i32, i32) {
    %c0_i32 = arith.constant 0 : i32
    %c0_i32_0 = arith.constant 0 : i32
    %c0_i32_1 = arith.constant 0 : i32
    %c0_i32_2 = arith.constant 0 : i32
    return %c0_i32, %c0_i32_0, %c0_i32_1 : i32, i32, i32
  }
  func.func @transform_17(%arg0: i32) -> (i32, i32, i32) {
    %c0_i32 = arith.constant 0 : i32
    %c0_i32_0 = arith.constant 0 : i32
    %c0_i32_1 = arith.constant 0 : i32
    %c0_i32_2 = arith.constant 0 : i32
    return %c0_i32, %c0_i32_0, %c0_i32_1 : i32, i32, i32
  }
  func.func @transform_18(%arg0: i32) -> (i32, i32, i32) {
    %c0_i32 = arith.constant 0 : i32
    %c0_i32_0 = arith.constant 0 : i32
    %c0_i32_1 = arith.constant 0 : i32
    %c0_i32_2 = arith.constant 0 : i32
    return %c0_i32, %c0_i32_0, %c0_i32_1 : i32, i32, i32
  }
  func.func @transform_19(%arg0: i32) -> (i32, i32, i32) {
    %c0_i32 = arith.constant 0 : i32
    %c0_i32_0 = arith.constant 0 : i32
    %c0_i32_1 = arith.constant 0 : i32
    %c0_i32_2 = arith.constant 0 : i32
    return %c0_i32, %c0_i32_0, %c0_i32_1 : i32, i32, i32
  }
  func.func @transform_20(%arg0: i32) -> (i32, i32, i32) {
    %c0_i32 = arith.constant 0 : i32
    %c0_i32_0 = arith.constant 0 : i32
    %c0_i32_1 = arith.constant 0 : i32
    %c0_i32_2 = arith.constant 0 : i32
    return %c0_i32, %c0_i32_0, %c0_i32_1 : i32, i32, i32
  }
  func.func @transform_21(%arg0: i32) -> (i32, i32, i32) {
    %c0_i32 = arith.constant 0 : i32
    %c0_i32_0 = arith.constant 0 : i32
    %c0_i32_1 = arith.constant 0 : i32
    %c0_i32_2 = arith.constant 0 : i32
    return %c0_i32, %c0_i32_0, %c0_i32_1 : i32, i32, i32
  }
  func.func @transform_22(%arg0: i32) -> (i32, i32, i32) {
    %c0_i32 = arith.constant 0 : i32
    %c0_i32_0 = arith.constant 0 : i32
    %c0_i32_1 = arith.constant 0 : i32
    %c0_i32_2 = arith.constant 0 : i32
    return %c0_i32, %c0_i32_0, %c0_i32_1 : i32, i32, i32
  }
  func.func @transform_23(%arg0: i32) -> (i32, i32, i32) {
    %c0_i32 = arith.constant 0 : i32
    %c0_i32_0 = arith.constant 0 : i32
    %c0_i32_1 = arith.constant 0 : i32
    %c0_i32_2 = arith.constant 0 : i32
    return %c0_i32, %c0_i32_0, %c0_i32_1 : i32, i32, i32
  }
  func.func @transform_24(%arg0: i32) -> (i32, i32, i32) {
    %c0_i32 = arith.constant 0 : i32
    %c0_i32_0 = arith.constant 0 : i32
    %c0_i32_1 = arith.constant 0 : i32
    %c0_i32_2 = arith.constant 0 : i32
    return %c0_i32, %c0_i32_0, %c0_i32_1 : i32, i32, i32
  }
  func.func @transform_25(%arg0: i32) -> (i32, i32, i32) {
    %c0_i32 = arith.constant 0 : i32
    %c0_i32_0 = arith.constant 0 : i32
    %c0_i32_1 = arith.constant 0 : i32
    %c0_i32_2 = arith.constant 0 : i32
    return %c0_i32, %c0_i32_0, %c0_i32_1 : i32, i32, i32
  }
  func.func @transform_26(%arg0: i32) -> (i32, i32, i32) {
    %c0_i32 = arith.constant 0 : i32
    %c0_i32_0 = arith.constant 0 : i32
    %c0_i32_1 = arith.constant 0 : i32
    %c0_i32_2 = arith.constant 0 : i32
    return %c0_i32, %c0_i32_0, %c0_i32_1 : i32, i32, i32
  }
  func.func @transform_27(%arg0: i32) -> (i32, i32, i32) {
    %c0_i32 = arith.constant 0 : i32
    %c0_i32_0 = arith.constant 0 : i32
    %c0_i32_1 = arith.constant 0 : i32
    %c0_i32_2 = arith.constant 0 : i32
    return %c0_i32, %c0_i32_0, %c0_i32_1 : i32, i32, i32
  }
  func.func @transform_28(%arg0: i32) -> (i32, i32, i32) {
    %c0_i32 = arith.constant 0 : i32
    %c0_i32_0 = arith.constant 0 : i32
    %c0_i32_1 = arith.constant 0 : i32
    %c0_i32_2 = arith.constant 0 : i32
    return %c0_i32, %c0_i32_0, %c0_i32_1 : i32, i32, i32
  }
  func.func @transform_29(%arg0: i32) -> (i32, i32, i32) {
    %c0_i32 = arith.constant 0 : i32
    %c0_i32_0 = arith.constant 0 : i32
    %c0_i32_1 = arith.constant 0 : i32
    %c0_i32_2 = arith.constant 0 : i32
    return %c0_i32, %c0_i32_0, %c0_i32_1 : i32, i32, i32
  }
  func.func @transform_30(%arg0: i32) -> (i32, i32, i32) {
    %c0_i32 = arith.constant 0 : i32
    %c0_i32_0 = arith.constant 0 : i32
    %c0_i32_1 = arith.constant 0 : i32
    %c0_i32_2 = arith.constant 0 : i32
    return %c0_i32, %c0_i32_0, %c0_i32_1 : i32, i32, i32
  }
  func.func @transform_31(%arg0: i32) -> (i32, i32, i32) {
    %c0_i32 = arith.constant 0 : i32
    %c0_i32_0 = arith.constant 0 : i32
    %c0_i32_1 = arith.constant 0 : i32
    %c0_i32_2 = arith.constant 0 : i32
    return %c0_i32, %c0_i32_0, %c0_i32_1 : i32, i32, i32
  }
  func.func @transform_32(%arg0: i32) -> (i32, i32, i32) {
    %c0_i32 = arith.constant 0 : i32
    %c0_i32_0 = arith.constant 0 : i32
    %c0_i32_1 = arith.constant 0 : i32
    %c0_i32_2 = arith.constant 0 : i32
    return %c0_i32, %c0_i32_0, %c0_i32_1 : i32, i32, i32
  }
  func.func @transform_33(%arg0: i32) -> (i32, i32, i32) {
    %c0_i32 = arith.constant 0 : i32
    %c0_i32_0 = arith.constant 0 : i32
    %c0_i32_1 = arith.constant 0 : i32
    %c0_i32_2 = arith.constant 0 : i32
    return %c0_i32, %c0_i32_0, %c0_i32_1 : i32, i32, i32
  }
  func.func @transform_34(%arg0: i32) -> (i32, i32, i32) {
    %c0_i32 = arith.constant 0 : i32
    %c0_i32_0 = arith.constant 0 : i32
    %c0_i32_1 = arith.constant 0 : i32
    %c0_i32_2 = arith.constant 0 : i32
    return %c0_i32, %c0_i32_0, %c0_i32_1 : i32, i32, i32
  }
  func.func @transform_35(%arg0: i32) -> (i32, i32) {
    %c0_i32 = arith.constant 0 : i32
    %c0_i32_0 = arith.constant 0 : i32
    %c0_i32_1 = arith.constant 0 : i32
    return %c0_i32, %c0_i32_0 : i32, i32
  }
  func.func @transform_36(%arg0: i32) -> (i32, i32) {
    %c0_i32 = arith.constant 0 : i32
    %c0_i32_0 = arith.constant 0 : i32
    %c0_i32_1 = arith.constant 0 : i32
    return %c0_i32, %c0_i32_0 : i32, i32
  }
  func.func @transform_37(%arg0: i32) -> (i32, i32, i32) {
    %c0_i32 = arith.constant 0 : i32
    %c0_i32_0 = arith.constant 0 : i32
    %c0_i32_1 = arith.constant 0 : i32
    return %arg0, %c0_i32, %c0_i32_0 : i32, i32, i32
  }
}

</mosaic_0001>

<llo_original>
// kernel: transformer_forward.1
$region0: #{transformer_forward.1}
  #allocation0 [shape = 'u32[]', space=smem, size = 0x4, offset = 0x4, fixed_abs, tag = 'smem constant byte address 0x4 - core index']
  #allocation1 [shape = 'u32[144,128]{1,0:T(1,128)}', space=vmem, size = 0x12000, scoped, tag = 'internal scratch']
  %s0 = inlined_call_operand.smem [shape: u32[38], index: -1, kind: input, shape index: {}]
  %s1 = sld [smem:[%s0]]
  %s2 = scalar_lea.smem %s0, 1
  %s3 = sld [smem:[%s2]]
  %s4 = scalar_lea.smem %s0, 2
  %s5 = sld [smem:[%s4]]
  %s6 = scalar_lea.smem %s0, 3
  %s7 = sld [smem:[%s6]]
  %s8 = scalar_lea.smem %s0, 4
  %s9 = sld [smem:[%s8]]
  %s10 = scalar_lea.smem %s0, 5
  %s11 = sld [smem:[%s10]]
  %s12 = scalar_lea.smem %s0, 6
  %s13 = sld [smem:[%s12]]
  %s14 = scalar_lea.smem %s0, 7
  %s15 = sld [smem:[%s14]]
  %s16 = scalar_lea.smem %s0, 8
  %s17 = sld [smem:[%s16]]
  %s18 = scalar_lea.smem %s0, 9
  %s19 = sld [smem:[%s18]]
  %s20 = scalar_lea.smem %s0, 10
  %s21 = sld [smem:[%s20]]
  %s22 = scalar_lea.smem %s0, 11
  %s23 = sld [smem:[%s22]]
  %s24 = scalar_lea.smem %s0, 12
  %s25 = sld [smem:[%s24]]
  %s26 = scalar_lea.smem %s0, 13
  %s27 = sld [smem:[%s26]]
  %s28 = scalar_lea.smem %s0, 14
  %s29 = sld [smem:[%s28]]
  %s30 = scalar_lea.smem %s0, 15
  %s31 = sld [smem:[%s30]]
  %s32 = scalar_lea.smem %s0, 16
  %s33 = sld [smem:[%s32]]
  %s34 = scalar_lea.smem %s0, 17
  %s35 = sld [smem:[%s34]]
  %s36 = scalar_lea.smem %s0, 18
  %s37 = sld [smem:[%s36]]
  %s38 = scalar_lea.smem %s0, 19
  %s39 = sld [smem:[%s38]]
  %s40 = scalar_lea.smem %s0, 20
  %s41 = sld [smem:[%s40]]
  %s42 = scalar_lea.smem %s0, 21
  %s43 = sld [smem:[%s42]]
  %s44 = scalar_lea.smem %s0, 22
  %s45 = sld [smem:[%s44]]
  %s46 = scalar_lea.smem %s0, 23
  %s47 = sld [smem:[%s46]]
  %s48 = scalar_lea.smem %s0, 24
  %s49 = sld [smem:[%s48]]
  %s50 = scalar_lea.smem %s0, 25
  %s51 = sld [smem:[%s50]]
  %s52 = scalar_lea.smem %s0, 26
  %s53 = sld [smem:[%s52]]
  %s54 = scalar_lea.smem %s0, 27
  %s55 = sld [smem:[%s54]]
  %s56 = scalar_lea.smem %s0, 28
  %s57 = sld [smem:[%s56]]
  %s58 = scalar_lea.smem %s0, 29
  %s59 = sld [smem:[%s58]]
  %s60 = scalar_lea.smem %s0, 30
  %s61 = sld [smem:[%s60]]
  %s62 = scalar_lea.smem %s0, 31
  %s63 = sld [smem:[%s62]]
  %s64 = scalar_lea.smem %s0, 32
  %s65 = sld [smem:[%s64]]
  %s66 = scalar_lea.smem %s0, 33
  %s67 = sld [smem:[%s66]]
  %s68 = scalar_lea.smem %s0, 34
  %s69 = sld [smem:[%s68]]
  %s70 = scalar_lea.smem %s0, 35
  %s71 = sld [smem:[%s70]]
  %s72 = scalar_lea.smem %s0, 36
  %s73 = sld [smem:[%s72]]
  %s74 = scalar_lea.smem %s0, 37
  %s75 = sld [smem:[%s74]]
  %s76 = sld [smem:[#allocation0]]
  $region181: #{transformer_forward.1} parent=0
    _
  %s78 = ssub.s32 1, %s76
  %s79 = scalar_select 0, %s78, %s76
  $region1: #{transformer_forward.1} parent=0
    #allocation2 [shape = 'u8[8192]{0}', space=vmem, size = 0x2000, scoped, tag = 'output window, operand 0']
    #allocation3 [shape = 's32[2]{0}', space=sflag, size = 0x8, scoped, tag = 'scoped memory for transformer_forward.1']
    %80 = vsyncpa [#allocation3], 0
    %s81 = scalar_lea.sflag [#allocation3], 1
    %82 = vsyncpa %s81, 0
    loop: start=0, step=1, limit=4
    $region2: #{transformer_forward.1} parent=1 // loop_pre_header
      _
    $region3: #{transformer_forward.1} parent=1 // loop_header
      %s84 = sphi 0, %s88
      %p85 = scmp.ge.s32.totalorder %s84, 4
      %s94 = sphi 0, %s96
      %s97 = sphi 0, %s94
      %s98 = sphi 0, %s97
      %s114 = sphi 0, %s98
      %s120 = sphi 0, %s122
      %s123 = sphi 0, %s120
      %s124 = sphi 0, %s123
      %s140 = sphi 0, %s124
      %s146 = sphi 0, %s148
      %s149 = sphi 0, %s146
      %s150 = sphi 0, %s149
      %s166 = sphi 0, %s150
      %s170 = sphi 0, %s170
      %s172 = sphi 0, %s170
      %s173 = sphi 0, %s172
      %s187 = sphi 0, %s173
      %s191 = sphi 0, %s191
      %s193 = sphi 0, %s191
      %s194 = sphi 0, %s193
      %s208 = sphi 0, %s194
      %s212 = sphi 0, %s212
      %s214 = sphi 0, %s212
      %s215 = sphi 0, %s214
      %s229 = sphi 0, %s215
      %s233 = sphi 0, %s233
      %s235 = sphi 0, %s233
      %s236 = sphi 0, %s235
      %s250 = sphi 0, %s236
      %s254 = sphi 0, %s254
      %s256 = sphi 0, %s254
      %s257 = sphi 0, %s256
      %s271 = sphi 0, %s257
      %s275 = sphi 0, %s275
      %s277 = sphi 0, %s275
      %s278 = sphi 0, %s277
      %s292 = sphi 0, %s278
      %s296 = sphi 0, %s296
      %s298 = sphi 0, %s296
      %s299 = sphi 0, %s298
      %s313 = sphi 0, %s299
      %s317 = sphi 0, %s317
      %s319 = sphi 0, %s317
      %s320 = sphi 0, %s319
      %s334 = sphi 0, %s320
      %s338 = sphi 0, %s338
      %s340 = sphi 0, %s338
      %s341 = sphi 0, %s340
      %s355 = sphi 0, %s341
      %s359 = sphi 0, %s359
      %s361 = sphi 0, %s359
      %s362 = sphi 0, %s361
      %s376 = sphi 0, %s362
      %s380 = sphi 0, %s380
      %s382 = sphi 0, %s380
      %s383 = sphi 0, %s382
      %s397 = sphi 0, %s383
      %s401 = sphi 0, %s401
      %s403 = sphi 0, %s401
      %s404 = sphi 0, %s403
      %s418 = sphi 0, %s404
      %s422 = sphi 0, %s422
      %s424 = sphi 0, %s422
      %s425 = sphi 0, %s424
      %s439 = sphi 0, %s425
      %s443 = sphi 0, %s443
      %s445 = sphi 0, %s443
      %s446 = sphi 0, %s445
      %s460 = sphi 0, %s446
      %s464 = sphi 0, %s464
      %s466 = sphi 0, %s464
      %s467 = sphi 0, %s466
      %s481 = sphi 0, %s467
      %s485 = sphi 0, %s485
      %s487 = sphi 0, %s485
      %s488 = sphi 0, %s487
      %s502 = sphi 0, %s488
      %s506 = sphi 0, %s506
      %s508 = sphi 0, %s506
      %s509 = sphi 0, %s508
      %s523 = sphi 0, %s509
      %s527 = sphi 0, %s527
      %s529 = sphi 0, %s527
      %s530 = sphi 0, %s529
      %s544 = sphi 0, %s530
      %s548 = sphi 0, %s548
      %s550 = sphi 0, %s548
      %s551 = sphi 0, %s550
      %s565 = sphi 0, %s551
      %s569 = sphi 0, %s569
      %s571 = sphi 0, %s569
      %s572 = sphi 0, %s571
      %s586 = sphi 0, %s572
      %s590 = sphi 0, %s590
      %s592 = sphi 0, %s590
      %s593 = sphi 0, %s592
      %s607 = sphi 0, %s593
      %s611 = sphi 0, %s611
      %s613 = sphi 0, %s611
      %s614 = sphi 0, %s613
      %s628 = sphi 0, %s614
      %s632 = sphi 0, %s632
      %s634 = sphi 0, %s632
      %s635 = sphi 0, %s634
      %s649 = sphi 0, %s635
      %s653 = sphi 0, %s653
      %s655 = sphi 0, %s653
      %s656 = sphi 0, %s655
      %s670 = sphi 0, %s656
      %s674 = sphi 0, %s674
      %s676 = sphi 0, %s674
      %s677 = sphi 0, %s676
      %s691 = sphi 0, %s677
      %s695 = sphi 0, %s695
      %s697 = sphi 0, %s695
      %s698 = sphi 0, %s697
      %s712 = sphi 0, %s698
      %s716 = sphi 0, %s716
      %s718 = sphi 0, %s716
      %s719 = sphi 0, %s718
      %s733 = sphi 0, %s719
      %s737 = sphi 0, %s737
      %s739 = sphi 0, %s737
      %s740 = sphi 0, %s739
      %s754 = sphi 0, %s740
      %s758 = sphi 0, %s758
      %s760 = sphi 0, %s758
      %s761 = sphi 0, %s760
      %s775 = sphi 0, %s761
      %s779 = sphi 0, %s779
      %s781 = sphi 0, %s779
      %s782 = sphi 0, %s781
      %s796 = sphi 0, %s782
      %s800 = sphi 0, %s800
      %s802 = sphi 0, %s800
      %s803 = sphi 0, %s802
      %s817 = sphi 0, %s803
      %s821 = sphi 0, %s821
      %s823 = sphi 0, %s821
      %s824 = sphi 0, %s823
      %s838 = sphi 0, %s824
      %s842 = sphi 0, %s842
      %s844 = sphi 0, %s842
      %s845 = sphi 0, %s844
      %s859 = sphi 0, %s845
      %s863 = sphi 0, %s863
      %s865 = sphi 0, %s863
      %s866 = sphi 0, %s865
      %s880 = sphi 0, %s866
      %s886 = sphi 0, %s888
      %s889 = sphi 0, %s886
      %s890 = sphi 0, %s889
      %s906 = sphi 0, %s890
    $region4: #{transformer_forward.1} parent=1 // loop_header_branch
      %87 = sbr.rel (%p85) target = $region8
    $region5: #{transformer_forward.1} parent=1 // loop_body
      %s89 = ssub.s32 %s84, 1
      %s90 = ssub.s32 %s84, 2
      %s91 = sadd.s32 %s84, 1
      %s92 = ssub.s32 %s84, %s91
      %p93 = scmp.eq.s32.totalorder %s92, 0
      %s95 = sadd.s32 %s94, 1
      %s96 = scalar_select %p93, %s94, %s95
      %p99 = pneg %p93
      %p100 = scmp.eq.s32.totalorder %s84, 1
      %p101 = por %p99, %p100
      %p102 = scmp.ne.s32.totalorder %s94, %s97
      %p103 = scmp.eq.s32.totalorder %s84, 0
      %p104 = por %p102, %p103
      %p105 = scmp.ne.s32.totalorder %s94, %s97
      %p106 = scmp.eq.s32.totalorder %s89, 1
      %p107 = por %p105, %p106
      %p108 = scmp.ne.s32.totalorder %s97, %s98
      %p109 = scmp.eq.s32.totalorder %s89, 0
      %p110 = por %p108, %p109
      %p111 = scmp.ne.s32.totalorder %s97, %s98
      %p112 = scmp.eq.s32.totalorder %s90, 1
      %p113 = por %p111, %p112
      %p115 = scmp.ne.s32.totalorder %s98, %s114
      %p116 = scmp.eq.s32.totalorder %s90, 0
      %p117 = por %p115, %p116
      %s118 = ssub.s32 %s84, %s91
      %p119 = scmp.eq.s32.totalorder %s118, 0
      %s121 = sadd.s32 %s120, 1
      %s122 = scalar_select %p119, %s120, %s121
      %p125 = pneg %p119
      %p126 = scmp.eq.s32.totalorder %s84, 1
      %p127 = por %p125, %p126
      %p128 = scmp.ne.s32.totalorder %s120, %s123
      %p129 = scmp.eq.s32.totalorder %s84, 0
      %p130 = por %p128, %p129
      %p131 = scmp.ne.s32.totalorder %s120, %s123
      %p132 = scmp.eq.s32.totalorder %s89, 1
      %p133 = por %p131, %p132
      %p134 = scmp.ne.s32.totalorder %s123, %s124
      %p135 = scmp.eq.s32.totalorder %s89, 0
      %p136 = por %p134, %p135
      %p137 = scmp.ne.s32.totalorder %s123, %s124
      %p138 = scmp.eq.s32.totalorder %s90, 1
      %p139 = por %p137, %p138
      %p141 = scmp.ne.s32.totalorder %s124, %s140
      %p142 = scmp.eq.s32.totalorder %s90, 0
      %p143 = por %p141, %p142
      %s144 = ssub.s32 %s84, %s91
      %p145 = scmp.eq.s32.totalorder %s144, 0
      %s147 = sadd.s32 %s146, 1
      %s148 = scalar_select %p145, %s146, %s147
      %p151 = pneg %p145
      %p152 = scmp.eq.s32.totalorder %s84, 1
      %p153 = por %p151, %p152
      %p154 = scmp.ne.s32.totalorder %s146, %s149
      %p155 = scmp.eq.s32.totalorder %s84, 0
      %p156 = por %p154, %p155
      %p157 = scmp.ne.s32.totalorder %s146, %s149
      %p158 = scmp.eq.s32.totalorder %s89, 1
      %p159 = por %p157, %p158
      %p160 = scmp.ne.s32.totalorder %s149, %s150
      %p161 = scmp.eq.s32.totalorder %s89, 0
      %p162 = por %p160, %p161
      %p163 = scmp.ne.s32.totalorder %s149, %s150
      %p164 = scmp.eq.s32.totalorder %s90, 1
      %p165 = por %p163, %p164
      %p167 = scmp.ne.s32.totalorder %s150, %s166
      %p168 = scmp.eq.s32.totalorder %s90, 0
      %p169 = por %p167, %p168
      %s171 = sadd.s32 %s170, 1
      %p174 = scmp.eq.s32.totalorder %s84, 1
      %p175 = scmp.ne.s32.totalorder %s170, %s172
      %p176 = scmp.eq.s32.totalorder %s84, 0
      %p177 = por %p175, %p176
      %p178 = scmp.ne.s32.totalorder %s170, %s172
      %p179 = scmp.eq.s32.totalorder %s89, 1
      %p180 = por %p178, %p179
      %p181 = scmp.ne.s32.totalorder %s172, %s173
      %p182 = scmp.eq.s32.totalorder %s89, 0
      %p183 = por %p181, %p182
      %p184 = scmp.ne.s32.totalorder %s172, %s173
      %p185 = scmp.eq.s32.totalorder %s90, 1
      %p186 = por %p184, %p185
      %p188 = scmp.ne.s32.totalorder %s173, %s187
      %p189 = scmp.eq.s32.totalorder %s90, 0
      %p190 = por %p188, %p189
      %s192 = sadd.s32 %s191, 1
      %p195 = scmp.eq.s32.totalorder %s84, 1
      %p196 = scmp.ne.s32.totalorder %s191, %s193
      %p197 = scmp.eq.s32.totalorder %s84, 0
      %p198 = por %p196, %p197
      %p199 = scmp.ne.s32.totalorder %s191, %s193
      %p200 = scmp.eq.s32.totalorder %s89, 1
      %p201 = por %p199, %p200
      %p202 = scmp.ne.s32.totalorder %s193, %s194
      %p203 = scmp.eq.s32.totalorder %s89, 0
      %p204 = por %p202, %p203
      %p205 = scmp.ne.s32.totalorder %s193, %s194
      %p206 = scmp.eq.s32.totalorder %s90, 1
      %p207 = por %p205, %p206
      %p209 = scmp.ne.s32.totalorder %s194, %s208
      %p210 = scmp.eq.s32.totalorder %s90, 0
      %p211 = por %p209, %p210
      %s213 = sadd.s32 %s212, 1
      %p216 = scmp.eq.s32.totalorder %s84, 1
      %p217 = scmp.ne.s32.totalorder %s212, %s214
      %p218 = scmp.eq.s32.totalorder %s84, 0
      %p219 = por %p217, %p218
      %p220 = scmp.ne.s32.totalorder %s212, %s214
      %p221 = scmp.eq.s32.totalorder %s89, 1
      %p222 = por %p220, %p221
      %p223 = scmp.ne.s32.totalorder %s214, %s215
      %p224 = scmp.eq.s32.totalorder %s89, 0
      %p225 = por %p223, %p224
      %p226 = scmp.ne.s32.totalorder %s214, %s215
      %p227 = scmp.eq.s32.totalorder %s90, 1
      %p228 = por %p226, %p227
      %p230 = scmp.ne.s32.totalorder %s215, %s229
      %p231 = scmp.eq.s32.totalorder %s90, 0
      %p232 = por %p230, %p231
      %s234 = sadd.s32 %s233, 1
      %p237 = scmp.eq.s32.totalorder %s84, 1
      %p238 = scmp.ne.s32.totalorder %s233, %s235
      %p239 = scmp.eq.s32.totalorder %s84, 0
      %p240 = por %p238, %p239
      %p241 = scmp.ne.s32.totalorder %s233, %s235
      %p242 = scmp.eq.s32.totalorder %s89, 1
      %p243 = por %p241, %p242
      %p244 = scmp.ne.s32.totalorder %s235, %s236
      %p245 = scmp.eq.s32.totalorder %s89, 0
      %p246 = por %p244, %p245
      %p247 = scmp.ne.s32.totalorder %s235, %s236
      %p248 = scmp.eq.s32.totalorder %s90, 1
      %p249 = por %p247, %p248
      %p251 = scmp.ne.s32.totalorder %s236, %s250
      %p252 = scmp.eq.s32.totalorder %s90, 0
      %p253 = por %p251, %p252
      %s255 = sadd.s32 %s254, 1
      %p258 = scmp.eq.s32.totalorder %s84, 1
      %p259 = scmp.ne.s32.totalorder %s254, %s256
      %p260 = scmp.eq.s32.totalorder %s84, 0
      %p261 = por %p259, %p260
      %p262 = scmp.ne.s32.totalorder %s254, %s256
      %p263 = scmp.eq.s32.totalorder %s89, 1
      %p264 = por %p262, %p263
      %p265 = scmp.ne.s32.totalorder %s256, %s257
      %p266 = scmp.eq.s32.totalorder %s89, 0
      %p267 = por %p265, %p266
      %p268 = scmp.ne.s32.totalorder %s256, %s257
      %p269 = scmp.eq.s32.totalorder %s90, 1
      %p270 = por %p268, %p269
      %p272 = scmp.ne.s32.totalorder %s257, %s271
      %p273 = scmp.eq.s32.totalorder %s90, 0
      %p274 = por %p272, %p273
      %s276 = sadd.s32 %s275, 1
      %p279 = scmp.eq.s32.totalorder %s84, 1
      %p280 = scmp.ne.s32.totalorder %s275, %s277
      %p281 = scmp.eq.s32.totalorder %s84, 0
      %p282 = por %p280, %p281
      %p283 = scmp.ne.s32.totalorder %s275, %s277
      %p284 = scmp.eq.s32.totalorder %s89, 1
      %p285 = por %p283, %p284
      %p286 = scmp.ne.s32.totalorder %s277, %s278
      %p287 = scmp.eq.s32.totalorder %s89, 0
      %p288 = por %p286, %p287
      %p289 = scmp.ne.s32.totalorder %s277, %s278
      %p290 = scmp.eq.s32.totalorder %s90, 1
      %p291 = por %p289, %p290
      %p293 = scmp.ne.s32.totalorder %s278, %s292
      %p294 = scmp.eq.s32.totalorder %s90, 0
      %p295 = por %p293, %p294
      %s297 = sadd.s32 %s296, 1
      %p300 = scmp.eq.s32.totalorder %s84, 1
      %p301 = scmp.ne.s32.totalorder %s296, %s298
      %p302 = scmp.eq.s32.totalorder %s84, 0
      %p303 = por %p301, %p302
      %p304 = scmp.ne.s32.totalorder %s296, %s298
      %p305 = scmp.eq.s32.totalorder %s89, 1
      %p306 = por %p304, %p305
      %p307 = scmp.ne.s32.totalorder %s298, %s299
      %p308 = scmp.eq.s32.totalorder %s89, 0
      %p309 = por %p307, %p308
      %p310 = scmp.ne.s32.totalorder %s298, %s299
      %p311 = scmp.eq.s32.totalorder %s90, 1
      %p312 = por %p310, %p311
      %p314 = scmp.ne.s32.totalorder %s299, %s313
      %p315 = scmp.eq.s32.totalorder %s90, 0
      %p316 = por %p314, %p315
      %s318 = sadd.s32 %s317, 1
      %p321 = scmp.eq.s32.totalorder %s84, 1
      %p322 = scmp.ne.s32.totalorder %s317, %s319
      %p323 = scmp.eq.s32.totalorder %s84, 0
      %p324 = por %p322, %p323
      %p325 = scmp.ne.s32.totalorder %s317, %s319
      %p326 = scmp.eq.s32.totalorder %s89, 1
      %p327 = por %p325, %p326
      %p328 = scmp.ne.s32.totalorder %s319, %s320
      %p329 = scmp.eq.s32.totalorder %s89, 0
      %p330 = por %p328, %p329
      %p331 = scmp.ne.s32.totalorder %s319, %s320
      %p332 = scmp.eq.s32.totalorder %s90, 1
      %p333 = por %p331, %p332
      %p335 = scmp.ne.s32.totalorder %s320, %s334
      %p336 = scmp.eq.s32.totalorder %s90, 0
      %p337 = por %p335, %p336
      %s339 = sadd.s32 %s338, 1
      %p342 = scmp.eq.s32.totalorder %s84, 1
      %p343 = scmp.ne.s32.totalorder %s338, %s340
      %p344 = scmp.eq.s32.totalorder %s84, 0
      %p345 = por %p343, %p344
      %p346 = scmp.ne.s32.totalorder %s338, %s340
      %p347 = scmp.eq.s32.totalorder %s89, 1
      %p348 = por %p346, %p347
      %p349 = scmp.ne.s32.totalorder %s340, %s341
      %p350 = scmp.eq.s32.totalorder %s89, 0
      %p351 = por %p349, %p350
      %p352 = scmp.ne.s32.totalorder %s340, %s341
      %p353 = scmp.eq.s32.totalorder %s90, 1
      %p354 = por %p352, %p353
      %p356 = scmp.ne.s32.totalorder %s341, %s355
      %p357 = scmp.eq.s32.totalorder %s90, 0
      %p358 = por %p356, %p357
      %s360 = sadd.s32 %s359, 1
      %p363 = scmp.eq.s32.totalorder %s84, 1
      %p364 = scmp.ne.s32.totalorder %s359, %s361
      %p365 = scmp.eq.s32.totalorder %s84, 0
      %p366 = por %p364, %p365
      %p367 = scmp.ne.s32.totalorder %s359, %s361
      %p368 = scmp.eq.s32.totalorder %s89, 1
      %p369 = por %p367, %p368
      %p370 = scmp.ne.s32.totalorder %s361, %s362
      %p371 = scmp.eq.s32.totalorder %s89, 0
      %p372 = por %p370, %p371
      %p373 = scmp.ne.s32.totalorder %s361, %s362
      %p374 = scmp.eq.s32.totalorder %s90, 1
      %p375 = por %p373, %p374
      %p377 = scmp.ne.s32.totalorder %s362, %s376
      %p378 = scmp.eq.s32.totalorder %s90, 0
      %p379 = por %p377, %p378
      %s381 = sadd.s32 %s380, 1
      %p384 = scmp.eq.s32.totalorder %s84, 1
      %p385 = scmp.ne.s32.totalorder %s380, %s382
      %p386 = scmp.eq.s32.totalorder %s84, 0
      %p387 = por %p385, %p386
      %p388 = scmp.ne.s32.totalorder %s380, %s382
      %p389 = scmp.eq.s32.totalorder %s89, 1
      %p390 = por %p388, %p389
      %p391 = scmp.ne.s32.totalorder %s382, %s383
      %p392 = scmp.eq.s32.totalorder %s89, 0
      %p393 = por %p391, %p392
      %p394 = scmp.ne.s32.totalorder %s382, %s383
      %p395 = scmp.eq.s32.totalorder %s90, 1
      %p396 = por %p394, %p395
      %p398 = scmp.ne.s32.totalorder %s383, %s397
      %p399 = scmp.eq.s32.totalorder %s90, 0
      %p400 = por %p398, %p399
      %s402 = sadd.s32 %s401, 1
      %p405 = scmp.eq.s32.totalorder %s84, 1
      %p406 = scmp.ne.s32.totalorder %s401, %s403
      %p407 = scmp.eq.s32.totalorder %s84, 0
      %p408 = por %p406, %p407
      %p409 = scmp.ne.s32.totalorder %s401, %s403
      %p410 = scmp.eq.s32.totalorder %s89, 1
      %p411 = por %p409, %p410
      %p412 = scmp.ne.s32.totalorder %s403, %s404
      %p413 = scmp.eq.s32.totalorder %s89, 0
      %p414 = por %p412, %p413
      %p415 = scmp.ne.s32.totalorder %s403, %s404
      %p416 = scmp.eq.s32.totalorder %s90, 1
      %p417 = por %p415, %p416
      %p419 = scmp.ne.s32.totalorder %s404, %s418
      %p420 = scmp.eq.s32.totalorder %s90, 0
      %p421 = por %p419, %p420
      %s423 = sadd.s32 %s422, 1
      %p426 = scmp.eq.s32.totalorder %s84, 1
      %p427 = scmp.ne.s32.totalorder %s422, %s424
      %p428 = scmp.eq.s32.totalorder %s84, 0
      %p429 = por %p427, %p428
      %p430 = scmp.ne.s32.totalorder %s422, %s424
      %p431 = scmp.eq.s32.totalorder %s89, 1
      %p432 = por %p430, %p431
      %p433 = scmp.ne.s32.totalorder %s424, %s425
      %p434 = scmp.eq.s32.totalorder %s89, 0
      %p435 = por %p433, %p434
      %p436 = scmp.ne.s32.totalorder %s424, %s425
      %p437 = scmp.eq.s32.totalorder %s90, 1
      %p438 = por %p436, %p437
      %p440 = scmp.ne.s32.totalorder %s425, %s439
      %p441 = scmp.eq.s32.totalorder %s90, 0
      %p442 = por %p440, %p441
      %s444 = sadd.s32 %s443, 1
      %p447 = scmp.eq.s32.totalorder %s84, 1
      %p448 = scmp.ne.s32.totalorder %s443, %s445
      %p449 = scmp.eq.s32.totalorder %s84, 0
      %p450 = por %p448, %p449
      %p451 = scmp.ne.s32.totalorder %s443, %s445
      %p452 = scmp.eq.s32.totalorder %s89, 1
      %p453 = por %p451, %p452
      %p454 = scmp.ne.s32.totalorder %s445, %s446
      %p455 = scmp.eq.s32.totalorder %s89, 0
      %p456 = por %p454, %p455
      %p457 = scmp.ne.s32.totalorder %s445, %s446
      %p458 = scmp.eq.s32.totalorder %s90, 1
      %p459 = por %p457, %p458
      %p461 = scmp.ne.s32.totalorder %s446, %s460
      %p462 = scmp.eq.s32.totalorder %s90, 0
      %p463 = por %p461, %p462
      %s465 = sadd.s32 %s464, 1
      %p468 = scmp.eq.s32.totalorder %s84, 1
      %p469 = scmp.ne.s32.totalorder %s464, %s466
      %p470 = scmp.eq.s32.totalorder %s84, 0
      %p471 = por %p469, %p470
      %p472 = scmp.ne.s32.totalorder %s464, %s466
      %p473 = scmp.eq.s32.totalorder %s89, 1
      %p474 = por %p472, %p473
      %p475 = scmp.ne.s32.totalorder %s466, %s467
      %p476 = scmp.eq.s32.totalorder %s89, 0
      %p477 = por %p475, %p476
      %p478 = scmp.ne.s32.totalorder %s466, %s467
      %p479 = scmp.eq.s32.totalorder %s90, 1
      %p480 = por %p478, %p479
      %p482 = scmp.ne.s32.totalorder %s467, %s481
      %p483 = scmp.eq.s32.totalorder %s90, 0
      %p484 = por %p482, %p483
      %s486 = sadd.s32 %s485, 1
      %p489 = scmp.eq.s32.totalorder %s84, 1
      %p490 = scmp.ne.s32.totalorder %s485, %s487
      %p491 = scmp.eq.s32.totalorder %s84, 0
      %p492 = por %p490, %p491
      %p493 = scmp.ne.s32.totalorder %s485, %s487
      %p494 = scmp.eq.s32.totalorder %s89, 1
      %p495 = por %p493, %p494
      %p496 = scmp.ne.s32.totalorder %s487, %s488
      %p497 = scmp.eq.s32.totalorder %s89, 0
      %p498 = por %p496, %p497
      %p499 = scmp.ne.s32.totalorder %s487, %s488
      %p500 = scmp.eq.s32.totalorder %s90, 1
      %p501 = por %p499, %p500
      %p503 = scmp.ne.s32.totalorder %s488, %s502
      %p504 = scmp.eq.s32.totalorder %s90, 0
      %p505 = por %p503, %p504
      %s507 = sadd.s32 %s506, 1
      %p510 = scmp.eq.s32.totalorder %s84, 1
      %p511 = scmp.ne.s32.totalorder %s506, %s508
      %p512 = scmp.eq.s32.totalorder %s84, 0
      %p513 = por %p511, %p512
      %p514 = scmp.ne.s32.totalorder %s506, %s508
      %p515 = scmp.eq.s32.totalorder %s89, 1
      %p516 = por %p514, %p515
      %p517 = scmp.ne.s32.totalorder %s508, %s509
      %p518 = scmp.eq.s32.totalorder %s89, 0
      %p519 = por %p517, %p518
      %p520 = scmp.ne.s32.totalorder %s508, %s509
      %p521 = scmp.eq.s32.totalorder %s90, 1
      %p522 = por %p520, %p521
      %p524 = scmp.ne.s32.totalorder %s509, %s523
      %p525 = scmp.eq.s32.totalorder %s90, 0
      %p526 = por %p524, %p525
      %s528 = sadd.s32 %s527, 1
      %p531 = scmp.eq.s32.totalorder %s84, 1
      %p532 = scmp.ne.s32.totalorder %s527, %s529
      %p533 = scmp.eq.s32.totalorder %s84, 0
      %p534 = por %p532, %p533
      %p535 = scmp.ne.s32.totalorder %s527, %s529
      %p536 = scmp.eq.s32.totalorder %s89, 1
      %p537 = por %p535, %p536
      %p538 = scmp.ne.s32.totalorder %s529, %s530
      %p539 = scmp.eq.s32.totalorder %s89, 0
      %p540 = por %p538, %p539
      %p541 = scmp.ne.s32.totalorder %s529, %s530
      %p542 = scmp.eq.s32.totalorder %s90, 1
      %p543 = por %p541, %p542
      %p545 = scmp.ne.s32.totalorder %s530, %s544
      %p546 = scmp.eq.s32.totalorder %s90, 0
      %p547 = por %p545, %p546
      %s549 = sadd.s32 %s548, 1
      %p552 = scmp.eq.s32.totalorder %s84, 1
      %p553 = scmp.ne.s32.totalorder %s548, %s550
      %p554 = scmp.eq.s32.totalorder %s84, 0
      %p555 = por %p553, %p554
      %p556 = scmp.ne.s32.totalorder %s548, %s550
      %p557 = scmp.eq.s32.totalorder %s89, 1
      %p558 = por %p556, %p557
      %p559 = scmp.ne.s32.totalorder %s550, %s551
      %p560 = scmp.eq.s32.totalorder %s89, 0
      %p561 = por %p559, %p560
      %p562 = scmp.ne.s32.totalorder %s550, %s551
      %p563 = scmp.eq.s32.totalorder %s90, 1
      %p564 = por %p562, %p563
      %p566 = scmp.ne.s32.totalorder %s551, %s565
      %p567 = scmp.eq.s32.totalorder %s90, 0
      %p568 = por %p566, %p567
      %s570 = sadd.s32 %s569, 1
      %p573 = scmp.eq.s32.totalorder %s84, 1
      %p574 = scmp.ne.s32.totalorder %s569, %s571
      %p575 = scmp.eq.s32.totalorder %s84, 0
      %p576 = por %p574, %p575
      %p577 = scmp.ne.s32.totalorder %s569, %s571
      %p578 = scmp.eq.s32.totalorder %s89, 1
      %p579 = por %p577, %p578
      %p580 = scmp.ne.s32.totalorder %s571, %s572
      %p581 = scmp.eq.s32.totalorder %s89, 0
      %p582 = por %p580, %p581
      %p583 = scmp.ne.s32.totalorder %s571, %s572
      %p584 = scmp.eq.s32.totalorder %s90, 1
      %p585 = por %p583, %p584
      %p587 = scmp.ne.s32.totalorder %s572, %s586
      %p588 = scmp.eq.s32.totalorder %s90, 0
      %p589 = por %p587, %p588
      %s591 = sadd.s32 %s590, 1
      %p594 = scmp.eq.s32.totalorder %s84, 1
      %p595 = scmp.ne.s32.totalorder %s590, %s592
      %p596 = scmp.eq.s32.totalorder %s84, 0
      %p597 = por %p595, %p596
      %p598 = scmp.ne.s32.totalorder %s590, %s592
      %p599 = scmp.eq.s32.totalorder %s89, 1
      %p600 = por %p598, %p599
      %p601 = scmp.ne.s32.totalorder %s592, %s593
      %p602 = scmp.eq.s32.totalorder %s89, 0
      %p603 = por %p601, %p602
      %p604 = scmp.ne.s32.totalorder %s592, %s593
      %p605 = scmp.eq.s32.totalorder %s90, 1
      %p606 = por %p604, %p605
      %p608 = scmp.ne.s32.totalorder %s593, %s607
      %p609 = scmp.eq.s32.totalorder %s90, 0
      %p610 = por %p608, %p609
      %s612 = sadd.s32 %s611, 1
      %p615 = scmp.eq.s32.totalorder %s84, 1
      %p616 = scmp.ne.s32.totalorder %s611, %s613
      %p617 = scmp.eq.s32.totalorder %s84, 0
      %p618 = por %p616, %p617
      %p619 = scmp.ne.s32.totalorder %s611, %s613
      %p620 = scmp.eq.s32.totalorder %s89, 1
      %p621 = por %p619, %p620
      %p622 = scmp.ne.s32.totalorder %s613, %s614
      %p623 = scmp.eq.s32.totalorder %s89, 0
      %p624 = por %p622, %p623
      %p625 = scmp.ne.s32.totalorder %s613, %s614
      %p626 = scmp.eq.s32.totalorder %s90, 1
      %p627 = por %p625, %p626
      %p629 = scmp.ne.s32.totalorder %s614, %s628
      %p630 = scmp.eq.s32.totalorder %s90, 0
      %p631 = por %p629, %p630
      %s633 = sadd.s32 %s632, 1
      %p636 = scmp.eq.s32.totalorder %s84, 1
      %p637 = scmp.ne.s32.totalorder %s632, %s634
      %p638 = scmp.eq.s32.totalorder %s84, 0
      %p639 = por %p637, %p638
      %p640 = scmp.ne.s32.totalorder %s632, %s634
      %p641 = scmp.eq.s32.totalorder %s89, 1
      %p642 = por %p640, %p641
      %p643 = scmp.ne.s32.totalorder %s634, %s635
      %p644 = scmp.eq.s32.totalorder %s89, 0
      %p645 = por %p643, %p644
      %p646 = scmp.ne.s32.totalorder %s634, %s635
      %p647 = scmp.eq.s32.totalorder %s90, 1
      %p648 = por %p646, %p647
      %p650 = scmp.ne.s32.totalorder %s635, %s649
      %p651 = scmp.eq.s32.totalorder %s90, 0
      %p652 = por %p650, %p651
      %s654 = sadd.s32 %s653, 1
      %p657 = scmp.eq.s32.totalorder %s84, 1
      %p658 = scmp.ne.s32.totalorder %s653, %s655
      %p659 = scmp.eq.s32.totalorder %s84, 0
      %p660 = por %p658, %p659
      %p661 = scmp.ne.s32.totalorder %s653, %s655
      %p662 = scmp.eq.s32.totalorder %s89, 1
      %p663 = por %p661, %p662
      %p664 = scmp.ne.s32.totalorder %s655, %s656
      %p665 = scmp.eq.s32.totalorder %s89, 0
      %p666 = por %p664, %p665
      %p667 = scmp.ne.s32.totalorder %s655, %s656
      %p668 = scmp.eq.s32.totalorder %s90, 1
      %p669 = por %p667, %p668
      %p671 = scmp.ne.s32.totalorder %s656, %s670
      %p672 = scmp.eq.s32.totalorder %s90, 0
      %p673 = por %p671, %p672
      %s675 = sadd.s32 %s674, 1
      %p678 = scmp.eq.s32.totalorder %s84, 1
      %p679 = scmp.ne.s32.totalorder %s674, %s676
      %p680 = scmp.eq.s32.totalorder %s84, 0
      %p681 = por %p679, %p680
      %p682 = scmp.ne.s32.totalorder %s674, %s676
      %p683 = scmp.eq.s32.totalorder %s89, 1
      %p684 = por %p682, %p683
      %p685 = scmp.ne.s32.totalorder %s676, %s677
      %p686 = scmp.eq.s32.totalorder %s89, 0
      %p687 = por %p685, %p686
      %p688 = scmp.ne.s32.totalorder %s676, %s677
      %p689 = scmp.eq.s32.totalorder %s90, 1
      %p690 = por %p688, %p689
      %p692 = scmp.ne.s32.totalorder %s677, %s691
      %p693 = scmp.eq.s32.totalorder %s90, 0
      %p694 = por %p692, %p693
      %s696 = sadd.s32 %s695, 1
      %p699 = scmp.eq.s32.totalorder %s84, 1
      %p700 = scmp.ne.s32.totalorder %s695, %s697
      %p701 = scmp.eq.s32.totalorder %s84, 0
      %p702 = por %p700, %p701
      %p703 = scmp.ne.s32.totalorder %s695, %s697
      %p704 = scmp.eq.s32.totalorder %s89, 1
      %p705 = por %p703, %p704
      %p706 = scmp.ne.s32.totalorder %s697, %s698
      %p707 = scmp.eq.s32.totalorder %s89, 0
      %p708 = por %p706, %p707
      %p709 = scmp.ne.s32.totalorder %s697, %s698
      %p710 = scmp.eq.s32.totalorder %s90, 1
      %p711 = por %p709, %p710
      %p713 = scmp.ne.s32.totalorder %s698, %s712
      %p714 = scmp.eq.s32.totalorder %s90, 0
      %p715 = por %p713, %p714
      %s717 = sadd.s32 %s716, 1
      %p720 = scmp.eq.s32.totalorder %s84, 1
      %p721 = scmp.ne.s32.totalorder %s716, %s718
      %p722 = scmp.eq.s32.totalorder %s84, 0
      %p723 = por %p721, %p722
      %p724 = scmp.ne.s32.totalorder %s716, %s718
      %p725 = scmp.eq.s32.totalorder %s89, 1
      %p726 = por %p724, %p725
      %p727 = scmp.ne.s32.totalorder %s718, %s719
      %p728 = scmp.eq.s32.totalorder %s89, 0
      %p729 = por %p727, %p728
      %p730 = scmp.ne.s32.totalorder %s718, %s719
      %p731 = scmp.eq.s32.totalorder %s90, 1
      %p732 = por %p730, %p731
      %p734 = scmp.ne.s32.totalorder %s719, %s733
      %p735 = scmp.eq.s32.totalorder %s90, 0
      %p736 = por %p734, %p735
      %s738 = sadd.s32 %s737, 1
      %p741 = scmp.eq.s32.totalorder %s84, 1
      %p742 = scmp.ne.s32.totalorder %s737, %s739
      %p743 = scmp.eq.s32.totalorder %s84, 0
      %p744 = por %p742, %p743
      %p745 = scmp.ne.s32.totalorder %s737, %s739
      %p746 = scmp.eq.s32.totalorder %s89, 1
      %p747 = por %p745, %p746
      %p748 = scmp.ne.s32.totalorder %s739, %s740
      %p749 = scmp.eq.s32.totalorder %s89, 0
      %p750 = por %p748, %p749
      %p751 = scmp.ne.s32.totalorder %s739, %s740
      %p752 = scmp.eq.s32.totalorder %s90, 1
      %p753 = por %p751, %p752
      %p755 = scmp.ne.s32.totalorder %s740, %s754
      %p756 = scmp.eq.s32.totalorder %s90, 0
      %p757 = por %p755, %p756
      %s759 = sadd.s32 %s758, 1
      %p762 = scmp.eq.s32.totalorder %s84, 1
      %p763 = scmp.ne.s32.totalorder %s758, %s760
      %p764 = scmp.eq.s32.totalorder %s84, 0
      %p765 = por %p763, %p764
      %p766 = scmp.ne.s32.totalorder %s758, %s760
      %p767 = scmp.eq.s32.totalorder %s89, 1
      %p768 = por %p766, %p767
      %p769 = scmp.ne.s32.totalorder %s760, %s761
      %p770 = scmp.eq.s32.totalorder %s89, 0
      %p771 = por %p769, %p770
      %p772 = scmp.ne.s32.totalorder %s760, %s761
      %p773 = scmp.eq.s32.totalorder %s90, 1
      %p774 = por %p772, %p773
      %p776 = scmp.ne.s32.totalorder %s761, %s775
      %p777 = scmp.eq.s32.totalorder %s90, 0
      %p778 = por %p776, %p777
      %s780 = sadd.s32 %s779, 1
      %p783 = scmp.eq.s32.totalorder %s84, 1
      %p784 = scmp.ne.s32.totalorder %s779, %s781
      %p785 = scmp.eq.s32.totalorder %s84, 0
      %p786 = por %p784, %p785
      %p787 = scmp.ne.s32.totalorder %s779, %s781
      %p788 = scmp.eq.s32.totalorder %s89, 1
      %p789 = por %p787, %p788
      %p790 = scmp.ne.s32.totalorder %s781, %s782
      %p791 = scmp.eq.s32.totalorder %s89, 0
      %p792 = por %p790, %p791
      %p793 = scmp.ne.s32.totalorder %s781, %s782
      %p794 = scmp.eq.s32.totalorder %s90, 1
      %p795 = por %p793, %p794
      %p797 = scmp.ne.s32.totalorder %s782, %s796
      %p798 = scmp.eq.s32.totalorder %s90, 0
      %p799 = por %p797, %p798
      %s801 = sadd.s32 %s800, 1
      %p804 = scmp.eq.s32.totalorder %s84, 1
      %p805 = scmp.ne.s32.totalorder %s800, %s802
      %p806 = scmp.eq.s32.totalorder %s84, 0
      %p807 = por %p805, %p806
      %p808 = scmp.ne.s32.totalorder %s800, %s802
      %p809 = scmp.eq.s32.totalorder %s89, 1
      %p810 = por %p808, %p809
      %p811 = scmp.ne.s32.totalorder %s802, %s803
      %p812 = scmp.eq.s32.totalorder %s89, 0
      %p813 = por %p811, %p812
      %p814 = scmp.ne.s32.totalorder %s802, %s803
      %p815 = scmp.eq.s32.totalorder %s90, 1
      %p816 = por %p814, %p815
      %p818 = scmp.ne.s32.totalorder %s803, %s817
      %p819 = scmp.eq.s32.totalorder %s90, 0
      %p820 = por %p818, %p819
      %s822 = sadd.s32 %s821, 1
      %p825 = scmp.eq.s32.totalorder %s84, 1
      %p826 = scmp.ne.s32.totalorder %s821, %s823
      %p827 = scmp.eq.s32.totalorder %s84, 0
      %p828 = por %p826, %p827
      %p829 = scmp.ne.s32.totalorder %s821, %s823
      %p830 = scmp.eq.s32.totalorder %s89, 1
      %p831 = por %p829, %p830
      %p832 = scmp.ne.s32.totalorder %s823, %s824
      %p833 = scmp.eq.s32.totalorder %s89, 0
      %p834 = por %p832, %p833
      %p835 = scmp.ne.s32.totalorder %s823, %s824
      %p836 = scmp.eq.s32.totalorder %s90, 1
      %p837 = por %p835, %p836
      %p839 = scmp.ne.s32.totalorder %s824, %s838
      %p840 = scmp.eq.s32.totalorder %s90, 0
      %p841 = por %p839, %p840
      %s843 = sadd.s32 %s842, 1
      %p846 = scmp.eq.s32.totalorder %s84, 1
      %p847 = scmp.ne.s32.totalorder %s842, %s844
      %p848 = scmp.eq.s32.totalorder %s84, 0
      %p849 = por %p847, %p848
      %p850 = scmp.ne.s32.totalorder %s842, %s844
      %p851 = scmp.eq.s32.totalorder %s89, 1
      %p852 = por %p850, %p851
      %p853 = scmp.ne.s32.totalorder %s844, %s845
      %p854 = scmp.eq.s32.totalorder %s89, 0
      %p855 = por %p853, %p854
      %p856 = scmp.ne.s32.totalorder %s844, %s845
      %p857 = scmp.eq.s32.totalorder %s90, 1
      %p858 = por %p856, %p857
      %p860 = scmp.ne.s32.totalorder %s845, %s859
      %p861 = scmp.eq.s32.totalorder %s90, 0
      %p862 = por %p860, %p861
      %s864 = sadd.s32 %s863, 1
      %p867 = scmp.eq.s32.totalorder %s84, 1
      %p868 = scmp.ne.s32.totalorder %s863, %s865
      %p869 = scmp.eq.s32.totalorder %s84, 0
      %p870 = por %p868, %p869
      %p871 = scmp.ne.s32.totalorder %s863, %s865
      %p872 = scmp.eq.s32.totalorder %s89, 1
      %p873 = por %p871, %p872
      %p874 = scmp.ne.s32.totalorder %s865, %s866
      %p875 = scmp.eq.s32.totalorder %s89, 0
      %p876 = por %p874, %p875
      %p877 = scmp.ne.s32.totalorder %s865, %s866
      %p878 = scmp.eq.s32.totalorder %s90, 1
      %p879 = por %p877, %p878
      %p881 = scmp.ne.s32.totalorder %s866, %s880
      %p882 = scmp.eq.s32.totalorder %s90, 0
      %p883 = por %p881, %p882
      %s884 = ssub.s32 %s84, %s91
      %p885 = scmp.eq.s32.totalorder %s884, 0
      %s887 = sadd.s32 %s886, 1
      %s888 = scalar_select %p885, %s886, %s887
      %p891 = pneg %p885
      %p892 = scmp.eq.s32.totalorder %s84, 1
      %p893 = por %p891, %p892
      %p894 = scmp.ne.s32.totalorder %s886, %s889
      %p895 = scmp.eq.s32.totalorder %s84, 0
      %p896 = por %p894, %p895
      %p897 = scmp.ne.s32.totalorder %s886, %s889
      %p898 = scmp.eq.s32.totalorder %s89, 1
      %p899 = por %p897, %p898
      %p900 = scmp.ne.s32.totalorder %s889, %s890
      %p901 = scmp.eq.s32.totalorder %s89, 0
      %p902 = por %p900, %p901
      %p903 = scmp.ne.s32.totalorder %s889, %s890
      %p904 = scmp.eq.s32.totalorder %s90, 1
      %p905 = por %p903, %p904
      %p907 = scmp.ne.s32.totalorder %s890, %s906
      %p908 = scmp.eq.s32.totalorder %s90, 0
      %p909 = por %p907, %p908
      %p910 = scmp.le.s32.totalorder 1, %s84
      %p911 = scmp.lt.s32.totalorder %s84, 3
      %p912 = pnand %p910, %p911
      %p913 = pneg %p912
      // Predicated region
      $region9: #{transformer_forward.1} parent=5 // pred_check
        _
      $region10: #{transformer_forward.1} parent=5 // pred_check_branch
        %915 = sbr.rel (%p912) target = $region12
      $region11: #{transformer_forward.1} parent=5 // pred_region
        %s916 = ssub.s32 %s84, 1
        // Predicated region
        $region13: #{transformer_forward.1} parent=11 // pred_check
          %p917 = pneg %p183
        $region14: #{transformer_forward.1} parent=11 // pred_check_branch
          %919 = sbr.rel (%p917) target = $region16
        $region15: #{transformer_forward.1} parent=11 // pred_region
          _
        $region16: #{transformer_forward.1} parent=11 // pred_fallthru
          _
        // Predicated region
        $region17: #{transformer_forward.1} parent=11 // pred_check
          %p920 = pneg %p204
        $region18: #{transformer_forward.1} parent=11 // pred_check_branch
          %922 = sbr.rel (%p920) target = $region20
        $region19: #{transformer_forward.1} parent=11 // pred_region
          _
        $region20: #{transformer_forward.1} parent=11 // pred_fallthru
          _
        // Predicated region
        $region21: #{transformer_forward.1} parent=11 // pred_check
          %p923 = pneg %p225
        $region22: #{transformer_forward.1} parent=11 // pred_check_branch
          %925 = sbr.rel (%p923) target = $region24
        $region23: #{transformer_forward.1} parent=11 // pred_region
          _
        $region24: #{transformer_forward.1} parent=11 // pred_fallthru
          _
        // Predicated region
        $region25: #{transformer_forward.1} parent=11 // pred_check
          %p926 = pneg %p246
        $region26: #{transformer_forward.1} parent=11 // pred_check_branch
          %928 = sbr.rel (%p926) target = $region28
        $region27: #{transformer_forward.1} parent=11 // pred_region
          _
        $region28: #{transformer_forward.1} parent=11 // pred_fallthru
          _
        // Predicated region
        $region29: #{transformer_forward.1} parent=11 // pred_check
          %p929 = pneg %p267
        $region30: #{transformer_forward.1} parent=11 // pred_check_branch
          %931 = sbr.rel (%p929) target = $region32
        $region31: #{transformer_forward.1} parent=11 // pred_region
          _
        $region32: #{transformer_forward.1} parent=11 // pred_fallthru
          _
        // Predicated region
        $region33: #{transformer_forward.1} parent=11 // pred_check
          %p932 = pneg %p288
        $region34: #{transformer_forward.1} parent=11 // pred_check_branch
          %934 = sbr.rel (%p932) target = $region36
        $region35: #{transformer_forward.1} parent=11 // pred_region
          _
        $region36: #{transformer_forward.1} parent=11 // pred_fallthru
          _
        // Predicated region
        $region37: #{transformer_forward.1} parent=11 // pred_check
          %p935 = pneg %p309
        $region38: #{transformer_forward.1} parent=11 // pred_check_branch
          %937 = sbr.rel (%p935) target = $region40
        $region39: #{transformer_forward.1} parent=11 // pred_region
          _
        $region40: #{transformer_forward.1} parent=11 // pred_fallthru
          _
        // Predicated region
        $region41: #{transformer_forward.1} parent=11 // pred_check
          %p938 = pneg %p330
        $region42: #{transformer_forward.1} parent=11 // pred_check_branch
          %940 = sbr.rel (%p938) target = $region44
        $region43: #{transformer_forward.1} parent=11 // pred_region
          _
        $region44: #{transformer_forward.1} parent=11 // pred_fallthru
          _
        // Predicated region
        $region45: #{transformer_forward.1} parent=11 // pred_check
          %p941 = pneg %p351
        $region46: #{transformer_forward.1} parent=11 // pred_check_branch
          %943 = sbr.rel (%p941) target = $region48
        $region47: #{transformer_forward.1} parent=11 // pred_region
          _
        $region48: #{transformer_forward.1} parent=11 // pred_fallthru
          _
        // Predicated region
        $region49: #{transformer_forward.1} parent=11 // pred_check
          %p944 = pneg %p372
        $region50: #{transformer_forward.1} parent=11 // pred_check_branch
          %946 = sbr.rel (%p944) target = $region52
        $region51: #{transformer_forward.1} parent=11 // pred_region
          _
        $region52: #{transformer_forward.1} parent=11 // pred_fallthru
          _
        // Predicated region
        $region53: #{transformer_forward.1} parent=11 // pred_check
          %p947 = pneg %p393
        $region54: #{transformer_forward.1} parent=11 // pred_check_branch
          %949 = sbr.rel (%p947) target = $region56
        $region55: #{transformer_forward.1} parent=11 // pred_region
          _
        $region56: #{transformer_forward.1} parent=11 // pred_fallthru
          _
        // Predicated region
        $region57: #{transformer_forward.1} parent=11 // pred_check
          %p950 = pneg %p414
        $region58: #{transformer_forward.1} parent=11 // pred_check_branch
          %952 = sbr.rel (%p950) target = $region60
        $region59: #{transformer_forward.1} parent=11 // pred_region
          _
        $region60: #{transformer_forward.1} parent=11 // pred_fallthru
          _
        // Predicated region
        $region61: #{transformer_forward.1} parent=11 // pred_check
          %p953 = pneg %p435
        $region62: #{transformer_forward.1} parent=11 // pred_check_branch
          %955 = sbr.rel (%p953) target = $region64
        $region63: #{transformer_forward.1} parent=11 // pred_region
          _
        $region64: #{transformer_forward.1} parent=11 // pred_fallthru
          _
        // Predicated region
        $region65: #{transformer_forward.1} parent=11 // pred_check
          %p956 = pneg %p456
        $region66: #{transformer_forward.1} parent=11 // pred_check_branch
          %958 = sbr.rel (%p956) target = $region68
        $region67: #{transformer_forward.1} parent=11 // pred_region
          _
        $region68: #{transformer_forward.1} parent=11 // pred_fallthru
          _
        // Predicated region
        $region69: #{transformer_forward.1} parent=11 // pred_check
          %p959 = pneg %p477
        $region70: #{transformer_forward.1} parent=11 // pred_check_branch
          %961 = sbr.rel (%p959) target = $region72
        $region71: #{transformer_forward.1} parent=11 // pred_region
          _
        $region72: #{transformer_forward.1} parent=11 // pred_fallthru
          _
        // Predicated region
        $region73: #{transformer_forward.1} parent=11 // pred_check
          %p962 = pneg %p498
        $region74: #{transformer_forward.1} parent=11 // pred_check_branch
          %964 = sbr.rel (%p962) target = $region76
        $region75: #{transformer_forward.1} parent=11 // pred_region
          _
        $region76: #{transformer_forward.1} parent=11 // pred_fallthru
          _
        // Predicated region
        $region77: #{transformer_forward.1} parent=11 // pred_check
          %p965 = pneg %p519
        $region78: #{transformer_forward.1} parent=11 // pred_check_branch
          %967 = sbr.rel (%p965) target = $region80
        $region79: #{transformer_forward.1} parent=11 // pred_region
          _
        $region80: #{transformer_forward.1} parent=11 // pred_fallthru
          _
        // Predicated region
        $region81: #{transformer_forward.1} parent=11 // pred_check
          %p968 = pneg %p540
        $region82: #{transformer_forward.1} parent=11 // pred_check_branch
          %970 = sbr.rel (%p968) target = $region84
        $region83: #{transformer_forward.1} parent=11 // pred_region
          _
        $region84: #{transformer_forward.1} parent=11 // pred_fallthru
          _
        // Predicated region
        $region85: #{transformer_forward.1} parent=11 // pred_check
          %p971 = pneg %p561
        $region86: #{transformer_forward.1} parent=11 // pred_check_branch
          %973 = sbr.rel (%p971) target = $region88
        $region87: #{transformer_forward.1} parent=11 // pred_region
          _
        $region88: #{transformer_forward.1} parent=11 // pred_fallthru
          _
        // Predicated region
        $region89: #{transformer_forward.1} parent=11 // pred_check
          %p974 = pneg %p582
        $region90: #{transformer_forward.1} parent=11 // pred_check_branch
          %976 = sbr.rel (%p974) target = $region92
        $region91: #{transformer_forward.1} parent=11 // pred_region
          _
        $region92: #{transformer_forward.1} parent=11 // pred_fallthru
          _
        // Predicated region
        $region93: #{transformer_forward.1} parent=11 // pred_check
          %p977 = pneg %p603
        $region94: #{transformer_forward.1} parent=11 // pred_check_branch
          %979 = sbr.rel (%p977) target = $region96
        $region95: #{transformer_forward.1} parent=11 // pred_region
          _
        $region96: #{transformer_forward.1} parent=11 // pred_fallthru
          _
        // Predicated region
        $region97: #{transformer_forward.1} parent=11 // pred_check
          %p980 = pneg %p624
        $region98: #{transformer_forward.1} parent=11 // pred_check_branch
          %982 = sbr.rel (%p980) target = $region100
        $region99: #{transformer_forward.1} parent=11 // pred_region
          _
        $region100: #{transformer_forward.1} parent=11 // pred_fallthru
          _
        // Predicated region
        $region101: #{transformer_forward.1} parent=11 // pred_check
          %p983 = pneg %p645
        $region102: #{transformer_forward.1} parent=11 // pred_check_branch
          %985 = sbr.rel (%p983) target = $region104
        $region103: #{transformer_forward.1} parent=11 // pred_region
          _
        $region104: #{transformer_forward.1} parent=11 // pred_fallthru
          _
        // Predicated region
        $region105: #{transformer_forward.1} parent=11 // pred_check
          %p986 = pneg %p666
        $region106: #{transformer_forward.1} parent=11 // pred_check_branch
          %988 = sbr.rel (%p986) target = $region108
        $region107: #{transformer_forward.1} parent=11 // pred_region
          _
        $region108: #{transformer_forward.1} parent=11 // pred_fallthru
          _
        // Predicated region
        $region109: #{transformer_forward.1} parent=11 // pred_check
          %p989 = pneg %p687
        $region110: #{transformer_forward.1} parent=11 // pred_check_branch
          %991 = sbr.rel (%p989) target = $region112
        $region111: #{transformer_forward.1} parent=11 // pred_region
          _
        $region112: #{transformer_forward.1} parent=11 // pred_fallthru
          _
        // Predicated region
        $region113: #{transformer_forward.1} parent=11 // pred_check
          %p992 = pneg %p708
        $region114: #{transformer_forward.1} parent=11 // pred_check_branch
          %994 = sbr.rel (%p992) target = $region116
        $region115: #{transformer_forward.1} parent=11 // pred_region
          _
        $region116: #{transformer_forward.1} parent=11 // pred_fallthru
          _
        // Predicated region
        $region117: #{transformer_forward.1} parent=11 // pred_check
          %p995 = pneg %p729
        $region118: #{transformer_forward.1} parent=11 // pred_check_branch
          %997 = sbr.rel (%p995) target = $region120
        $region119: #{transformer_forward.1} parent=11 // pred_region
          _
        $region120: #{transformer_forward.1} parent=11 // pred_fallthru
          _
        // Predicated region
        $region121: #{transformer_forward.1} parent=11 // pred_check
          %p998 = pneg %p750
        $region122: #{transformer_forward.1} parent=11 // pred_check_branch
          %1000 = sbr.rel (%p998) target = $region124
        $region123: #{transformer_forward.1} parent=11 // pred_region
          _
        $region124: #{transformer_forward.1} parent=11 // pred_fallthru
          _
        // Predicated region
        $region125: #{transformer_forward.1} parent=11 // pred_check
          %p1001 = pneg %p771
        $region126: #{transformer_forward.1} parent=11 // pred_check_branch
          %1003 = sbr.rel (%p1001) target = $region128
        $region127: #{transformer_forward.1} parent=11 // pred_region
          _
        $region128: #{transformer_forward.1} parent=11 // pred_fallthru
          _
        // Predicated region
        $region129: #{transformer_forward.1} parent=11 // pred_check
          %p1004 = pneg %p792
        $region130: #{transformer_forward.1} parent=11 // pred_check_branch
          %1006 = sbr.rel (%p1004) target = $region132
        $region131: #{transformer_forward.1} parent=11 // pred_region
          _
        $region132: #{transformer_forward.1} parent=11 // pred_fallthru
          _
        // Predicated region
        $region133: #{transformer_forward.1} parent=11 // pred_check
          %p1007 = pneg %p813
        $region134: #{transformer_forward.1} parent=11 // pred_check_branch
          %1009 = sbr.rel (%p1007) target = $region136
        $region135: #{transformer_forward.1} parent=11 // pred_region
          _
        $region136: #{transformer_forward.1} parent=11 // pred_fallthru
          _
        // Predicated region
        $region137: #{transformer_forward.1} parent=11 // pred_check
          %p1010 = pneg %p834
        $region138: #{transformer_forward.1} parent=11 // pred_check_branch
          %1012 = sbr.rel (%p1010) target = $region140
        $region139: #{transformer_forward.1} parent=11 // pred_region
          _
        $region140: #{transformer_forward.1} parent=11 // pred_fallthru
          _
        // Predicated region
        $region141: #{transformer_forward.1} parent=11 // pred_check
          %p1013 = pneg %p855
        $region142: #{transformer_forward.1} parent=11 // pred_check_branch
          %1015 = sbr.rel (%p1013) target = $region144
        $region143: #{transformer_forward.1} parent=11 // pred_region
          _
        $region144: #{transformer_forward.1} parent=11 // pred_fallthru
          _
        // Predicated region
        $region145: #{transformer_forward.1} parent=11 // pred_check
          %p1016 = pneg %p876
        $region146: #{transformer_forward.1} parent=11 // pred_check_branch
          %1018 = sbr.rel (%p1016) target = $region148
        $region147: #{transformer_forward.1} parent=11 // pred_region
          _
        $region148: #{transformer_forward.1} parent=11 // pred_fallthru
          _
      $region12: #{transformer_forward.1} parent=5 // pred_fallthru
        _
      %p1019 = scmp.lt.s32.totalorder %s84, 2
      // Predicated region
      $region149: #{transformer_forward.1} parent=5 // pred_check
        %p1020 = pneg %p1019
      $region150: #{transformer_forward.1} parent=5 // pred_check_branch
        %1022 = sbr.rel (%p1020) target = $region152
      $region151: #{transformer_forward.1} parent=5 // pred_region
        // Predicated region
        $region153: #{transformer_forward.1} parent=151 // pred_check
          %p1023 = pneg %p104
        $region154: #{transformer_forward.1} parent=151 // pred_check_branch
          %1025 = sbr.rel (%p1023) target = $region156
        $region155: #{transformer_forward.1} parent=151 // pred_region
          %p1026 = scmp.lt.s32.totalorder %s84, 1
          %s1027 = scalar_select %p1026, %s84, 1
          %s1028 = smul.addr %s1027, 8
          %s1029 = scalar_lea.vmem %s1, %s1028
        $region156: #{transformer_forward.1} parent=151 // pred_fallthru
          _
        // Predicated region
        $region157: #{transformer_forward.1} parent=151 // pred_check
          %p1030 = pneg %p130
        $region158: #{transformer_forward.1} parent=151 // pred_check_branch
          %1032 = sbr.rel (%p1030) target = $region160
        $region159: #{transformer_forward.1} parent=151 // pred_region
          %p1033 = scmp.lt.s32.totalorder %s84, 1
          %s1034 = scalar_select %p1033, %s84, 1
          %s1035 = smul.addr %s1034, 8
          %s1036 = scalar_lea.vmem %s3, %s1035
        $region160: #{transformer_forward.1} parent=151 // pred_fallthru
          _
        // Predicated region
        $region161: #{transformer_forward.1} parent=151 // pred_check
          %p1037 = pneg %p156
        $region162: #{transformer_forward.1} parent=151 // pred_check_branch
          %1039 = sbr.rel (%p1037) target = $region164
        $region163: #{transformer_forward.1} parent=151 // pred_region
          %p1040 = scmp.lt.s32.totalorder %s84, 1
          %s1041 = scalar_select %p1040, %s84, 1
          %s1042 = scalar_lea.vmem %s5, %s1041
        $region164: #{transformer_forward.1} parent=151 // pred_fallthru
          _
      $region152: #{transformer_forward.1} parent=5 // pred_fallthru
        _
      %p1043 = scmp.le.s32.totalorder 1, %s84
      %p1044 = scmp.lt.s32.totalorder %s84, 3
      %p1045 = pnand %p1043, %p1044
      %p1046 = pneg %p1045
      // Predicated region
      $region165: #{transformer_forward.1} parent=5 // pred_check
        _
      $region166: #{transformer_forward.1} parent=5 // pred_check_branch
        %1048 = sbr.rel (%p1045) target = $region168
      $region167: #{transformer_forward.1} parent=5 // pred_region
        %s1049 = ssub.s32 %s84, 1
        %p1050 = scmp.lt.s32.totalorder %s89, 1
        %s1051 = scalar_select %p1050, %s89, 1
        %s1052 = smul.addr %s1051, 8
        %s1053 = scalar_lea.vmem %s1, %s1052
        %p1054 = pneg %p110
        %p1055 = pneg %p107
        %p1056 = scmp.lt.s32.totalorder %s89, 1
        %s1057 = scalar_select %p1056, %s89, 1
        %s1058 = smul.addr %s1057, 8
        %s1059 = scalar_lea.vmem %s3, %s1058
        %p1060 = pneg %p136
        %p1061 = pneg %p133
        %p1062 = scmp.lt.s32.totalorder %s89, 1
        %s1063 = scalar_select %p1062, %s89, 1
        %s1064 = scalar_lea.vmem %s5, %s1063
        %p1065 = pneg %p162
        %p1066 = pneg %p159
        %p1067 = pneg %p183
        %p1068 = pneg %p180
        %p1069 = pneg %p204
        %p1070 = pneg %p201
        %p1071 = pneg %p225
        %p1072 = pneg %p222
        %p1073 = pneg %p246
        %p1074 = pneg %p243
        %p1075 = pneg %p267
        %p1076 = pneg %p264
        %p1077 = pneg %p288
        %p1078 = pneg %p285
        %p1079 = pneg %p309
        %p1080 = pneg %p306
        %p1081 = pneg %p330
        %p1082 = pneg %p327
        %p1083 = pneg %p351
        %p1084 = pneg %p348
        %p1085 = pneg %p372
        %p1086 = pneg %p369
        %p1087 = pneg %p393
        %p1088 = pneg %p390
        %p1089 = pneg %p414
        %p1090 = pneg %p411
        %p1091 = pneg %p435
        %p1092 = pneg %p432
        %p1093 = pneg %p456
        %p1094 = pneg %p453
        %p1095 = pneg %p477
        %p1096 = pneg %p474
        %p1097 = pneg %p498
        %p1098 = pneg %p495
        %p1099 = pneg %p519
        %p1100 = pneg %p516
        %p1101 = pneg %p540
        %p1102 = pneg %p537
        %p1103 = pneg %p561
        %p1104 = pneg %p558
        %p1105 = pneg %p582
        %p1106 = pneg %p579
        %p1107 = pneg %p603
        %p1108 = pneg %p600
        %p1109 = pneg %p624
        %p1110 = pneg %p621
        %p1111 = pneg %p645
        %p1112 = pneg %p642
        %p1113 = pneg %p666
        %p1114 = pneg %p663
        %p1115 = pneg %p687
        %p1116 = pneg %p684
        %p1117 = pneg %p708
        %p1118 = pneg %p705
        %p1119 = pneg %p729
        %p1120 = pneg %p726
        %p1121 = pneg %p750
        %p1122 = pneg %p747
        %p1123 = pneg %p771
        %p1124 = pneg %p768
        %p1125 = pneg %p792
        %p1126 = pneg %p789
        %p1127 = pneg %p813
        %p1128 = pneg %p810
        %p1129 = pneg %p834
        %p1130 = pneg %p831
        %p1131 = pneg %p855
        %p1132 = pneg %p852
        %p1133 = pneg %p876
        %p1134 = pneg %p873
        %p1135 = pneg %p902
        %p1136 = pneg %p899
        %s1137 = sand.u32 %s889, 1
        %s1138 = scalar_lea.sflag [#allocation3], %s1137
        %s1139 = sand.u32 %s889, 1
        %s1140 = smul.addr %s1139, 8
        %s1141 = scalar_lea.vmem [#allocation2], %s1140
        %p1142 = scmp.lt.s32.totalorder %s89, 1
        %s1143 = scalar_select %p1142, %s89, 1
        %s1144 = smul.addr %s1143, 8
        %s1145 = scalar_lea.vmem %s1, %s1144
        %p1146 = scmp.lt.s32.totalorder %s89, 1
        %s1147 = scalar_select %p1146, %s89, 1
        %s1148 = smul.addr %s1147, 8
        %s1149 = scalar_lea.vmem %s3, %s1148
        %p1150 = scmp.lt.s32.totalorder %s89, 1
        %s1151 = scalar_select %p1150, %s89, 1
        %s1152 = scalar_lea.vmem %s5, %s1151
        %v1154 = vld [vmem:[%s1152] sm:$0x1]
        %v1155 = vld [vmem:[%s1145] sm:$0xff]
        %v1156 = vmul.f32 %v1155, 5.656854
        %v1158 = vlaneseq
        %v1159 = vshrl.u32 %v1158, 7
        %v1160 = vsub.s32 0, %v1159
        %v1161 = vrot.slane %v1154, %v1160
        %v1163 = vadd.f32 %v1156, %v1161
        %v1164 = vld [vmem:[%s7] sm:$0xf]
        %v1165 = vld [vmem:[%s7 + $0x4] sm:$0xf]
        %v1166 = vld [vmem:[%s7 + $0x8] sm:$0xf]
        %v1167 = vld [vmem:[%s7 + $0xc] sm:$0xf]
        %v1168 = vld [vmem:[%s9] sm:$0x1]
        %v1169 = vld [vmem:[%s11] sm:$0xf]
        %v1170 = vld [vmem:[%s11 + $0x4] sm:$0xf]
        %v1171 = vld [vmem:[%s11 + $0x8] sm:$0xf]
        %v1172 = vld [vmem:[%s11 + $0xc] sm:$0xf]
        %v1173 = vld [vmem:[%s13] sm:$0x1]
        %v1174 = vpack.c.bf16 %v1163, %v1163
        %v1176 = vlaneseq
        %v1177 = vshrl.u32 %v1176, 7
        %v1178 = vsub.s32 0, %v1177
        %v1179 = vrot.slane %v1168, %v1178
        %v1185 = vunpack.c.l.b16 %v1164
        %v1186 = vunpack.c.l.b16 %v1165
        %v1187 = vunpack.c.l.b16 %v1166
        %v1188 = vunpack.c.l.b16 %v1167
        %v1189 = vpack.c.b16 %v1186, %v1185
        %v1190 = vpack.c.b16 %v1188, %v1187
        %vm1193 = vcmask 261120
        %v1195 = vsel %vm1193, %v1174, 0
        %1197 = vmatprep.subr.bf16.mxu0 0
        %1198 = vmatpush1.bf16.msra.mxu0 %v1189
        %1199 = vmatprep.subr.bf16.mxu0 0
        %1200 = vmatpush1.bf16.msra.mxu0 %v1190
        %1201 = vmatprep.subr.bf16.mxu0 0
        %1202 = vmatpush1.bf16.msra.mxu0 0
        %1203 = vmatprep.subr.bf16.mxu0 0
        %1204 = vmatpush1.bf16.msra.mxu0 0
        %1205 = vmatprep.subr.bf16.mxu0 0
        %1206 = vmatpush1.bf16.msra.mxu0 0
        %1207 = vmatprep.subr.bf16.mxu0 0
        %1208 = vmatpush1.bf16.msra.mxu0 0
        %1209 = vmatprep.subr.bf16.mxu0 0
        %1210 = vmatpush1.bf16.msra.mxu0 0
        %1211 = vmatprep.subr.bf16.mxu0 0
        %1212 = vmatpush1.bf16.msra.mxu0 0
        %1213 = vmatprep.subr.bf16.mxu0 0
        %1214 = vmatpush1.bf16.msra.mxu0 0
        %1215 = vmatprep.subr.bf16.mxu0 0
        %1216 = vmatpush1.bf16.msra.mxu0 0
        %1217 = vmatprep.subr.bf16.mxu0 0
        %1218 = vmatpush1.bf16.msra.mxu0 0
        %1219 = vmatprep.subr.bf16.mxu0 0
        %1220 = vmatpush1.bf16.msra.mxu0 0
        %1221 = vmatprep.subr.bf16.mxu0 0
        %1222 = vmatpush1.bf16.msra.mxu0 0
        %1223 = vmatprep.subr.bf16.mxu0 0
        %1224 = vmatpush1.bf16.msra.mxu0 0
        %1225 = vmatprep.subr.bf16.mxu0 0
        %1226 = vmatpush1.bf16.msra.mxu0 0
        %1227 = vmatprep.subr.bf16.mxu0 0
        %1228 = vmatpush1.bf16.msra.mxu0 0
        %1229 = vmatprep.mubr.bf16.mxu0 0
        %1230 = vmatmul.mubr.bf16.gmra.mrb[0].mxu0 %v1195
        %v1231 = vpop.f32.mrb[0].mxu0
        %v1232 = vadd.f32 %v1179, %v1231
        %v1233 = vpop.f32.mrb[0].mxu0
        %v1234 = vpop.f32.mrb[0].mxu0
        %v1235 = vpop.f32.mrb[0].mxu0
        %1236 = vdwg.mxu0
        %v1237 = vpack.c.bf16 %v1232, %v1232
        %1239 = vrot.lane.b32.xlu0 %v1237, 96
        %v1240 = vpop.permute.xlu0 %1239
        %vm1241 = vcmask 64512
        %v1243 = vsel %vm1241, %v1237, 0
        %v1246 = vsel %vm1241, %v1240, 0
        %1248 = vmatprep.subr.bf16.mxu0 0
        %1249 = vmatpush1.bf16.xpose.msra.mxu0 %v1246
        %1250 = vmatprep.subr.bf16.mxu0 0
        %1251 = vmatpush1.bf16.xpose.msra.mxu0 0
        %1252 = vmatprep.subr.bf16.mxu0 0
        %1253 = vmatpush1.bf16.xpose.msra.mxu0 0
        %1254 = vmatprep.subr.bf16.mxu0 0
        %1255 = vmatpush1.bf16.xpose.msra.mxu0 0
        %1256 = vmatprep.subr.bf16.mxu0 0
        %1257 = vmatpush1.bf16.xpose.msra.mxu0 0
        %1258 = vmatprep.subr.bf16.mxu0 0
        %1259 = vmatpush1.bf16.xpose.msra.mxu0 0
        %1260 = vmatprep.subr.bf16.mxu0 0
        %1261 = vmatpush1.bf16.xpose.msra.mxu0 0
        %1262 = vmatprep.subr.bf16.mxu0 0
        %1263 = vmatpush1.bf16.xpose.msra.mxu0 0
        %1264 = vmatprep.subr.bf16.mxu0 0
        %1265 = vmatpush1.bf16.xpose.msra.mxu0 0
        %1266 = vmatprep.subr.bf16.mxu0 0
        %1267 = vmatpush1.bf16.xpose.msra.mxu0 0
        %1268 = vmatprep.subr.bf16.mxu0 0
        %1269 = vmatpush1.bf16.xpose.msra.mxu0 0
        %1270 = vmatprep.subr.bf16.mxu0 0
        %1271 = vmatpush1.bf16.xpose.msra.mxu0 0
        %1272 = vmatprep.subr.bf16.mxu0 0
        %1273 = vmatpush1.bf16.xpose.msra.mxu0 0
        %1274 = vmatprep.subr.bf16.mxu0 0
        %1275 = vmatpush1.bf16.xpose.msra.mxu0 0
        %1276 = vmatprep.subr.bf16.mxu0 0
        %1277 = vmatpush1.bf16.xpose.msra.mxu0 0
        %1278 = vmatprep.subr.bf16.mxu0 0
        %1279 = vmatpush1.bf16.xpose.msra.mxu0 0
        %1280 = vmatprep.mubr.bf16.mxu0 0
        %1281 = vmatmul.mubr.bf16.gmra.mrb[0].mxu0 %v1243
        %v1282 = vpop.f32.mrb[0].mxu0
        %v1283 = vadd.f32 0.0, %v1282
        %v1284 = vpop.f32.mrb[0].mxu0
        %v1285 = vpop.f32.mrb[0].mxu0
        %v1286 = vpop.f32.mrb[0].mxu0
        %1287 = vdwg.mxu0
        %v1288 = vmul.f32 %v1283, 0.35355338
        %v1289 = vsel %vm1241, %v1288, -inf
        %1290 = vmax.xlane.f32.xlu0 %v1289
        %v1291 = vpop.xlane.xlu0 %1290
        %v1292 = vsub.f32 %v1288, %v1291
        %v1293 = vmul.f32 %v1292, 1.442695
        %v1294 = vpow.pop %v1293
        %v1295 = vsel %vm1241, %v1294, 0.0
        %1296 = vadd.xlane.f32.xlu0 %v1295
        %v1297 = vpop.xlane.xlu0 %1296
        %v1298 = vadd.f32 %v1297, 1e-09
        %v1299 = vrcp.pop %v1298
        %v1300 = vmul.f32 %v1294, %v1299
        %v1301 = vpack.c.bf16 %v1300, %v1300
        %1302 = vrot.lane.b32.xlu0 %v1237, 64
        %v1303 = vpop.permute.xlu0 %1302
        %v1305 = vsel %vm1241, %v1301, 0
        %vm1307 = vcmask 1043456
        %v1309 = vsel %vm1307, %v1303, 0
        %1311 = vmatprep.subr.bf16.mxu0 0
        %1312 = vmatpush1.bf16.msra.mxu0 %v1309
        %1313 = vmatprep.subr.bf16.mxu0 0
        %1314 = vmatpush1.bf16.msra.mxu0 0
        %1315 = vmatprep.subr.bf16.mxu0 0
        %1316 = vmatpush1.bf16.msra.mxu0 0
        %1317 = vmatprep.subr.bf16.mxu0 0
        %1318 = vmatpush1.bf16.msra.mxu0 0
        %1319 = vmatprep.subr.bf16.mxu0 0
        %1320 = vmatpush1.bf16.msra.mxu0 0
        %1321 = vmatprep.subr.bf16.mxu0 0
        %1322 = vmatpush1.bf16.msra.mxu0 0
        %1323 = vmatprep.subr.bf16.mxu0 0
        %1324 = vmatpush1.bf16.msra.mxu0 0
        %1325 = vmatprep.subr.bf16.mxu0 0
        %1326 = vmatpush1.bf16.msra.mxu0 0
        %1327 = vmatprep.subr.bf16.mxu0 0
        %1328 = vmatpush1.bf16.msra.mxu0 0
        %1329 = vmatprep.subr.bf16.mxu0 0
        %1330 = vmatpush1.bf16.msra.mxu0 0
        %1331 = vmatprep.subr.bf16.mxu0 0
        %1332 = vmatpush1.bf16.msra.mxu0 0
        %1333 = vmatprep.subr.bf16.mxu0 0
        %1334 = vmatpush1.bf16.msra.mxu0 0
        %1335 = vmatprep.subr.bf16.mxu0 0
        %1336 = vmatpush1.bf16.msra.mxu0 0
        %1337 = vmatprep.subr.bf16.mxu0 0
        %1338 = vmatpush1.bf16.msra.mxu0 0
        %1339 = vmatprep.subr.bf16.mxu0 0
        %1340 = vmatpush1.bf16.msra.mxu0 0
        %1341 = vmatprep.subr.bf16.mxu0 0
        %1342 = vmatpush1.bf16.msra.mxu0 0
        %1343 = vmatprep.mubr.bf16.mxu0 0
        %1344 = vmatmul.mubr.bf16.gmra.mrb[0].mxu0 %v1305
        %v1345 = vpop.f32.mrb[0].mxu0
        %v1346 = vadd.f32 0.0, %v1345
        %v1347 = vpop.f32.mrb[0].mxu0
        %v1348 = vpop.f32.mrb[0].mxu0
        %v1349 = vpop.f32.mrb[0].mxu0
        %1350 = vdwg.mxu0
        %1351 = vrot.lane.b32.xlu0 %v1237, 120
        %v1352 = vpop.permute.xlu0 %1351
        %1353 = vrot.lane.b32.xlu0 %v1237, 88
        %v1354 = vpop.permute.xlu0 %1353
        %v1356 = vsel %vm1241, %v1352, 0
        %v1359 = vsel %vm1241, %v1354, 0
        %1361 = vmatprep.subr.bf16.mxu0 0
        %1362 = vmatpush1.bf16.xpose.msra.mxu0 %v1359
        %1363 = vmatprep.subr.bf16.mxu0 0
        %1364 = vmatpush1.bf16.xpose.msra.mxu0 0
        %1365 = vmatprep.subr.bf16.mxu0 0
        %1366 = vmatpush1.bf16.xpose.msra.mxu0 0
        %1367 = vmatprep.subr.bf16.mxu0 0
        %1368 = vmatpush1.bf16.xpose.msra.mxu0 0
        %1369 = vmatprep.subr.bf16.mxu0 0
        %1370 = vmatpush1.bf16.xpose.msra.mxu0 0
        %1371 = vmatprep.subr.bf16.mxu0 0
        %1372 = vmatpush1.bf16.xpose.msra.mxu0 0
        %1373 = vmatprep.subr.bf16.mxu0 0
        %1374 = vmatpush1.bf16.xpose.msra.mxu0 0
        %1375 = vmatprep.subr.bf16.mxu0 0
        %1376 = vmatpush1.bf16.xpose.msra.mxu0 0
        %1377 = vmatprep.subr.bf16.mxu0 0
        %1378 = vmatpush1.bf16.xpose.msra.mxu0 0
        %1379 = vmatprep.subr.bf16.mxu0 0
        %1380 = vmatpush1.bf16.xpose.msra.mxu0 0
        %1381 = vmatprep.subr.bf16.mxu0 0
        %1382 = vmatpush1.bf16.xpose.msra.mxu0 0
        %1383 = vmatprep.subr.bf16.mxu0 0
        %1384 = vmatpush1.bf16.xpose.msra.mxu0 0
        %1385 = vmatprep.subr.bf16.mxu0 0
        %1386 = vmatpush1.bf16.xpose.msra.mxu0 0
        %1387 = vmatprep.subr.bf16.mxu0 0
        %1388 = vmatpush1.bf16.xpose.msra.mxu0 0
        %1389 = vmatprep.subr.bf16.mxu0 0
        %1390 = vmatpush1.bf16.xpose.msra.mxu0 0
        %1391 = vmatprep.subr.bf16.mxu0 0
        %1392 = vmatpush1.bf16.xpose.msra.mxu0 0
        %1393 = vmatprep.mubr.bf16.mxu0 0
        %1394 = vmatmul.mubr.bf16.gmra.mrb[0].mxu0 %v1356
        %v1395 = vpop.f32.mrb[0].mxu0
        %v1396 = vadd.f32 0.0, %v1395
        %v1397 = vpop.f32.mrb[0].mxu0
        %v1398 = vpop.f32.mrb[0].mxu0
        %v1399 = vpop.f32.mrb[0].mxu0
        %1400 = vdwg.mxu0
        %v1401 = vmul.f32 %v1396, 0.35355338
        %v1402 = vsel %vm1241, %v1401, -inf
        %1403 = vmax.xlane.f32.xlu0 %v1402
        %v1404 = vpop.xlane.xlu0 %1403
        %v1405 = vsub.f32 %v1401, %v1404
        %v1406 = vmul.f32 %v1405, 1.442695
        %v1407 = vpow.pop %v1406
        %v1408 = vsel %vm1241, %v1407, 0.0
        %1409 = vadd.xlane.f32.xlu0 %v1408
        %v1410 = vpop.xlane.xlu0 %1409
        %v1411 = vadd.f32 %v1410, 1e-09
        %v1412 = vrcp.pop %v1411
        %v1413 = vmul.f32 %v1407, %v1412
        %v1414 = vpack.c.bf16 %v1413, %v1413
        %1415 = vrot.lane.b32.xlu0 %v1237, 56
        %v1416 = vpop.permute.xlu0 %1415
        %v1418 = vsel %vm1241, %v1414, 0
        %v1421 = vsel %vm1307, %v1416, 0
        %1423 = vmatprep.subr.bf16.mxu0 0
        %1424 = vmatpush1.bf16.msra.mxu0 %v1421
        %1425 = vmatprep.subr.bf16.mxu0 0
        %1426 = vmatpush1.bf16.msra.mxu0 0
        %1427 = vmatprep.subr.bf16.mxu0 0
        %1428 = vmatpush1.bf16.msra.mxu0 0
        %1429 = vmatprep.subr.bf16.mxu0 0
        %1430 = vmatpush1.bf16.msra.mxu0 0
        %1431 = vmatprep.subr.bf16.mxu0 0
        %1432 = vmatpush1.bf16.msra.mxu0 0
        %1433 = vmatprep.subr.bf16.mxu0 0
        %1434 = vmatpush1.bf16.msra.mxu0 0
        %1435 = vmatprep.subr.bf16.mxu0 0
        %1436 = vmatpush1.bf16.msra.mxu0 0
        %1437 = vmatprep.subr.bf16.mxu0 0
        %1438 = vmatpush1.bf16.msra.mxu0 0
        %1439 = vmatprep.subr.bf16.mxu0 0
        %1440 = vmatpush1.bf16.msra.mxu0 0
        %1441 = vmatprep.subr.bf16.mxu0 0
        %1442 = vmatpush1.bf16.msra.mxu0 0
        %1443 = vmatprep.subr.bf16.mxu0 0
        %1444 = vmatpush1.bf16.msra.mxu0 0
        %1445 = vmatprep.subr.bf16.mxu0 0
        %1446 = vmatpush1.bf16.msra.mxu0 0
        %1447 = vmatprep.subr.bf16.mxu0 0
        %1448 = vmatpush1.bf16.msra.mxu0 0
        %1449 = vmatprep.subr.bf16.mxu0 0
        %1450 = vmatpush1.bf16.msra.mxu0 0
        %1451 = vmatprep.subr.bf16.mxu0 0
        %1452 = vmatpush1.bf16.msra.mxu0 0
        %1453 = vmatprep.subr.bf16.mxu0 0
        %1454 = vmatpush1.bf16.msra.mxu0 0
        %1455 = vmatprep.mubr.bf16.mxu0 0
        %1456 = vmatmul.mubr.bf16.gmra.mrb[0].mxu0 %v1418
        %v1457 = vpop.f32.mrb[0].mxu0
        %v1458 = vadd.f32 0.0, %v1457
        %v1459 = vpop.f32.mrb[0].mxu0
        %v1460 = vpop.f32.mrb[0].mxu0
        %v1461 = vpop.f32.mrb[0].mxu0
        %1462 = vdwg.mxu0
        %1463 = vrot.lane.b32.xlu0 %v1237, 112
        %v1464 = vpop.permute.xlu0 %1463
        %1465 = vrot.lane.b32.xlu0 %v1237, 80
        %v1466 = vpop.permute.xlu0 %1465
        %v1468 = vsel %vm1241, %v1464, 0
        %v1471 = vsel %vm1241, %v1466, 0
        %1473 = vmatprep.subr.bf16.mxu0 0
        %1474 = vmatpush1.bf16.xpose.msra.mxu0 %v1471
        %1475 = vmatprep.subr.bf16.mxu0 0
        %1476 = vmatpush1.bf16.xpose.msra.mxu0 0
        %1477 = vmatprep.subr.bf16.mxu0 0
        %1478 = vmatpush1.bf16.xpose.msra.mxu0 0
        %1479 = vmatprep.subr.bf16.mxu0 0
        %1480 = vmatpush1.bf16.xpose.msra.mxu0 0
        %1481 = vmatprep.subr.bf16.mxu0 0
        %1482 = vmatpush1.bf16.xpose.msra.mxu0 0
        %1483 = vmatprep.subr.bf16.mxu0 0
        %1484 = vmatpush1.bf16.xpose.msra.mxu0 0
        %1485 = vmatprep.subr.bf16.mxu0 0
        %1486 = vmatpush1.bf16.xpose.msra.mxu0 0
        %1487 = vmatprep.subr.bf16.mxu0 0
        %1488 = vmatpush1.bf16.xpose.msra.mxu0 0
        %1489 = vmatprep.subr.bf16.mxu0 0
        %1490 = vmatpush1.bf16.xpose.msra.mxu0 0
        %1491 = vmatprep.subr.bf16.mxu0 0
        %1492 = vmatpush1.bf16.xpose.msra.mxu0 0
        %1493 = vmatprep.subr.bf16.mxu0 0
        %1494 = vmatpush1.bf16.xpose.msra.mxu0 0
        %1495 = vmatprep.subr.bf16.mxu0 0
        %1496 = vmatpush1.bf16.xpose.msra.mxu0 0
        %1497 = vmatprep.subr.bf16.mxu0 0
        %1498 = vmatpush1.bf16.xpose.msra.mxu0 0
        %1499 = vmatprep.subr.bf16.mxu0 0
        %1500 = vmatpush1.bf16.xpose.msra.mxu0 0
        %1501 = vmatprep.subr.bf16.mxu0 0
        %1502 = vmatpush1.bf16.xpose.msra.mxu0 0
        %1503 = vmatprep.subr.bf16.mxu0 0
        %1504 = vmatpush1.bf16.xpose.msra.mxu0 0
        %1505 = vmatprep.mubr.bf16.mxu0 0
        %1506 = vmatmul.mubr.bf16.gmra.mrb[0].mxu0 %v1468
        %v1507 = vpop.f32.mrb[0].mxu0
        %v1508 = vadd.f32 0.0, %v1507
        %v1509 = vpop.f32.mrb[0].mxu0
        %v1510 = vpop.f32.mrb[0].mxu0
        %v1511 = vpop.f32.mrb[0].mxu0
        %1512 = vdwg.mxu0
        %v1513 = vmul.f32 %v1508, 0.35355338
        %v1514 = vsel %vm1241, %v1513, -inf
        %1515 = vmax.xlane.f32.xlu0 %v1514
        %v1516 = vpop.xlane.xlu0 %1515
        %v1517 = vsub.f32 %v1513, %v1516
        %v1518 = vmul.f32 %v1517, 1.442695
        %v1519 = vpow.pop %v1518
        %v1520 = vsel %vm1241, %v1519, 0.0
        %1521 = vadd.xlane.f32.xlu0 %v1520
        %v1522 = vpop.xlane.xlu0 %1521
        %v1523 = vadd.f32 %v1522, 1e-09
        %v1524 = vrcp.pop %v1523
        %v1525 = vmul.f32 %v1519, %v1524
        %v1526 = vpack.c.bf16 %v1525, %v1525
        %1527 = vrot.lane.b32.xlu0 %v1237, 48
        %v1528 = vpop.permute.xlu0 %1527
        %v1530 = vsel %vm1241, %v1526, 0
        %v1533 = vsel %vm1307, %v1528, 0
        %1535 = vmatprep.subr.bf16.mxu0 0
        %1536 = vmatpush1.bf16.msra.mxu0 %v1533
        %1537 = vmatprep.subr.bf16.mxu0 0
        %1538 = vmatpush1.bf16.msra.mxu0 0
        %1539 = vmatprep.subr.bf16.mxu0 0
        %1540 = vmatpush1.bf16.msra.mxu0 0
        %1541 = vmatprep.subr.bf16.mxu0 0
        %1542 = vmatpush1.bf16.msra.mxu0 0
        %1543 = vmatprep.subr.bf16.mxu0 0
        %1544 = vmatpush1.bf16.msra.mxu0 0
        %1545 = vmatprep.subr.bf16.mxu0 0
        %1546 = vmatpush1.bf16.msra.mxu0 0
        %1547 = vmatprep.subr.bf16.mxu0 0
        %1548 = vmatpush1.bf16.msra.mxu0 0
        %1549 = vmatprep.subr.bf16.mxu0 0
        %1550 = vmatpush1.bf16.msra.mxu0 0
        %1551 = vmatprep.subr.bf16.mxu0 0
        %1552 = vmatpush1.bf16.msra.mxu0 0
        %1553 = vmatprep.subr.bf16.mxu0 0
        %1554 = vmatpush1.bf16.msra.mxu0 0
        %1555 = vmatprep.subr.bf16.mxu0 0
        %1556 = vmatpush1.bf16.msra.mxu0 0
        %1557 = vmatprep.subr.bf16.mxu0 0
        %1558 = vmatpush1.bf16.msra.mxu0 0
        %1559 = vmatprep.subr.bf16.mxu0 0
        %1560 = vmatpush1.bf16.msra.mxu0 0
        %1561 = vmatprep.subr.bf16.mxu0 0
        %1562 = vmatpush1.bf16.msra.mxu0 0
        %1563 = vmatprep.subr.bf16.mxu0 0
        %1564 = vmatpush1.bf16.msra.mxu0 0
        %1565 = vmatprep.subr.bf16.mxu0 0
        %1566 = vmatpush1.bf16.msra.mxu0 0
        %1567 = vmatprep.mubr.bf16.mxu0 0
        %1568 = vmatmul.mubr.bf16.gmra.mrb[0].mxu0 %v1530
        %v1569 = vpop.f32.mrb[0].mxu0
        %v1570 = vadd.f32 0.0, %v1569
        %v1571 = vpop.f32.mrb[0].mxu0
        %v1572 = vpop.f32.mrb[0].mxu0
        %v1573 = vpop.f32.mrb[0].mxu0
        %1574 = vdwg.mxu0
        %1575 = vrot.lane.b32.xlu0 %v1237, 104
        %v1576 = vpop.permute.xlu0 %1575
        %1577 = vrot.lane.b32.xlu0 %v1237, 72
        %v1578 = vpop.permute.xlu0 %1577
        %v1580 = vsel %vm1241, %v1576, 0
        %v1583 = vsel %vm1241, %v1578, 0
        %1585 = vmatprep.subr.bf16.mxu0 0
        %1586 = vmatpush1.bf16.xpose.msra.mxu0 %v1583
        %1587 = vmatprep.subr.bf16.mxu0 0
        %1588 = vmatpush1.bf16.xpose.msra.mxu0 0
        %1589 = vmatprep.subr.bf16.mxu0 0
        %1590 = vmatpush1.bf16.xpose.msra.mxu0 0
        %1591 = vmatprep.subr.bf16.mxu0 0
        %1592 = vmatpush1.bf16.xpose.msra.mxu0 0
        %1593 = vmatprep.subr.bf16.mxu0 0
        %1594 = vmatpush1.bf16.xpose.msra.mxu0 0
        %1595 = vmatprep.subr.bf16.mxu0 0
        %1596 = vmatpush1.bf16.xpose.msra.mxu0 0
        %1597 = vmatprep.subr.bf16.mxu0 0
        %1598 = vmatpush1.bf16.xpose.msra.mxu0 0
        %1599 = vmatprep.subr.bf16.mxu0 0
        %1600 = vmatpush1.bf16.xpose.msra.mxu0 0
        %1601 = vmatprep.subr.bf16.mxu0 0
        %1602 = vmatpush1.bf16.xpose.msra.mxu0 0
        %1603 = vmatprep.subr.bf16.mxu0 0
        %1604 = vmatpush1.bf16.xpose.msra.mxu0 0
        %1605 = vmatprep.subr.bf16.mxu0 0
        %1606 = vmatpush1.bf16.xpose.msra.mxu0 0
        %1607 = vmatprep.subr.bf16.mxu0 0
        %1608 = vmatpush1.bf16.xpose.msra.mxu0 0
        %1609 = vmatprep.subr.bf16.mxu0 0
        %1610 = vmatpush1.bf16.xpose.msra.mxu0 0
        %1611 = vmatprep.subr.bf16.mxu0 0
        %1612 = vmatpush1.bf16.xpose.msra.mxu0 0
        %1613 = vmatprep.subr.bf16.mxu0 0
        %1614 = vmatpush1.bf16.xpose.msra.mxu0 0
        %1615 = vmatprep.subr.bf16.mxu0 0
        %1616 = vmatpush1.bf16.xpose.msra.mxu0 0
        %1617 = vmatprep.mubr.bf16.mxu0 0
        %1618 = vmatmul.mubr.bf16.gmra.mrb[0].mxu0 %v1580
        %v1619 = vpop.f32.mrb[0].mxu0
        %v1620 = vadd.f32 0.0, %v1619
        %v1621 = vpop.f32.mrb[0].mxu0
        %v1622 = vpop.f32.mrb[0].mxu0
        %v1623 = vpop.f32.mrb[0].mxu0
        %1624 = vdwg.mxu0
        %v1625 = vmul.f32 %v1620, 0.35355338
        %v1626 = vsel %vm1241, %v1625, -inf
        %1627 = vmax.xlane.f32.xlu0 %v1626
        %v1628 = vpop.xlane.xlu0 %1627
        %v1629 = vsub.f32 %v1625, %v1628
        %v1630 = vmul.f32 %v1629, 1.442695
        %v1631 = vpow.pop %v1630
        %v1632 = vsel %vm1241, %v1631, 0.0
        %1633 = vadd.xlane.f32.xlu0 %v1632
        %v1634 = vpop.xlane.xlu0 %1633
        %v1635 = vadd.f32 %v1634, 1e-09
        %v1636 = vrcp.pop %v1635
        %v1637 = vmul.f32 %v1631, %v1636
        %v1638 = vpack.c.bf16 %v1637, %v1637
        %1639 = vrot.lane.b32.xlu0 %v1237, 40
        %v1640 = vpop.permute.xlu0 %1639
        %v1642 = vsel %vm1241, %v1638, 0
        %v1645 = vsel %vm1307, %v1640, 0
        %1647 = vmatprep.subr.bf16.mxu0 0
        %1648 = vmatpush1.bf16.msra.mxu0 %v1645
        %1649 = vmatprep.subr.bf16.mxu0 0
        %1650 = vmatpush1.bf16.msra.mxu0 0
        %1651 = vmatprep.subr.bf16.mxu0 0
        %1652 = vmatpush1.bf16.msra.mxu0 0
        %1653 = vmatprep.subr.bf16.mxu0 0
        %1654 = vmatpush1.bf16.msra.mxu0 0
        %1655 = vmatprep.subr.bf16.mxu0 0
        %1656 = vmatpush1.bf16.msra.mxu0 0
        %1657 = vmatprep.subr.bf16.mxu0 0
        %1658 = vmatpush1.bf16.msra.mxu0 0
        %1659 = vmatprep.subr.bf16.mxu0 0
        %1660 = vmatpush1.bf16.msra.mxu0 0
        %1661 = vmatprep.subr.bf16.mxu0 0
        %1662 = vmatpush1.bf16.msra.mxu0 0
        %1663 = vmatprep.subr.bf16.mxu0 0
        %1664 = vmatpush1.bf16.msra.mxu0 0
        %1665 = vmatprep.subr.bf16.mxu0 0
        %1666 = vmatpush1.bf16.msra.mxu0 0
        %1667 = vmatprep.subr.bf16.mxu0 0
        %1668 = vmatpush1.bf16.msra.mxu0 0
        %1669 = vmatprep.subr.bf16.mxu0 0
        %1670 = vmatpush1.bf16.msra.mxu0 0
        %1671 = vmatprep.subr.bf16.mxu0 0
        %1672 = vmatpush1.bf16.msra.mxu0 0
        %1673 = vmatprep.subr.bf16.mxu0 0
        %1674 = vmatpush1.bf16.msra.mxu0 0
        %1675 = vmatprep.subr.bf16.mxu0 0
        %1676 = vmatpush1.bf16.msra.mxu0 0
        %1677 = vmatprep.subr.bf16.mxu0 0
        %1678 = vmatpush1.bf16.msra.mxu0 0
        %1679 = vmatprep.mubr.bf16.mxu0 0
        %1680 = vmatmul.mubr.bf16.gmra.mrb[0].mxu0 %v1642
        %v1681 = vpop.f32.mrb[0].mxu0
        %v1682 = vadd.f32 0.0, %v1681
        %v1683 = vpop.f32.mrb[0].mxu0
        %v1684 = vpop.f32.mrb[0].mxu0
        %v1685 = vpop.f32.mrb[0].mxu0
        %1686 = vdwg.mxu0
        %1688 = vrot.lane.b32.xlu0 %v1458, 8
        %v1689 = vpop.permute.xlu0 %1688
        %1692 = vrot.lane.b32.xlu0 %v1570, 16
        %v1693 = vpop.permute.xlu0 %1692
        %1696 = vrot.lane.b32.xlu0 %v1682, 24
        %v1697 = vpop.permute.xlu0 %1696
        %v1699 = vsel %vm1241, %v1346, %v1689
        %vm1700 = vcmask 130048
        %v1701 = vsel %vm1700, %v1699, %v1693
        %vm1702 = vcmask 195584
        %v1703 = vsel %vm1702, %v1701, %v1697
        %v1704 = vpack.c.bf16 %v1703, %v1703
        %v1706 = vlaneseq
        %v1707 = vshrl.u32 %v1706, 7
        %v1708 = vsub.s32 0, %v1707
        %v1709 = vrot.slane %v1173, %v1708
        %v1715 = vunpack.c.l.b16 %v1169
        %v1716 = vunpack.c.l.b16 %v1170
        %v1717 = vunpack.c.l.b16 %v1171
        %v1718 = vunpack.c.l.b16 %v1172
        %v1719 = vpack.c.b16 %v1716, %v1715
        %v1720 = vpack.c.b16 %v1718, %v1717
        %v1724 = vsel %vm1193, %v1704, 0
        %1726 = vmatprep.subr.bf16.mxu0 0
        %1727 = vmatpush1.bf16.msra.mxu0 %v1719
        %1728 = vmatprep.subr.bf16.mxu0 0
        %1729 = vmatpush1.bf16.msra.mxu0 %v1720
        %1730 = vmatprep.subr.bf16.mxu0 0
        %1731 = vmatpush1.bf16.msra.mxu0 0
        %1732 = vmatprep.subr.bf16.mxu0 0
        %1733 = vmatpush1.bf16.msra.mxu0 0
        %1734 = vmatprep.subr.bf16.mxu0 0
        %1735 = vmatpush1.bf16.msra.mxu0 0
        %1736 = vmatprep.subr.bf16.mxu0 0
        %1737 = vmatpush1.bf16.msra.mxu0 0
        %1738 = vmatprep.subr.bf16.mxu0 0
        %1739 = vmatpush1.bf16.msra.mxu0 0
        %1740 = vmatprep.subr.bf16.mxu0 0
        %1741 = vmatpush1.bf16.msra.mxu0 0
        %1742 = vmatprep.subr.bf16.mxu0 0
        %1743 = vmatpush1.bf16.msra.mxu0 0
        %1744 = vmatprep.subr.bf16.mxu0 0
        %1745 = vmatpush1.bf16.msra.mxu0 0
        %1746 = vmatprep.subr.bf16.mxu0 0
        %1747 = vmatpush1.bf16.msra.mxu0 0
        %1748 = vmatprep.subr.bf16.mxu0 0
        %1749 = vmatpush1.bf16.msra.mxu0 0
        %1750 = vmatprep.subr.bf16.mxu0 0
        %1751 = vmatpush1.bf16.msra.mxu0 0
        %1752 = vmatprep.subr.bf16.mxu0 0
        %1753 = vmatpush1.bf16.msra.mxu0 0
        %1754 = vmatprep.subr.bf16.mxu0 0
        %1755 = vmatpush1.bf16.msra.mxu0 0
        %1756 = vmatprep.subr.bf16.mxu0 0
        %1757 = vmatpush1.bf16.msra.mxu0 0
        %1758 = vmatprep.mubr.bf16.mxu0 0
        %1759 = vmatmul.mubr.bf16.gmra.mrb[0].mxu0 %v1724
        %v1760 = vpop.f32.mrb[0].mxu0
        %v1761 = vadd.f32 %v1709, %v1760
        %v1762 = vpop.f32.mrb[0].mxu0
        %v1763 = vpop.f32.mrb[0].mxu0
        %v1764 = vpop.f32.mrb[0].mxu0
        %1765 = vdwg.mxu0
        %v1766 = vadd.f32 %v1163, %v1761
        %v1767 = vld [vmem:[%s23] sm:$0x1]
        %v1768 = vld [vmem:[%s25] sm:$0x1]
        %v1769 = vsel %vm1193, %v1766, 0.0
        %1770 = vadd.xlane.f32.xlu0 %v1769
        %v1771 = vpop.xlane.xlu0 %1770
        %v1772 = vrcp.pop 32.0
        %v1773 = vmul.f32 %v1771, %v1772
        %v1774 = vsub.f32 %v1766, %v1773
        %v1775 = vmul.f32 %v1774, %v1774
        %v1776 = vsel %vm1193, %v1775, 0.0
        %1777 = vadd.xlane.f32.xlu0 %v1776
        %v1778 = vpop.xlane.xlu0 %1777
        %v1779 = vmul.f32 %v1778, %v1772
        %v1780 = vadd.f32 %v1779, 1e-05
        %v1781 = vrsqrt.pop %v1780
        %v1782 = vmul.f32 %v1774, %v1781
        %v1784 = vlaneseq
        %v1785 = vshrl.u32 %v1784, 7
        %v1786 = vsub.s32 0, %v1785
        %v1787 = vrot.slane %v1767, %v1786
        %v1789 = vmul.f32 %v1782, %v1787
        %v1791 = vlaneseq
        %v1792 = vshrl.u32 %v1791, 7
        %v1793 = vsub.s32 0, %v1792
        %v1794 = vrot.slane %v1768, %v1793
        %v1796 = vadd.f32 %v1789, %v1794
        %v1797 = vld [vmem:[%s15] sm:$0xf]
        %v1798 = vld [vmem:[%s15 + $0x4] sm:$0xf]
        %v1799 = vld [vmem:[%s15 + $0x8] sm:$0xf]
        %v1800 = vld [vmem:[%s15 + $0xc] sm:$0xf]
        %v1801 = vld [vmem:[%s17] sm:$0x1]
        %v1802 = vld [vmem:[%s19] sm:$0xf]
        %v1803 = vld [vmem:[%s19 + $0x4] sm:$0xf]
        %v1804 = vld [vmem:[%s19 + $0x8] sm:$0xf]
        %v1805 = vld [vmem:[%s19 + $0xc] sm:$0xf]
        %v1806 = vld [vmem:[%s19 + $0x10] sm:$0xf]
        %v1807 = vld [vmem:[%s19 + $0x14] sm:$0xf]
        %v1808 = vld [vmem:[%s19 + $0x18] sm:$0xf]
        %v1809 = vld [vmem:[%s19 + $0x1c] sm:$0xf]
        %v1810 = vld [vmem:[%s21] sm:$0x1]
        %v1811 = vpack.c.bf16 %v1796, %v1796
        %v1813 = vlaneseq
        %v1814 = vshrl.u32 %v1813, 7
        %v1815 = vsub.s32 0, %v1814
        %v1816 = vrot.slane %v1801, %v1815
        %v1822 = vunpack.c.l.b16 %v1797
        %v1823 = vunpack.c.l.b16 %v1798
        %v1824 = vunpack.c.l.b16 %v1799
        %v1825 = vunpack.c.l.b16 %v1800
        %v1826 = vpack.c.b16 %v1823, %v1822
        %v1827 = vpack.c.b16 %v1825, %v1824
        %v1831 = vsel %vm1193, %v1811, 0
        %1833 = vmatprep.subr.bf16.mxu0 0
        %1834 = vmatpush1.bf16.msra.mxu0 %v1826
        %1835 = vmatprep.subr.bf16.mxu0 0
        %1836 = vmatpush1.bf16.msra.mxu0 %v1827
        %1837 = vmatprep.subr.bf16.mxu0 0
        %1838 = vmatpush1.bf16.msra.mxu0 0
        %1839 = vmatprep.subr.bf16.mxu0 0
        %1840 = vmatpush1.bf16.msra.mxu0 0
        %1841 = vmatprep.subr.bf16.mxu0 0
        %1842 = vmatpush1.bf16.msra.mxu0 0
        %1843 = vmatprep.subr.bf16.mxu0 0
        %1844 = vmatpush1.bf16.msra.mxu0 0
        %1845 = vmatprep.subr.bf16.mxu0 0
        %1846 = vmatpush1.bf16.msra.mxu0 0
        %1847 = vmatprep.subr.bf16.mxu0 0
        %1848 = vmatpush1.bf16.msra.mxu0 0
        %1849 = vmatprep.subr.bf16.mxu0 0
        %1850 = vmatpush1.bf16.msra.mxu0 0
        %1851 = vmatprep.subr.bf16.mxu0 0
        %1852 = vmatpush1.bf16.msra.mxu0 0
        %1853 = vmatprep.subr.bf16.mxu0 0
        %1854 = vmatpush1.bf16.msra.mxu0 0
        %1855 = vmatprep.subr.bf16.mxu0 0
        %1856 = vmatpush1.bf16.msra.mxu0 0
        %1857 = vmatprep.subr.bf16.mxu0 0
        %1858 = vmatpush1.bf16.msra.mxu0 0
        %1859 = vmatprep.subr.bf16.mxu0 0
        %1860 = vmatpush1.bf16.msra.mxu0 0
        %1861 = vmatprep.subr.bf16.mxu0 0
        %1862 = vmatpush1.bf16.msra.mxu0 0
        %1863 = vmatprep.subr.bf16.mxu0 0
        %1864 = vmatpush1.bf16.msra.mxu0 0
        %1865 = vmatprep.mubr.bf16.mxu0 0
        %1866 = vmatmul.mubr.bf16.gmra.mrb[0].mxu0 %v1831
        %v1867 = vpop.f32.mrb[0].mxu0
        %v1868 = vadd.f32 %v1816, %v1867
        %v1869 = vpop.f32.mrb[0].mxu0
        %v1870 = vpop.f32.mrb[0].mxu0
        %v1871 = vpop.f32.mrb[0].mxu0
        %1872 = vdwg.mxu0
        %v1873 = vmax.f32 %v1868, 0.0
        %v1874 = vpack.c.bf16 %v1873, %v1873
        %v1876 = vlaneseq
        %v1877 = vshrl.u32 %v1876, 7
        %v1878 = vsub.s32 0, %v1877
        %v1879 = vrot.slane %v1810, %v1878
        %v1889 = vunpack.c.l.b16 %v1802
        %v1890 = vunpack.c.l.b16 %v1803
        %v1891 = vunpack.c.l.b16 %v1804
        %v1892 = vunpack.c.l.b16 %v1805
        %v1893 = vunpack.c.l.b16 %v1806
        %v1894 = vunpack.c.l.b16 %v1807
        %v1895 = vunpack.c.l.b16 %v1808
        %v1896 = vunpack.c.l.b16 %v1809
        %v1897 = vpack.c.b16 %v1890, %v1889
        %v1898 = vpack.c.b16 %v1892, %v1891
        %v1899 = vpack.c.b16 %v1894, %v1893
        %v1900 = vpack.c.b16 %v1896, %v1895
        %vm1905 = vcmask 523264
        %v1907 = vsel %vm1905, %v1874, 0
        %1909 = vmatprep.subr.bf16.mxu0 0
        %1910 = vmatpush1.bf16.msra.mxu0 %v1897
        %1911 = vmatprep.subr.bf16.mxu0 0
        %1912 = vmatpush1.bf16.msra.mxu0 %v1898
        %1913 = vmatprep.subr.bf16.mxu0 0
        %1914 = vmatpush1.bf16.msra.mxu0 %v1899
        %1915 = vmatprep.subr.bf16.mxu0 0
        %1916 = vmatpush1.bf16.msra.mxu0 %v1900
        %1917 = vmatprep.subr.bf16.mxu0 0
        %1918 = vmatpush1.bf16.msra.mxu0 0
        %1919 = vmatprep.subr.bf16.mxu0 0
        %1920 = vmatpush1.bf16.msra.mxu0 0
        %1921 = vmatprep.subr.bf16.mxu0 0
        %1922 = vmatpush1.bf16.msra.mxu0 0
        %1923 = vmatprep.subr.bf16.mxu0 0
        %1924 = vmatpush1.bf16.msra.mxu0 0
        %1925 = vmatprep.subr.bf16.mxu0 0
        %1926 = vmatpush1.bf16.msra.mxu0 0
        %1927 = vmatprep.subr.bf16.mxu0 0
        %1928 = vmatpush1.bf16.msra.mxu0 0
        %1929 = vmatprep.subr.bf16.mxu0 0
        %1930 = vmatpush1.bf16.msra.mxu0 0
        %1931 = vmatprep.subr.bf16.mxu0 0
        %1932 = vmatpush1.bf16.msra.mxu0 0
        %1933 = vmatprep.subr.bf16.mxu0 0
        %1934 = vmatpush1.bf16.msra.mxu0 0
        %1935 = vmatprep.subr.bf16.mxu0 0
        %1936 = vmatpush1.bf16.msra.mxu0 0
        %1937 = vmatprep.subr.bf16.mxu0 0
        %1938 = vmatpush1.bf16.msra.mxu0 0
        %1939 = vmatprep.subr.bf16.mxu0 0
        %1940 = vmatpush1.bf16.msra.mxu0 0
        %1941 = vmatprep.mubr.bf16.mxu0 0
        %1942 = vmatmul.mubr.bf16.gmra.mrb[0].mxu0 %v1907
        %v1943 = vpop.f32.mrb[0].mxu0
        %v1944 = vadd.f32 %v1879, %v1943
        %v1945 = vpop.f32.mrb[0].mxu0
        %v1946 = vpop.f32.mrb[0].mxu0
        %v1947 = vpop.f32.mrb[0].mxu0
        %1948 = vdwg.mxu0
        %v1949 = vadd.f32 %v1796, %v1944
        %v1950 = vld [vmem:[%s27] sm:$0x1]
        %v1951 = vld [vmem:[%s29] sm:$0x1]
        %v1952 = vsel %vm1193, %v1949, 0.0
        %1953 = vadd.xlane.f32.xlu0 %v1952
        %v1954 = vpop.xlane.xlu0 %1953
        %v1955 = vmul.f32 %v1954, %v1772
        %v1956 = vsub.f32 %v1949, %v1955
        %v1957 = vmul.f32 %v1956, %v1956
        %v1958 = vsel %vm1193, %v1957, 0.0
        %1959 = vadd.xlane.f32.xlu0 %v1958
        %v1960 = vpop.xlane.xlu0 %1959
        %v1961 = vmul.f32 %v1960, %v1772
        %v1962 = vadd.f32 %v1961, 1e-05
        %v1963 = vrsqrt.pop %v1962
        %v1964 = vmul.f32 %v1956, %v1963
        %v1966 = vlaneseq
        %v1967 = vshrl.u32 %v1966, 7
        %v1968 = vsub.s32 0, %v1967
        %v1969 = vrot.slane %v1950, %v1968
        %v1971 = vmul.f32 %v1964, %v1969
        %v1973 = vlaneseq
        %v1974 = vshrl.u32 %v1973, 7
        %v1975 = vsub.s32 0, %v1974
        %v1976 = vrot.slane %v1951, %v1975
        %v1978 = vadd.f32 %v1971, %v1976
        %s1979 = scalar_lea.vmem %s7, 16
        %v1980 = vld [vmem:[%s1979] sm:$0xf]
        %v1981 = vld [vmem:[%s1979 + $0x4] sm:$0xf]
        %v1982 = vld [vmem:[%s1979 + $0x8] sm:$0xf]
        %v1983 = vld [vmem:[%s1979 + $0xc] sm:$0xf]
        %s1984 = scalar_lea.vmem %s9, 1
        %v1985 = vld [vmem:[%s1984] sm:$0x1]
        %s1986 = scalar_lea.vmem %s11, 16
        %v1987 = vld [vmem:[%s1986] sm:$0xf]
        %v1988 = vld [vmem:[%s1986 + $0x4] sm:$0xf]
        %v1989 = vld [vmem:[%s1986 + $0x8] sm:$0xf]
        %v1990 = vld [vmem:[%s1986 + $0xc] sm:$0xf]
        %s1991 = scalar_lea.vmem %s13, 1
        %v1992 = vld [vmem:[%s1991] sm:$0x1]
        %v1993 = vpack.c.bf16 %v1978, %v1978
        %v1995 = vlaneseq
        %v1996 = vshrl.u32 %v1995, 7
        %v1997 = vsub.s32 0, %v1996
        %v1998 = vrot.slane %v1985, %v1997
        %v2004 = vunpack.c.l.b16 %v1980
        %v2005 = vunpack.c.l.b16 %v1981
        %v2006 = vunpack.c.l.b16 %v1982
        %v2007 = vunpack.c.l.b16 %v1983
        %v2008 = vpack.c.b16 %v2005, %v2004
        %v2009 = vpack.c.b16 %v2007, %v2006
        %v2013 = vsel %vm1193, %v1993, 0
        %2015 = vmatprep.subr.bf16.mxu0 0
        %2016 = vmatpush1.bf16.msra.mxu0 %v2008
        %2017 = vmatprep.subr.bf16.mxu0 0
        %2018 = vmatpush1.bf16.msra.mxu0 %v2009
        %2019 = vmatprep.subr.bf16.mxu0 0
        %2020 = vmatpush1.bf16.msra.mxu0 0
        %2021 = vmatprep.subr.bf16.mxu0 0
        %2022 = vmatpush1.bf16.msra.mxu0 0
        %2023 = vmatprep.subr.bf16.mxu0 0
        %2024 = vmatpush1.bf16.msra.mxu0 0
        %2025 = vmatprep.subr.bf16.mxu0 0
        %2026 = vmatpush1.bf16.msra.mxu0 0
        %2027 = vmatprep.subr.bf16.mxu0 0
        %2028 = vmatpush1.bf16.msra.mxu0 0
        %2029 = vmatprep.subr.bf16.mxu0 0
        %2030 = vmatpush1.bf16.msra.mxu0 0
        %2031 = vmatprep.subr.bf16.mxu0 0
        %2032 = vmatpush1.bf16.msra.mxu0 0
        %2033 = vmatprep.subr.bf16.mxu0 0
        %2034 = vmatpush1.bf16.msra.mxu0 0
        %2035 = vmatprep.subr.bf16.mxu0 0
        %2036 = vmatpush1.bf16.msra.mxu0 0
        %2037 = vmatprep.subr.bf16.mxu0 0
        %2038 = vmatpush1.bf16.msra.mxu0 0
        %2039 = vmatprep.subr.bf16.mxu0 0
        %2040 = vmatpush1.bf16.msra.mxu0 0
        %2041 = vmatprep.subr.bf16.mxu0 0
        %2042 = vmatpush1.bf16.msra.mxu0 0
        %2043 = vmatprep.subr.bf16.mxu0 0
        %2044 = vmatpush1.bf16.msra.mxu0 0
        %2045 = vmatprep.subr.bf16.mxu0 0
        %2046 = vmatpush1.bf16.msra.mxu0 0
        %2047 = vmatprep.mubr.bf16.mxu0 0
        %2048 = vmatmul.mubr.bf16.gmra.mrb[0].mxu0 %v2013
        %v2049 = vpop.f32.mrb[0].mxu0
        %v2050 = vadd.f32 %v1998, %v2049
        %v2051 = vpop.f32.mrb[0].mxu0
        %v2052 = vpop.f32.mrb[0].mxu0
        %v2053 = vpop.f32.mrb[0].mxu0
        %2054 = vdwg.mxu0
        %v2055 = vpack.c.bf16 %v2050, %v2050
        %2057 = vrot.lane.b32.xlu0 %v2055, 96
        %v2058 = vpop.permute.xlu0 %2057
        %v2060 = vsel %vm1241, %v2055, 0
        %v2063 = vsel %vm1241, %v2058, 0
        %2065 = vmatprep.subr.bf16.mxu0 0
        %2066 = vmatpush1.bf16.xpose.msra.mxu0 %v2063
        %2067 = vmatprep.subr.bf16.mxu0 0
        %2068 = vmatpush1.bf16.xpose.msra.mxu0 0
        %2069 = vmatprep.subr.bf16.mxu0 0
        %2070 = vmatpush1.bf16.xpose.msra.mxu0 0
        %2071 = vmatprep.subr.bf16.mxu0 0
        %2072 = vmatpush1.bf16.xpose.msra.mxu0 0
        %2073 = vmatprep.subr.bf16.mxu0 0
        %2074 = vmatpush1.bf16.xpose.msra.mxu0 0
        %2075 = vmatprep.subr.bf16.mxu0 0
        %2076 = vmatpush1.bf16.xpose.msra.mxu0 0
        %2077 = vmatprep.subr.bf16.mxu0 0
        %2078 = vmatpush1.bf16.xpose.msra.mxu0 0
        %2079 = vmatprep.subr.bf16.mxu0 0
        %2080 = vmatpush1.bf16.xpose.msra.mxu0 0
        %2081 = vmatprep.subr.bf16.mxu0 0
        %2082 = vmatpush1.bf16.xpose.msra.mxu0 0
        %2083 = vmatprep.subr.bf16.mxu0 0
        %2084 = vmatpush1.bf16.xpose.msra.mxu0 0
        %2085 = vmatprep.subr.bf16.mxu0 0
        %2086 = vmatpush1.bf16.xpose.msra.mxu0 0
        %2087 = vmatprep.subr.bf16.mxu0 0
        %2088 = vmatpush1.bf16.xpose.msra.mxu0 0
        %2089 = vmatprep.subr.bf16.mxu0 0
        %2090 = vmatpush1.bf16.xpose.msra.mxu0 0
        %2091 = vmatprep.subr.bf16.mxu0 0
        %2092 = vmatpush1.bf16.xpose.msra.mxu0 0
        %2093 = vmatprep.subr.bf16.mxu0 0
        %2094 = vmatpush1.bf16.xpose.msra.mxu0 0
        %2095 = vmatprep.subr.bf16.mxu0 0
        %2096 = vmatpush1.bf16.xpose.msra.mxu0 0
        %2097 = vmatprep.mubr.bf16.mxu0 0
        %2098 = vmatmul.mubr.bf16.gmra.mrb[0].mxu0 %v2060
        %v2099 = vpop.f32.mrb[0].mxu0
        %v2100 = vadd.f32 0.0, %v2099
        %v2101 = vpop.f32.mrb[0].mxu0
        %v2102 = vpop.f32.mrb[0].mxu0
        %v2103 = vpop.f32.mrb[0].mxu0
        %2104 = vdwg.mxu0
        %v2105 = vmul.f32 %v2100, 0.35355338
        %v2106 = vsel %vm1241, %v2105, -inf
        %2107 = vmax.xlane.f32.xlu0 %v2106
        %v2108 = vpop.xlane.xlu0 %2107
        %v2109 = vsub.f32 %v2105, %v2108
        %v2110 = vmul.f32 %v2109, 1.442695
        %v2111 = vpow.pop %v2110
        %v2112 = vsel %vm1241, %v2111, 0.0
        %2113 = vadd.xlane.f32.xlu0 %v2112
        %v2114 = vpop.xlane.xlu0 %2113
        %v2115 = vadd.f32 %v2114, 1e-09
        %v2116 = vrcp.pop %v2115
        %v2117 = vmul.f32 %v2111, %v2116
        %v2118 = vpack.c.bf16 %v2117, %v2117
        %2119 = vrot.lane.b32.xlu0 %v2055, 64
        %v2120 = vpop.permute.xlu0 %2119
        %v2122 = vsel %vm1241, %v2118, 0
        %v2125 = vsel %vm1307, %v2120, 0
        %2127 = vmatprep.subr.bf16.mxu0 0
        %2128 = vmatpush1.bf16.msra.mxu0 %v2125
        %2129 = vmatprep.subr.bf16.mxu0 0
        %2130 = vmatpush1.bf16.msra.mxu0 0
        %2131 = vmatprep.subr.bf16.mxu0 0
        %2132 = vmatpush1.bf16.msra.mxu0 0
        %2133 = vmatprep.subr.bf16.mxu0 0
        %2134 = vmatpush1.bf16.msra.mxu0 0
        %2135 = vmatprep.subr.bf16.mxu0 0
        %2136 = vmatpush1.bf16.msra.mxu0 0
        %2137 = vmatprep.subr.bf16.mxu0 0
        %2138 = vmatpush1.bf16.msra.mxu0 0
        %2139 = vmatprep.subr.bf16.mxu0 0
        %2140 = vmatpush1.bf16.msra.mxu0 0
        %2141 = vmatprep.subr.bf16.mxu0 0
        %2142 = vmatpush1.bf16.msra.mxu0 0
        %2143 = vmatprep.subr.bf16.mxu0 0
        %2144 = vmatpush1.bf16.msra.mxu0 0
        %2145 = vmatprep.subr.bf16.mxu0 0
        %2146 = vmatpush1.bf16.msra.mxu0 0
        %2147 = vmatprep.subr.bf16.mxu0 0
        %2148 = vmatpush1.bf16.msra.mxu0 0
        %2149 = vmatprep.subr.bf16.mxu0 0
        %2150 = vmatpush1.bf16.msra.mxu0 0
        %2151 = vmatprep.subr.bf16.mxu0 0
        %2152 = vmatpush1.bf16.msra.mxu0 0
        %2153 = vmatprep.subr.bf16.mxu0 0
        %2154 = vmatpush1.bf16.msra.mxu0 0
        %2155 = vmatprep.subr.bf16.mxu0 0
        %2156 = vmatpush1.bf16.msra.mxu0 0
        %2157 = vmatprep.subr.bf16.mxu0 0
        %2158 = vmatpush1.bf16.msra.mxu0 0
        %2159 = vmatprep.mubr.bf16.mxu0 0
        %2160 = vmatmul.mubr.bf16.gmra.mrb[0].mxu0 %v2122
        %v2161 = vpop.f32.mrb[0].mxu0
        %v2162 = vadd.f32 0.0, %v2161
        %v2163 = vpop.f32.mrb[0].mxu0
        %v2164 = vpop.f32.mrb[0].mxu0
        %v2165 = vpop.f32.mrb[0].mxu0
        %2166 = vdwg.mxu0
        %2167 = vrot.lane.b32.xlu0 %v2055, 120
        %v2168 = vpop.permute.xlu0 %2167
        %2169 = vrot.lane.b32.xlu0 %v2055, 88
        %v2170 = vpop.permute.xlu0 %2169
        %v2172 = vsel %vm1241, %v2168, 0
        %v2175 = vsel %vm1241, %v2170, 0
        %2177 = vmatprep.subr.bf16.mxu0 0
        %2178 = vmatpush1.bf16.xpose.msra.mxu0 %v2175
        %2179 = vmatprep.subr.bf16.mxu0 0
        %2180 = vmatpush1.bf16.xpose.msra.mxu0 0
        %2181 = vmatprep.subr.bf16.mxu0 0
        %2182 = vmatpush1.bf16.xpose.msra.mxu0 0
        %2183 = vmatprep.subr.bf16.mxu0 0
        %2184 = vmatpush1.bf16.xpose.msra.mxu0 0
        %2185 = vmatprep.subr.bf16.mxu0 0
        %2186 = vmatpush1.bf16.xpose.msra.mxu0 0
        %2187 = vmatprep.subr.bf16.mxu0 0
        %2188 = vmatpush1.bf16.xpose.msra.mxu0 0
        %2189 = vmatprep.subr.bf16.mxu0 0
        %2190 = vmatpush1.bf16.xpose.msra.mxu0 0
        %2191 = vmatprep.subr.bf16.mxu0 0
        %2192 = vmatpush1.bf16.xpose.msra.mxu0 0
        %2193 = vmatprep.subr.bf16.mxu0 0
        %2194 = vmatpush1.bf16.xpose.msra.mxu0 0
        %2195 = vmatprep.subr.bf16.mxu0 0
        %2196 = vmatpush1.bf16.xpose.msra.mxu0 0
        %2197 = vmatprep.subr.bf16.mxu0 0
        %2198 = vmatpush1.bf16.xpose.msra.mxu0 0
        %2199 = vmatprep.subr.bf16.mxu0 0
        %2200 = vmatpush1.bf16.xpose.msra.mxu0 0
        %2201 = vmatprep.subr.bf16.mxu0 0
        %2202 = vmatpush1.bf16.xpose.msra.mxu0 0
        %2203 = vmatprep.subr.bf16.mxu0 0
        %2204 = vmatpush1.bf16.xpose.msra.mxu0 0
        %2205 = vmatprep.subr.bf16.mxu0 0
        %2206 = vmatpush1.bf16.xpose.msra.mxu0 0
        %2207 = vmatprep.subr.bf16.mxu0 0
        %2208 = vmatpush1.bf16.xpose.msra.mxu0 0
        %2209 = vmatprep.mubr.bf16.mxu0 0
        %2210 = vmatmul.mubr.bf16.gmra.mrb[0].mxu0 %v2172
        %v2211 = vpop.f32.mrb[0].mxu0
        %v2212 = vadd.f32 0.0, %v2211
        %v2213 = vpop.f32.mrb[0].mxu0
        %v2214 = vpop.f32.mrb[0].mxu0
        %v2215 = vpop.f32.mrb[0].mxu0
        %2216 = vdwg.mxu0
        %v2217 = vmul.f32 %v2212, 0.35355338
        %v2218 = vsel %vm1241, %v2217, -inf
        %2219 = vmax.xlane.f32.xlu0 %v2218
        %v2220 = vpop.xlane.xlu0 %2219
        %v2221 = vsub.f32 %v2217, %v2220
        %v2222 = vmul.f32 %v2221, 1.442695
        %v2223 = vpow.pop %v2222
        %v2224 = vsel %vm1241, %v2223, 0.0
        %2225 = vadd.xlane.f32.xlu0 %v2224
        %v2226 = vpop.xlane.xlu0 %2225
        %v2227 = vadd.f32 %v2226, 1e-09
        %v2228 = vrcp.pop %v2227
        %v2229 = vmul.f32 %v2223, %v2228
        %v2230 = vpack.c.bf16 %v2229, %v2229
        %2231 = vrot.lane.b32.xlu0 %v2055, 56
        %v2232 = vpop.permute.xlu0 %2231
        %v2234 = vsel %vm1241, %v2230, 0
        %v2237 = vsel %vm1307, %v2232, 0
        %2239 = vmatprep.subr.bf16.mxu0 0
        %2240 = vmatpush1.bf16.msra.mxu0 %v2237
        %2241 = vmatprep.subr.bf16.mxu0 0
        %2242 = vmatpush1.bf16.msra.mxu0 0
        %2243 = vmatprep.subr.bf16.mxu0 0
        %2244 = vmatpush1.bf16.msra.mxu0 0
        %2245 = vmatprep.subr.bf16.mxu0 0
        %2246 = vmatpush1.bf16.msra.mxu0 0
        %2247 = vmatprep.subr.bf16.mxu0 0
        %2248 = vmatpush1.bf16.msra.mxu0 0
        %2249 = vmatprep.subr.bf16.mxu0 0
        %2250 = vmatpush1.bf16.msra.mxu0 0
        %2251 = vmatprep.subr.bf16.mxu0 0
        %2252 = vmatpush1.bf16.msra.mxu0 0
        %2253 = vmatprep.subr.bf16.mxu0 0
        %2254 = vmatpush1.bf16.msra.mxu0 0
        %2255 = vmatprep.subr.bf16.mxu0 0
        %2256 = vmatpush1.bf16.msra.mxu0 0
        %2257 = vmatprep.subr.bf16.mxu0 0
        %2258 = vmatpush1.bf16.msra.mxu0 0
        %2259 = vmatprep.subr.bf16.mxu0 0
        %2260 = vmatpush1.bf16.msra.mxu0 0
        %2261 = vmatprep.subr.bf16.mxu0 0
        %2262 = vmatpush1.bf16.msra.mxu0 0
        %2263 = vmatprep.subr.bf16.mxu0 0
        %2264 = vmatpush1.bf16.msra.mxu0 0
        %2265 = vmatprep.subr.bf16.mxu0 0
        %2266 = vmatpush1.bf16.msra.mxu0 0
        %2267 = vmatprep.subr.bf16.mxu0 0
        %2268 = vmatpush1.bf16.msra.mxu0 0
        %2269 = vmatprep.subr.bf16.mxu0 0
        %2270 = vmatpush1.bf16.msra.mxu0 0
        %2271 = vmatprep.mubr.bf16.mxu0 0
        %2272 = vmatmul.mubr.bf16.gmra.mrb[0].mxu0 %v2234
        %v2273 = vpop.f32.mrb[0].mxu0
        %v2274 = vadd.f32 0.0, %v2273
        %v2275 = vpop.f32.mrb[0].mxu0
        %v2276 = vpop.f32.mrb[0].mxu0
        %v2277 = vpop.f32.mrb[0].mxu0
        %2278 = vdwg.mxu0
        %2279 = vrot.lane.b32.xlu0 %v2055, 112
        %v2280 = vpop.permute.xlu0 %2279
        %2281 = vrot.lane.b32.xlu0 %v2055, 80
        %v2282 = vpop.permute.xlu0 %2281
        %v2284 = vsel %vm1241, %v2280, 0
        %v2287 = vsel %vm1241, %v2282, 0
        %2289 = vmatprep.subr.bf16.mxu0 0
        %2290 = vmatpush1.bf16.xpose.msra.mxu0 %v2287
        %2291 = vmatprep.subr.bf16.mxu0 0
        %2292 = vmatpush1.bf16.xpose.msra.mxu0 0
        %2293 = vmatprep.subr.bf16.mxu0 0
        %2294 = vmatpush1.bf16.xpose.msra.mxu0 0
        %2295 = vmatprep.subr.bf16.mxu0 0
        %2296 = vmatpush1.bf16.xpose.msra.mxu0 0
        %2297 = vmatprep.subr.bf16.mxu0 0
        %2298 = vmatpush1.bf16.xpose.msra.mxu0 0
        %2299 = vmatprep.subr.bf16.mxu0 0
        %2300 = vmatpush1.bf16.xpose.msra.mxu0 0
        %2301 = vmatprep.subr.bf16.mxu0 0
        %2302 = vmatpush1.bf16.xpose.msra.mxu0 0
        %2303 = vmatprep.subr.bf16.mxu0 0
        %2304 = vmatpush1.bf16.xpose.msra.mxu0 0
        %2305 = vmatprep.subr.bf16.mxu0 0
        %2306 = vmatpush1.bf16.xpose.msra.mxu0 0
        %2307 = vmatprep.subr.bf16.mxu0 0
        %2308 = vmatpush1.bf16.xpose.msra.mxu0 0
        %2309 = vmatprep.subr.bf16.mxu0 0
        %2310 = vmatpush1.bf16.xpose.msra.mxu0 0
        %2311 = vmatprep.subr.bf16.mxu0 0
        %2312 = vmatpush1.bf16.xpose.msra.mxu0 0
        %2313 = vmatprep.subr.bf16.mxu0 0
        %2314 = vmatpush1.bf16.xpose.msra.mxu0 0
        %2315 = vmatprep.subr.bf16.mxu0 0
        %2316 = vmatpush1.bf16.xpose.msra.mxu0 0
        %2317 = vmatprep.subr.bf16.mxu0 0
        %2318 = vmatpush1.bf16.xpose.msra.mxu0 0
        %2319 = vmatprep.subr.bf16.mxu0 0
        %2320 = vmatpush1.bf16.xpose.msra.mxu0 0
        %2321 = vmatprep.mubr.bf16.mxu0 0
        %2322 = vmatmul.mubr.bf16.gmra.mrb[0].mxu0 %v2284
        %v2323 = vpop.f32.mrb[0].mxu0
        %v2324 = vadd.f32 0.0, %v2323
        %v2325 = vpop.f32.mrb[0].mxu0
        %v2326 = vpop.f32.mrb[0].mxu0
        %v2327 = vpop.f32.mrb[0].mxu0
        %2328 = vdwg.mxu0
        %v2329 = vmul.f32 %v2324, 0.35355338
        %v2330 = vsel %vm1241, %v2329, -inf
        %2331 = vmax.xlane.f32.xlu0 %v2330
        %v2332 = vpop.xlane.xlu0 %2331
        %v2333 = vsub.f32 %v2329, %v2332
        %v2334 = vmul.f32 %v2333, 1.442695
        %v2335 = vpow.pop %v2334
        %v2336 = vsel %vm1241, %v2335, 0.0
        %2337 = vadd.xlane.f32.xlu0 %v2336
        %v2338 = vpop.xlane.xlu0 %2337
        %v2339 = vadd.f32 %v2338, 1e-09
        %v2340 = vrcp.pop %v2339
        %v2341 = vmul.f32 %v2335, %v2340
        %v2342 = vpack.c.bf16 %v2341, %v2341
        %2343 = vrot.lane.b32.xlu0 %v2055, 48
        %v2344 = vpop.permute.xlu0 %2343
        %v2346 = vsel %vm1241, %v2342, 0
        %v2349 = vsel %vm1307, %v2344, 0
        %2351 = vmatprep.subr.bf16.mxu0 0
        %2352 = vmatpush1.bf16.msra.mxu0 %v2349
        %2353 = vmatprep.subr.bf16.mxu0 0
        %2354 = vmatpush1.bf16.msra.mxu0 0
        %2355 = vmatprep.subr.bf16.mxu0 0
        %2356 = vmatpush1.bf16.msra.mxu0 0
        %2357 = vmatprep.subr.bf16.mxu0 0
        %2358 = vmatpush1.bf16.msra.mxu0 0
        %2359 = vmatprep.subr.bf16.mxu0 0
        %2360 = vmatpush1.bf16.msra.mxu0 0
        %2361 = vmatprep.subr.bf16.mxu0 0
        %2362 = vmatpush1.bf16.msra.mxu0 0
        %2363 = vmatprep.subr.bf16.mxu0 0
        %2364 = vmatpush1.bf16.msra.mxu0 0
        %2365 = vmatprep.subr.bf16.mxu0 0
        %2366 = vmatpush1.bf16.msra.mxu0 0
        %2367 = vmatprep.subr.bf16.mxu0 0
        %2368 = vmatpush1.bf16.msra.mxu0 0
        %2369 = vmatprep.subr.bf16.mxu0 0
        %2370 = vmatpush1.bf16.msra.mxu0 0
        %2371 = vmatprep.subr.bf16.mxu0 0
        %2372 = vmatpush1.bf16.msra.mxu0 0
        %2373 = vmatprep.subr.bf16.mxu0 0
        %2374 = vmatpush1.bf16.msra.mxu0 0
        %2375 = vmatprep.subr.bf16.mxu0 0
        %2376 = vmatpush1.bf16.msra.mxu0 0
        %2377 = vmatprep.subr.bf16.mxu0 0
        %2378 = vmatpush1.bf16.msra.mxu0 0
        %2379 = vmatprep.subr.bf16.mxu0 0
        %2380 = vmatpush1.bf16.msra.mxu0 0
        %2381 = vmatprep.subr.bf16.mxu0 0
        %2382 = vmatpush1.bf16.msra.mxu0 0
        %2383 = vmatprep.mubr.bf16.mxu0 0
        %2384 = vmatmul.mubr.bf16.gmra.mrb[0].mxu0 %v2346
        %v2385 = vpop.f32.mrb[0].mxu0
        %v2386 = vadd.f32 0.0, %v2385
        %v2387 = vpop.f32.mrb[0].mxu0
        %v2388 = vpop.f32.mrb[0].mxu0
        %v2389 = vpop.f32.mrb[0].mxu0
        %2390 = vdwg.mxu0
        %2391 = vrot.lane.b32.xlu0 %v2055, 104
        %v2392 = vpop.permute.xlu0 %2391
        %2393 = vrot.lane.b32.xlu0 %v2055, 72
        %v2394 = vpop.permute.xlu0 %2393
        %v2396 = vsel %vm1241, %v2392, 0
        %v2399 = vsel %vm1241, %v2394, 0
        %2401 = vmatprep.subr.bf16.mxu0 0
        %2402 = vmatpush1.bf16.xpose.msra.mxu0 %v2399
        %2403 = vmatprep.subr.bf16.mxu0 0
        %2404 = vmatpush1.bf16.xpose.msra.mxu0 0
        %2405 = vmatprep.subr.bf16.mxu0 0
        %2406 = vmatpush1.bf16.xpose.msra.mxu0 0
        %2407 = vmatprep.subr.bf16.mxu0 0
        %2408 = vmatpush1.bf16.xpose.msra.mxu0 0
        %2409 = vmatprep.subr.bf16.mxu0 0
        %2410 = vmatpush1.bf16.xpose.msra.mxu0 0
        %2411 = vmatprep.subr.bf16.mxu0 0
        %2412 = vmatpush1.bf16.xpose.msra.mxu0 0
        %2413 = vmatprep.subr.bf16.mxu0 0
        %2414 = vmatpush1.bf16.xpose.msra.mxu0 0
        %2415 = vmatprep.subr.bf16.mxu0 0
        %2416 = vmatpush1.bf16.xpose.msra.mxu0 0
        %2417 = vmatprep.subr.bf16.mxu0 0
        %2418 = vmatpush1.bf16.xpose.msra.mxu0 0
        %2419 = vmatprep.subr.bf16.mxu0 0
        %2420 = vmatpush1.bf16.xpose.msra.mxu0 0
        %2421 = vmatprep.subr.bf16.mxu0 0
        %2422 = vmatpush1.bf16.xpose.msra.mxu0 0
        %2423 = vmatprep.subr.bf16.mxu0 0
        %2424 = vmatpush1.bf16.xpose.msra.mxu0 0
        %2425 = vmatprep.subr.bf16.mxu0 0
        %2426 = vmatpush1.bf16.xpose.msra.mxu0 0
        %2427 = vmatprep.subr.bf16.mxu0 0
        %2428 = vmatpush1.bf16.xpose.msra.mxu0 0
        %2429 = vmatprep.subr.bf16.mxu0 0
        %2430 = vmatpush1.bf16.xpose.msra.mxu0 0
        %2431 = vmatprep.subr.bf16.mxu0 0
        %2432 = vmatpush1.bf16.xpose.msra.mxu0 0
        %2433 = vmatprep.mubr.bf16.mxu0 0
        %2434 = vmatmul.mubr.bf16.gmra.mrb[0].mxu0 %v2396
        %v2435 = vpop.f32.mrb[0].mxu0
        %v2436 = vadd.f32 0.0, %v2435
        %v2437 = vpop.f32.mrb[0].mxu0
        %v2438 = vpop.f32.mrb[0].mxu0
        %v2439 = vpop.f32.mrb[0].mxu0
        %2440 = vdwg.mxu0
        %v2441 = vmul.f32 %v2436, 0.35355338
        %v2442 = vsel %vm1241, %v2441, -inf
        %2443 = vmax.xlane.f32.xlu0 %v2442
        %v2444 = vpop.xlane.xlu0 %2443
        %v2445 = vsub.f32 %v2441, %v2444
        %v2446 = vmul.f32 %v2445, 1.442695
        %v2447 = vpow.pop %v2446
        %v2448 = vsel %vm1241, %v2447, 0.0
        %2449 = vadd.xlane.f32.xlu0 %v2448
        %v2450 = vpop.xlane.xlu0 %2449
        %v2451 = vadd.f32 %v2450, 1e-09
        %v2452 = vrcp.pop %v2451
        %v2453 = vmul.f32 %v2447, %v2452
        %v2454 = vpack.c.bf16 %v2453, %v2453
        %2455 = vrot.lane.b32.xlu0 %v2055, 40
        %v2456 = vpop.permute.xlu0 %2455
        %v2458 = vsel %vm1241, %v2454, 0
        %v2461 = vsel %vm1307, %v2456, 0
        %2463 = vmatprep.subr.bf16.mxu0 0
        %2464 = vmatpush1.bf16.msra.mxu0 %v2461
        %2465 = vmatprep.subr.bf16.mxu0 0
        %2466 = vmatpush1.bf16.msra.mxu0 0
        %2467 = vmatprep.subr.bf16.mxu0 0
        %2468 = vmatpush1.bf16.msra.mxu0 0
        %2469 = vmatprep.subr.bf16.mxu0 0
        %2470 = vmatpush1.bf16.msra.mxu0 0
        %2471 = vmatprep.subr.bf16.mxu0 0
        %2472 = vmatpush1.bf16.msra.mxu0 0
        %2473 = vmatprep.subr.bf16.mxu0 0
        %2474 = vmatpush1.bf16.msra.mxu0 0
        %2475 = vmatprep.subr.bf16.mxu0 0
        %2476 = vmatpush1.bf16.msra.mxu0 0
        %2477 = vmatprep.subr.bf16.mxu0 0
        %2478 = vmatpush1.bf16.msra.mxu0 0
        %2479 = vmatprep.subr.bf16.mxu0 0
        %2480 = vmatpush1.bf16.msra.mxu0 0
        %2481 = vmatprep.subr.bf16.mxu0 0
        %2482 = vmatpush1.bf16.msra.mxu0 0
        %2483 = vmatprep.subr.bf16.mxu0 0
        %2484 = vmatpush1.bf16.msra.mxu0 0
        %2485 = vmatprep.subr.bf16.mxu0 0
        %2486 = vmatpush1.bf16.msra.mxu0 0
        %2487 = vmatprep.subr.bf16.mxu0 0
        %2488 = vmatpush1.bf16.msra.mxu0 0
        %2489 = vmatprep.subr.bf16.mxu0 0
        %2490 = vmatpush1.bf16.msra.mxu0 0
        %2491 = vmatprep.subr.bf16.mxu0 0
        %2492 = vmatpush1.bf16.msra.mxu0 0
        %2493 = vmatprep.subr.bf16.mxu0 0
        %2494 = vmatpush1.bf16.msra.mxu0 0
        %2495 = vmatprep.mubr.bf16.mxu0 0
        %2496 = vmatmul.mubr.bf16.gmra.mrb[0].mxu0 %v2458
        %v2497 = vpop.f32.mrb[0].mxu0
        %v2498 = vadd.f32 0.0, %v2497
        %v2499 = vpop.f32.mrb[0].mxu0
        %v2500 = vpop.f32.mrb[0].mxu0
        %v2501 = vpop.f32.mrb[0].mxu0
        %2502 = vdwg.mxu0
        %2504 = vrot.lane.b32.xlu0 %v2274, 8
        %v2505 = vpop.permute.xlu0 %2504
        %2508 = vrot.lane.b32.xlu0 %v2386, 16
        %v2509 = vpop.permute.xlu0 %2508
        %2512 = vrot.lane.b32.xlu0 %v2498, 24
        %v2513 = vpop.permute.xlu0 %2512
        %v2515 = vsel %vm1241, %v2162, %v2505
        %v2516 = vsel %vm1700, %v2515, %v2509
        %v2517 = vsel %vm1702, %v2516, %v2513
        %v2518 = vpack.c.bf16 %v2517, %v2517
        %v2520 = vlaneseq
        %v2521 = vshrl.u32 %v2520, 7
        %v2522 = vsub.s32 0, %v2521
        %v2523 = vrot.slane %v1992, %v2522
        %v2529 = vunpack.c.l.b16 %v1987
        %v2530 = vunpack.c.l.b16 %v1988
        %v2531 = vunpack.c.l.b16 %v1989
        %v2532 = vunpack.c.l.b16 %v1990
        %v2533 = vpack.c.b16 %v2530, %v2529
        %v2534 = vpack.c.b16 %v2532, %v2531
        %v2538 = vsel %vm1193, %v2518, 0
        %2540 = vmatprep.subr.bf16.mxu0 0
        %2541 = vmatpush1.bf16.msra.mxu0 %v2533
        %2542 = vmatprep.subr.bf16.mxu0 0
        %2543 = vmatpush1.bf16.msra.mxu0 %v2534
        %2544 = vmatprep.subr.bf16.mxu0 0
        %2545 = vmatpush1.bf16.msra.mxu0 0
        %2546 = vmatprep.subr.bf16.mxu0 0
        %2547 = vmatpush1.bf16.msra.mxu0 0
        %2548 = vmatprep.subr.bf16.mxu0 0
        %2549 = vmatpush1.bf16.msra.mxu0 0
        %2550 = vmatprep.subr.bf16.mxu0 0
        %2551 = vmatpush1.bf16.msra.mxu0 0
        %2552 = vmatprep.subr.bf16.mxu0 0
        %2553 = vmatpush1.bf16.msra.mxu0 0
        %2554 = vmatprep.subr.bf16.mxu0 0
        %2555 = vmatpush1.bf16.msra.mxu0 0
        %2556 = vmatprep.subr.bf16.mxu0 0
        %2557 = vmatpush1.bf16.msra.mxu0 0
        %2558 = vmatprep.subr.bf16.mxu0 0
        %2559 = vmatpush1.bf16.msra.mxu0 0
        %2560 = vmatprep.subr.bf16.mxu0 0
        %2561 = vmatpush1.bf16.msra.mxu0 0
        %2562 = vmatprep.subr.bf16.mxu0 0
        %2563 = vmatpush1.bf16.msra.mxu0 0
        %2564 = vmatprep.subr.bf16.mxu0 0
        %2565 = vmatpush1.bf16.msra.mxu0 0
        %2566 = vmatprep.subr.bf16.mxu0 0
        %2567 = vmatpush1.bf16.msra.mxu0 0
        %2568 = vmatprep.subr.bf16.mxu0 0
        %2569 = vmatpush1.bf16.msra.mxu0 0
        %2570 = vmatprep.subr.bf16.mxu0 0
        %2571 = vmatpush1.bf16.msra.mxu0 0
        %2572 = vmatprep.mubr.bf16.mxu0 0
        %2573 = vmatmul.mubr.bf16.gmra.mrb[0].mxu0 %v2538
        %v2574 = vpop.f32.mrb[0].mxu0
        %v2575 = vadd.f32 %v2523, %v2574
        %v2576 = vpop.f32.mrb[0].mxu0
        %v2577 = vpop.f32.mrb[0].mxu0
        %v2578 = vpop.f32.mrb[0].mxu0
        %2579 = vdwg.mxu0
        %v2580 = vadd.f32 %v1978, %v2575
        %s2581 = scalar_lea.vmem %s23, 1
        %v2582 = vld [vmem:[%s2581] sm:$0x1]
        %s2583 = scalar_lea.vmem %s25, 1
        %v2584 = vld [vmem:[%s2583] sm:$0x1]
        %v2585 = vsel %vm1193, %v2580, 0.0
        %2586 = vadd.xlane.f32.xlu0 %v2585
        %v2587 = vpop.xlane.xlu0 %2586
        %v2588 = vmul.f32 %v2587, %v1772
        %v2589 = vsub.f32 %v2580, %v2588
        %v2590 = vmul.f32 %v2589, %v2589
        %v2591 = vsel %vm1193, %v2590, 0.0
        %2592 = vadd.xlane.f32.xlu0 %v2591
        %v2593 = vpop.xlane.xlu0 %2592
        %v2594 = vmul.f32 %v2593, %v1772
        %v2595 = vadd.f32 %v2594, 1e-05
        %v2596 = vrsqrt.pop %v2595
        %v2597 = vmul.f32 %v2589, %v2596
        %v2599 = vlaneseq
        %v2600 = vshrl.u32 %v2599, 7
        %v2601 = vsub.s32 0, %v2600
        %v2602 = vrot.slane %v2582, %v2601
        %v2604 = vmul.f32 %v2597, %v2602
        %v2606 = vlaneseq
        %v2607 = vshrl.u32 %v2606, 7
        %v2608 = vsub.s32 0, %v2607
        %v2609 = vrot.slane %v2584, %v2608
        %v2611 = vadd.f32 %v2604, %v2609
        %s2612 = scalar_lea.vmem %s15, 16
        %v2613 = vld [vmem:[%s2612] sm:$0xf]
        %v2614 = vld [vmem:[%s2612 + $0x4] sm:$0xf]
        %v2615 = vld [vmem:[%s2612 + $0x8] sm:$0xf]
        %v2616 = vld [vmem:[%s2612 + $0xc] sm:$0xf]
        %s2617 = scalar_lea.vmem %s17, 1
        %v2618 = vld [vmem:[%s2617] sm:$0x1]
        %s2619 = scalar_lea.vmem %s19, 32
        %v2620 = vld [vmem:[%s2619] sm:$0xf]
        %v2621 = vld [vmem:[%s2619 + $0x4] sm:$0xf]
        %v2622 = vld [vmem:[%s2619 + $0x8] sm:$0xf]
        %v2623 = vld [vmem:[%s2619 + $0xc] sm:$0xf]
        %v2624 = vld [vmem:[%s2619 + $0x10] sm:$0xf]
        %v2625 = vld [vmem:[%s2619 + $0x14] sm:$0xf]
        %v2626 = vld [vmem:[%s2619 + $0x18] sm:$0xf]
        %v2627 = vld [vmem:[%s2619 + $0x1c] sm:$0xf]
        %s2628 = scalar_lea.vmem %s21, 1
        %v2629 = vld [vmem:[%s2628] sm:$0x1]
        %v2630 = vpack.c.bf16 %v2611, %v2611
        %v2632 = vlaneseq
        %v2633 = vshrl.u32 %v2632, 7
        %v2634 = vsub.s32 0, %v2633
        %v2635 = vrot.slane %v2618, %v2634
        %v2641 = vunpack.c.l.b16 %v2613
        %v2642 = vunpack.c.l.b16 %v2614
        %v2643 = vunpack.c.l.b16 %v2615
        %v2644 = vunpack.c.l.b16 %v2616
        %v2645 = vpack.c.b16 %v2642, %v2641
        %v2646 = vpack.c.b16 %v2644, %v2643
        %v2650 = vsel %vm1193, %v2630, 0
        %2652 = vmatprep.subr.bf16.mxu0 0
        %2653 = vmatpush1.bf16.msra.mxu0 %v2645
        %2654 = vmatprep.subr.bf16.mxu0 0
        %2655 = vmatpush1.bf16.msra.mxu0 %v2646
        %2656 = vmatprep.subr.bf16.mxu0 0
        %2657 = vmatpush1.bf16.msra.mxu0 0
        %2658 = vmatprep.subr.bf16.mxu0 0
        %2659 = vmatpush1.bf16.msra.mxu0 0
        %2660 = vmatprep.subr.bf16.mxu0 0
        %2661 = vmatpush1.bf16.msra.mxu0 0
        %2662 = vmatprep.subr.bf16.mxu0 0
        %2663 = vmatpush1.bf16.msra.mxu0 0
        %2664 = vmatprep.subr.bf16.mxu0 0
        %2665 = vmatpush1.bf16.msra.mxu0 0
        %2666 = vmatprep.subr.bf16.mxu0 0
        %2667 = vmatpush1.bf16.msra.mxu0 0
        %2668 = vmatprep.subr.bf16.mxu0 0
        %2669 = vmatpush1.bf16.msra.mxu0 0
        %2670 = vmatprep.subr.bf16.mxu0 0
        %2671 = vmatpush1.bf16.msra.mxu0 0
        %2672 = vmatprep.subr.bf16.mxu0 0
        %2673 = vmatpush1.bf16.msra.mxu0 0
        %2674 = vmatprep.subr.bf16.mxu0 0
        %2675 = vmatpush1.bf16.msra.mxu0 0
        %2676 = vmatprep.subr.bf16.mxu0 0
        %2677 = vmatpush1.bf16.msra.mxu0 0
        %2678 = vmatprep.subr.bf16.mxu0 0
        %2679 = vmatpush1.bf16.msra.mxu0 0
        %2680 = vmatprep.subr.bf16.mxu0 0
        %2681 = vmatpush1.bf16.msra.mxu0 0
        %2682 = vmatprep.subr.bf16.mxu0 0
        %2683 = vmatpush1.bf16.msra.mxu0 0
        %2684 = vmatprep.mubr.bf16.mxu0 0
        %2685 = vmatmul.mubr.bf16.gmra.mrb[0].mxu0 %v2650
        %v2686 = vpop.f32.mrb[0].mxu0
        %v2687 = vadd.f32 %v2635, %v2686
        %v2688 = vpop.f32.mrb[0].mxu0
        %v2689 = vpop.f32.mrb[0].mxu0
        %v2690 = vpop.f32.mrb[0].mxu0
        %2691 = vdwg.mxu0
        %v2692 = vmax.f32 %v2687, 0.0
        %v2693 = vpack.c.bf16 %v2692, %v2692
        %v2695 = vlaneseq
        %v2696 = vshrl.u32 %v2695, 7
        %v2697 = vsub.s32 0, %v2696
        %v2698 = vrot.slane %v2629, %v2697
        %v2708 = vunpack.c.l.b16 %v2620
        %v2709 = vunpack.c.l.b16 %v2621
        %v2710 = vunpack.c.l.b16 %v2622
        %v2711 = vunpack.c.l.b16 %v2623
        %v2712 = vunpack.c.l.b16 %v2624
        %v2713 = vunpack.c.l.b16 %v2625
        %v2714 = vunpack.c.l.b16 %v2626
        %v2715 = vunpack.c.l.b16 %v2627
        %v2716 = vpack.c.b16 %v2709, %v2708
        %v2717 = vpack.c.b16 %v2711, %v2710
        %v2718 = vpack.c.b16 %v2713, %v2712
        %v2719 = vpack.c.b16 %v2715, %v2714
        %v2725 = vsel %vm1905, %v2693, 0
        %2727 = vmatprep.subr.bf16.mxu0 0
        %2728 = vmatpush1.bf16.msra.mxu0 %v2716
        %2729 = vmatprep.subr.bf16.mxu0 0
        %2730 = vmatpush1.bf16.msra.mxu0 %v2717
        %2731 = vmatprep.subr.bf16.mxu0 0
        %2732 = vmatpush1.bf16.msra.mxu0 %v2718
        %2733 = vmatprep.subr.bf16.mxu0 0
        %2734 = vmatpush1.bf16.msra.mxu0 %v2719
        %2735 = vmatprep.subr.bf16.mxu0 0
        %2736 = vmatpush1.bf16.msra.mxu0 0
        %2737 = vmatprep.subr.bf16.mxu0 0
        %2738 = vmatpush1.bf16.msra.mxu0 0
        %2739 = vmatprep.subr.bf16.mxu0 0
        %2740 = vmatpush1.bf16.msra.mxu0 0
        %2741 = vmatprep.subr.bf16.mxu0 0
        %2742 = vmatpush1.bf16.msra.mxu0 0
        %2743 = vmatprep.subr.bf16.mxu0 0
        %2744 = vmatpush1.bf16.msra.mxu0 0
        %2745 = vmatprep.subr.bf16.mxu0 0
        %2746 = vmatpush1.bf16.msra.mxu0 0
        %2747 = vmatprep.subr.bf16.mxu0 0
        %2748 = vmatpush1.bf16.msra.mxu0 0
        %2749 = vmatprep.subr.bf16.mxu0 0
        %2750 = vmatpush1.bf16.msra.mxu0 0
        %2751 = vmatprep.subr.bf16.mxu0 0
        %2752 = vmatpush1.bf16.msra.mxu0 0
        %2753 = vmatprep.subr.bf16.mxu0 0
        %2754 = vmatpush1.bf16.msra.mxu0 0
        %2755 = vmatprep.subr.bf16.mxu0 0
        %2756 = vmatpush1.bf16.msra.mxu0 0
        %2757 = vmatprep.subr.bf16.mxu0 0
        %2758 = vmatpush1.bf16.msra.mxu0 0
        %2759 = vmatprep.mubr.bf16.mxu0 0
        %2760 = vmatmul.mubr.bf16.gmra.mrb[0].mxu0 %v2725
        %v2761 = vpop.f32.mrb[0].mxu0
        %v2762 = vadd.f32 %v2698, %v2761
        %v2763 = vpop.f32.mrb[0].mxu0
        %v2764 = vpop.f32.mrb[0].mxu0
        %v2765 = vpop.f32.mrb[0].mxu0
        %2766 = vdwg.mxu0
        %v2767 = vadd.f32 %v2611, %v2762
        %s2768 = scalar_lea.vmem %s27, 1
        %v2769 = vld [vmem:[%s2768] sm:$0x1]
        %s2770 = scalar_lea.vmem %s29, 1
        %v2771 = vld [vmem:[%s2770] sm:$0x1]
        %v2772 = vsel %vm1193, %v2767, 0.0
        %2773 = vadd.xlane.f32.xlu0 %v2772
        %v2774 = vpop.xlane.xlu0 %2773
        %v2775 = vmul.f32 %v2774, %v1772
        %v2776 = vsub.f32 %v2767, %v2775
        %v2777 = vmul.f32 %v2776, %v2776
        %v2778 = vsel %vm1193, %v2777, 0.0
        %2779 = vadd.xlane.f32.xlu0 %v2778
        %v2780 = vpop.xlane.xlu0 %2779
        %v2781 = vmul.f32 %v2780, %v1772
        %v2782 = vadd.f32 %v2781, 1e-05
        %v2783 = vrsqrt.pop %v2782
        %v2784 = vmul.f32 %v2776, %v2783
        %v2786 = vlaneseq
        %v2787 = vshrl.u32 %v2786, 7
        %v2788 = vsub.s32 0, %v2787
        %v2789 = vrot.slane %v2769, %v2788
        %v2791 = vmul.f32 %v2784, %v2789
        %v2793 = vlaneseq
        %v2794 = vshrl.u32 %v2793, 7
        %v2795 = vsub.s32 0, %v2794
        %v2796 = vrot.slane %v2771, %v2795
        %v2798 = vadd.f32 %v2791, %v2796
        %v2799 = vld [vmem:[%s1149] sm:$0xff]
        %v2800 = vmul.f32 %v2799, 5.656854
        %v2801 = vadd.f32 %v2800, %v1161
        %v2802 = vld [vmem:[%s31] sm:$0xf]
        %v2803 = vld [vmem:[%s31 + $0x4] sm:$0xf]
        %v2804 = vld [vmem:[%s31 + $0x8] sm:$0xf]
        %v2805 = vld [vmem:[%s31 + $0xc] sm:$0xf]
        %v2806 = vld [vmem:[%s33] sm:$0x1]
        %v2807 = vld [vmem:[%s35] sm:$0xf]
        %v2808 = vld [vmem:[%s35 + $0x4] sm:$0xf]
        %v2809 = vld [vmem:[%s35 + $0x8] sm:$0xf]
        %v2810 = vld [vmem:[%s35 + $0xc] sm:$0xf]
        %v2811 = vld [vmem:[%s37] sm:$0x1]
        %v2812 = vpack.c.bf16 %v2801, %v2801
        %v2814 = vlaneseq
        %v2815 = vshrl.u32 %v2814, 7
        %v2816 = vsub.s32 0, %v2815
        %v2817 = vrot.slane %v2806, %v2816
        %v2823 = vunpack.c.l.b16 %v2802
        %v2824 = vunpack.c.l.b16 %v2803
        %v2825 = vunpack.c.l.b16 %v2804
        %v2826 = vunpack.c.l.b16 %v2805
        %v2827 = vpack.c.b16 %v2824, %v2823
        %v2828 = vpack.c.b16 %v2826, %v2825
        %v2832 = vsel %vm1193, %v2812, 0
        %2834 = vmatprep.subr.bf16.mxu0 0
        %2835 = vmatpush1.bf16.msra.mxu0 %v2827
        %2836 = vmatprep.subr.bf16.mxu0 0
        %2837 = vmatpush1.bf16.msra.mxu0 %v2828
        %2838 = vmatprep.subr.bf16.mxu0 0
        %2839 = vmatpush1.bf16.msra.mxu0 0
        %2840 = vmatprep.subr.bf16.mxu0 0
        %2841 = vmatpush1.bf16.msra.mxu0 0
        %2842 = vmatprep.subr.bf16.mxu0 0
        %2843 = vmatpush1.bf16.msra.mxu0 0
        %2844 = vmatprep.subr.bf16.mxu0 0
        %2845 = vmatpush1.bf16.msra.mxu0 0
        %2846 = vmatprep.subr.bf16.mxu0 0
        %2847 = vmatpush1.bf16.msra.mxu0 0
        %2848 = vmatprep.subr.bf16.mxu0 0
        %2849 = vmatpush1.bf16.msra.mxu0 0
        %2850 = vmatprep.subr.bf16.mxu0 0
        %2851 = vmatpush1.bf16.msra.mxu0 0
        %2852 = vmatprep.subr.bf16.mxu0 0
        %2853 = vmatpush1.bf16.msra.mxu0 0
        %2854 = vmatprep.subr.bf16.mxu0 0
        %2855 = vmatpush1.bf16.msra.mxu0 0
        %2856 = vmatprep.subr.bf16.mxu0 0
        %2857 = vmatpush1.bf16.msra.mxu0 0
        %2858 = vmatprep.subr.bf16.mxu0 0
        %2859 = vmatpush1.bf16.msra.mxu0 0
        %2860 = vmatprep.subr.bf16.mxu0 0
        %2861 = vmatpush1.bf16.msra.mxu0 0
        %2862 = vmatprep.subr.bf16.mxu0 0
        %2863 = vmatpush1.bf16.msra.mxu0 0
        %2864 = vmatprep.subr.bf16.mxu0 0
        %2865 = vmatpush1.bf16.msra.mxu0 0
        %2866 = vmatprep.mubr.bf16.mxu0 0
        %2867 = vmatmul.mubr.bf16.gmra.mrb[0].mxu0 %v2832
        %v2868 = vpop.f32.mrb[0].mxu0
        %v2869 = vadd.f32 %v2817, %v2868
        %v2870 = vpop.f32.mrb[0].mxu0
        %v2871 = vpop.f32.mrb[0].mxu0
        %v2872 = vpop.f32.mrb[0].mxu0
        %2873 = vdwg.mxu0
        %v2874 = vpack.c.bf16 %v2869, %v2869
        %2876 = vrot.lane.b32.xlu0 %v2874, 96
        %v2877 = vpop.permute.xlu0 %2876
        %v2879 = vsel %vm1241, %v2874, 0
        %v2882 = vsel %vm1241, %v2877, 0
        %2884 = vmatprep.subr.bf16.mxu0 0
        %2885 = vmatpush1.bf16.xpose.msra.mxu0 %v2882
        %2886 = vmatprep.subr.bf16.mxu0 0
        %2887 = vmatpush1.bf16.xpose.msra.mxu0 0
        %2888 = vmatprep.subr.bf16.mxu0 0
        %2889 = vmatpush1.bf16.xpose.msra.mxu0 0
        %2890 = vmatprep.subr.bf16.mxu0 0
        %2891 = vmatpush1.bf16.xpose.msra.mxu0 0
        %2892 = vmatprep.subr.bf16.mxu0 0
        %2893 = vmatpush1.bf16.xpose.msra.mxu0 0
        %2894 = vmatprep.subr.bf16.mxu0 0
        %2895 = vmatpush1.bf16.xpose.msra.mxu0 0
        %2896 = vmatprep.subr.bf16.mxu0 0
        %2897 = vmatpush1.bf16.xpose.msra.mxu0 0
        %2898 = vmatprep.subr.bf16.mxu0 0
        %2899 = vmatpush1.bf16.xpose.msra.mxu0 0
        %2900 = vmatprep.subr.bf16.mxu0 0
        %2901 = vmatpush1.bf16.xpose.msra.mxu0 0
        %2902 = vmatprep.subr.bf16.mxu0 0
        %2903 = vmatpush1.bf16.xpose.msra.mxu0 0
        %2904 = vmatprep.subr.bf16.mxu0 0
        %2905 = vmatpush1.bf16.xpose.msra.mxu0 0
        %2906 = vmatprep.subr.bf16.mxu0 0
        %2907 = vmatpush1.bf16.xpose.msra.mxu0 0
        %2908 = vmatprep.subr.bf16.mxu0 0
        %2909 = vmatpush1.bf16.xpose.msra.mxu0 0
        %2910 = vmatprep.subr.bf16.mxu0 0
        %2911 = vmatpush1.bf16.xpose.msra.mxu0 0
        %2912 = vmatprep.subr.bf16.mxu0 0
        %2913 = vmatpush1.bf16.xpose.msra.mxu0 0
        %2914 = vmatprep.subr.bf16.mxu0 0
        %2915 = vmatpush1.bf16.xpose.msra.mxu0 0
        %2916 = vmatprep.mubr.bf16.mxu0 0
        %2917 = vmatmul.mubr.bf16.gmra.mrb[0].mxu0 %v2879
        %v2918 = vpop.f32.mrb[0].mxu0
        %v2919 = vadd.f32 0.0, %v2918
        %v2920 = vpop.f32.mrb[0].mxu0
        %v2921 = vpop.f32.mrb[0].mxu0
        %v2922 = vpop.f32.mrb[0].mxu0
        %2923 = vdwg.mxu0
        %v2924 = vmul.f32 %v2919, 0.35355338
        %v2925 = vsel %vm1241, %v2924, -inf
        %2926 = vmax.xlane.f32.xlu0 %v2925
        %v2927 = vpop.xlane.xlu0 %2926
        %v2928 = vsub.f32 %v2924, %v2927
        %v2929 = vmul.f32 %v2928, 1.442695
        %v2930 = vpow.pop %v2929
        %v2931 = vsel %vm1241, %v2930, 0.0
        %2932 = vadd.xlane.f32.xlu0 %v2931
        %v2933 = vpop.xlane.xlu0 %2932
        %v2934 = vadd.f32 %v2933, 1e-09
        %v2935 = vrcp.pop %v2934
        %v2936 = vmul.f32 %v2930, %v2935
        %v2937 = vpack.c.bf16 %v2936, %v2936
        %2938 = vrot.lane.b32.xlu0 %v2874, 64
        %v2939 = vpop.permute.xlu0 %2938
        %v2941 = vsel %vm1241, %v2937, 0
        %v2944 = vsel %vm1307, %v2939, 0
        %2946 = vmatprep.subr.bf16.mxu0 0
        %2947 = vmatpush1.bf16.msra.mxu0 %v2944
        %2948 = vmatprep.subr.bf16.mxu0 0
        %2949 = vmatpush1.bf16.msra.mxu0 0
        %2950 = vmatprep.subr.bf16.mxu0 0
        %2951 = vmatpush1.bf16.msra.mxu0 0
        %2952 = vmatprep.subr.bf16.mxu0 0
        %2953 = vmatpush1.bf16.msra.mxu0 0
        %2954 = vmatprep.subr.bf16.mxu0 0
        %2955 = vmatpush1.bf16.msra.mxu0 0
        %2956 = vmatprep.subr.bf16.mxu0 0
        %2957 = vmatpush1.bf16.msra.mxu0 0
        %2958 = vmatprep.subr.bf16.mxu0 0
        %2959 = vmatpush1.bf16.msra.mxu0 0
        %2960 = vmatprep.subr.bf16.mxu0 0
        %2961 = vmatpush1.bf16.msra.mxu0 0
        %2962 = vmatprep.subr.bf16.mxu0 0
        %2963 = vmatpush1.bf16.msra.mxu0 0
        %2964 = vmatprep.subr.bf16.mxu0 0
        %2965 = vmatpush1.bf16.msra.mxu0 0
        %2966 = vmatprep.subr.bf16.mxu0 0
        %2967 = vmatpush1.bf16.msra.mxu0 0
        %2968 = vmatprep.subr.bf16.mxu0 0
        %2969 = vmatpush1.bf16.msra.mxu0 0
        %2970 = vmatprep.subr.bf16.mxu0 0
        %2971 = vmatpush1.bf16.msra.mxu0 0
        %2972 = vmatprep.subr.bf16.mxu0 0
        %2973 = vmatpush1.bf16.msra.mxu0 0
        %2974 = vmatprep.subr.bf16.mxu0 0
        %2975 = vmatpush1.bf16.msra.mxu0 0
        %2976 = vmatprep.subr.bf16.mxu0 0
        %2977 = vmatpush1.bf16.msra.mxu0 0
        %2978 = vmatprep.mubr.bf16.mxu0 0
        %2979 = vmatmul.mubr.bf16.gmra.mrb[0].mxu0 %v2941
        %v2980 = vpop.f32.mrb[0].mxu0
        %v2981 = vadd.f32 0.0, %v2980
        %v2982 = vpop.f32.mrb[0].mxu0
        %v2983 = vpop.f32.mrb[0].mxu0
        %v2984 = vpop.f32.mrb[0].mxu0
        %2985 = vdwg.mxu0
        %2986 = vrot.lane.b32.xlu0 %v2874, 120
        %v2987 = vpop.permute.xlu0 %2986
        %2988 = vrot.lane.b32.xlu0 %v2874, 88
        %v2989 = vpop.permute.xlu0 %2988
        %v2991 = vsel %vm1241, %v2987, 0
        %v2994 = vsel %vm1241, %v2989, 0
        %2996 = vmatprep.subr.bf16.mxu0 0
        %2997 = vmatpush1.bf16.xpose.msra.mxu0 %v2994
        %2998 = vmatprep.subr.bf16.mxu0 0
        %2999 = vmatpush1.bf16.xpose.msra.mxu0 0
        %3000 = vmatprep.subr.bf16.mxu0 0
        %3001 = vmatpush1.bf16.xpose.msra.mxu0 0
        %3002 = vmatprep.subr.bf16.mxu0 0
        %3003 = vmatpush1.bf16.xpose.msra.mxu0 0
        %3004 = vmatprep.subr.bf16.mxu0 0
        %3005 = vmatpush1.bf16.xpose.msra.mxu0 0
        %3006 = vmatprep.subr.bf16.mxu0 0
        %3007 = vmatpush1.bf16.xpose.msra.mxu0 0
        %3008 = vmatprep.subr.bf16.mxu0 0
        %3009 = vmatpush1.bf16.xpose.msra.mxu0 0
        %3010 = vmatprep.subr.bf16.mxu0 0
        %3011 = vmatpush1.bf16.xpose.msra.mxu0 0
        %3012 = vmatprep.subr.bf16.mxu0 0
        %3013 = vmatpush1.bf16.xpose.msra.mxu0 0
        %3014 = vmatprep.subr.bf16.mxu0 0
        %3015 = vmatpush1.bf16.xpose.msra.mxu0 0
        %3016 = vmatprep.subr.bf16.mxu0 0
        %3017 = vmatpush1.bf16.xpose.msra.mxu0 0
        %3018 = vmatprep.subr.bf16.mxu0 0
        %3019 = vmatpush1.bf16.xpose.msra.mxu0 0
        %3020 = vmatprep.subr.bf16.mxu0 0
        %3021 = vmatpush1.bf16.xpose.msra.mxu0 0
        %3022 = vmatprep.subr.bf16.mxu0 0
        %3023 = vmatpush1.bf16.xpose.msra.mxu0 0
        %3024 = vmatprep.subr.bf16.mxu0 0
        %3025 = vmatpush1.bf16.xpose.msra.mxu0 0
        %3026 = vmatprep.subr.bf16.mxu0 0
        %3027 = vmatpush1.bf16.xpose.msra.mxu0 0
        %3028 = vmatprep.mubr.bf16.mxu0 0
        %3029 = vmatmul.mubr.bf16.gmra.mrb[0].mxu0 %v2991
        %v3030 = vpop.f32.mrb[0].mxu0
        %v3031 = vadd.f32 0.0, %v3030
        %v3032 = vpop.f32.mrb[0].mxu0
        %v3033 = vpop.f32.mrb[0].mxu0
        %v3034 = vpop.f32.mrb[0].mxu0
        %3035 = vdwg.mxu0
        %v3036 = vmul.f32 %v3031, 0.35355338
        %v3037 = vsel %vm1241, %v3036, -inf
        %3038 = vmax.xlane.f32.xlu0 %v3037
        %v3039 = vpop.xlane.xlu0 %3038
        %v3040 = vsub.f32 %v3036, %v3039
        %v3041 = vmul.f32 %v3040, 1.442695
        %v3042 = vpow.pop %v3041
        %v3043 = vsel %vm1241, %v3042, 0.0
        %3044 = vadd.xlane.f32.xlu0 %v3043
        %v3045 = vpop.xlane.xlu0 %3044
        %v3046 = vadd.f32 %v3045, 1e-09
        %v3047 = vrcp.pop %v3046
        %v3048 = vmul.f32 %v3042, %v3047
        %v3049 = vpack.c.bf16 %v3048, %v3048
        %3050 = vrot.lane.b32.xlu0 %v2874, 56
        %v3051 = vpop.permute.xlu0 %3050
        %v3053 = vsel %vm1241, %v3049, 0
        %v3056 = vsel %vm1307, %v3051, 0
        %3058 = vmatprep.subr.bf16.mxu0 0
        %3059 = vmatpush1.bf16.msra.mxu0 %v3056
        %3060 = vmatprep.subr.bf16.mxu0 0
        %3061 = vmatpush1.bf16.msra.mxu0 0
        %3062 = vmatprep.subr.bf16.mxu0 0
        %3063 = vmatpush1.bf16.msra.mxu0 0
        %3064 = vmatprep.subr.bf16.mxu0 0
        %3065 = vmatpush1.bf16.msra.mxu0 0
        %3066 = vmatprep.subr.bf16.mxu0 0
        %3067 = vmatpush1.bf16.msra.mxu0 0
        %3068 = vmatprep.subr.bf16.mxu0 0
        %3069 = vmatpush1.bf16.msra.mxu0 0
        %3070 = vmatprep.subr.bf16.mxu0 0
        %3071 = vmatpush1.bf16.msra.mxu0 0
        %3072 = vmatprep.subr.bf16.mxu0 0
        %3073 = vmatpush1.bf16.msra.mxu0 0
        %3074 = vmatprep.subr.bf16.mxu0 0
        %3075 = vmatpush1.bf16.msra.mxu0 0
        %3076 = vmatprep.subr.bf16.mxu0 0
        %3077 = vmatpush1.bf16.msra.mxu0 0
        %3078 = vmatprep.subr.bf16.mxu0 0
        %3079 = vmatpush1.bf16.msra.mxu0 0
        %3080 = vmatprep.subr.bf16.mxu0 0
        %3081 = vmatpush1.bf16.msra.mxu0 0
        %3082 = vmatprep.subr.bf16.mxu0 0
        %3083 = vmatpush1.bf16.msra.mxu0 0
        %3084 = vmatprep.subr.bf16.mxu0 0
        %3085 = vmatpush1.bf16.msra.mxu0 0
        %3086 = vmatprep.subr.bf16.mxu0 0
        %3087 = vmatpush1.bf16.msra.mxu0 0
        %3088 = vmatprep.subr.bf16.mxu0 0
        %3089 = vmatpush1.bf16.msra.mxu0 0
        %3090 = vmatprep.mubr.bf16.mxu0 0
        %3091 = vmatmul.mubr.bf16.gmra.mrb[0].mxu0 %v3053
        %v3092 = vpop.f32.mrb[0].mxu0
        %v3093 = vadd.f32 0.0, %v3092
        %v3094 = vpop.f32.mrb[0].mxu0
        %v3095 = vpop.f32.mrb[0].mxu0
        %v3096 = vpop.f32.mrb[0].mxu0
        %3097 = vdwg.mxu0
        %3098 = vrot.lane.b32.xlu0 %v2874, 112
        %v3099 = vpop.permute.xlu0 %3098
        %3100 = vrot.lane.b32.xlu0 %v2874, 80
        %v3101 = vpop.permute.xlu0 %3100
        %v3103 = vsel %vm1241, %v3099, 0
        %v3106 = vsel %vm1241, %v3101, 0
        %3108 = vmatprep.subr.bf16.mxu0 0
        %3109 = vmatpush1.bf16.xpose.msra.mxu0 %v3106
        %3110 = vmatprep.subr.bf16.mxu0 0
        %3111 = vmatpush1.bf16.xpose.msra.mxu0 0
        %3112 = vmatprep.subr.bf16.mxu0 0
        %3113 = vmatpush1.bf16.xpose.msra.mxu0 0
        %3114 = vmatprep.subr.bf16.mxu0 0
        %3115 = vmatpush1.bf16.xpose.msra.mxu0 0
        %3116 = vmatprep.subr.bf16.mxu0 0
        %3117 = vmatpush1.bf16.xpose.msra.mxu0 0
        %3118 = vmatprep.subr.bf16.mxu0 0
        %3119 = vmatpush1.bf16.xpose.msra.mxu0 0
        %3120 = vmatprep.subr.bf16.mxu0 0
        %3121 = vmatpush1.bf16.xpose.msra.mxu0 0
        %3122 = vmatprep.subr.bf16.mxu0 0
        %3123 = vmatpush1.bf16.xpose.msra.mxu0 0
        %3124 = vmatprep.subr.bf16.mxu0 0
        %3125 = vmatpush1.bf16.xpose.msra.mxu0 0
        %3126 = vmatprep.subr.bf16.mxu0 0
        %3127 = vmatpush1.bf16.xpose.msra.mxu0 0
        %3128 = vmatprep.subr.bf16.mxu0 0
        %3129 = vmatpush1.bf16.xpose.msra.mxu0 0
        %3130 = vmatprep.subr.bf16.mxu0 0
        %3131 = vmatpush1.bf16.xpose.msra.mxu0 0
        %3132 = vmatprep.subr.bf16.mxu0 0
        %3133 = vmatpush1.bf16.xpose.msra.mxu0 0
        %3134 = vmatprep.subr.bf16.mxu0 0
        %3135 = vmatpush1.bf16.xpose.msra.mxu0 0
        %3136 = vmatprep.subr.bf16.mxu0 0
        %3137 = vmatpush1.bf16.xpose.msra.mxu0 0
        %3138 = vmatprep.subr.bf16.mxu0 0
        %3139 = vmatpush1.bf16.xpose.msra.mxu0 0
        %3140 = vmatprep.mubr.bf16.mxu0 0
        %3141 = vmatmul.mubr.bf16.gmra.mrb[0].mxu0 %v3103
        %v3142 = vpop.f32.mrb[0].mxu0
        %v3143 = vadd.f32 0.0, %v3142
        %v3144 = vpop.f32.mrb[0].mxu0
        %v3145 = vpop.f32.mrb[0].mxu0
        %v3146 = vpop.f32.mrb[0].mxu0
        %3147 = vdwg.mxu0
        %v3148 = vmul.f32 %v3143, 0.35355338
        %v3149 = vsel %vm1241, %v3148, -inf
        %3150 = vmax.xlane.f32.xlu0 %v3149
        %v3151 = vpop.xlane.xlu0 %3150
        %v3152 = vsub.f32 %v3148, %v3151
        %v3153 = vmul.f32 %v3152, 1.442695
        %v3154 = vpow.pop %v3153
        %v3155 = vsel %vm1241, %v3154, 0.0
        %3156 = vadd.xlane.f32.xlu0 %v3155
        %v3157 = vpop.xlane.xlu0 %3156
        %v3158 = vadd.f32 %v3157, 1e-09
        %v3159 = vrcp.pop %v3158
        %v3160 = vmul.f32 %v3154, %v3159
        %v3161 = vpack.c.bf16 %v3160, %v3160
        %3162 = vrot.lane.b32.xlu0 %v2874, 48
        %v3163 = vpop.permute.xlu0 %3162
        %v3165 = vsel %vm1241, %v3161, 0
        %v3168 = vsel %vm1307, %v3163, 0
        %3170 = vmatprep.subr.bf16.mxu0 0
        %3171 = vmatpush1.bf16.msra.mxu0 %v3168
        %3172 = vmatprep.subr.bf16.mxu0 0
        %3173 = vmatpush1.bf16.msra.mxu0 0
        %3174 = vmatprep.subr.bf16.mxu0 0
        %3175 = vmatpush1.bf16.msra.mxu0 0
        %3176 = vmatprep.subr.bf16.mxu0 0
        %3177 = vmatpush1.bf16.msra.mxu0 0
        %3178 = vmatprep.subr.bf16.mxu0 0
        %3179 = vmatpush1.bf16.msra.mxu0 0
        %3180 = vmatprep.subr.bf16.mxu0 0
        %3181 = vmatpush1.bf16.msra.mxu0 0
        %3182 = vmatprep.subr.bf16.mxu0 0
        %3183 = vmatpush1.bf16.msra.mxu0 0
        %3184 = vmatprep.subr.bf16.mxu0 0
        %3185 = vmatpush1.bf16.msra.mxu0 0
        %3186 = vmatprep.subr.bf16.mxu0 0
        %3187 = vmatpush1.bf16.msra.mxu0 0
        %3188 = vmatprep.subr.bf16.mxu0 0
        %3189 = vmatpush1.bf16.msra.mxu0 0
        %3190 = vmatprep.subr.bf16.mxu0 0
        %3191 = vmatpush1.bf16.msra.mxu0 0
        %3192 = vmatprep.subr.bf16.mxu0 0
        %3193 = vmatpush1.bf16.msra.mxu0 0
        %3194 = vmatprep.subr.bf16.mxu0 0
        %3195 = vmatpush1.bf16.msra.mxu0 0
        %3196 = vmatprep.subr.bf16.mxu0 0
        %3197 = vmatpush1.bf16.msra.mxu0 0
        %3198 = vmatprep.subr.bf16.mxu0 0
        %3199 = vmatpush1.bf16.msra.mxu0 0
        %3200 = vmatprep.subr.bf16.mxu0 0
        %3201 = vmatpush1.bf16.msra.mxu0 0
        %3202 = vmatprep.mubr.bf16.mxu0 0
        %3203 = vmatmul.mubr.bf16.gmra.mrb[0].mxu0 %v3165
        %v3204 = vpop.f32.mrb[0].mxu0
        %v3205 = vadd.f32 0.0, %v3204
        %v3206 = vpop.f32.mrb[0].mxu0
        %v3207 = vpop.f32.mrb[0].mxu0
        %v3208 = vpop.f32.mrb[0].mxu0
        %3209 = vdwg.mxu0
        %3210 = vrot.lane.b32.xlu0 %v2874, 104
        %v3211 = vpop.permute.xlu0 %3210
        %3212 = vrot.lane.b32.xlu0 %v2874, 72
        %v3213 = vpop.permute.xlu0 %3212
        %v3215 = vsel %vm1241, %v3211, 0
        %v3218 = vsel %vm1241, %v3213, 0
        %3220 = vmatprep.subr.bf16.mxu0 0
        %3221 = vmatpush1.bf16.xpose.msra.mxu0 %v3218
        %3222 = vmatprep.subr.bf16.mxu0 0
        %3223 = vmatpush1.bf16.xpose.msra.mxu0 0
        %3224 = vmatprep.subr.bf16.mxu0 0
        %3225 = vmatpush1.bf16.xpose.msra.mxu0 0
        %3226 = vmatprep.subr.bf16.mxu0 0
        %3227 = vmatpush1.bf16.xpose.msra.mxu0 0
        %3228 = vmatprep.subr.bf16.mxu0 0
        %3229 = vmatpush1.bf16.xpose.msra.mxu0 0
        %3230 = vmatprep.subr.bf16.mxu0 0
        %3231 = vmatpush1.bf16.xpose.msra.mxu0 0
        %3232 = vmatprep.subr.bf16.mxu0 0
        %3233 = vmatpush1.bf16.xpose.msra.mxu0 0
        %3234 = vmatprep.subr.bf16.mxu0 0
        %3235 = vmatpush1.bf16.xpose.msra.mxu0 0
        %3236 = vmatprep.subr.bf16.mxu0 0
        %3237 = vmatpush1.bf16.xpose.msra.mxu0 0
        %3238 = vmatprep.subr.bf16.mxu0 0
        %3239 = vmatpush1.bf16.xpose.msra.mxu0 0
        %3240 = vmatprep.subr.bf16.mxu0 0
        %3241 = vmatpush1.bf16.xpose.msra.mxu0 0
        %3242 = vmatprep.subr.bf16.mxu0 0
        %3243 = vmatpush1.bf16.xpose.msra.mxu0 0
        %3244 = vmatprep.subr.bf16.mxu0 0
        %3245 = vmatpush1.bf16.xpose.msra.mxu0 0
        %3246 = vmatprep.subr.bf16.mxu0 0
        %3247 = vmatpush1.bf16.xpose.msra.mxu0 0
        %3248 = vmatprep.subr.bf16.mxu0 0
        %3249 = vmatpush1.bf16.xpose.msra.mxu0 0
        %3250 = vmatprep.subr.bf16.mxu0 0
        %3251 = vmatpush1.bf16.xpose.msra.mxu0 0
        %3252 = vmatprep.mubr.bf16.mxu0 0
        %3253 = vmatmul.mubr.bf16.gmra.mrb[0].mxu0 %v3215
        %v3254 = vpop.f32.mrb[0].mxu0
        %v3255 = vadd.f32 0.0, %v3254
        %v3256 = vpop.f32.mrb[0].mxu0
        %v3257 = vpop.f32.mrb[0].mxu0
        %v3258 = vpop.f32.mrb[0].mxu0
        %3259 = vdwg.mxu0
        %v3260 = vmul.f32 %v3255, 0.35355338
        %v3261 = vsel %vm1241, %v3260, -inf
        %3262 = vmax.xlane.f32.xlu0 %v3261
        %v3263 = vpop.xlane.xlu0 %3262
        %v3264 = vsub.f32 %v3260, %v3263
        %v3265 = vmul.f32 %v3264, 1.442695
        %v3266 = vpow.pop %v3265
        %v3267 = vsel %vm1241, %v3266, 0.0
        %3268 = vadd.xlane.f32.xlu0 %v3267
        %v3269 = vpop.xlane.xlu0 %3268
        %v3270 = vadd.f32 %v3269, 1e-09
        %v3271 = vrcp.pop %v3270
        %v3272 = vmul.f32 %v3266, %v3271
        %v3273 = vpack.c.bf16 %v3272, %v3272
        %3274 = vrot.lane.b32.xlu0 %v2874, 40
        %v3275 = vpop.permute.xlu0 %3274
        %v3277 = vsel %vm1241, %v3273, 0
        %v3280 = vsel %vm1307, %v3275, 0
        %3282 = vmatprep.subr.bf16.mxu0 0
        %3283 = vmatpush1.bf16.msra.mxu0 %v3280
        %3284 = vmatprep.subr.bf16.mxu0 0
        %3285 = vmatpush1.bf16.msra.mxu0 0
        %3286 = vmatprep.subr.bf16.mxu0 0
        %3287 = vmatpush1.bf16.msra.mxu0 0
        %3288 = vmatprep.subr.bf16.mxu0 0
        %3289 = vmatpush1.bf16.msra.mxu0 0
        %3290 = vmatprep.subr.bf16.mxu0 0
        %3291 = vmatpush1.bf16.msra.mxu0 0
        %3292 = vmatprep.subr.bf16.mxu0 0
        %3293 = vmatpush1.bf16.msra.mxu0 0
        %3294 = vmatprep.subr.bf16.mxu0 0
        %3295 = vmatpush1.bf16.msra.mxu0 0
        %3296 = vmatprep.subr.bf16.mxu0 0
        %3297 = vmatpush1.bf16.msra.mxu0 0
        %3298 = vmatprep.subr.bf16.mxu0 0
        %3299 = vmatpush1.bf16.msra.mxu0 0
        %3300 = vmatprep.subr.bf16.mxu0 0
        %3301 = vmatpush1.bf16.msra.mxu0 0
        %3302 = vmatprep.subr.bf16.mxu0 0
        %3303 = vmatpush1.bf16.msra.mxu0 0
        %3304 = vmatprep.subr.bf16.mxu0 0
        %3305 = vmatpush1.bf16.msra.mxu0 0
        %3306 = vmatprep.subr.bf16.mxu0 0
        %3307 = vmatpush1.bf16.msra.mxu0 0
        %3308 = vmatprep.subr.bf16.mxu0 0
        %3309 = vmatpush1.bf16.msra.mxu0 0
        %3310 = vmatprep.subr.bf16.mxu0 0
        %3311 = vmatpush1.bf16.msra.mxu0 0
        %3312 = vmatprep.subr.bf16.mxu0 0
        %3313 = vmatpush1.bf16.msra.mxu0 0
        %3314 = vmatprep.mubr.bf16.mxu0 0
        %3315 = vmatmul.mubr.bf16.gmra.mrb[0].mxu0 %v3277
        %v3316 = vpop.f32.mrb[0].mxu0
        %v3317 = vadd.f32 0.0, %v3316
        %v3318 = vpop.f32.mrb[0].mxu0
        %v3319 = vpop.f32.mrb[0].mxu0
        %v3320 = vpop.f32.mrb[0].mxu0
        %3321 = vdwg.mxu0
        %3323 = vrot.lane.b32.xlu0 %v3093, 8
        %v3324 = vpop.permute.xlu0 %3323
        %3327 = vrot.lane.b32.xlu0 %v3205, 16
        %v3328 = vpop.permute.xlu0 %3327
        %3331 = vrot.lane.b32.xlu0 %v3317, 24
        %v3332 = vpop.permute.xlu0 %3331
        %v3334 = vsel %vm1241, %v2981, %v3324
        %v3335 = vsel %vm1700, %v3334, %v3328
        %v3336 = vsel %vm1702, %v3335, %v3332
        %v3337 = vpack.c.bf16 %v3336, %v3336
        %v3339 = vlaneseq
        %v3340 = vshrl.u32 %v3339, 7
        %v3341 = vsub.s32 0, %v3340
        %v3342 = vrot.slane %v2811, %v3341
        %v3348 = vunpack.c.l.b16 %v2807
        %v3349 = vunpack.c.l.b16 %v2808
        %v3350 = vunpack.c.l.b16 %v2809
        %v3351 = vunpack.c.l.b16 %v2810
        %v3352 = vpack.c.b16 %v3349, %v3348
        %v3353 = vpack.c.b16 %v3351, %v3350
        %v3357 = vsel %vm1193, %v3337, 0
        %3359 = vmatprep.subr.bf16.mxu0 0
        %3360 = vmatpush1.bf16.msra.mxu0 %v3352
        %3361 = vmatprep.subr.bf16.mxu0 0
        %3362 = vmatpush1.bf16.msra.mxu0 %v3353
        %3363 = vmatprep.subr.bf16.mxu0 0
        %3364 = vmatpush1.bf16.msra.mxu0 0
        %3365 = vmatprep.subr.bf16.mxu0 0
        %3366 = vmatpush1.bf16.msra.mxu0 0
        %3367 = vmatprep.subr.bf16.mxu0 0
        %3368 = vmatpush1.bf16.msra.mxu0 0
        %3369 = vmatprep.subr.bf16.mxu0 0
        %3370 = vmatpush1.bf16.msra.mxu0 0
        %3371 = vmatprep.subr.bf16.mxu0 0
        %3372 = vmatpush1.bf16.msra.mxu0 0
        %3373 = vmatprep.subr.bf16.mxu0 0
        %3374 = vmatpush1.bf16.msra.mxu0 0
        %3375 = vmatprep.subr.bf16.mxu0 0
        %3376 = vmatpush1.bf16.msra.mxu0 0
        %3377 = vmatprep.subr.bf16.mxu0 0
        %3378 = vmatpush1.bf16.msra.mxu0 0
        %3379 = vmatprep.subr.bf16.mxu0 0
        %3380 = vmatpush1.bf16.msra.mxu0 0
        %3381 = vmatprep.subr.bf16.mxu0 0
        %3382 = vmatpush1.bf16.msra.mxu0 0
        %3383 = vmatprep.subr.bf16.mxu0 0
        %3384 = vmatpush1.bf16.msra.mxu0 0
        %3385 = vmatprep.subr.bf16.mxu0 0
        %3386 = vmatpush1.bf16.msra.mxu0 0
        %3387 = vmatprep.subr.bf16.mxu0 0
        %3388 = vmatpush1.bf16.msra.mxu0 0
        %3389 = vmatprep.subr.bf16.mxu0 0
        %3390 = vmatpush1.bf16.msra.mxu0 0
        %3391 = vmatprep.mubr.bf16.mxu0 0
        %3392 = vmatmul.mubr.bf16.gmra.mrb[0].mxu0 %v3357
        %v3393 = vpop.f32.mrb[0].mxu0
        %v3394 = vadd.f32 %v3342, %v3393
        %v3395 = vpop.f32.mrb[0].mxu0
        %v3396 = vpop.f32.mrb[0].mxu0
        %v3397 = vpop.f32.mrb[0].mxu0
        %3398 = vdwg.mxu0
        %v3399 = vadd.f32 %v2801, %v3394
        %v3400 = vld [vmem:[%s59] sm:$0x1]
        %v3401 = vld [vmem:[%s61] sm:$0x1]
        %v3402 = vsel %vm1193, %v3399, 0.0
        %3403 = vadd.xlane.f32.xlu0 %v3402
        %v3404 = vpop.xlane.xlu0 %3403
        %v3405 = vmul.f32 %v3404, %v1772
        %v3406 = vsub.f32 %v3399, %v3405
        %v3407 = vmul.f32 %v3406, %v3406
        %v3408 = vsel %vm1193, %v3407, 0.0
        %3409 = vadd.xlane.f32.xlu0 %v3408
        %v3410 = vpop.xlane.xlu0 %3409
        %v3411 = vmul.f32 %v3410, %v1772
        %v3412 = vadd.f32 %v3411, 1e-05
        %v3413 = vrsqrt.pop %v3412
        %v3414 = vmul.f32 %v3406, %v3413
        %v3416 = vlaneseq
        %v3417 = vshrl.u32 %v3416, 7
        %v3418 = vsub.s32 0, %v3417
        %v3419 = vrot.slane %v3400, %v3418
        %v3421 = vmul.f32 %v3414, %v3419
        %v3423 = vlaneseq
        %v3424 = vshrl.u32 %v3423, 7
        %v3425 = vsub.s32 0, %v3424
        %v3426 = vrot.slane %v3401, %v3425
        %v3428 = vadd.f32 %v3421, %v3426
        %v3429 = vld [vmem:[%s39] sm:$0xf]
        %v3430 = vld [vmem:[%s39 + $0x4] sm:$0xf]
        %v3431 = vld [vmem:[%s39 + $0x8] sm:$0xf]
        %v3432 = vld [vmem:[%s39 + $0xc] sm:$0xf]
        %v3433 = vld [vmem:[%s41] sm:$0x1]
        %v3434 = vld [vmem:[%s43] sm:$0xf]
        %v3435 = vld [vmem:[%s43 + $0x4] sm:$0xf]
        %v3436 = vld [vmem:[%s43 + $0x8] sm:$0xf]
        %v3437 = vld [vmem:[%s43 + $0xc] sm:$0xf]
        %v3438 = vld [vmem:[%s45] sm:$0x1]
        %v3439 = vld [vmem:[%s47] sm:$0xf]
        %v3440 = vld [vmem:[%s47 + $0x4] sm:$0xf]
        %v3441 = vld [vmem:[%s47 + $0x8] sm:$0xf]
        %v3442 = vld [vmem:[%s47 + $0xc] sm:$0xf]
        %v3443 = vld [vmem:[%s49] sm:$0x1]
        %v3444 = vpack.c.bf16 %v3428, %v3428
        %v3446 = vlaneseq
        %v3447 = vshrl.u32 %v3446, 7
        %v3448 = vsub.s32 0, %v3447
        %v3449 = vrot.slane %v3433, %v3448
        %v3455 = vunpack.c.l.b16 %v3429
        %v3456 = vunpack.c.l.b16 %v3430
        %v3457 = vunpack.c.l.b16 %v3431
        %v3458 = vunpack.c.l.b16 %v3432
        %v3459 = vpack.c.b16 %v3456, %v3455
        %v3460 = vpack.c.b16 %v3458, %v3457
        %v3464 = vsel %vm1193, %v3444, 0
        %3466 = vmatprep.subr.bf16.mxu0 0
        %3467 = vmatpush1.bf16.msra.mxu0 %v3459
        %3468 = vmatprep.subr.bf16.mxu0 0
        %3469 = vmatpush1.bf16.msra.mxu0 %v3460
        %3470 = vmatprep.subr.bf16.mxu0 0
        %3471 = vmatpush1.bf16.msra.mxu0 0
        %3472 = vmatprep.subr.bf16.mxu0 0
        %3473 = vmatpush1.bf16.msra.mxu0 0
        %3474 = vmatprep.subr.bf16.mxu0 0
        %3475 = vmatpush1.bf16.msra.mxu0 0
        %3476 = vmatprep.subr.bf16.mxu0 0
        %3477 = vmatpush1.bf16.msra.mxu0 0
        %3478 = vmatprep.subr.bf16.mxu0 0
        %3479 = vmatpush1.bf16.msra.mxu0 0
        %3480 = vmatprep.subr.bf16.mxu0 0
        %3481 = vmatpush1.bf16.msra.mxu0 0
        %3482 = vmatprep.subr.bf16.mxu0 0
        %3483 = vmatpush1.bf16.msra.mxu0 0
        %3484 = vmatprep.subr.bf16.mxu0 0
        %3485 = vmatpush1.bf16.msra.mxu0 0
        %3486 = vmatprep.subr.bf16.mxu0 0
        %3487 = vmatpush1.bf16.msra.mxu0 0
        %3488 = vmatprep.subr.bf16.mxu0 0
        %3489 = vmatpush1.bf16.msra.mxu0 0
        %3490 = vmatprep.subr.bf16.mxu0 0
        %3491 = vmatpush1.bf16.msra.mxu0 0
        %3492 = vmatprep.subr.bf16.mxu0 0
        %3493 = vmatpush1.bf16.msra.mxu0 0
        %3494 = vmatprep.subr.bf16.mxu0 0
        %3495 = vmatpush1.bf16.msra.mxu0 0
        %3496 = vmatprep.subr.bf16.mxu0 0
        %3497 = vmatpush1.bf16.msra.mxu0 0
        %3498 = vmatprep.mubr.bf16.mxu0 0
        %3499 = vmatmul.mubr.bf16.gmra.mrb[0].mxu0 %v3464
        %v3500 = vpop.f32.mrb[0].mxu0
        %v3501 = vadd.f32 %v3449, %v3500
        %v3502 = vpop.f32.mrb[0].mxu0
        %v3503 = vpop.f32.mrb[0].mxu0
        %v3504 = vpop.f32.mrb[0].mxu0
        %3505 = vdwg.mxu0
        %v3506 = vpack.c.bf16 %v2798, %v2798
        %v3508 = vlaneseq
        %v3509 = vshrl.u32 %v3508, 7
        %v3510 = vsub.s32 0, %v3509
        %v3511 = vrot.slane %v3438, %v3510
        %v3517 = vunpack.c.l.b16 %v3434
        %v3518 = vunpack.c.l.b16 %v3435
        %v3519 = vunpack.c.l.b16 %v3436
        %v3520 = vunpack.c.l.b16 %v3437
        %v3521 = vpack.c.b16 %v3518, %v3517
        %v3522 = vpack.c.b16 %v3520, %v3519
        %v3526 = vsel %vm1193, %v3506, 0
        %3528 = vmatprep.subr.bf16.mxu0 0
        %3529 = vmatpush1.bf16.msra.mxu0 %v3521
        %3530 = vmatprep.subr.bf16.mxu0 0
        %3531 = vmatpush1.bf16.msra.mxu0 %v3522
        %3532 = vmatprep.subr.bf16.mxu0 0
        %3533 = vmatpush1.bf16.msra.mxu0 0
        %3534 = vmatprep.subr.bf16.mxu0 0
        %3535 = vmatpush1.bf16.msra.mxu0 0
        %3536 = vmatprep.subr.bf16.mxu0 0
        %3537 = vmatpush1.bf16.msra.mxu0 0
        %3538 = vmatprep.subr.bf16.mxu0 0
        %3539 = vmatpush1.bf16.msra.mxu0 0
        %3540 = vmatprep.subr.bf16.mxu0 0
        %3541 = vmatpush1.bf16.msra.mxu0 0
        %3542 = vmatprep.subr.bf16.mxu0 0
        %3543 = vmatpush1.bf16.msra.mxu0 0
        %3544 = vmatprep.subr.bf16.mxu0 0
        %3545 = vmatpush1.bf16.msra.mxu0 0
        %3546 = vmatprep.subr.bf16.mxu0 0
        %3547 = vmatpush1.bf16.msra.mxu0 0
        %3548 = vmatprep.subr.bf16.mxu0 0
        %3549 = vmatpush1.bf16.msra.mxu0 0
        %3550 = vmatprep.subr.bf16.mxu0 0
        %3551 = vmatpush1.bf16.msra.mxu0 0
        %3552 = vmatprep.subr.bf16.mxu0 0
        %3553 = vmatpush1.bf16.msra.mxu0 0
        %3554 = vmatprep.subr.bf16.mxu0 0
        %3555 = vmatpush1.bf16.msra.mxu0 0
        %3556 = vmatprep.subr.bf16.mxu0 0
        %3557 = vmatpush1.bf16.msra.mxu0 0
        %3558 = vmatprep.subr.bf16.mxu0 0
        %3559 = vmatpush1.bf16.msra.mxu0 0
        %3560 = vmatprep.mubr.bf16.mxu0 0
        %3561 = vmatmul.mubr.bf16.gmra.mrb[0].mxu0 %v3526
        %v3562 = vpop.f32.mrb[0].mxu0
        %v3563 = vadd.f32 %v3511, %v3562
        %v3564 = vpop.f32.mrb[0].mxu0
        %v3565 = vpop.f32.mrb[0].mxu0
        %v3566 = vpop.f32.mrb[0].mxu0
        %3567 = vdwg.mxu0
        %v3568 = vpack.c.bf16 %v3501, %v3501
        %v3569 = vpack.c.bf16 %v3563, %v3563
        %v3571 = vsel %vm1241, %v3568, 0
        %v3574 = vsel %vm1241, %v3569, 0
        %3576 = vmatprep.subr.bf16.mxu0 0
        %3577 = vmatpush1.bf16.xpose.msra.mxu0 %v3574
        %3578 = vmatprep.subr.bf16.mxu0 0
        %3579 = vmatpush1.bf16.xpose.msra.mxu0 0
        %3580 = vmatprep.subr.bf16.mxu0 0
        %3581 = vmatpush1.bf16.xpose.msra.mxu0 0
        %3582 = vmatprep.subr.bf16.mxu0 0
        %3583 = vmatpush1.bf16.xpose.msra.mxu0 0
        %3584 = vmatprep.subr.bf16.mxu0 0
        %3585 = vmatpush1.bf16.xpose.msra.mxu0 0
        %3586 = vmatprep.subr.bf16.mxu0 0
        %3587 = vmatpush1.bf16.xpose.msra.mxu0 0
        %3588 = vmatprep.subr.bf16.mxu0 0
        %3589 = vmatpush1.bf16.xpose.msra.mxu0 0
        %3590 = vmatprep.subr.bf16.mxu0 0
        %3591 = vmatpush1.bf16.xpose.msra.mxu0 0
        %3592 = vmatprep.subr.bf16.mxu0 0
        %3593 = vmatpush1.bf16.xpose.msra.mxu0 0
        %3594 = vmatprep.subr.bf16.mxu0 0
        %3595 = vmatpush1.bf16.xpose.msra.mxu0 0
        %3596 = vmatprep.subr.bf16.mxu0 0
        %3597 = vmatpush1.bf16.xpose.msra.mxu0 0
        %3598 = vmatprep.subr.bf16.mxu0 0
        %3599 = vmatpush1.bf16.xpose.msra.mxu0 0
        %3600 = vmatprep.subr.bf16.mxu0 0
        %3601 = vmatpush1.bf16.xpose.msra.mxu0 0
        %3602 = vmatprep.subr.bf16.mxu0 0
        %3603 = vmatpush1.bf16.xpose.msra.mxu0 0
        %3604 = vmatprep.subr.bf16.mxu0 0
        %3605 = vmatpush1.bf16.xpose.msra.mxu0 0
        %3606 = vmatprep.subr.bf16.mxu0 0
        %3607 = vmatpush1.bf16.xpose.msra.mxu0 0
        %3608 = vmatprep.mubr.bf16.mxu0 0
        %3609 = vmatmul.mubr.bf16.gmra.mrb[0].mxu0 %v3571
        %v3610 = vpop.f32.mrb[0].mxu0
        %v3611 = vadd.f32 0.0, %v3610
        %v3612 = vpop.f32.mrb[0].mxu0
        %v3613 = vpop.f32.mrb[0].mxu0
        %v3614 = vpop.f32.mrb[0].mxu0
        %3615 = vdwg.mxu0
        %v3616 = vmul.f32 %v3611, 0.35355338
        %v3617 = vsel %vm1241, %v3616, -inf
        %3618 = vmax.xlane.f32.xlu0 %v3617
        %v3619 = vpop.xlane.xlu0 %3618
        %v3620 = vsub.f32 %v3616, %v3619
        %v3621 = vmul.f32 %v3620, 1.442695
        %v3622 = vpow.pop %v3621
        %v3623 = vsel %vm1241, %v3622, 0.0
        %3624 = vadd.xlane.f32.xlu0 %v3623
        %v3625 = vpop.xlane.xlu0 %3624
        %v3626 = vadd.f32 %v3625, 1e-09
        %v3627 = vrcp.pop %v3626
        %v3628 = vmul.f32 %v3622, %v3627
        %v3629 = vpack.c.bf16 %v3628, %v3628
        %3631 = vrot.lane.b32.xlu0 %v3569, 96
        %v3632 = vpop.permute.xlu0 %3631
        %v3634 = vsel %vm1241, %v3629, 0
        %v3637 = vsel %vm1307, %v3632, 0
        %3639 = vmatprep.subr.bf16.mxu0 0
        %3640 = vmatpush1.bf16.msra.mxu0 %v3637
        %3641 = vmatprep.subr.bf16.mxu0 0
        %3642 = vmatpush1.bf16.msra.mxu0 0
        %3643 = vmatprep.subr.bf16.mxu0 0
        %3644 = vmatpush1.bf16.msra.mxu0 0
        %3645 = vmatprep.subr.bf16.mxu0 0
        %3646 = vmatpush1.bf16.msra.mxu0 0
        %3647 = vmatprep.subr.bf16.mxu0 0
        %3648 = vmatpush1.bf16.msra.mxu0 0
        %3649 = vmatprep.subr.bf16.mxu0 0
        %3650 = vmatpush1.bf16.msra.mxu0 0
        %3651 = vmatprep.subr.bf16.mxu0 0
        %3652 = vmatpush1.bf16.msra.mxu0 0
        %3653 = vmatprep.subr.bf16.mxu0 0
        %3654 = vmatpush1.bf16.msra.mxu0 0
        %3655 = vmatprep.subr.bf16.mxu0 0
        %3656 = vmatpush1.bf16.msra.mxu0 0
        %3657 = vmatprep.subr.bf16.mxu0 0
        %3658 = vmatpush1.bf16.msra.mxu0 0
        %3659 = vmatprep.subr.bf16.mxu0 0
        %3660 = vmatpush1.bf16.msra.mxu0 0
        %3661 = vmatprep.subr.bf16.mxu0 0
        %3662 = vmatpush1.bf16.msra.mxu0 0
        %3663 = vmatprep.subr.bf16.mxu0 0
        %3664 = vmatpush1.bf16.msra.mxu0 0
        %3665 = vmatprep.subr.bf16.mxu0 0
        %3666 = vmatpush1.bf16.msra.mxu0 0
        %3667 = vmatprep.subr.bf16.mxu0 0
        %3668 = vmatpush1.bf16.msra.mxu0 0
        %3669 = vmatprep.subr.bf16.mxu0 0
        %3670 = vmatpush1.bf16.msra.mxu0 0
        %3671 = vmatprep.mubr.bf16.mxu0 0
        %3672 = vmatmul.mubr.bf16.gmra.mrb[0].mxu0 %v3634
        %v3673 = vpop.f32.mrb[0].mxu0
        %v3674 = vadd.f32 0.0, %v3673
        %v3675 = vpop.f32.mrb[0].mxu0
        %v3676 = vpop.f32.mrb[0].mxu0
        %v3677 = vpop.f32.mrb[0].mxu0
        %3678 = vdwg.mxu0
        %3680 = vrot.lane.b32.xlu0 %v3568, 120
        %v3681 = vpop.permute.xlu0 %3680
        %3682 = vrot.lane.b32.xlu0 %v3569, 120
        %v3683 = vpop.permute.xlu0 %3682
        %v3685 = vsel %vm1241, %v3681, 0
        %v3688 = vsel %vm1241, %v3683, 0
        %3690 = vmatprep.subr.bf16.mxu0 0
        %3691 = vmatpush1.bf16.xpose.msra.mxu0 %v3688
        %3692 = vmatprep.subr.bf16.mxu0 0
        %3693 = vmatpush1.bf16.xpose.msra.mxu0 0
        %3694 = vmatprep.subr.bf16.mxu0 0
        %3695 = vmatpush1.bf16.xpose.msra.mxu0 0
        %3696 = vmatprep.subr.bf16.mxu0 0
        %3697 = vmatpush1.bf16.xpose.msra.mxu0 0
        %3698 = vmatprep.subr.bf16.mxu0 0
        %3699 = vmatpush1.bf16.xpose.msra.mxu0 0
        %3700 = vmatprep.subr.bf16.mxu0 0
        %3701 = vmatpush1.bf16.xpose.msra.mxu0 0
        %3702 = vmatprep.subr.bf16.mxu0 0
        %3703 = vmatpush1.bf16.xpose.msra.mxu0 0
        %3704 = vmatprep.subr.bf16.mxu0 0
        %3705 = vmatpush1.bf16.xpose.msra.mxu0 0
        %3706 = vmatprep.subr.bf16.mxu0 0
        %3707 = vmatpush1.bf16.xpose.msra.mxu0 0
        %3708 = vmatprep.subr.bf16.mxu0 0
        %3709 = vmatpush1.bf16.xpose.msra.mxu0 0
        %3710 = vmatprep.subr.bf16.mxu0 0
        %3711 = vmatpush1.bf16.xpose.msra.mxu0 0
        %3712 = vmatprep.subr.bf16.mxu0 0
        %3713 = vmatpush1.bf16.xpose.msra.mxu0 0
        %3714 = vmatprep.subr.bf16.mxu0 0
        %3715 = vmatpush1.bf16.xpose.msra.mxu0 0
        %3716 = vmatprep.subr.bf16.mxu0 0
        %3717 = vmatpush1.bf16.xpose.msra.mxu0 0
        %3718 = vmatprep.subr.bf16.mxu0 0
        %3719 = vmatpush1.bf16.xpose.msra.mxu0 0
        %3720 = vmatprep.subr.bf16.mxu0 0
        %3721 = vmatpush1.bf16.xpose.msra.mxu0 0
        %3722 = vmatprep.mubr.bf16.mxu0 0
        %3723 = vmatmul.mubr.bf16.gmra.mrb[0].mxu0 %v3685
        %v3724 = vpop.f32.mrb[0].mxu0
        %v3725 = vadd.f32 0.0, %v3724
        %v3726 = vpop.f32.mrb[0].mxu0
        %v3727 = vpop.f32.mrb[0].mxu0
        %v3728 = vpop.f32.mrb[0].mxu0
        %3729 = vdwg.mxu0
        %v3730 = vmul.f32 %v3725, 0.35355338
        %v3731 = vsel %vm1241, %v3730, -inf
        %3732 = vmax.xlane.f32.xlu0 %v3731
        %v3733 = vpop.xlane.xlu0 %3732
        %v3734 = vsub.f32 %v3730, %v3733
        %v3735 = vmul.f32 %v3734, 1.442695
        %v3736 = vpow.pop %v3735
        %v3737 = vsel %vm1241, %v3736, 0.0
        %3738 = vadd.xlane.f32.xlu0 %v3737
        %v3739 = vpop.xlane.xlu0 %3738
        %v3740 = vadd.f32 %v3739, 1e-09
        %v3741 = vrcp.pop %v3740
        %v3742 = vmul.f32 %v3736, %v3741
        %v3743 = vpack.c.bf16 %v3742, %v3742
        %3744 = vrot.lane.b32.xlu0 %v3569, 88
        %v3745 = vpop.permute.xlu0 %3744
        %v3747 = vsel %vm1241, %v3743, 0
        %v3750 = vsel %vm1307, %v3745, 0
        %3752 = vmatprep.subr.bf16.mxu0 0
        %3753 = vmatpush1.bf16.msra.mxu0 %v3750
        %3754 = vmatprep.subr.bf16.mxu0 0
        %3755 = vmatpush1.bf16.msra.mxu0 0
        %3756 = vmatprep.subr.bf16.mxu0 0
        %3757 = vmatpush1.bf16.msra.mxu0 0
        %3758 = vmatprep.subr.bf16.mxu0 0
        %3759 = vmatpush1.bf16.msra.mxu0 0
        %3760 = vmatprep.subr.bf16.mxu0 0
        %3761 = vmatpush1.bf16.msra.mxu0 0
        %3762 = vmatprep.subr.bf16.mxu0 0
        %3763 = vmatpush1.bf16.msra.mxu0 0
        %3764 = vmatprep.subr.bf16.mxu0 0
        %3765 = vmatpush1.bf16.msra.mxu0 0
        %3766 = vmatprep.subr.bf16.mxu0 0
        %3767 = vmatpush1.bf16.msra.mxu0 0
        %3768 = vmatprep.subr.bf16.mxu0 0
        %3769 = vmatpush1.bf16.msra.mxu0 0
        %3770 = vmatprep.subr.bf16.mxu0 0
        %3771 = vmatpush1.bf16.msra.mxu0 0
        %3772 = vmatprep.subr.bf16.mxu0 0
        %3773 = vmatpush1.bf16.msra.mxu0 0
        %3774 = vmatprep.subr.bf16.mxu0 0
        %3775 = vmatpush1.bf16.msra.mxu0 0
        %3776 = vmatprep.subr.bf16.mxu0 0
        %3777 = vmatpush1.bf16.msra.mxu0 0
        %3778 = vmatprep.subr.bf16.mxu0 0
        %3779 = vmatpush1.bf16.msra.mxu0 0
        %3780 = vmatprep.subr.bf16.mxu0 0
        %3781 = vmatpush1.bf16.msra.mxu0 0
        %3782 = vmatprep.subr.bf16.mxu0 0
        %3783 = vmatpush1.bf16.msra.mxu0 0
        %3784 = vmatprep.mubr.bf16.mxu0 0
        %3785 = vmatmul.mubr.bf16.gmra.mrb[0].mxu0 %v3747
        %v3786 = vpop.f32.mrb[0].mxu0
        %v3787 = vadd.f32 0.0, %v3786
        %v3788 = vpop.f32.mrb[0].mxu0
        %v3789 = vpop.f32.mrb[0].mxu0
        %v3790 = vpop.f32.mrb[0].mxu0
        %3791 = vdwg.mxu0
        %3792 = vrot.lane.b32.xlu0 %v3568, 112
        %v3793 = vpop.permute.xlu0 %3792
        %3794 = vrot.lane.b32.xlu0 %v3569, 112
        %v3795 = vpop.permute.xlu0 %3794
        %v3797 = vsel %vm1241, %v3793, 0
        %v3800 = vsel %vm1241, %v3795, 0
        %3802 = vmatprep.subr.bf16.mxu0 0
        %3803 = vmatpush1.bf16.xpose.msra.mxu0 %v3800
        %3804 = vmatprep.subr.bf16.mxu0 0
        %3805 = vmatpush1.bf16.xpose.msra.mxu0 0
        %3806 = vmatprep.subr.bf16.mxu0 0
        %3807 = vmatpush1.bf16.xpose.msra.mxu0 0
        %3808 = vmatprep.subr.bf16.mxu0 0
        %3809 = vmatpush1.bf16.xpose.msra.mxu0 0
        %3810 = vmatprep.subr.bf16.mxu0 0
        %3811 = vmatpush1.bf16.xpose.msra.mxu0 0
        %3812 = vmatprep.subr.bf16.mxu0 0
        %3813 = vmatpush1.bf16.xpose.msra.mxu0 0
        %3814 = vmatprep.subr.bf16.mxu0 0
        %3815 = vmatpush1.bf16.xpose.msra.mxu0 0
        %3816 = vmatprep.subr.bf16.mxu0 0
        %3817 = vmatpush1.bf16.xpose.msra.mxu0 0
        %3818 = vmatprep.subr.bf16.mxu0 0
        %3819 = vmatpush1.bf16.xpose.msra.mxu0 0
        %3820 = vmatprep.subr.bf16.mxu0 0
        %3821 = vmatpush1.bf16.xpose.msra.mxu0 0
        %3822 = vmatprep.subr.bf16.mxu0 0
        %3823 = vmatpush1.bf16.xpose.msra.mxu0 0
        %3824 = vmatprep.subr.bf16.mxu0 0
        %3825 = vmatpush1.bf16.xpose.msra.mxu0 0
        %3826 = vmatprep.subr.bf16.mxu0 0
        %3827 = vmatpush1.bf16.xpose.msra.mxu0 0
        %3828 = vmatprep.subr.bf16.mxu0 0
        %3829 = vmatpush1.bf16.xpose.msra.mxu0 0
        %3830 = vmatprep.subr.bf16.mxu0 0
        %3831 = vmatpush1.bf16.xpose.msra.mxu0 0
        %3832 = vmatprep.subr.bf16.mxu0 0
        %3833 = vmatpush1.bf16.xpose.msra.mxu0 0
        %3834 = vmatprep.mubr.bf16.mxu0 0
        %3835 = vmatmul.mubr.bf16.gmra.mrb[0].mxu0 %v3797
        %v3836 = vpop.f32.mrb[0].mxu0
        %v3837 = vadd.f32 0.0, %v3836
        %v3838 = vpop.f32.mrb[0].mxu0
        %v3839 = vpop.f32.mrb[0].mxu0
        %v3840 = vpop.f32.mrb[0].mxu0
        %3841 = vdwg.mxu0
        %v3842 = vmul.f32 %v3837, 0.35355338
        %v3843 = vsel %vm1241, %v3842, -inf
        %3844 = vmax.xlane.f32.xlu0 %v3843
        %v3845 = vpop.xlane.xlu0 %3844
        %v3846 = vsub.f32 %v3842, %v3845
        %v3847 = vmul.f32 %v3846, 1.442695
        %v3848 = vpow.pop %v3847
        %v3849 = vsel %vm1241, %v3848, 0.0
        %3850 = vadd.xlane.f32.xlu0 %v3849
        %v3851 = vpop.xlane.xlu0 %3850
        %v3852 = vadd.f32 %v3851, 1e-09
        %v3853 = vrcp.pop %v3852
        %v3854 = vmul.f32 %v3848, %v3853
        %v3855 = vpack.c.bf16 %v3854, %v3854
        %3856 = vrot.lane.b32.xlu0 %v3569, 80
        %v3857 = vpop.permute.xlu0 %3856
        %v3859 = vsel %vm1241, %v3855, 0
        %v3862 = vsel %vm1307, %v3857, 0
        %3864 = vmatprep.subr.bf16.mxu0 0
        %3865 = vmatpush1.bf16.msra.mxu0 %v3862
        %3866 = vmatprep.subr.bf16.mxu0 0
        %3867 = vmatpush1.bf16.msra.mxu0 0
        %3868 = vmatprep.subr.bf16.mxu0 0
        %3869 = vmatpush1.bf16.msra.mxu0 0
        %3870 = vmatprep.subr.bf16.mxu0 0
        %3871 = vmatpush1.bf16.msra.mxu0 0
        %3872 = vmatprep.subr.bf16.mxu0 0
        %3873 = vmatpush1.bf16.msra.mxu0 0
        %3874 = vmatprep.subr.bf16.mxu0 0
        %3875 = vmatpush1.bf16.msra.mxu0 0
        %3876 = vmatprep.subr.bf16.mxu0 0
        %3877 = vmatpush1.bf16.msra.mxu0 0
        %3878 = vmatprep.subr.bf16.mxu0 0
        %3879 = vmatpush1.bf16.msra.mxu0 0
        %3880 = vmatprep.subr.bf16.mxu0 0
        %3881 = vmatpush1.bf16.msra.mxu0 0
        %3882 = vmatprep.subr.bf16.mxu0 0
        %3883 = vmatpush1.bf16.msra.mxu0 0
        %3884 = vmatprep.subr.bf16.mxu0 0
        %3885 = vmatpush1.bf16.msra.mxu0 0
        %3886 = vmatprep.subr.bf16.mxu0 0
        %3887 = vmatpush1.bf16.msra.mxu0 0
        %3888 = vmatprep.subr.bf16.mxu0 0
        %3889 = vmatpush1.bf16.msra.mxu0 0
        %3890 = vmatprep.subr.bf16.mxu0 0
        %3891 = vmatpush1.bf16.msra.mxu0 0
        %3892 = vmatprep.subr.bf16.mxu0 0
        %3893 = vmatpush1.bf16.msra.mxu0 0
        %3894 = vmatprep.subr.bf16.mxu0 0
        %3895 = vmatpush1.bf16.msra.mxu0 0
        %3896 = vmatprep.mubr.bf16.mxu0 0
        %3897 = vmatmul.mubr.bf16.gmra.mrb[0].mxu0 %v3859
        %v3898 = vpop.f32.mrb[0].mxu0
        %v3899 = vadd.f32 0.0, %v3898
        %v3900 = vpop.f32.mrb[0].mxu0
        %v3901 = vpop.f32.mrb[0].mxu0
        %v3902 = vpop.f32.mrb[0].mxu0
        %3903 = vdwg.mxu0
        %3904 = vrot.lane.b32.xlu0 %v3568, 104
        %v3905 = vpop.permute.xlu0 %3904
        %3906 = vrot.lane.b32.xlu0 %v3569, 104
        %v3907 = vpop.permute.xlu0 %3906
        %v3909 = vsel %vm1241, %v3905, 0
        %v3912 = vsel %vm1241, %v3907, 0
        %3914 = vmatprep.subr.bf16.mxu0 0
        %3915 = vmatpush1.bf16.xpose.msra.mxu0 %v3912
        %3916 = vmatprep.subr.bf16.mxu0 0
        %3917 = vmatpush1.bf16.xpose.msra.mxu0 0
        %3918 = vmatprep.subr.bf16.mxu0 0
        %3919 = vmatpush1.bf16.xpose.msra.mxu0 0
        %3920 = vmatprep.subr.bf16.mxu0 0
        %3921 = vmatpush1.bf16.xpose.msra.mxu0 0
        %3922 = vmatprep.subr.bf16.mxu0 0
        %3923 = vmatpush1.bf16.xpose.msra.mxu0 0
        %3924 = vmatprep.subr.bf16.mxu0 0
        %3925 = vmatpush1.bf16.xpose.msra.mxu0 0
        %3926 = vmatprep.subr.bf16.mxu0 0
        %3927 = vmatpush1.bf16.xpose.msra.mxu0 0
        %3928 = vmatprep.subr.bf16.mxu0 0
        %3929 = vmatpush1.bf16.xpose.msra.mxu0 0
        %3930 = vmatprep.subr.bf16.mxu0 0
        %3931 = vmatpush1.bf16.xpose.msra.mxu0 0
        %3932 = vmatprep.subr.bf16.mxu0 0
        %3933 = vmatpush1.bf16.xpose.msra.mxu0 0
        %3934 = vmatprep.subr.bf16.mxu0 0
        %3935 = vmatpush1.bf16.xpose.msra.mxu0 0
        %3936 = vmatprep.subr.bf16.mxu0 0
        %3937 = vmatpush1.bf16.xpose.msra.mxu0 0
        %3938 = vmatprep.subr.bf16.mxu0 0
        %3939 = vmatpush1.bf16.xpose.msra.mxu0 0
        %3940 = vmatprep.subr.bf16.mxu0 0
        %3941 = vmatpush1.bf16.xpose.msra.mxu0 0
        %3942 = vmatprep.subr.bf16.mxu0 0
        %3943 = vmatpush1.bf16.xpose.msra.mxu0 0
        %3944 = vmatprep.subr.bf16.mxu0 0
        %3945 = vmatpush1.bf16.xpose.msra.mxu0 0
        %3946 = vmatprep.mubr.bf16.mxu0 0
        %3947 = vmatmul.mubr.bf16.gmra.mrb[0].mxu0 %v3909
        %v3948 = vpop.f32.mrb[0].mxu0
        %v3949 = vadd.f32 0.0, %v3948
        %v3950 = vpop.f32.mrb[0].mxu0
        %v3951 = vpop.f32.mrb[0].mxu0
        %v3952 = vpop.f32.mrb[0].mxu0
        %3953 = vdwg.mxu0
        %v3954 = vmul.f32 %v3949, 0.35355338
        %v3955 = vsel %vm1241, %v3954, -inf
        %3956 = vmax.xlane.f32.xlu0 %v3955
        %v3957 = vpop.xlane.xlu0 %3956
        %v3958 = vsub.f32 %v3954, %v3957
        %v3959 = vmul.f32 %v3958, 1.442695
        %v3960 = vpow.pop %v3959
        %v3961 = vsel %vm1241, %v3960, 0.0
        %3962 = vadd.xlane.f32.xlu0 %v3961
        %v3963 = vpop.xlane.xlu0 %3962
        %v3964 = vadd.f32 %v3963, 1e-09
        %v3965 = vrcp.pop %v3964
        %v3966 = vmul.f32 %v3960, %v3965
        %v3967 = vpack.c.bf16 %v3966, %v3966
        %3968 = vrot.lane.b32.xlu0 %v3569, 72
        %v3969 = vpop.permute.xlu0 %3968
        %v3971 = vsel %vm1241, %v3967, 0
        %v3974 = vsel %vm1307, %v3969, 0
        %3976 = vmatprep.subr.bf16.mxu0 0
        %3977 = vmatpush1.bf16.msra.mxu0 %v3974
        %3978 = vmatprep.subr.bf16.mxu0 0
        %3979 = vmatpush1.bf16.msra.mxu0 0
        %3980 = vmatprep.subr.bf16.mxu0 0
        %3981 = vmatpush1.bf16.msra.mxu0 0
        %3982 = vmatprep.subr.bf16.mxu0 0
        %3983 = vmatpush1.bf16.msra.mxu0 0
        %3984 = vmatprep.subr.bf16.mxu0 0
        %3985 = vmatpush1.bf16.msra.mxu0 0
        %3986 = vmatprep.subr.bf16.mxu0 0
        %3987 = vmatpush1.bf16.msra.mxu0 0
        %3988 = vmatprep.subr.bf16.mxu0 0
        %3989 = vmatpush1.bf16.msra.mxu0 0
        %3990 = vmatprep.subr.bf16.mxu0 0
        %3991 = vmatpush1.bf16.msra.mxu0 0
        %3992 = vmatprep.subr.bf16.mxu0 0
        %3993 = vmatpush1.bf16.msra.mxu0 0
        %3994 = vmatprep.subr.bf16.mxu0 0
        %3995 = vmatpush1.bf16.msra.mxu0 0
        %3996 = vmatprep.subr.bf16.mxu0 0
        %3997 = vmatpush1.bf16.msra.mxu0 0
        %3998 = vmatprep.subr.bf16.mxu0 0
        %3999 = vmatpush1.bf16.msra.mxu0 0
        %4000 = vmatprep.subr.bf16.mxu0 0
        %4001 = vmatpush1.bf16.msra.mxu0 0
        %4002 = vmatprep.subr.bf16.mxu0 0
        %4003 = vmatpush1.bf16.msra.mxu0 0
        %4004 = vmatprep.subr.bf16.mxu0 0
        %4005 = vmatpush1.bf16.msra.mxu0 0
        %4006 = vmatprep.subr.bf16.mxu0 0
        %4007 = vmatpush1.bf16.msra.mxu0 0
        %4008 = vmatprep.mubr.bf16.mxu0 0
        %4009 = vmatmul.mubr.bf16.gmra.mrb[0].mxu0 %v3971
        %v4010 = vpop.f32.mrb[0].mxu0
        %v4011 = vadd.f32 0.0, %v4010
        %v4012 = vpop.f32.mrb[0].mxu0
        %v4013 = vpop.f32.mrb[0].mxu0
        %v4014 = vpop.f32.mrb[0].mxu0
        %4015 = vdwg.mxu0
        %4017 = vrot.lane.b32.xlu0 %v3787, 8
        %v4018 = vpop.permute.xlu0 %4017
        %4021 = vrot.lane.b32.xlu0 %v3899, 16
        %v4022 = vpop.permute.xlu0 %4021
        %4025 = vrot.lane.b32.xlu0 %v4011, 24
        %v4026 = vpop.permute.xlu0 %4025
        %v4028 = vsel %vm1241, %v3674, %v4018
        %v4029 = vsel %vm1700, %v4028, %v4022
        %v4030 = vsel %vm1702, %v4029, %v4026
        %v4031 = vpack.c.bf16 %v4030, %v4030
        %v4033 = vlaneseq
        %v4034 = vshrl.u32 %v4033, 7
        %v4035 = vsub.s32 0, %v4034
        %v4036 = vrot.slane %v3443, %v4035
        %v4042 = vunpack.c.l.b16 %v3439
        %v4043 = vunpack.c.l.b16 %v3440
        %v4044 = vunpack.c.l.b16 %v3441
        %v4045 = vunpack.c.l.b16 %v3442
        %v4046 = vpack.c.b16 %v4043, %v4042
        %v4047 = vpack.c.b16 %v4045, %v4044
        %v4051 = vsel %vm1193, %v4031, 0
        %4053 = vmatprep.subr.bf16.mxu0 0
        %4054 = vmatpush1.bf16.msra.mxu0 %v4046
        %4055 = vmatprep.subr.bf16.mxu0 0
        %4056 = vmatpush1.bf16.msra.mxu0 %v4047
        %4057 = vmatprep.subr.bf16.mxu0 0
        %4058 = vmatpush1.bf16.msra.mxu0 0
        %4059 = vmatprep.subr.bf16.mxu0 0
        %4060 = vmatpush1.bf16.msra.mxu0 0
        %4061 = vmatprep.subr.bf16.mxu0 0
        %4062 = vmatpush1.bf16.msra.mxu0 0
        %4063 = vmatprep.subr.bf16.mxu0 0
        %4064 = vmatpush1.bf16.msra.mxu0 0
        %4065 = vmatprep.subr.bf16.mxu0 0
        %4066 = vmatpush1.bf16.msra.mxu0 0
        %4067 = vmatprep.subr.bf16.mxu0 0
        %4068 = vmatpush1.bf16.msra.mxu0 0
        %4069 = vmatprep.subr.bf16.mxu0 0
        %4070 = vmatpush1.bf16.msra.mxu0 0
        %4071 = vmatprep.subr.bf16.mxu0 0
        %4072 = vmatpush1.bf16.msra.mxu0 0
        %4073 = vmatprep.subr.bf16.mxu0 0
        %4074 = vmatpush1.bf16.msra.mxu0 0
        %4075 = vmatprep.subr.bf16.mxu0 0
        %4076 = vmatpush1.bf16.msra.mxu0 0
        %4077 = vmatprep.subr.bf16.mxu0 0
        %4078 = vmatpush1.bf16.msra.mxu0 0
        %4079 = vmatprep.subr.bf16.mxu0 0
        %4080 = vmatpush1.bf16.msra.mxu0 0
        %4081 = vmatprep.subr.bf16.mxu0 0
        %4082 = vmatpush1.bf16.msra.mxu0 0
        %4083 = vmatprep.subr.bf16.mxu0 0
        %4084 = vmatpush1.bf16.msra.mxu0 0
        %4085 = vmatprep.mubr.bf16.mxu0 0
        %4086 = vmatmul.mubr.bf16.gmra.mrb[0].mxu0 %v4051
        %v4087 = vpop.f32.mrb[0].mxu0
        %v4088 = vadd.f32 %v4036, %v4087
        %v4089 = vpop.f32.mrb[0].mxu0
        %v4090 = vpop.f32.mrb[0].mxu0
        %v4091 = vpop.f32.mrb[0].mxu0
        %4092 = vdwg.mxu0
        %v4093 = vadd.f32 %v3428, %v4088
        %v4094 = vld [vmem:[%s63] sm:$0x1]
        %v4095 = vld [vmem:[%s65] sm:$0x1]
        %v4096 = vsel %vm1193, %v4093, 0.0
        %4097 = vadd.xlane.f32.xlu0 %v4096
        %v4098 = vpop.xlane.xlu0 %4097
        %v4099 = vmul.f32 %v4098, %v1772
        %v4100 = vsub.f32 %v4093, %v4099
        %v4101 = vmul.f32 %v4100, %v4100
        %v4102 = vsel %vm1193, %v4101, 0.0
        %4103 = vadd.xlane.f32.xlu0 %v4102
        %v4104 = vpop.xlane.xlu0 %4103
        %v4105 = vmul.f32 %v4104, %v1772
        %v4106 = vadd.f32 %v4105, 1e-05
        %v4107 = vrsqrt.pop %v4106
        %v4108 = vmul.f32 %v4100, %v4107
        %v4110 = vlaneseq
        %v4111 = vshrl.u32 %v4110, 7
        %v4112 = vsub.s32 0, %v4111
        %v4113 = vrot.slane %v4094, %v4112
        %v4115 = vmul.f32 %v4108, %v4113
        %v4117 = vlaneseq
        %v4118 = vshrl.u32 %v4117, 7
        %v4119 = vsub.s32 0, %v4118
        %v4120 = vrot.slane %v4095, %v4119
        %v4122 = vadd.f32 %v4115, %v4120
        %v4123 = vld [vmem:[%s51] sm:$0xf]
        %v4124 = vld [vmem:[%s51 + $0x4] sm:$0xf]
        %v4125 = vld [vmem:[%s51 + $0x8] sm:$0xf]
        %v4126 = vld [vmem:[%s51 + $0xc] sm:$0xf]
        %v4127 = vld [vmem:[%s53] sm:$0x1]
        %v4128 = vld [vmem:[%s55] sm:$0xf]
        %v4129 = vld [vmem:[%s55 + $0x4] sm:$0xf]
        %v4130 = vld [vmem:[%s55 + $0x8] sm:$0xf]
        %v4131 = vld [vmem:[%s55 + $0xc] sm:$0xf]
        %v4132 = vld [vmem:[%s55 + $0x10] sm:$0xf]
        %v4133 = vld [vmem:[%s55 + $0x14] sm:$0xf]
        %v4134 = vld [vmem:[%s55 + $0x18] sm:$0xf]
        %v4135 = vld [vmem:[%s55 + $0x1c] sm:$0xf]
        %v4136 = vld [vmem:[%s57] sm:$0x1]
        %v4137 = vpack.c.bf16 %v4122, %v4122
        %v4139 = vlaneseq
        %v4140 = vshrl.u32 %v4139, 7
        %v4141 = vsub.s32 0, %v4140
        %v4142 = vrot.slane %v4127, %v4141
        %v4148 = vunpack.c.l.b16 %v4123
        %v4149 = vunpack.c.l.b16 %v4124
        %v4150 = vunpack.c.l.b16 %v4125
        %v4151 = vunpack.c.l.b16 %v4126
        %v4152 = vpack.c.b16 %v4149, %v4148
        %v4153 = vpack.c.b16 %v4151, %v4150
        %v4157 = vsel %vm1193, %v4137, 0
        %4159 = vmatprep.subr.bf16.mxu0 0
        %4160 = vmatpush1.bf16.msra.mxu0 %v4152
        %4161 = vmatprep.subr.bf16.mxu0 0
        %4162 = vmatpush1.bf16.msra.mxu0 %v4153
        %4163 = vmatprep.subr.bf16.mxu0 0
        %4164 = vmatpush1.bf16.msra.mxu0 0
        %4165 = vmatprep.subr.bf16.mxu0 0
        %4166 = vmatpush1.bf16.msra.mxu0 0
        %4167 = vmatprep.subr.bf16.mxu0 0
        %4168 = vmatpush1.bf16.msra.mxu0 0
        %4169 = vmatprep.subr.bf16.mxu0 0
        %4170 = vmatpush1.bf16.msra.mxu0 0
        %4171 = vmatprep.subr.bf16.mxu0 0
        %4172 = vmatpush1.bf16.msra.mxu0 0
        %4173 = vmatprep.subr.bf16.mxu0 0
        %4174 = vmatpush1.bf16.msra.mxu0 0
        %4175 = vmatprep.subr.bf16.mxu0 0
        %4176 = vmatpush1.bf16.msra.mxu0 0
        %4177 = vmatprep.subr.bf16.mxu0 0
        %4178 = vmatpush1.bf16.msra.mxu0 0
        %4179 = vmatprep.subr.bf16.mxu0 0
        %4180 = vmatpush1.bf16.msra.mxu0 0
        %4181 = vmatprep.subr.bf16.mxu0 0
        %4182 = vmatpush1.bf16.msra.mxu0 0
        %4183 = vmatprep.subr.bf16.mxu0 0
        %4184 = vmatpush1.bf16.msra.mxu0 0
        %4185 = vmatprep.subr.bf16.mxu0 0
        %4186 = vmatpush1.bf16.msra.mxu0 0
        %4187 = vmatprep.subr.bf16.mxu0 0
        %4188 = vmatpush1.bf16.msra.mxu0 0
        %4189 = vmatprep.subr.bf16.mxu0 0
        %4190 = vmatpush1.bf16.msra.mxu0 0
        %4191 = vmatprep.mubr.bf16.mxu0 0
        %4192 = vmatmul.mubr.bf16.gmra.mrb[0].mxu0 %v4157
        %v4193 = vpop.f32.mrb[0].mxu0
        %v4194 = vadd.f32 %v4142, %v4193
        %v4195 = vpop.f32.mrb[0].mxu0
        %v4196 = vpop.f32.mrb[0].mxu0
        %v4197 = vpop.f32.mrb[0].mxu0
        %4198 = vdwg.mxu0
        %v4199 = vmax.f32 %v4194, 0.0
        %v4200 = vpack.c.bf16 %v4199, %v4199
        %v4202 = vlaneseq
        %v4203 = vshrl.u32 %v4202, 7
        %v4204 = vsub.s32 0, %v4203
        %v4205 = vrot.slane %v4136, %v4204
        %v4215 = vunpack.c.l.b16 %v4128
        %v4216 = vunpack.c.l.b16 %v4129
        %v4217 = vunpack.c.l.b16 %v4130
        %v4218 = vunpack.c.l.b16 %v4131
        %v4219 = vunpack.c.l.b16 %v4132
        %v4220 = vunpack.c.l.b16 %v4133
        %v4221 = vunpack.c.l.b16 %v4134
        %v4222 = vunpack.c.l.b16 %v4135
        %v4223 = vpack.c.b16 %v4216, %v4215
        %v4224 = vpack.c.b16 %v4218, %v4217
        %v4225 = vpack.c.b16 %v4220, %v4219
        %v4226 = vpack.c.b16 %v4222, %v4221
        %v4232 = vsel %vm1905, %v4200, 0
        %4234 = vmatprep.subr.bf16.mxu0 0
        %4235 = vmatpush1.bf16.msra.mxu0 %v4223
        %4236 = vmatprep.subr.bf16.mxu0 0
        %4237 = vmatpush1.bf16.msra.mxu0 %v4224
        %4238 = vmatprep.subr.bf16.mxu0 0
        %4239 = vmatpush1.bf16.msra.mxu0 %v4225
        %4240 = vmatprep.subr.bf16.mxu0 0
        %4241 = vmatpush1.bf16.msra.mxu0 %v4226
        %4242 = vmatprep.subr.bf16.mxu0 0
        %4243 = vmatpush1.bf16.msra.mxu0 0
        %4244 = vmatprep.subr.bf16.mxu0 0
        %4245 = vmatpush1.bf16.msra.mxu0 0
        %4246 = vmatprep.subr.bf16.mxu0 0
        %4247 = vmatpush1.bf16.msra.mxu0 0
        %4248 = vmatprep.subr.bf16.mxu0 0
        %4249 = vmatpush1.bf16.msra.mxu0 0
        %4250 = vmatprep.subr.bf16.mxu0 0
        %4251 = vmatpush1.bf16.msra.mxu0 0
        %4252 = vmatprep.subr.bf16.mxu0 0
        %4253 = vmatpush1.bf16.msra.mxu0 0
        %4254 = vmatprep.subr.bf16.mxu0 0
        %4255 = vmatpush1.bf16.msra.mxu0 0
        %4256 = vmatprep.subr.bf16.mxu0 0
        %4257 = vmatpush1.bf16.msra.mxu0 0
        %4258 = vmatprep.subr.bf16.mxu0 0
        %4259 = vmatpush1.bf16.msra.mxu0 0
        %4260 = vmatprep.subr.bf16.mxu0 0
        %4261 = vmatpush1.bf16.msra.mxu0 0
        %4262 = vmatprep.subr.bf16.mxu0 0
        %4263 = vmatpush1.bf16.msra.mxu0 0
        %4264 = vmatprep.subr.bf16.mxu0 0
        %4265 = vmatpush1.bf16.msra.mxu0 0
        %4266 = vmatprep.mubr.bf16.mxu0 0
        %4267 = vmatmul.mubr.bf16.gmra.mrb[0].mxu0 %v4232
        %v4268 = vpop.f32.mrb[0].mxu0
        %v4269 = vadd.f32 %v4205, %v4268
        %v4270 = vpop.f32.mrb[0].mxu0
        %v4271 = vpop.f32.mrb[0].mxu0
        %v4272 = vpop.f32.mrb[0].mxu0
        %4273 = vdwg.mxu0
        %v4274 = vadd.f32 %v4122, %v4269
        %v4275 = vld [vmem:[%s67] sm:$0x1]
        %v4276 = vld [vmem:[%s69] sm:$0x1]
        %v4277 = vsel %vm1193, %v4274, 0.0
        %4278 = vadd.xlane.f32.xlu0 %v4277
        %v4279 = vpop.xlane.xlu0 %4278
        %v4280 = vmul.f32 %v4279, %v1772
        %v4281 = vsub.f32 %v4274, %v4280
        %v4282 = vmul.f32 %v4281, %v4281
        %v4283 = vsel %vm1193, %v4282, 0.0
        %4284 = vadd.xlane.f32.xlu0 %v4283
        %v4285 = vpop.xlane.xlu0 %4284
        %v4286 = vmul.f32 %v4285, %v1772
        %v4287 = vadd.f32 %v4286, 1e-05
        %v4288 = vrsqrt.pop %v4287
        %v4289 = vmul.f32 %v4281, %v4288
        %v4291 = vlaneseq
        %v4292 = vshrl.u32 %v4291, 7
        %v4293 = vsub.s32 0, %v4292
        %v4294 = vrot.slane %v4275, %v4293
        %v4296 = vmul.f32 %v4289, %v4294
        %v4298 = vlaneseq
        %v4299 = vshrl.u32 %v4298, 7
        %v4300 = vsub.s32 0, %v4299
        %v4301 = vrot.slane %v4276, %v4300
        %v4303 = vadd.f32 %v4296, %v4301
        %s4304 = scalar_lea.vmem %s31, 16
        %v4305 = vld [vmem:[%s4304] sm:$0xf]
        %v4306 = vld [vmem:[%s4304 + $0x4] sm:$0xf]
        %v4307 = vld [vmem:[%s4304 + $0x8] sm:$0xf]
        %v4308 = vld [vmem:[%s4304 + $0xc] sm:$0xf]
        %s4309 = scalar_lea.vmem %s33, 1
        %v4310 = vld [vmem:[%s4309] sm:$0x1]
        %s4311 = scalar_lea.vmem %s35, 16
        %v4312 = vld [vmem:[%s4311] sm:$0xf]
        %v4313 = vld [vmem:[%s4311 + $0x4] sm:$0xf]
        %v4314 = vld [vmem:[%s4311 + $0x8] sm:$0xf]
        %v4315 = vld [vmem:[%s4311 + $0xc] sm:$0xf]
        %s4316 = scalar_lea.vmem %s37, 1
        %v4317 = vld [vmem:[%s4316] sm:$0x1]
        %v4318 = vpack.c.bf16 %v4303, %v4303
        %v4320 = vlaneseq
        %v4321 = vshrl.u32 %v4320, 7
        %v4322 = vsub.s32 0, %v4321
        %v4323 = vrot.slane %v4310, %v4322
        %v4329 = vunpack.c.l.b16 %v4305
        %v4330 = vunpack.c.l.b16 %v4306
        %v4331 = vunpack.c.l.b16 %v4307
        %v4332 = vunpack.c.l.b16 %v4308
        %v4333 = vpack.c.b16 %v4330, %v4329
        %v4334 = vpack.c.b16 %v4332, %v4331
        %v4338 = vsel %vm1193, %v4318, 0
        %4340 = vmatprep.subr.bf16.mxu0 0
        %4341 = vmatpush1.bf16.msra.mxu0 %v4333
        %4342 = vmatprep.subr.bf16.mxu0 0
        %4343 = vmatpush1.bf16.msra.mxu0 %v4334
        %4344 = vmatprep.subr.bf16.mxu0 0
        %4345 = vmatpush1.bf16.msra.mxu0 0
        %4346 = vmatprep.subr.bf16.mxu0 0
        %4347 = vmatpush1.bf16.msra.mxu0 0
        %4348 = vmatprep.subr.bf16.mxu0 0
        %4349 = vmatpush1.bf16.msra.mxu0 0
        %4350 = vmatprep.subr.bf16.mxu0 0
        %4351 = vmatpush1.bf16.msra.mxu0 0
        %4352 = vmatprep.subr.bf16.mxu0 0
        %4353 = vmatpush1.bf16.msra.mxu0 0
        %4354 = vmatprep.subr.bf16.mxu0 0
        %4355 = vmatpush1.bf16.msra.mxu0 0
        %4356 = vmatprep.subr.bf16.mxu0 0
        %4357 = vmatpush1.bf16.msra.mxu0 0
        %4358 = vmatprep.subr.bf16.mxu0 0
        %4359 = vmatpush1.bf16.msra.mxu0 0
        %4360 = vmatprep.subr.bf16.mxu0 0
        %4361 = vmatpush1.bf16.msra.mxu0 0
        %4362 = vmatprep.subr.bf16.mxu0 0
        %4363 = vmatpush1.bf16.msra.mxu0 0
        %4364 = vmatprep.subr.bf16.mxu0 0
        %4365 = vmatpush1.bf16.msra.mxu0 0
        %4366 = vmatprep.subr.bf16.mxu0 0
        %4367 = vmatpush1.bf16.msra.mxu0 0
        %4368 = vmatprep.subr.bf16.mxu0 0
        %4369 = vmatpush1.bf16.msra.mxu0 0
        %4370 = vmatprep.subr.bf16.mxu0 0
        %4371 = vmatpush1.bf16.msra.mxu0 0
        %4372 = vmatprep.mubr.bf16.mxu0 0
        %4373 = vmatmul.mubr.bf16.gmra.mrb[0].mxu0 %v4338
        %v4374 = vpop.f32.mrb[0].mxu0
        %v4375 = vadd.f32 %v4323, %v4374
        %v4376 = vpop.f32.mrb[0].mxu0
        %v4377 = vpop.f32.mrb[0].mxu0
        %v4378 = vpop.f32.mrb[0].mxu0
        %4379 = vdwg.mxu0
        %v4380 = vpack.c.bf16 %v4375, %v4375
        %4382 = vrot.lane.b32.xlu0 %v4380, 96
        %v4383 = vpop.permute.xlu0 %4382
        %v4385 = vsel %vm1241, %v4380, 0
        %v4388 = vsel %vm1241, %v4383, 0
        %4390 = vmatprep.subr.bf16.mxu0 0
        %4391 = vmatpush1.bf16.xpose.msra.mxu0 %v4388
        %4392 = vmatprep.subr.bf16.mxu0 0
        %4393 = vmatpush1.bf16.xpose.msra.mxu0 0
        %4394 = vmatprep.subr.bf16.mxu0 0
        %4395 = vmatpush1.bf16.xpose.msra.mxu0 0
        %4396 = vmatprep.subr.bf16.mxu0 0
        %4397 = vmatpush1.bf16.xpose.msra.mxu0 0
        %4398 = vmatprep.subr.bf16.mxu0 0
        %4399 = vmatpush1.bf16.xpose.msra.mxu0 0
        %4400 = vmatprep.subr.bf16.mxu0 0
        %4401 = vmatpush1.bf16.xpose.msra.mxu0 0
        %4402 = vmatprep.subr.bf16.mxu0 0
        %4403 = vmatpush1.bf16.xpose.msra.mxu0 0
        %4404 = vmatprep.subr.bf16.mxu0 0
        %4405 = vmatpush1.bf16.xpose.msra.mxu0 0
        %4406 = vmatprep.subr.bf16.mxu0 0
        %4407 = vmatpush1.bf16.xpose.msra.mxu0 0
        %4408 = vmatprep.subr.bf16.mxu0 0
        %4409 = vmatpush1.bf16.xpose.msra.mxu0 0
        %4410 = vmatprep.subr.bf16.mxu0 0
        %4411 = vmatpush1.bf16.xpose.msra.mxu0 0
        %4412 = vmatprep.subr.bf16.mxu0 0
        %4413 = vmatpush1.bf16.xpose.msra.mxu0 0
        %4414 = vmatprep.subr.bf16.mxu0 0
        %4415 = vmatpush1.bf16.xpose.msra.mxu0 0
        %4416 = vmatprep.subr.bf16.mxu0 0
        %4417 = vmatpush1.bf16.xpose.msra.mxu0 0
        %4418 = vmatprep.subr.bf16.mxu0 0
        %4419 = vmatpush1.bf16.xpose.msra.mxu0 0
        %4420 = vmatprep.subr.bf16.mxu0 0
        %4421 = vmatpush1.bf16.xpose.msra.mxu0 0
        %4422 = vmatprep.mubr.bf16.mxu0 0
        %4423 = vmatmul.mubr.bf16.gmra.mrb[0].mxu0 %v4385
        %v4424 = vpop.f32.mrb[0].mxu0
        %v4425 = vadd.f32 0.0, %v4424
        %v4426 = vpop.f32.mrb[0].mxu0
        %v4427 = vpop.f32.mrb[0].mxu0
        %v4428 = vpop.f32.mrb[0].mxu0
        %4429 = vdwg.mxu0
        %v4430 = vmul.f32 %v4425, 0.35355338
        %v4431 = vsel %vm1241, %v4430, -inf
        %4432 = vmax.xlane.f32.xlu0 %v4431
        %v4433 = vpop.xlane.xlu0 %4432
        %v4434 = vsub.f32 %v4430, %v4433
        %v4435 = vmul.f32 %v4434, 1.442695
        %v4436 = vpow.pop %v4435
        %v4437 = vsel %vm1241, %v4436, 0.0
        %4438 = vadd.xlane.f32.xlu0 %v4437
        %v4439 = vpop.xlane.xlu0 %4438
        %v4440 = vadd.f32 %v4439, 1e-09
        %v4441 = vrcp.pop %v4440
        %v4442 = vmul.f32 %v4436, %v4441
        %v4443 = vpack.c.bf16 %v4442, %v4442
        %4444 = vrot.lane.b32.xlu0 %v4380, 64
        %v4445 = vpop.permute.xlu0 %4444
        %v4447 = vsel %vm1241, %v4443, 0
        %v4450 = vsel %vm1307, %v4445, 0
        %4452 = vmatprep.subr.bf16.mxu0 0
        %4453 = vmatpush1.bf16.msra.mxu0 %v4450
        %4454 = vmatprep.subr.bf16.mxu0 0
        %4455 = vmatpush1.bf16.msra.mxu0 0
        %4456 = vmatprep.subr.bf16.mxu0 0
        %4457 = vmatpush1.bf16.msra.mxu0 0
        %4458 = vmatprep.subr.bf16.mxu0 0
        %4459 = vmatpush1.bf16.msra.mxu0 0
        %4460 = vmatprep.subr.bf16.mxu0 0
        %4461 = vmatpush1.bf16.msra.mxu0 0
        %4462 = vmatprep.subr.bf16.mxu0 0
        %4463 = vmatpush1.bf16.msra.mxu0 0
        %4464 = vmatprep.subr.bf16.mxu0 0
        %4465 = vmatpush1.bf16.msra.mxu0 0
        %4466 = vmatprep.subr.bf16.mxu0 0
        %4467 = vmatpush1.bf16.msra.mxu0 0
        %4468 = vmatprep.subr.bf16.mxu0 0
        %4469 = vmatpush1.bf16.msra.mxu0 0
        %4470 = vmatprep.subr.bf16.mxu0 0
        %4471 = vmatpush1.bf16.msra.mxu0 0
        %4472 = vmatprep.subr.bf16.mxu0 0
        %4473 = vmatpush1.bf16.msra.mxu0 0
        %4474 = vmatprep.subr.bf16.mxu0 0
        %4475 = vmatpush1.bf16.msra.mxu0 0
        %4476 = vmatprep.subr.bf16.mxu0 0
        %4477 = vmatpush1.bf16.msra.mxu0 0
        %4478 = vmatprep.subr.bf16.mxu0 0
        %4479 = vmatpush1.bf16.msra.mxu0 0
        %4480 = vmatprep.subr.bf16.mxu0 0
        %4481 = vmatpush1.bf16.msra.mxu0 0
        %4482 = vmatprep.subr.bf16.mxu0 0
        %4483 = vmatpush1.bf16.msra.mxu0 0
        %4484 = vmatprep.mubr.bf16.mxu0 0
        %4485 = vmatmul.mubr.bf16.gmra.mrb[0].mxu0 %v4447
        %v4486 = vpop.f32.mrb[0].mxu0
        %v4487 = vadd.f32 0.0, %v4486
        %v4488 = vpop.f32.mrb[0].mxu0
        %v4489 = vpop.f32.mrb[0].mxu0
        %v4490 = vpop.f32.mrb[0].mxu0
        %4491 = vdwg.mxu0
        %4492 = vrot.lane.b32.xlu0 %v4380, 120
        %v4493 = vpop.permute.xlu0 %4492
        %4494 = vrot.lane.b32.xlu0 %v4380, 88
        %v4495 = vpop.permute.xlu0 %4494
        %v4497 = vsel %vm1241, %v4493, 0
        %v4500 = vsel %vm1241, %v4495, 0
        %4502 = vmatprep.subr.bf16.mxu0 0
        %4503 = vmatpush1.bf16.xpose.msra.mxu0 %v4500
        %4504 = vmatprep.subr.bf16.mxu0 0
        %4505 = vmatpush1.bf16.xpose.msra.mxu0 0
        %4506 = vmatprep.subr.bf16.mxu0 0
        %4507 = vmatpush1.bf16.xpose.msra.mxu0 0
        %4508 = vmatprep.subr.bf16.mxu0 0
        %4509 = vmatpush1.bf16.xpose.msra.mxu0 0
        %4510 = vmatprep.subr.bf16.mxu0 0
        %4511 = vmatpush1.bf16.xpose.msra.mxu0 0
        %4512 = vmatprep.subr.bf16.mxu0 0
        %4513 = vmatpush1.bf16.xpose.msra.mxu0 0
        %4514 = vmatprep.subr.bf16.mxu0 0
        %4515 = vmatpush1.bf16.xpose.msra.mxu0 0
        %4516 = vmatprep.subr.bf16.mxu0 0
        %4517 = vmatpush1.bf16.xpose.msra.mxu0 0
        %4518 = vmatprep.subr.bf16.mxu0 0
        %4519 = vmatpush1.bf16.xpose.msra.mxu0 0
        %4520 = vmatprep.subr.bf16.mxu0 0
        %4521 = vmatpush1.bf16.xpose.msra.mxu0 0
        %4522 = vmatprep.subr.bf16.mxu0 0
        %4523 = vmatpush1.bf16.xpose.msra.mxu0 0
        %4524 = vmatprep.subr.bf16.mxu0 0
        %4525 = vmatpush1.bf16.xpose.msra.mxu0 0
        %4526 = vmatprep.subr.bf16.mxu0 0
        %4527 = vmatpush1.bf16.xpose.msra.mxu0 0
        %4528 = vmatprep.subr.bf16.mxu0 0
        %4529 = vmatpush1.bf16.xpose.msra.mxu0 0
        %4530 = vmatprep.subr.bf16.mxu0 0
        %4531 = vmatpush1.bf16.xpose.msra.mxu0 0
        %4532 = vmatprep.subr.bf16.mxu0 0
        %4533 = vmatpush1.bf16.xpose.msra.mxu0 0
        %4534 = vmatprep.mubr.bf16.mxu0 0
        %4535 = vmatmul.mubr.bf16.gmra.mrb[0].mxu0 %v4497
        %v4536 = vpop.f32.mrb[0].mxu0
        %v4537 = vadd.f32 0.0, %v4536
        %v4538 = vpop.f32.mrb[0].mxu0
        %v4539 = vpop.f32.mrb[0].mxu0
        %v4540 = vpop.f32.mrb[0].mxu0
        %4541 = vdwg.mxu0
        %v4542 = vmul.f32 %v4537, 0.35355338
        %v4543 = vsel %vm1241, %v4542, -inf
        %4544 = vmax.xlane.f32.xlu0 %v4543
        %v4545 = vpop.xlane.xlu0 %4544
        %v4546 = vsub.f32 %v4542, %v4545
        %v4547 = vmul.f32 %v4546, 1.442695
        %v4548 = vpow.pop %v4547
        %v4549 = vsel %vm1241, %v4548, 0.0
        %4550 = vadd.xlane.f32.xlu0 %v4549
        %v4551 = vpop.xlane.xlu0 %4550
        %v4552 = vadd.f32 %v4551, 1e-09
        %v4553 = vrcp.pop %v4552
        %v4554 = vmul.f32 %v4548, %v4553
        %v4555 = vpack.c.bf16 %v4554, %v4554
        %4556 = vrot.lane.b32.xlu0 %v4380, 56
        %v4557 = vpop.permute.xlu0 %4556
        %v4559 = vsel %vm1241, %v4555, 0
        %v4562 = vsel %vm1307, %v4557, 0
        %4564 = vmatprep.subr.bf16.mxu0 0
        %4565 = vmatpush1.bf16.msra.mxu0 %v4562
        %4566 = vmatprep.subr.bf16.mxu0 0
        %4567 = vmatpush1.bf16.msra.mxu0 0
        %4568 = vmatprep.subr.bf16.mxu0 0
        %4569 = vmatpush1.bf16.msra.mxu0 0
        %4570 = vmatprep.subr.bf16.mxu0 0
        %4571 = vmatpush1.bf16.msra.mxu0 0
        %4572 = vmatprep.subr.bf16.mxu0 0
        %4573 = vmatpush1.bf16.msra.mxu0 0
        %4574 = vmatprep.subr.bf16.mxu0 0
        %4575 = vmatpush1.bf16.msra.mxu0 0
        %4576 = vmatprep.subr.bf16.mxu0 0
        %4577 = vmatpush1.bf16.msra.mxu0 0
        %4578 = vmatprep.subr.bf16.mxu0 0
        %4579 = vmatpush1.bf16.msra.mxu0 0
        %4580 = vmatprep.subr.bf16.mxu0 0
        %4581 = vmatpush1.bf16.msra.mxu0 0
        %4582 = vmatprep.subr.bf16.mxu0 0
        %4583 = vmatpush1.bf16.msra.mxu0 0
        %4584 = vmatprep.subr.bf16.mxu0 0
        %4585 = vmatpush1.bf16.msra.mxu0 0
        %4586 = vmatprep.subr.bf16.mxu0 0
        %4587 = vmatpush1.bf16.msra.mxu0 0
        %4588 = vmatprep.subr.bf16.mxu0 0
        %4589 = vmatpush1.bf16.msra.mxu0 0
        %4590 = vmatprep.subr.bf16.mxu0 0
        %4591 = vmatpush1.bf16.msra.mxu0 0
        %4592 = vmatprep.subr.bf16.mxu0 0
        %4593 = vmatpush1.bf16.msra.mxu0 0
        %4594 = vmatprep.subr.bf16.mxu0 0
        %4595 = vmatpush1.bf16.msra.mxu0 0
        %4596 = vmatprep.mubr.bf16.mxu0 0
        %4597 = vmatmul.mubr.bf16.gmra.mrb[0].mxu0 %v4559
        %v4598 = vpop.f32.mrb[0].mxu0
        %v4599 = vadd.f32 0.0, %v4598
        %v4600 = vpop.f32.mrb[0].mxu0
        %v4601 = vpop.f32.mrb[0].mxu0
        %v4602 = vpop.f32.mrb[0].mxu0
        %4603 = vdwg.mxu0
        %4604 = vrot.lane.b32.xlu0 %v4380, 112
        %v4605 = vpop.permute.xlu0 %4604
        %4606 = vrot.lane.b32.xlu0 %v4380, 80
        %v4607 = vpop.permute.xlu0 %4606
        %v4609 = vsel %vm1241, %v4605, 0
        %v4612 = vsel %vm1241, %v4607, 0
        %4614 = vmatprep.subr.bf16.mxu0 0
        %4615 = vmatpush1.bf16.xpose.msra.mxu0 %v4612
        %4616 = vmatprep.subr.bf16.mxu0 0
        %4617 = vmatpush1.bf16.xpose.msra.mxu0 0
        %4618 = vmatprep.subr.bf16.mxu0 0
        %4619 = vmatpush1.bf16.xpose.msra.mxu0 0
        %4620 = vmatprep.subr.bf16.mxu0 0
        %4621 = vmatpush1.bf16.xpose.msra.mxu0 0
        %4622 = vmatprep.subr.bf16.mxu0 0
        %4623 = vmatpush1.bf16.xpose.msra.mxu0 0
        %4624 = vmatprep.subr.bf16.mxu0 0
        %4625 = vmatpush1.bf16.xpose.msra.mxu0 0
        %4626 = vmatprep.subr.bf16.mxu0 0
        %4627 = vmatpush1.bf16.xpose.msra.mxu0 0
        %4628 = vmatprep.subr.bf16.mxu0 0
        %4629 = vmatpush1.bf16.xpose.msra.mxu0 0
        %4630 = vmatprep.subr.bf16.mxu0 0
        %4631 = vmatpush1.bf16.xpose.msra.mxu0 0
        %4632 = vmatprep.subr.bf16.mxu0 0
        %4633 = vmatpush1.bf16.xpose.msra.mxu0 0
        %4634 = vmatprep.subr.bf16.mxu0 0
        %4635 = vmatpush1.bf16.xpose.msra.mxu0 0
        %4636 = vmatprep.subr.bf16.mxu0 0
        %4637 = vmatpush1.bf16.xpose.msra.mxu0 0
        %4638 = vmatprep.subr.bf16.mxu0 0
        %4639 = vmatpush1.bf16.xpose.msra.mxu0 0
        %4640 = vmatprep.subr.bf16.mxu0 0
        %4641 = vmatpush1.bf16.xpose.msra.mxu0 0
        %4642 = vmatprep.subr.bf16.mxu0 0
        %4643 = vmatpush1.bf16.xpose.msra.mxu0 0
        %4644 = vmatprep.subr.bf16.mxu0 0
        %4645 = vmatpush1.bf16.xpose.msra.mxu0 0
        %4646 = vmatprep.mubr.bf16.mxu0 0
        %4647 = vmatmul.mubr.bf16.gmra.mrb[0].mxu0 %v4609
        %v4648 = vpop.f32.mrb[0].mxu0
        %v4649 = vadd.f32 0.0, %v4648
        %v4650 = vpop.f32.mrb[0].mxu0
        %v4651 = vpop.f32.mrb[0].mxu0
        %v4652 = vpop.f32.mrb[0].mxu0
        %4653 = vdwg.mxu0
        %v4654 = vmul.f32 %v4649, 0.35355338
        %v4655 = vsel %vm1241, %v4654, -inf
        %4656 = vmax.xlane.f32.xlu0 %v4655
        %v4657 = vpop.xlane.xlu0 %4656
        %v4658 = vsub.f32 %v4654, %v4657
        %v4659 = vmul.f32 %v4658, 1.442695
        %v4660 = vpow.pop %v4659
        %v4661 = vsel %vm1241, %v4660, 0.0
        %4662 = vadd.xlane.f32.xlu0 %v4661
        %v4663 = vpop.xlane.xlu0 %4662
        %v4664 = vadd.f32 %v4663, 1e-09
        %v4665 = vrcp.pop %v4664
        %v4666 = vmul.f32 %v4660, %v4665
        %v4667 = vpack.c.bf16 %v4666, %v4666
        %4668 = vrot.lane.b32.xlu0 %v4380, 48
        %v4669 = vpop.permute.xlu0 %4668
        %v4671 = vsel %vm1241, %v4667, 0
        %v4674 = vsel %vm1307, %v4669, 0
        %4676 = vmatprep.subr.bf16.mxu0 0
        %4677 = vmatpush1.bf16.msra.mxu0 %v4674
        %4678 = vmatprep.subr.bf16.mxu0 0
        %4679 = vmatpush1.bf16.msra.mxu0 0
        %4680 = vmatprep.subr.bf16.mxu0 0
        %4681 = vmatpush1.bf16.msra.mxu0 0
        %4682 = vmatprep.subr.bf16.mxu0 0
        %4683 = vmatpush1.bf16.msra.mxu0 0
        %4684 = vmatprep.subr.bf16.mxu0 0
        %4685 = vmatpush1.bf16.msra.mxu0 0
        %4686 = vmatprep.subr.bf16.mxu0 0
        %4687 = vmatpush1.bf16.msra.mxu0 0
        %4688 = vmatprep.subr.bf16.mxu0 0
        %4689 = vmatpush1.bf16.msra.mxu0 0
        %4690 = vmatprep.subr.bf16.mxu0 0
        %4691 = vmatpush1.bf16.msra.mxu0 0
        %4692 = vmatprep.subr.bf16.mxu0 0
        %4693 = vmatpush1.bf16.msra.mxu0 0
        %4694 = vmatprep.subr.bf16.mxu0 0
        %4695 = vmatpush1.bf16.msra.mxu0 0
        %4696 = vmatprep.subr.bf16.mxu0 0
        %4697 = vmatpush1.bf16.msra.mxu0 0
        %4698 = vmatprep.subr.bf16.mxu0 0
        %4699 = vmatpush1.bf16.msra.mxu0 0
        %4700 = vmatprep.subr.bf16.mxu0 0
        %4701 = vmatpush1.bf16.msra.mxu0 0
        %4702 = vmatprep.subr.bf16.mxu0 0
        %4703 = vmatpush1.bf16.msra.mxu0 0
        %4704 = vmatprep.subr.bf16.mxu0 0
        %4705 = vmatpush1.bf16.msra.mxu0 0
        %4706 = vmatprep.subr.bf16.mxu0 0
        %4707 = vmatpush1.bf16.msra.mxu0 0
        %4708 = vmatprep.mubr.bf16.mxu0 0
        %4709 = vmatmul.mubr.bf16.gmra.mrb[0].mxu0 %v4671
        %v4710 = vpop.f32.mrb[0].mxu0
        %v4711 = vadd.f32 0.0, %v4710
        %v4712 = vpop.f32.mrb[0].mxu0
        %v4713 = vpop.f32.mrb[0].mxu0
        %v4714 = vpop.f32.mrb[0].mxu0
        %4715 = vdwg.mxu0
        %4716 = vrot.lane.b32.xlu0 %v4380, 104
        %v4717 = vpop.permute.xlu0 %4716
        %4718 = vrot.lane.b32.xlu0 %v4380, 72
        %v4719 = vpop.permute.xlu0 %4718
        %v4721 = vsel %vm1241, %v4717, 0
        %v4724 = vsel %vm1241, %v4719, 0
        %4726 = vmatprep.subr.bf16.mxu0 0
        %4727 = vmatpush1.bf16.xpose.msra.mxu0 %v4724
        %4728 = vmatprep.subr.bf16.mxu0 0
        %4729 = vmatpush1.bf16.xpose.msra.mxu0 0
        %4730 = vmatprep.subr.bf16.mxu0 0
        %4731 = vmatpush1.bf16.xpose.msra.mxu0 0
        %4732 = vmatprep.subr.bf16.mxu0 0
        %4733 = vmatpush1.bf16.xpose.msra.mxu0 0
        %4734 = vmatprep.subr.bf16.mxu0 0
        %4735 = vmatpush1.bf16.xpose.msra.mxu0 0
        %4736 = vmatprep.subr.bf16.mxu0 0
        %4737 = vmatpush1.bf16.xpose.msra.mxu0 0
        %4738 = vmatprep.subr.bf16.mxu0 0
        %4739 = vmatpush1.bf16.xpose.msra.mxu0 0
        %4740 = vmatprep.subr.bf16.mxu0 0
        %4741 = vmatpush1.bf16.xpose.msra.mxu0 0
        %4742 = vmatprep.subr.bf16.mxu0 0
        %4743 = vmatpush1.bf16.xpose.msra.mxu0 0
        %4744 = vmatprep.subr.bf16.mxu0 0
        %4745 = vmatpush1.bf16.xpose.msra.mxu0 0
        %4746 = vmatprep.subr.bf16.mxu0 0
        %4747 = vmatpush1.bf16.xpose.msra.mxu0 0
        %4748 = vmatprep.subr.bf16.mxu0 0
        %4749 = vmatpush1.bf16.xpose.msra.mxu0 0
        %4750 = vmatprep.subr.bf16.mxu0 0
        %4751 = vmatpush1.bf16.xpose.msra.mxu0 0
        %4752 = vmatprep.subr.bf16.mxu0 0
        %4753 = vmatpush1.bf16.xpose.msra.mxu0 0
        %4754 = vmatprep.subr.bf16.mxu0 0
        %4755 = vmatpush1.bf16.xpose.msra.mxu0 0
        %4756 = vmatprep.subr.bf16.mxu0 0
        %4757 = vmatpush1.bf16.xpose.msra.mxu0 0
        %4758 = vmatprep.mubr.bf16.mxu0 0
        %4759 = vmatmul.mubr.bf16.gmra.mrb[0].mxu0 %v4721
        %v4760 = vpop.f32.mrb[0].mxu0
        %v4761 = vadd.f32 0.0, %v4760
        %v4762 = vpop.f32.mrb[0].mxu0
        %v4763 = vpop.f32.mrb[0].mxu0
        %v4764 = vpop.f32.mrb[0].mxu0
        %4765 = vdwg.mxu0
        %v4766 = vmul.f32 %v4761, 0.35355338
        %v4767 = vsel %vm1241, %v4766, -inf
        %4768 = vmax.xlane.f32.xlu0 %v4767
        %v4769 = vpop.xlane.xlu0 %4768
        %v4770 = vsub.f32 %v4766, %v4769
        %v4771 = vmul.f32 %v4770, 1.442695
        %v4772 = vpow.pop %v4771
        %v4773 = vsel %vm1241, %v4772, 0.0
        %4774 = vadd.xlane.f32.xlu0 %v4773
        %v4775 = vpop.xlane.xlu0 %4774
        %v4776 = vadd.f32 %v4775, 1e-09
        %v4777 = vrcp.pop %v4776
        %v4778 = vmul.f32 %v4772, %v4777
        %v4779 = vpack.c.bf16 %v4778, %v4778
        %4780 = vrot.lane.b32.xlu0 %v4380, 40
        %v4781 = vpop.permute.xlu0 %4780
        %v4783 = vsel %vm1241, %v4779, 0
        %v4786 = vsel %vm1307, %v4781, 0
        %4788 = vmatprep.subr.bf16.mxu0 0
        %4789 = vmatpush1.bf16.msra.mxu0 %v4786
        %4790 = vmatprep.subr.bf16.mxu0 0
        %4791 = vmatpush1.bf16.msra.mxu0 0
        %4792 = vmatprep.subr.bf16.mxu0 0
        %4793 = vmatpush1.bf16.msra.mxu0 0
        %4794 = vmatprep.subr.bf16.mxu0 0
        %4795 = vmatpush1.bf16.msra.mxu0 0
        %4796 = vmatprep.subr.bf16.mxu0 0
        %4797 = vmatpush1.bf16.msra.mxu0 0
        %4798 = vmatprep.subr.bf16.mxu0 0
        %4799 = vmatpush1.bf16.msra.mxu0 0
        %4800 = vmatprep.subr.bf16.mxu0 0
        %4801 = vmatpush1.bf16.msra.mxu0 0
        %4802 = vmatprep.subr.bf16.mxu0 0
        %4803 = vmatpush1.bf16.msra.mxu0 0
        %4804 = vmatprep.subr.bf16.mxu0 0
        %4805 = vmatpush1.bf16.msra.mxu0 0
        %4806 = vmatprep.subr.bf16.mxu0 0
        %4807 = vmatpush1.bf16.msra.mxu0 0
        %4808 = vmatprep.subr.bf16.mxu0 0
        %4809 = vmatpush1.bf16.msra.mxu0 0
        %4810 = vmatprep.subr.bf16.mxu0 0
        %4811 = vmatpush1.bf16.msra.mxu0 0
        %4812 = vmatprep.subr.bf16.mxu0 0
        %4813 = vmatpush1.bf16.msra.mxu0 0
        %4814 = vmatprep.subr.bf16.mxu0 0
        %4815 = vmatpush1.bf16.msra.mxu0 0
        %4816 = vmatprep.subr.bf16.mxu0 0
        %4817 = vmatpush1.bf16.msra.mxu0 0
        %4818 = vmatprep.subr.bf16.mxu0 0
        %4819 = vmatpush1.bf16.msra.mxu0 0
        %4820 = vmatprep.mubr.bf16.mxu0 0
        %4821 = vmatmul.mubr.bf16.gmra.mrb[0].mxu0 %v4783
        %v4822 = vpop.f32.mrb[0].mxu0
        %v4823 = vadd.f32 0.0, %v4822
        %v4824 = vpop.f32.mrb[0].mxu0
        %v4825 = vpop.f32.mrb[0].mxu0
        %v4826 = vpop.f32.mrb[0].mxu0
        %4827 = vdwg.mxu0
        %4829 = vrot.lane.b32.xlu0 %v4599, 8
        %v4830 = vpop.permute.xlu0 %4829
        %4833 = vrot.lane.b32.xlu0 %v4711, 16
        %v4834 = vpop.permute.xlu0 %4833
        %4837 = vrot.lane.b32.xlu0 %v4823, 24
        %v4838 = vpop.permute.xlu0 %4837
        %v4840 = vsel %vm1241, %v4487, %v4830
        %v4841 = vsel %vm1700, %v4840, %v4834
        %v4842 = vsel %vm1702, %v4841, %v4838
        %v4843 = vpack.c.bf16 %v4842, %v4842
        %v4845 = vlaneseq
        %v4846 = vshrl.u32 %v4845, 7
        %v4847 = vsub.s32 0, %v4846
        %v4848 = vrot.slane %v4317, %v4847
        %v4854 = vunpack.c.l.b16 %v4312
        %v4855 = vunpack.c.l.b16 %v4313
        %v4856 = vunpack.c.l.b16 %v4314
        %v4857 = vunpack.c.l.b16 %v4315
        %v4858 = vpack.c.b16 %v4855, %v4854
        %v4859 = vpack.c.b16 %v4857, %v4856
        %v4863 = vsel %vm1193, %v4843, 0
        %4865 = vmatprep.subr.bf16.mxu0 0
        %4866 = vmatpush1.bf16.msra.mxu0 %v4858
        %4867 = vmatprep.subr.bf16.mxu0 0
        %4868 = vmatpush1.bf16.msra.mxu0 %v4859
        %4869 = vmatprep.subr.bf16.mxu0 0
        %4870 = vmatpush1.bf16.msra.mxu0 0
        %4871 = vmatprep.subr.bf16.mxu0 0
        %4872 = vmatpush1.bf16.msra.mxu0 0
        %4873 = vmatprep.subr.bf16.mxu0 0
        %4874 = vmatpush1.bf16.msra.mxu0 0
        %4875 = vmatprep.subr.bf16.mxu0 0
        %4876 = vmatpush1.bf16.msra.mxu0 0
        %4877 = vmatprep.subr.bf16.mxu0 0
        %4878 = vmatpush1.bf16.msra.mxu0 0
        %4879 = vmatprep.subr.bf16.mxu0 0
        %4880 = vmatpush1.bf16.msra.mxu0 0
        %4881 = vmatprep.subr.bf16.mxu0 0
        %4882 = vmatpush1.bf16.msra.mxu0 0
        %4883 = vmatprep.subr.bf16.mxu0 0
        %4884 = vmatpush1.bf16.msra.mxu0 0
        %4885 = vmatprep.subr.bf16.mxu0 0
        %4886 = vmatpush1.bf16.msra.mxu0 0
        %4887 = vmatprep.subr.bf16.mxu0 0
        %4888 = vmatpush1.bf16.msra.mxu0 0
        %4889 = vmatprep.subr.bf16.mxu0 0
        %4890 = vmatpush1.bf16.msra.mxu0 0
        %4891 = vmatprep.subr.bf16.mxu0 0
        %4892 = vmatpush1.bf16.msra.mxu0 0
        %4893 = vmatprep.subr.bf16.mxu0 0
        %4894 = vmatpush1.bf16.msra.mxu0 0
        %4895 = vmatprep.subr.bf16.mxu0 0
        %4896 = vmatpush1.bf16.msra.mxu0 0
        %4897 = vmatprep.mubr.bf16.mxu0 0
        %4898 = vmatmul.mubr.bf16.gmra.mrb[0].mxu0 %v4863
        %v4899 = vpop.f32.mrb[0].mxu0
        %v4900 = vadd.f32 %v4848, %v4899
        %v4901 = vpop.f32.mrb[0].mxu0
        %v4902 = vpop.f32.mrb[0].mxu0
        %v4903 = vpop.f32.mrb[0].mxu0
        %4904 = vdwg.mxu0
        %v4905 = vadd.f32 %v4303, %v4900
        %s4906 = scalar_lea.vmem %s59, 1
        %v4907 = vld [vmem:[%s4906] sm:$0x1]
        %s4908 = scalar_lea.vmem %s61, 1
        %v4909 = vld [vmem:[%s4908] sm:$0x1]
        %v4910 = vsel %vm1193, %v4905, 0.0
        %4911 = vadd.xlane.f32.xlu0 %v4910
        %v4912 = vpop.xlane.xlu0 %4911
        %v4913 = vmul.f32 %v4912, %v1772
        %v4914 = vsub.f32 %v4905, %v4913
        %v4915 = vmul.f32 %v4914, %v4914
        %v4916 = vsel %vm1193, %v4915, 0.0
        %4917 = vadd.xlane.f32.xlu0 %v4916
        %v4918 = vpop.xlane.xlu0 %4917
        %v4919 = vmul.f32 %v4918, %v1772
        %v4920 = vadd.f32 %v4919, 1e-05
        %v4921 = vrsqrt.pop %v4920
        %v4922 = vmul.f32 %v4914, %v4921
        %v4924 = vlaneseq
        %v4925 = vshrl.u32 %v4924, 7
        %v4926 = vsub.s32 0, %v4925
        %v4927 = vrot.slane %v4907, %v4926
        %v4929 = vmul.f32 %v4922, %v4927
        %v4931 = vlaneseq
        %v4932 = vshrl.u32 %v4931, 7
        %v4933 = vsub.s32 0, %v4932
        %v4934 = vrot.slane %v4909, %v4933
        %v4936 = vadd.f32 %v4929, %v4934
        %s4937 = scalar_lea.vmem %s39, 16
        %v4938 = vld [vmem:[%s4937] sm:$0xf]
        %v4939 = vld [vmem:[%s4937 + $0x4] sm:$0xf]
        %v4940 = vld [vmem:[%s4937 + $0x8] sm:$0xf]
        %v4941 = vld [vmem:[%s4937 + $0xc] sm:$0xf]
        %s4942 = scalar_lea.vmem %s41, 1
        %v4943 = vld [vmem:[%s4942] sm:$0x1]
        %s4944 = scalar_lea.vmem %s43, 16
        %v4945 = vld [vmem:[%s4944] sm:$0xf]
        %v4946 = vld [vmem:[%s4944 + $0x4] sm:$0xf]
        %v4947 = vld [vmem:[%s4944 + $0x8] sm:$0xf]
        %v4948 = vld [vmem:[%s4944 + $0xc] sm:$0xf]
        %s4949 = scalar_lea.vmem %s45, 1
        %v4950 = vld [vmem:[%s4949] sm:$0x1]
        %s4951 = scalar_lea.vmem %s47, 16
        %v4952 = vld [vmem:[%s4951] sm:$0xf]
        %v4953 = vld [vmem:[%s4951 + $0x4] sm:$0xf]
        %v4954 = vld [vmem:[%s4951 + $0x8] sm:$0xf]
        %v4955 = vld [vmem:[%s4951 + $0xc] sm:$0xf]
        %s4956 = scalar_lea.vmem %s49, 1
        %v4957 = vld [vmem:[%s4956] sm:$0x1]
        %v4958 = vpack.c.bf16 %v4936, %v4936
        %v4960 = vlaneseq
        %v4961 = vshrl.u32 %v4960, 7
        %v4962 = vsub.s32 0, %v4961
        %v4963 = vrot.slane %v4943, %v4962
        %v4969 = vunpack.c.l.b16 %v4938
        %v4970 = vunpack.c.l.b16 %v4939
        %v4971 = vunpack.c.l.b16 %v4940
        %v4972 = vunpack.c.l.b16 %v4941
        %v4973 = vpack.c.b16 %v4970, %v4969
        %v4974 = vpack.c.b16 %v4972, %v4971
        %v4978 = vsel %vm1193, %v4958, 0
        %4980 = vmatprep.subr.bf16.mxu0 0
        %4981 = vmatpush1.bf16.msra.mxu0 %v4973
        %4982 = vmatprep.subr.bf16.mxu0 0
        %4983 = vmatpush1.bf16.msra.mxu0 %v4974
        %4984 = vmatprep.subr.bf16.mxu0 0
        %4985 = vmatpush1.bf16.msra.mxu0 0
        %4986 = vmatprep.subr.bf16.mxu0 0
        %4987 = vmatpush1.bf16.msra.mxu0 0
        %4988 = vmatprep.subr.bf16.mxu0 0
        %4989 = vmatpush1.bf16.msra.mxu0 0
        %4990 = vmatprep.subr.bf16.mxu0 0
        %4991 = vmatpush1.bf16.msra.mxu0 0
        %4992 = vmatprep.subr.bf16.mxu0 0
        %4993 = vmatpush1.bf16.msra.mxu0 0
        %4994 = vmatprep.subr.bf16.mxu0 0
        %4995 = vmatpush1.bf16.msra.mxu0 0
        %4996 = vmatprep.subr.bf16.mxu0 0
        %4997 = vmatpush1.bf16.msra.mxu0 0
        %4998 = vmatprep.subr.bf16.mxu0 0
        %4999 = vmatpush1.bf16.msra.mxu0 0
        %5000 = vmatprep.subr.bf16.mxu0 0
        %5001 = vmatpush1.bf16.msra.mxu0 0
        %5002 = vmatprep.subr.bf16.mxu0 0
        %5003 = vmatpush1.bf16.msra.mxu0 0
        %5004 = vmatprep.subr.bf16.mxu0 0
        %5005 = vmatpush1.bf16.msra.mxu0 0
        %5006 = vmatprep.subr.bf16.mxu0 0
        %5007 = vmatpush1.bf16.msra.mxu0 0
        %5008 = vmatprep.subr.bf16.mxu0 0
        %5009 = vmatpush1.bf16.msra.mxu0 0
        %5010 = vmatprep.subr.bf16.mxu0 0
        %5011 = vmatpush1.bf16.msra.mxu0 0
        %5012 = vmatprep.mubr.bf16.mxu0 0
        %5013 = vmatmul.mubr.bf16.gmra.mrb[0].mxu0 %v4978
        %v5014 = vpop.f32.mrb[0].mxu0
        %v5015 = vadd.f32 %v4963, %v5014
        %v5016 = vpop.f32.mrb[0].mxu0
        %v5017 = vpop.f32.mrb[0].mxu0
        %v5018 = vpop.f32.mrb[0].mxu0
        %5019 = vdwg.mxu0
        %v5021 = vlaneseq
        %v5022 = vshrl.u32 %v5021, 7
        %v5023 = vsub.s32 0, %v5022
        %v5024 = vrot.slane %v4950, %v5023
        %v5030 = vunpack.c.l.b16 %v4945
        %v5031 = vunpack.c.l.b16 %v4946
        %v5032 = vunpack.c.l.b16 %v4947
        %v5033 = vunpack.c.l.b16 %v4948
        %v5034 = vpack.c.b16 %v5031, %v5030
        %v5035 = vpack.c.b16 %v5033, %v5032
        %5038 = vmatprep.subr.bf16.mxu0 0
        %5039 = vmatpush1.bf16.msra.mxu0 %v5034
        %5040 = vmatprep.subr.bf16.mxu0 0
        %5041 = vmatpush1.bf16.msra.mxu0 %v5035
        %5042 = vmatprep.subr.bf16.mxu0 0
        %5043 = vmatpush1.bf16.msra.mxu0 0
        %5044 = vmatprep.subr.bf16.mxu0 0
        %5045 = vmatpush1.bf16.msra.mxu0 0
        %5046 = vmatprep.subr.bf16.mxu0 0
        %5047 = vmatpush1.bf16.msra.mxu0 0
        %5048 = vmatprep.subr.bf16.mxu0 0
        %5049 = vmatpush1.bf16.msra.mxu0 0
        %5050 = vmatprep.subr.bf16.mxu0 0
        %5051 = vmatpush1.bf16.msra.mxu0 0
        %5052 = vmatprep.subr.bf16.mxu0 0
        %5053 = vmatpush1.bf16.msra.mxu0 0
        %5054 = vmatprep.subr.bf16.mxu0 0
        %5055 = vmatpush1.bf16.msra.mxu0 0
        %5056 = vmatprep.subr.bf16.mxu0 0
        %5057 = vmatpush1.bf16.msra.mxu0 0
        %5058 = vmatprep.subr.bf16.mxu0 0
        %5059 = vmatpush1.bf16.msra.mxu0 0
        %5060 = vmatprep.subr.bf16.mxu0 0
        %5061 = vmatpush1.bf16.msra.mxu0 0
        %5062 = vmatprep.subr.bf16.mxu0 0
        %5063 = vmatpush1.bf16.msra.mxu0 0
        %5064 = vmatprep.subr.bf16.mxu0 0
        %5065 = vmatpush1.bf16.msra.mxu0 0
        %5066 = vmatprep.subr.bf16.mxu0 0
        %5067 = vmatpush1.bf16.msra.mxu0 0
        %5068 = vmatprep.subr.bf16.mxu0 0
        %5069 = vmatpush1.bf16.msra.mxu0 0
        %5070 = vmatprep.mubr.bf16.mxu0 0
        %5071 = vmatmul.mubr.bf16.gmra.mrb[0].mxu0 %v3526
        %v5072 = vpop.f32.mrb[0].mxu0
        %v5073 = vadd.f32 %v5024, %v5072
        %v5074 = vpop.f32.mrb[0].mxu0
        %v5075 = vpop.f32.mrb[0].mxu0
        %v5076 = vpop.f32.mrb[0].mxu0
        %5077 = vdwg.mxu0
        %v5078 = vpack.c.bf16 %v5015, %v5015
        %v5079 = vpack.c.bf16 %v5073, %v5073
        %v5081 = vsel %vm1241, %v5078, 0
        %v5084 = vsel %vm1241, %v5079, 0
        %5086 = vmatprep.subr.bf16.mxu0 0
        %5087 = vmatpush1.bf16.xpose.msra.mxu0 %v5084
        %5088 = vmatprep.subr.bf16.mxu0 0
        %5089 = vmatpush1.bf16.xpose.msra.mxu0 0
        %5090 = vmatprep.subr.bf16.mxu0 0
        %5091 = vmatpush1.bf16.xpose.msra.mxu0 0
        %5092 = vmatprep.subr.bf16.mxu0 0
        %5093 = vmatpush1.bf16.xpose.msra.mxu0 0
        %5094 = vmatprep.subr.bf16.mxu0 0
        %5095 = vmatpush1.bf16.xpose.msra.mxu0 0
        %5096 = vmatprep.subr.bf16.mxu0 0
        %5097 = vmatpush1.bf16.xpose.msra.mxu0 0
        %5098 = vmatprep.subr.bf16.mxu0 0
        %5099 = vmatpush1.bf16.xpose.msra.mxu0 0
        %5100 = vmatprep.subr.bf16.mxu0 0
        %5101 = vmatpush1.bf16.xpose.msra.mxu0 0
        %5102 = vmatprep.subr.bf16.mxu0 0
        %5103 = vmatpush1.bf16.xpose.msra.mxu0 0
        %5104 = vmatprep.subr.bf16.mxu0 0
        %5105 = vmatpush1.bf16.xpose.msra.mxu0 0
        %5106 = vmatprep.subr.bf16.mxu0 0
        %5107 = vmatpush1.bf16.xpose.msra.mxu0 0
        %5108 = vmatprep.subr.bf16.mxu0 0
        %5109 = vmatpush1.bf16.xpose.msra.mxu0 0
        %5110 = vmatprep.subr.bf16.mxu0 0
        %5111 = vmatpush1.bf16.xpose.msra.mxu0 0
        %5112 = vmatprep.subr.bf16.mxu0 0
        %5113 = vmatpush1.bf16.xpose.msra.mxu0 0
        %5114 = vmatprep.subr.bf16.mxu0 0
        %5115 = vmatpush1.bf16.xpose.msra.mxu0 0
        %5116 = vmatprep.subr.bf16.mxu0 0
        %5117 = vmatpush1.bf16.xpose.msra.mxu0 0
        %5118 = vmatprep.mubr.bf16.mxu0 0
        %5119 = vmatmul.mubr.bf16.gmra.mrb[0].mxu0 %v5081
        %v5120 = vpop.f32.mrb[0].mxu0
        %v5121 = vadd.f32 0.0, %v5120
        %v5122 = vpop.f32.mrb[0].mxu0
        %v5123 = vpop.f32.mrb[0].mxu0
        %v5124 = vpop.f32.mrb[0].mxu0
        %5125 = vdwg.mxu0
        %v5126 = vmul.f32 %v5121, 0.35355338
        %v5127 = vsel %vm1241, %v5126, -inf
        %5128 = vmax.xlane.f32.xlu0 %v5127
        %v5129 = vpop.xlane.xlu0 %5128
        %v5130 = vsub.f32 %v5126, %v5129
        %v5131 = vmul.f32 %v5130, 1.442695
        %v5132 = vpow.pop %v5131
        %v5133 = vsel %vm1241, %v5132, 0.0
        %5134 = vadd.xlane.f32.xlu0 %v5133
        %v5135 = vpop.xlane.xlu0 %5134
        %v5136 = vadd.f32 %v5135, 1e-09
        %v5137 = vrcp.pop %v5136
        %v5138 = vmul.f32 %v5132, %v5137
        %v5139 = vpack.c.bf16 %v5138, %v5138
        %5141 = vrot.lane.b32.xlu0 %v5079, 96
        %v5142 = vpop.permute.xlu0 %5141
        %v5144 = vsel %vm1241, %v5139, 0
        %v5147 = vsel %vm1307, %v5142, 0
        %5149 = vmatprep.subr.bf16.mxu0 0
        %5150 = vmatpush1.bf16.msra.mxu0 %v5147
        %5151 = vmatprep.subr.bf16.mxu0 0
        %5152 = vmatpush1.bf16.msra.mxu0 0
        %5153 = vmatprep.subr.bf16.mxu0 0
        %5154 = vmatpush1.bf16.msra.mxu0 0
        %5155 = vmatprep.subr.bf16.mxu0 0
        %5156 = vmatpush1.bf16.msra.mxu0 0
        %5157 = vmatprep.subr.bf16.mxu0 0
        %5158 = vmatpush1.bf16.msra.mxu0 0
        %5159 = vmatprep.subr.bf16.mxu0 0
        %5160 = vmatpush1.bf16.msra.mxu0 0
        %5161 = vmatprep.subr.bf16.mxu0 0
        %5162 = vmatpush1.bf16.msra.mxu0 0
        %5163 = vmatprep.subr.bf16.mxu0 0
        %5164 = vmatpush1.bf16.msra.mxu0 0
        %5165 = vmatprep.subr.bf16.mxu0 0
        %5166 = vmatpush1.bf16.msra.mxu0 0
        %5167 = vmatprep.subr.bf16.mxu0 0
        %5168 = vmatpush1.bf16.msra.mxu0 0
        %5169 = vmatprep.subr.bf16.mxu0 0
        %5170 = vmatpush1.bf16.msra.mxu0 0
        %5171 = vmatprep.subr.bf16.mxu0 0
        %5172 = vmatpush1.bf16.msra.mxu0 0
        %5173 = vmatprep.subr.bf16.mxu0 0
        %5174 = vmatpush1.bf16.msra.mxu0 0
        %5175 = vmatprep.subr.bf16.mxu0 0
        %5176 = vmatpush1.bf16.msra.mxu0 0
        %5177 = vmatprep.subr.bf16.mxu0 0
        %5178 = vmatpush1.bf16.msra.mxu0 0
        %5179 = vmatprep.subr.bf16.mxu0 0
        %5180 = vmatpush1.bf16.msra.mxu0 0
        %5181 = vmatprep.mubr.bf16.mxu0 0
        %5182 = vmatmul.mubr.bf16.gmra.mrb[0].mxu0 %v5144
        %v5183 = vpop.f32.mrb[0].mxu0
        %v5184 = vadd.f32 0.0, %v5183
        %v5185 = vpop.f32.mrb[0].mxu0
        %v5186 = vpop.f32.mrb[0].mxu0
        %v5187 = vpop.f32.mrb[0].mxu0
        %5188 = vdwg.mxu0
        %5190 = vrot.lane.b32.xlu0 %v5078, 120
        %v5191 = vpop.permute.xlu0 %5190
        %5192 = vrot.lane.b32.xlu0 %v5079, 120
        %v5193 = vpop.permute.xlu0 %5192
        %v5195 = vsel %vm1241, %v5191, 0
        %v5198 = vsel %vm1241, %v5193, 0
        %5200 = vmatprep.subr.bf16.mxu0 0
        %5201 = vmatpush1.bf16.xpose.msra.mxu0 %v5198
        %5202 = vmatprep.subr.bf16.mxu0 0
        %5203 = vmatpush1.bf16.xpose.msra.mxu0 0
        %5204 = vmatprep.subr.bf16.mxu0 0
        %5205 = vmatpush1.bf16.xpose.msra.mxu0 0
        %5206 = vmatprep.subr.bf16.mxu0 0
        %5207 = vmatpush1.bf16.xpose.msra.mxu0 0
        %5208 = vmatprep.subr.bf16.mxu0 0
        %5209 = vmatpush1.bf16.xpose.msra.mxu0 0
        %5210 = vmatprep.subr.bf16.mxu0 0
        %5211 = vmatpush1.bf16.xpose.msra.mxu0 0
        %5212 = vmatprep.subr.bf16.mxu0 0
        %5213 = vmatpush1.bf16.xpose.msra.mxu0 0
        %5214 = vmatprep.subr.bf16.mxu0 0
        %5215 = vmatpush1.bf16.xpose.msra.mxu0 0
        %5216 = vmatprep.subr.bf16.mxu0 0
        %5217 = vmatpush1.bf16.xpose.msra.mxu0 0
        %5218 = vmatprep.subr.bf16.mxu0 0
        %5219 = vmatpush1.bf16.xpose.msra.mxu0 0
        %5220 = vmatprep.subr.bf16.mxu0 0
        %5221 = vmatpush1.bf16.xpose.msra.mxu0 0
        %5222 = vmatprep.subr.bf16.mxu0 0
        %5223 = vmatpush1.bf16.xpose.msra.mxu0 0
        %5224 = vmatprep.subr.bf16.mxu0 0
        %5225 = vmatpush1.bf16.xpose.msra.mxu0 0
        %5226 = vmatprep.subr.bf16.mxu0 0
        %5227 = vmatpush1.bf16.xpose.msra.mxu0 0
        %5228 = vmatprep.subr.bf16.mxu0 0
        %5229 = vmatpush1.bf16.xpose.msra.mxu0 0
        %5230 = vmatprep.subr.bf16.mxu0 0
        %5231 = vmatpush1.bf16.xpose.msra.mxu0 0
        %5232 = vmatprep.mubr.bf16.mxu0 0
        %5233 = vmatmul.mubr.bf16.gmra.mrb[0].mxu0 %v5195
        %v5234 = vpop.f32.mrb[0].mxu0
        %v5235 = vadd.f32 0.0, %v5234
        %v5236 = vpop.f32.mrb[0].mxu0
        %v5237 = vpop.f32.mrb[0].mxu0
        %v5238 = vpop.f32.mrb[0].mxu0
        %5239 = vdwg.mxu0
        %v5240 = vmul.f32 %v5235, 0.35355338
        %v5241 = vsel %vm1241, %v5240, -inf
        %5242 = vmax.xlane.f32.xlu0 %v5241
        %v5243 = vpop.xlane.xlu0 %5242
        %v5244 = vsub.f32 %v5240, %v5243
        %v5245 = vmul.f32 %v5244, 1.442695
        %v5246 = vpow.pop %v5245
        %v5247 = vsel %vm1241, %v5246, 0.0
        %5248 = vadd.xlane.f32.xlu0 %v5247
        %v5249 = vpop.xlane.xlu0 %5248
        %v5250 = vadd.f32 %v5249, 1e-09
        %v5251 = vrcp.pop %v5250
        %v5252 = vmul.f32 %v5246, %v5251
        %v5253 = vpack.c.bf16 %v5252, %v5252
        %5254 = vrot.lane.b32.xlu0 %v5079, 88
        %v5255 = vpop.permute.xlu0 %5254
        %v5257 = vsel %vm1241, %v5253, 0
        %v5260 = vsel %vm1307, %v5255, 0
        %5262 = vmatprep.subr.bf16.mxu0 0
        %5263 = vmatpush1.bf16.msra.mxu0 %v5260
        %5264 = vmatprep.subr.bf16.mxu0 0
        %5265 = vmatpush1.bf16.msra.mxu0 0
        %5266 = vmatprep.subr.bf16.mxu0 0
        %5267 = vmatpush1.bf16.msra.mxu0 0
        %5268 = vmatprep.subr.bf16.mxu0 0
        %5269 = vmatpush1.bf16.msra.mxu0 0
        %5270 = vmatprep.subr.bf16.mxu0 0
        %5271 = vmatpush1.bf16.msra.mxu0 0
        %5272 = vmatprep.subr.bf16.mxu0 0
        %5273 = vmatpush1.bf16.msra.mxu0 0
        %5274 = vmatprep.subr.bf16.mxu0 0
        %5275 = vmatpush1.bf16.msra.mxu0 0
        %5276 = vmatprep.subr.bf16.mxu0 0
        %5277 = vmatpush1.bf16.msra.mxu0 0
        %5278 = vmatprep.subr.bf16.mxu0 0
        %5279 = vmatpush1.bf16.msra.mxu0 0
        %5280 = vmatprep.subr.bf16.mxu0 0
        %5281 = vmatpush1.bf16.msra.mxu0 0
        %5282 = vmatprep.subr.bf16.mxu0 0
        %5283 = vmatpush1.bf16.msra.mxu0 0
        %5284 = vmatprep.subr.bf16.mxu0 0
        %5285 = vmatpush1.bf16.msra.mxu0 0
        %5286 = vmatprep.subr.bf16.mxu0 0
        %5287 = vmatpush1.bf16.msra.mxu0 0
        %5288 = vmatprep.subr.bf16.mxu0 0
        %5289 = vmatpush1.bf16.msra.mxu0 0
        %5290 = vmatprep.subr.bf16.mxu0 0
        %5291 = vmatpush1.bf16.msra.mxu0 0
        %5292 = vmatprep.subr.bf16.mxu0 0
        %5293 = vmatpush1.bf16.msra.mxu0 0
        %5294 = vmatprep.mubr.bf16.mxu0 0
        %5295 = vmatmul.mubr.bf16.gmra.mrb[0].mxu0 %v5257
        %v5296 = vpop.f32.mrb[0].mxu0
        %v5297 = vadd.f32 0.0, %v5296
        %v5298 = vpop.f32.mrb[0].mxu0
        %v5299 = vpop.f32.mrb[0].mxu0
        %v5300 = vpop.f32.mrb[0].mxu0
        %5301 = vdwg.mxu0
        %5302 = vrot.lane.b32.xlu0 %v5078, 112
        %v5303 = vpop.permute.xlu0 %5302
        %5304 = vrot.lane.b32.xlu0 %v5079, 112
        %v5305 = vpop.permute.xlu0 %5304
        %v5307 = vsel %vm1241, %v5303, 0
        %v5310 = vsel %vm1241, %v5305, 0
        %5312 = vmatprep.subr.bf16.mxu0 0
        %5313 = vmatpush1.bf16.xpose.msra.mxu0 %v5310
        %5314 = vmatprep.subr.bf16.mxu0 0
        %5315 = vmatpush1.bf16.xpose.msra.mxu0 0
        %5316 = vmatprep.subr.bf16.mxu0 0
        %5317 = vmatpush1.bf16.xpose.msra.mxu0 0
        %5318 = vmatprep.subr.bf16.mxu0 0
        %5319 = vmatpush1.bf16.xpose.msra.mxu0 0
        %5320 = vmatprep.subr.bf16.mxu0 0
        %5321 = vmatpush1.bf16.xpose.msra.mxu0 0
        %5322 = vmatprep.subr.bf16.mxu0 0
        %5323 = vmatpush1.bf16.xpose.msra.mxu0 0
        %5324 = vmatprep.subr.bf16.mxu0 0
        %5325 = vmatpush1.bf16.xpose.msra.mxu0 0
        %5326 = vmatprep.subr.bf16.mxu0 0
        %5327 = vmatpush1.bf16.xpose.msra.mxu0 0
        %5328 = vmatprep.subr.bf16.mxu0 0
        %5329 = vmatpush1.bf16.xpose.msra.mxu0 0
        %5330 = vmatprep.subr.bf16.mxu0 0
        %5331 = vmatpush1.bf16.xpose.msra.mxu0 0
        %5332 = vmatprep.subr.bf16.mxu0 0
        %5333 = vmatpush1.bf16.xpose.msra.mxu0 0
        %5334 = vmatprep.subr.bf16.mxu0 0
        %5335 = vmatpush1.bf16.xpose.msra.mxu0 0
        %5336 = vmatprep.subr.bf16.mxu0 0
        %5337 = vmatpush1.bf16.xpose.msra.mxu0 0
        %5338 = vmatprep.subr.bf16.mxu0 0
        %5339 = vmatpush1.bf16.xpose.msra.mxu0 0
        %5340 = vmatprep.subr.bf16.mxu0 0
        %5341 = vmatpush1.bf16.xpose.msra.mxu0 0
        %5342 = vmatprep.subr.bf16.mxu0 0
        %5343 = vmatpush1.bf16.xpose.msra.mxu0 0
        %5344 = vmatprep.mubr.bf16.mxu0 0
        %5345 = vmatmul.mubr.bf16.gmra.mrb[0].mxu0 %v5307
        %v5346 = vpop.f32.mrb[0].mxu0
        %v5347 = vadd.f32 0.0, %v5346
        %v5348 = vpop.f32.mrb[0].mxu0
        %v5349 = vpop.f32.mrb[0].mxu0
        %v5350 = vpop.f32.mrb[0].mxu0
        %5351 = vdwg.mxu0
        %v5352 = vmul.f32 %v5347, 0.35355338
        %v5353 = vsel %vm1241, %v5352, -inf
        %5354 = vmax.xlane.f32.xlu0 %v5353
        %v5355 = vpop.xlane.xlu0 %5354
        %v5356 = vsub.f32 %v5352, %v5355
        %v5357 = vmul.f32 %v5356, 1.442695
        %v5358 = vpow.pop %v5357
        %v5359 = vsel %vm1241, %v5358, 0.0
        %5360 = vadd.xlane.f32.xlu0 %v5359
        %v5361 = vpop.xlane.xlu0 %5360
        %v5362 = vadd.f32 %v5361, 1e-09
        %v5363 = vrcp.pop %v5362
        %v5364 = vmul.f32 %v5358, %v5363
        %v5365 = vpack.c.bf16 %v5364, %v5364
        %5366 = vrot.lane.b32.xlu0 %v5079, 80
        %v5367 = vpop.permute.xlu0 %5366
        %v5369 = vsel %vm1241, %v5365, 0
        %v5372 = vsel %vm1307, %v5367, 0
        %5374 = vmatprep.subr.bf16.mxu0 0
        %5375 = vmatpush1.bf16.msra.mxu0 %v5372
        %5376 = vmatprep.subr.bf16.mxu0 0
        %5377 = vmatpush1.bf16.msra.mxu0 0
        %5378 = vmatprep.subr.bf16.mxu0 0
        %5379 = vmatpush1.bf16.msra.mxu0 0
        %5380 = vmatprep.subr.bf16.mxu0 0
        %5381 = vmatpush1.bf16.msra.mxu0 0
        %5382 = vmatprep.subr.bf16.mxu0 0
        %5383 = vmatpush1.bf16.msra.mxu0 0
        %5384 = vmatprep.subr.bf16.mxu0 0
        %5385 = vmatpush1.bf16.msra.mxu0 0
        %5386 = vmatprep.subr.bf16.mxu0 0
        %5387 = vmatpush1.bf16.msra.mxu0 0
        %5388 = vmatprep.subr.bf16.mxu0 0
        %5389 = vmatpush1.bf16.msra.mxu0 0
        %5390 = vmatprep.subr.bf16.mxu0 0
        %5391 = vmatpush1.bf16.msra.mxu0 0
        %5392 = vmatprep.subr.bf16.mxu0 0
        %5393 = vmatpush1.bf16.msra.mxu0 0
        %5394 = vmatprep.subr.bf16.mxu0 0
        %5395 = vmatpush1.bf16.msra.mxu0 0
        %5396 = vmatprep.subr.bf16.mxu0 0
        %5397 = vmatpush1.bf16.msra.mxu0 0
        %5398 = vmatprep.subr.bf16.mxu0 0
        %5399 = vmatpush1.bf16.msra.mxu0 0
        %5400 = vmatprep.subr.bf16.mxu0 0
        %5401 = vmatpush1.bf16.msra.mxu0 0
        %5402 = vmatprep.subr.bf16.mxu0 0
        %5403 = vmatpush1.bf16.msra.mxu0 0
        %5404 = vmatprep.subr.bf16.mxu0 0
        %5405 = vmatpush1.bf16.msra.mxu0 0
        %5406 = vmatprep.mubr.bf16.mxu0 0
        %5407 = vmatmul.mubr.bf16.gmra.mrb[0].mxu0 %v5369
        %v5408 = vpop.f32.mrb[0].mxu0
        %v5409 = vadd.f32 0.0, %v5408
        %v5410 = vpop.f32.mrb[0].mxu0
        %v5411 = vpop.f32.mrb[0].mxu0
        %v5412 = vpop.f32.mrb[0].mxu0
        %5413 = vdwg.mxu0
        %5414 = vrot.lane.b32.xlu0 %v5078, 104
        %v5415 = vpop.permute.xlu0 %5414
        %5416 = vrot.lane.b32.xlu0 %v5079, 104
        %v5417 = vpop.permute.xlu0 %5416
        %v5419 = vsel %vm1241, %v5415, 0
        %v5422 = vsel %vm1241, %v5417, 0
        %5424 = vmatprep.subr.bf16.mxu0 0
        %5425 = vmatpush1.bf16.xpose.msra.mxu0 %v5422
        %5426 = vmatprep.subr.bf16.mxu0 0
        %5427 = vmatpush1.bf16.xpose.msra.mxu0 0
        %5428 = vmatprep.subr.bf16.mxu0 0
        %5429 = vmatpush1.bf16.xpose.msra.mxu0 0
        %5430 = vmatprep.subr.bf16.mxu0 0
        %5431 = vmatpush1.bf16.xpose.msra.mxu0 0
        %5432 = vmatprep.subr.bf16.mxu0 0
        %5433 = vmatpush1.bf16.xpose.msra.mxu0 0
        %5434 = vmatprep.subr.bf16.mxu0 0
        %5435 = vmatpush1.bf16.xpose.msra.mxu0 0
        %5436 = vmatprep.subr.bf16.mxu0 0
        %5437 = vmatpush1.bf16.xpose.msra.mxu0 0
        %5438 = vmatprep.subr.bf16.mxu0 0
        %5439 = vmatpush1.bf16.xpose.msra.mxu0 0
        %5440 = vmatprep.subr.bf16.mxu0 0
        %5441 = vmatpush1.bf16.xpose.msra.mxu0 0
        %5442 = vmatprep.subr.bf16.mxu0 0
        %5443 = vmatpush1.bf16.xpose.msra.mxu0 0
        %5444 = vmatprep.subr.bf16.mxu0 0
        %5445 = vmatpush1.bf16.xpose.msra.mxu0 0
        %5446 = vmatprep.subr.bf16.mxu0 0
        %5447 = vmatpush1.bf16.xpose.msra.mxu0 0
        %5448 = vmatprep.subr.bf16.mxu0 0
        %5449 = vmatpush1.bf16.xpose.msra.mxu0 0
        %5450 = vmatprep.subr.bf16.mxu0 0
        %5451 = vmatpush1.bf16.xpose.msra.mxu0 0
        %5452 = vmatprep.subr.bf16.mxu0 0
        %5453 = vmatpush1.bf16.xpose.msra.mxu0 0
        %5454 = vmatprep.subr.bf16.mxu0 0
        %5455 = vmatpush1.bf16.xpose.msra.mxu0 0
        %5456 = vmatprep.mubr.bf16.mxu0 0
        %5457 = vmatmul.mubr.bf16.gmra.mrb[0].mxu0 %v5419
        %v5458 = vpop.f32.mrb[0].mxu0
        %v5459 = vadd.f32 0.0, %v5458
        %v5460 = vpop.f32.mrb[0].mxu0
        %v5461 = vpop.f32.mrb[0].mxu0
        %v5462 = vpop.f32.mrb[0].mxu0
        %5463 = vdwg.mxu0
        %v5464 = vmul.f32 %v5459, 0.35355338
        %v5465 = vsel %vm1241, %v5464, -inf
        %5466 = vmax.xlane.f32.xlu0 %v5465
        %v5467 = vpop.xlane.xlu0 %5466
        %v5468 = vsub.f32 %v5464, %v5467
        %v5469 = vmul.f32 %v5468, 1.442695
        %v5470 = vpow.pop %v5469
        %v5471 = vsel %vm1241, %v5470, 0.0
        %5472 = vadd.xlane.f32.xlu0 %v5471
        %v5473 = vpop.xlane.xlu0 %5472
        %v5474 = vadd.f32 %v5473, 1e-09
        %v5475 = vrcp.pop %v5474
        %v5476 = vmul.f32 %v5470, %v5475
        %v5477 = vpack.c.bf16 %v5476, %v5476
        %5478 = vrot.lane.b32.xlu0 %v5079, 72
        %v5479 = vpop.permute.xlu0 %5478
        %v5481 = vsel %vm1241, %v5477, 0
        %v5484 = vsel %vm1307, %v5479, 0
        %5486 = vmatprep.subr.bf16.mxu0 0
        %5487 = vmatpush1.bf16.msra.mxu0 %v5484
        %5488 = vmatprep.subr.bf16.mxu0 0
        %5489 = vmatpush1.bf16.msra.mxu0 0
        %5490 = vmatprep.subr.bf16.mxu0 0
        %5491 = vmatpush1.bf16.msra.mxu0 0
        %5492 = vmatprep.subr.bf16.mxu0 0
        %5493 = vmatpush1.bf16.msra.mxu0 0
        %5494 = vmatprep.subr.bf16.mxu0 0
        %5495 = vmatpush1.bf16.msra.mxu0 0
        %5496 = vmatprep.subr.bf16.mxu0 0
        %5497 = vmatpush1.bf16.msra.mxu0 0
        %5498 = vmatprep.subr.bf16.mxu0 0
        %5499 = vmatpush1.bf16.msra.mxu0 0
        %5500 = vmatprep.subr.bf16.mxu0 0
        %5501 = vmatpush1.bf16.msra.mxu0 0
        %5502 = vmatprep.subr.bf16.mxu0 0
        %5503 = vmatpush1.bf16.msra.mxu0 0
        %5504 = vmatprep.subr.bf16.mxu0 0
        %5505 = vmatpush1.bf16.msra.mxu0 0
        %5506 = vmatprep.subr.bf16.mxu0 0
        %5507 = vmatpush1.bf16.msra.mxu0 0
        %5508 = vmatprep.subr.bf16.mxu0 0
        %5509 = vmatpush1.bf16.msra.mxu0 0
        %5510 = vmatprep.subr.bf16.mxu0 0
        %5511 = vmatpush1.bf16.msra.mxu0 0
        %5512 = vmatprep.subr.bf16.mxu0 0
        %5513 = vmatpush1.bf16.msra.mxu0 0
        %5514 = vmatprep.subr.bf16.mxu0 0
        %5515 = vmatpush1.bf16.msra.mxu0 0
        %5516 = vmatprep.subr.bf16.mxu0 0
        %5517 = vmatpush1.bf16.msra.mxu0 0
        %5518 = vmatprep.mubr.bf16.mxu0 0
        %5519 = vmatmul.mubr.bf16.gmra.mrb[0].mxu0 %v5481
        %v5520 = vpop.f32.mrb[0].mxu0
        %v5521 = vadd.f32 0.0, %v5520
        %v5522 = vpop.f32.mrb[0].mxu0
        %v5523 = vpop.f32.mrb[0].mxu0
        %v5524 = vpop.f32.mrb[0].mxu0
        %5525 = vdwg.mxu0
        %5527 = vrot.lane.b32.xlu0 %v5297, 8
        %v5528 = vpop.permute.xlu0 %5527
        %5531 = vrot.lane.b32.xlu0 %v5409, 16
        %v5532 = vpop.permute.xlu0 %5531
        %5535 = vrot.lane.b32.xlu0 %v5521, 24
        %v5536 = vpop.permute.xlu0 %5535
        %v5538 = vsel %vm1241, %v5184, %v5528
        %v5539 = vsel %vm1700, %v5538, %v5532
        %v5540 = vsel %vm1702, %v5539, %v5536
        %v5541 = vpack.c.bf16 %v5540, %v5540
        %v5543 = vlaneseq
        %v5544 = vshrl.u32 %v5543, 7
        %v5545 = vsub.s32 0, %v5544
        %v5546 = vrot.slane %v4957, %v5545
        %v5552 = vunpack.c.l.b16 %v4952
        %v5553 = vunpack.c.l.b16 %v4953
        %v5554 = vunpack.c.l.b16 %v4954
        %v5555 = vunpack.c.l.b16 %v4955
        %v5556 = vpack.c.b16 %v5553, %v5552
        %v5557 = vpack.c.b16 %v5555, %v5554
        %v5561 = vsel %vm1193, %v5541, 0
        %5563 = vmatprep.subr.bf16.mxu0 0
        %5564 = vmatpush1.bf16.msra.mxu0 %v5556
        %5565 = vmatprep.subr.bf16.mxu0 0
        %5566 = vmatpush1.bf16.msra.mxu0 %v5557
        %5567 = vmatprep.subr.bf16.mxu0 0
        %5568 = vmatpush1.bf16.msra.mxu0 0
        %5569 = vmatprep.subr.bf16.mxu0 0
        %5570 = vmatpush1.bf16.msra.mxu0 0
        %5571 = vmatprep.subr.bf16.mxu0 0
        %5572 = vmatpush1.bf16.msra.mxu0 0
        %5573 = vmatprep.subr.bf16.mxu0 0
        %5574 = vmatpush1.bf16.msra.mxu0 0
        %5575 = vmatprep.subr.bf16.mxu0 0
        %5576 = vmatpush1.bf16.msra.mxu0 0
        %5577 = vmatprep.subr.bf16.mxu0 0
        %5578 = vmatpush1.bf16.msra.mxu0 0
        %5579 = vmatprep.subr.bf16.mxu0 0
        %5580 = vmatpush1.bf16.msra.mxu0 0
        %5581 = vmatprep.subr.bf16.mxu0 0
        %5582 = vmatpush1.bf16.msra.mxu0 0
        %5583 = vmatprep.subr.bf16.mxu0 0
        %5584 = vmatpush1.bf16.msra.mxu0 0
        %5585 = vmatprep.subr.bf16.mxu0 0
        %5586 = vmatpush1.bf16.msra.mxu0 0
        %5587 = vmatprep.subr.bf16.mxu0 0
        %5588 = vmatpush1.bf16.msra.mxu0 0
        %5589 = vmatprep.subr.bf16.mxu0 0
        %5590 = vmatpush1.bf16.msra.mxu0 0
        %5591 = vmatprep.subr.bf16.mxu0 0
        %5592 = vmatpush1.bf16.msra.mxu0 0
        %5593 = vmatprep.subr.bf16.mxu0 0
        %5594 = vmatpush1.bf16.msra.mxu0 0
        %5595 = vmatprep.mubr.bf16.mxu0 0
        %5596 = vmatmul.mubr.bf16.gmra.mrb[0].mxu0 %v5561
        %v5597 = vpop.f32.mrb[0].mxu0
        %v5598 = vadd.f32 %v5546, %v5597
        %v5599 = vpop.f32.mrb[0].mxu0
        %v5600 = vpop.f32.mrb[0].mxu0
        %v5601 = vpop.f32.mrb[0].mxu0
        %5602 = vdwg.mxu0
        %v5603 = vadd.f32 %v4936, %v5598
        %s5604 = scalar_lea.vmem %s63, 1
        %v5605 = vld [vmem:[%s5604] sm:$0x1]
        %s5606 = scalar_lea.vmem %s65, 1
        %v5607 = vld [vmem:[%s5606] sm:$0x1]
        %v5608 = vsel %vm1193, %v5603, 0.0
        %5609 = vadd.xlane.f32.xlu0 %v5608
        %v5610 = vpop.xlane.xlu0 %5609
        %v5611 = vmul.f32 %v5610, %v1772
        %v5612 = vsub.f32 %v5603, %v5611
        %v5613 = vmul.f32 %v5612, %v5612
        %v5614 = vsel %vm1193, %v5613, 0.0
        %5615 = vadd.xlane.f32.xlu0 %v5614
        %v5616 = vpop.xlane.xlu0 %5615
        %v5617 = vmul.f32 %v5616, %v1772
        %v5618 = vadd.f32 %v5617, 1e-05
        %v5619 = vrsqrt.pop %v5618
        %v5620 = vmul.f32 %v5612, %v5619
        %v5622 = vlaneseq
        %v5623 = vshrl.u32 %v5622, 7
        %v5624 = vsub.s32 0, %v5623
        %v5625 = vrot.slane %v5605, %v5624
        %v5627 = vmul.f32 %v5620, %v5625
        %v5629 = vlaneseq
        %v5630 = vshrl.u32 %v5629, 7
        %v5631 = vsub.s32 0, %v5630
        %v5632 = vrot.slane %v5607, %v5631
        %v5634 = vadd.f32 %v5627, %v5632
        %s5635 = scalar_lea.vmem %s51, 16
        %v5636 = vld [vmem:[%s5635] sm:$0xf]
        %v5637 = vld [vmem:[%s5635 + $0x4] sm:$0xf]
        %v5638 = vld [vmem:[%s5635 + $0x8] sm:$0xf]
        %v5639 = vld [vmem:[%s5635 + $0xc] sm:$0xf]
        %s5640 = scalar_lea.vmem %s53, 1
        %v5641 = vld [vmem:[%s5640] sm:$0x1]
        %s5642 = scalar_lea.vmem %s55, 32
        %v5643 = vld [vmem:[%s5642] sm:$0xf]
        %v5644 = vld [vmem:[%s5642 + $0x4] sm:$0xf]
        %v5645 = vld [vmem:[%s5642 + $0x8] sm:$0xf]
        %v5646 = vld [vmem:[%s5642 + $0xc] sm:$0xf]
        %v5647 = vld [vmem:[%s5642 + $0x10] sm:$0xf]
        %v5648 = vld [vmem:[%s5642 + $0x14] sm:$0xf]
        %v5649 = vld [vmem:[%s5642 + $0x18] sm:$0xf]
        %v5650 = vld [vmem:[%s5642 + $0x1c] sm:$0xf]
        %s5651 = scalar_lea.vmem %s57, 1
        %v5652 = vld [vmem:[%s5651] sm:$0x1]
        %v5653 = vpack.c.bf16 %v5634, %v5634
        %v5655 = vlaneseq
        %v5656 = vshrl.u32 %v5655, 7
        %v5657 = vsub.s32 0, %v5656
        %v5658 = vrot.slane %v5641, %v5657
        %v5664 = vunpack.c.l.b16 %v5636
        %v5665 = vunpack.c.l.b16 %v5637
        %v5666 = vunpack.c.l.b16 %v5638
        %v5667 = vunpack.c.l.b16 %v5639
        %v5668 = vpack.c.b16 %v5665, %v5664
        %v5669 = vpack.c.b16 %v5667, %v5666
        %v5673 = vsel %vm1193, %v5653, 0
        %5675 = vmatprep.subr.bf16.mxu0 0
        %5676 = vmatpush1.bf16.msra.mxu0 %v5668
        %5677 = vmatprep.subr.bf16.mxu0 0
        %5678 = vmatpush1.bf16.msra.mxu0 %v5669
        %5679 = vmatprep.subr.bf16.mxu0 0
        %5680 = vmatpush1.bf16.msra.mxu0 0
        %5681 = vmatprep.subr.bf16.mxu0 0
        %5682 = vmatpush1.bf16.msra.mxu0 0
        %5683 = vmatprep.subr.bf16.mxu0 0
        %5684 = vmatpush1.bf16.msra.mxu0 0
        %5685 = vmatprep.subr.bf16.mxu0 0
        %5686 = vmatpush1.bf16.msra.mxu0 0
        %5687 = vmatprep.subr.bf16.mxu0 0
        %5688 = vmatpush1.bf16.msra.mxu0 0
        %5689 = vmatprep.subr.bf16.mxu0 0
        %5690 = vmatpush1.bf16.msra.mxu0 0
        %5691 = vmatprep.subr.bf16.mxu0 0
        %5692 = vmatpush1.bf16.msra.mxu0 0
        %5693 = vmatprep.subr.bf16.mxu0 0
        %5694 = vmatpush1.bf16.msra.mxu0 0
        %5695 = vmatprep.subr.bf16.mxu0 0
        %5696 = vmatpush1.bf16.msra.mxu0 0
        %5697 = vmatprep.subr.bf16.mxu0 0
        %5698 = vmatpush1.bf16.msra.mxu0 0
        %5699 = vmatprep.subr.bf16.mxu0 0
        %5700 = vmatpush1.bf16.msra.mxu0 0
        %5701 = vmatprep.subr.bf16.mxu0 0
        %5702 = vmatpush1.bf16.msra.mxu0 0
        %5703 = vmatprep.subr.bf16.mxu0 0
        %5704 = vmatpush1.bf16.msra.mxu0 0
        %5705 = vmatprep.subr.bf16.mxu0 0
        %5706 = vmatpush1.bf16.msra.mxu0 0
        %5707 = vmatprep.mubr.bf16.mxu0 0
        %5708 = vmatmul.mubr.bf16.gmra.mrb[0].mxu0 %v5673
        %v5709 = vpop.f32.mrb[0].mxu0
        %v5710 = vadd.f32 %v5658, %v5709
        %v5711 = vpop.f32.mrb[0].mxu0
        %v5712 = vpop.f32.mrb[0].mxu0
        %v5713 = vpop.f32.mrb[0].mxu0
        %5714 = vdwg.mxu0
        %v5715 = vmax.f32 %v5710, 0.0
        %v5716 = vpack.c.bf16 %v5715, %v5715
        %v5718 = vlaneseq
        %v5719 = vshrl.u32 %v5718, 7
        %v5720 = vsub.s32 0, %v5719
        %v5721 = vrot.slane %v5652, %v5720
        %v5731 = vunpack.c.l.b16 %v5643
        %v5732 = vunpack.c.l.b16 %v5644
        %v5733 = vunpack.c.l.b16 %v5645
        %v5734 = vunpack.c.l.b16 %v5646
        %v5735 = vunpack.c.l.b16 %v5647
        %v5736 = vunpack.c.l.b16 %v5648
        %v5737 = vunpack.c.l.b16 %v5649
        %v5738 = vunpack.c.l.b16 %v5650
        %v5739 = vpack.c.b16 %v5732, %v5731
        %v5740 = vpack.c.b16 %v5734, %v5733
        %v5741 = vpack.c.b16 %v5736, %v5735
        %v5742 = vpack.c.b16 %v5738, %v5737
        %v5748 = vsel %vm1905, %v5716, 0
        %5750 = vmatprep.subr.bf16.mxu0 0
        %5751 = vmatpush1.bf16.msra.mxu0 %v5739
        %5752 = vmatprep.subr.bf16.mxu0 0
        %5753 = vmatpush1.bf16.msra.mxu0 %v5740
        %5754 = vmatprep.subr.bf16.mxu0 0
        %5755 = vmatpush1.bf16.msra.mxu0 %v5741
        %5756 = vmatprep.subr.bf16.mxu0 0
        %5757 = vmatpush1.bf16.msra.mxu0 %v5742
        %5758 = vmatprep.subr.bf16.mxu0 0
        %5759 = vmatpush1.bf16.msra.mxu0 0
        %5760 = vmatprep.subr.bf16.mxu0 0
        %5761 = vmatpush1.bf16.msra.mxu0 0
        %5762 = vmatprep.subr.bf16.mxu0 0
        %5763 = vmatpush1.bf16.msra.mxu0 0
        %5764 = vmatprep.subr.bf16.mxu0 0
        %5765 = vmatpush1.bf16.msra.mxu0 0
        %5766 = vmatprep.subr.bf16.mxu0 0
        %5767 = vmatpush1.bf16.msra.mxu0 0
        %5768 = vmatprep.subr.bf16.mxu0 0
        %5769 = vmatpush1.bf16.msra.mxu0 0
        %5770 = vmatprep.subr.bf16.mxu0 0
        %5771 = vmatpush1.bf16.msra.mxu0 0
        %5772 = vmatprep.subr.bf16.mxu0 0
        %5773 = vmatpush1.bf16.msra.mxu0 0
        %5774 = vmatprep.subr.bf16.mxu0 0
        %5775 = vmatpush1.bf16.msra.mxu0 0
        %5776 = vmatprep.subr.bf16.mxu0 0
        %5777 = vmatpush1.bf16.msra.mxu0 0
        %5778 = vmatprep.subr.bf16.mxu0 0
        %5779 = vmatpush1.bf16.msra.mxu0 0
        %5780 = vmatprep.subr.bf16.mxu0 0
        %5781 = vmatpush1.bf16.msra.mxu0 0
        %5782 = vmatprep.mubr.bf16.mxu0 0
        %5783 = vmatmul.mubr.bf16.gmra.mrb[0].mxu0 %v5748
        %v5784 = vpop.f32.mrb[0].mxu0
        %v5785 = vadd.f32 %v5721, %v5784
        %v5786 = vpop.f32.mrb[0].mxu0
        %v5787 = vpop.f32.mrb[0].mxu0
        %v5788 = vpop.f32.mrb[0].mxu0
        %5789 = vdwg.mxu0
        %v5790 = vadd.f32 %v5634, %v5785
        %s5791 = scalar_lea.vmem %s67, 1
        %v5792 = vld [vmem:[%s5791] sm:$0x1]
        %s5793 = scalar_lea.vmem %s69, 1
        %v5794 = vld [vmem:[%s5793] sm:$0x1]
        %v5795 = vsel %vm1193, %v5790, 0.0
        %5796 = vadd.xlane.f32.xlu0 %v5795
        %v5797 = vpop.xlane.xlu0 %5796
        %v5798 = vmul.f32 %v5797, %v1772
        %v5799 = vsub.f32 %v5790, %v5798
        %v5800 = vmul.f32 %v5799, %v5799
        %v5801 = vsel %vm1193, %v5800, 0.0
        %5802 = vadd.xlane.f32.xlu0 %v5801
        %v5803 = vpop.xlane.xlu0 %5802
        %v5804 = vmul.f32 %v5803, %v1772
        %v5805 = vadd.f32 %v5804, 1e-05
        %v5806 = vrsqrt.pop %v5805
        %v5807 = vmul.f32 %v5799, %v5806
        %v5809 = vlaneseq
        %v5810 = vshrl.u32 %v5809, 7
        %v5811 = vsub.s32 0, %v5810
        %v5812 = vrot.slane %v5792, %v5811
        %v5814 = vmul.f32 %v5807, %v5812
        %v5816 = vlaneseq
        %v5817 = vshrl.u32 %v5816, 7
        %v5818 = vsub.s32 0, %v5817
        %v5819 = vrot.slane %v5794, %v5818
        %v5821 = vadd.f32 %v5814, %v5819
        %v5822 = vld [vmem:[%s71] sm:$0xf]
        %v5823 = vld [vmem:[%s71 + $0x4] sm:$0xf]
        %v5824 = vld [vmem:[%s71 + $0x8] sm:$0xf]
        %v5825 = vld [vmem:[%s71 + $0xc] sm:$0xf]
        %v5826 = vpack.c.bf16 %v5821, %v5821
        %v5827 = vld [vmem:[%s73] sm:$0x1]
        %v5829 = vlaneseq
        %v5830 = vshrl.u32 %v5829, 7
        %v5831 = vsub.s32 0, %v5830
        %v5832 = vrot.slane %v5827, %v5831
        %v5838 = vunpack.c.l.b16 %v5822
        %v5839 = vunpack.c.l.b16 %v5823
        %v5840 = vunpack.c.l.b16 %v5824
        %v5841 = vunpack.c.l.b16 %v5825
        %v5842 = vpack.c.b16 %v5839, %v5838
        %v5843 = vpack.c.b16 %v5841, %v5840
        %v5847 = vsel %vm1193, %v5826, 0
        %5849 = vmatprep.subr.bf16.mxu0 0
        %5850 = vmatpush1.bf16.msra.mxu0 %v5842
        %5851 = vmatprep.subr.bf16.mxu0 0
        %5852 = vmatpush1.bf16.msra.mxu0 %v5843
        %5853 = vmatprep.subr.bf16.mxu0 0
        %5854 = vmatpush1.bf16.msra.mxu0 0
        %5855 = vmatprep.subr.bf16.mxu0 0
        %5856 = vmatpush1.bf16.msra.mxu0 0
        %5857 = vmatprep.subr.bf16.mxu0 0
        %5858 = vmatpush1.bf16.msra.mxu0 0
        %5859 = vmatprep.subr.bf16.mxu0 0
        %5860 = vmatpush1.bf16.msra.mxu0 0
        %5861 = vmatprep.subr.bf16.mxu0 0
        %5862 = vmatpush1.bf16.msra.mxu0 0
        %5863 = vmatprep.subr.bf16.mxu0 0
        %5864 = vmatpush1.bf16.msra.mxu0 0
        %5865 = vmatprep.subr.bf16.mxu0 0
        %5866 = vmatpush1.bf16.msra.mxu0 0
        %5867 = vmatprep.subr.bf16.mxu0 0
        %5868 = vmatpush1.bf16.msra.mxu0 0
        %5869 = vmatprep.subr.bf16.mxu0 0
        %5870 = vmatpush1.bf16.msra.mxu0 0
        %5871 = vmatprep.subr.bf16.mxu0 0
        %5872 = vmatpush1.bf16.msra.mxu0 0
        %5873 = vmatprep.subr.bf16.mxu0 0
        %5874 = vmatpush1.bf16.msra.mxu0 0
        %5875 = vmatprep.subr.bf16.mxu0 0
        %5876 = vmatpush1.bf16.msra.mxu0 0
        %5877 = vmatprep.subr.bf16.mxu0 0
        %5878 = vmatpush1.bf16.msra.mxu0 0
        %5879 = vmatprep.subr.bf16.mxu0 0
        %5880 = vmatpush1.bf16.msra.mxu0 0
        %5881 = vmatprep.mubr.bf16.mxu0 0
        %5882 = vmatmul.mubr.bf16.gmra.mrb[0].mxu0 %v5847
        %v5883 = vpop.f32.mrb[0].mxu0
        %v5884 = vadd.f32 %v5832, %v5883
        %v5885 = vpop.f32.mrb[0].mxu0
        %v5886 = vpop.f32.mrb[0].mxu0
        %v5887 = vpop.f32.mrb[0].mxu0
        %5888 = vdwg.mxu0
        %5889 = vst [vmem:[%s1141] sm:$0xff] %v5884
        %s5890 = sand.u32 %s889, 1
        %s5891 = scalar_lea.sflag [#allocation3], %s5890
        %s5892 = sand.u32 %s889, 1
        %s5893 = smul.addr %s5892, 8
        %s5894 = scalar_lea.vmem [#allocation2], %s5893
        // Predicated region
        $region169: #{transformer_forward.1} parent=167 // pred_check
          %p5895 = pneg %p899
        $region170: #{transformer_forward.1} parent=167 // pred_check_branch
          %5897 = sbr.rel (%p5895) target = $region172
        $region171: #{transformer_forward.1} parent=167 // pred_region
          %s5899 = ssub.s32 128, 128
          %5900 = vsyncadd %s5891, %s5899
          %s5901 = smul.addr %s89, 128
          %s5902 = scalar_lea.hbm %s75, %s5901
          %s5904 = sshll.u32 %s5894, 4
          %s5905 = int_to_ptr.vmem [resolvable:$true] %s5904
          %5907 = dma.vmem_to_hbm [thread:$0]  %s5905, 128, %s5902, %s5891
        $region172: #{transformer_forward.1} parent=167 // pred_fallthru
          _
      $region168: #{transformer_forward.1} parent=5 // pred_fallthru
        _
      %p5908 = scmp.le.s32.totalorder 2, %s84
      // Predicated region
      $region173: #{transformer_forward.1} parent=5 // pred_check
        %p5909 = pneg %p5908
      $region174: #{transformer_forward.1} parent=5 // pred_check_branch
        %5911 = sbr.rel (%p5909) target = $region176
      $region175: #{transformer_forward.1} parent=5 // pred_region
        %s5912 = ssub.s32 %s84, 2
        // Predicated region
        $region177: #{transformer_forward.1} parent=175 // pred_check
          %p5913 = pneg %p905
        $region178: #{transformer_forward.1} parent=175 // pred_check_branch
          %5915 = sbr.rel (%p5913) target = $region180
        $region179: #{transformer_forward.1} parent=175 // pred_region
          %s5916 = sand.u32 %s890, 1
          %s5917 = scalar_lea.sflag [#allocation3], %s5916
          %s5918 = sand.u32 %s890, 1
          %s5919 = smul.addr %s5918, 8
          %s5920 = scalar_lea.vmem [#allocation2], %s5919
          %5921 = dma.done %s5917, 128
        $region180: #{transformer_forward.1} parent=175 // pred_fallthru
          _
      $region176: #{transformer_forward.1} parent=5 // pred_fallthru
        _
    $region6: #{transformer_forward.1} parent=1 // loop_footer
      %s88 = sadd.s32 1, %s84
    $region7: #{transformer_forward.1} parent=1 // loop_footer_branch
      %83 = sbr.rel target = $region3
    $region8: #{transformer_forward.1} parent=1 // loop_exit
      _
    %5922 = vsyncpa [#allocation3], 1
    %s5923 = scalar_lea.sflag [#allocation3], 1
    %5924 = vsyncpa %s5923, 1

</llo_original>
